<compile_context>
chip_gen: v7x
topology: tpu7x:2x2x1
jax: 0.10.0
libtpu: 0.0.40
codegen_flags: <defaults>
</compile_context>

<pallas_src>
import functools

import jax
import jax.numpy as jnp
import numpy as np
from jax.experimental import pallas as pl
from jax.experimental.pallas import tpu as pltpu

C_PAD = 128  # channel padding carried between layers (one MXU lane tile)


# ----------------------------------------------------------------------------
# Pallas kernels
# ----------------------------------------------------------------------------
def _mm_bias_relu_kernel(a_ref, w_ref, b_ref, o_ref):
    """o = relu(A @ W + b) for one (TM, K) x (K, N) tile."""
    acc = jnp.dot(a_ref[...], w_ref[...], preferred_element_type=jnp.float32)
    o_ref[...] = jnp.maximum(acc + b_ref[...], 0.0).astype(o_ref.dtype)


def _mlp_fused_kernel(x_ref, w1_ref, b1_ref, w2_ref, b2_ref, o_ref):
    """Fused MLP head: o = relu(x @ W1 + b1) @ W2 + b2 in one launch."""
    h = jnp.dot(x_ref[...], w1_ref[...], preferred_element_type=jnp.float32)
    h = jnp.maximum(h + b1_ref[...], 0.0)
    o = jnp.dot(h, w2_ref[...], preferred_element_type=jnp.float32)
    o_ref[...] = (o + b2_ref[...]).astype(o_ref.dtype)


# ----------------------------------------------------------------------------
# Pallas wrappers
# ----------------------------------------------------------------------------
def matmul_bias_relu(a, w_p, b_p):
    """relu(a @ W + b).  W (K, Np) and b (1, Np) are pre-padded at init.
    No per-call padding / slicing of activations: blocks cover the full
    (possibly non-8-multiple) row count, which Pallas allows."""
    M, K = a.shape
    Kw, Np = w_p.shape
    assert K == Kw, (K, Kw)

    # 2 row-tiles only when there is enough work for v7x's two TensorCores;
    # otherwise a single full-array block (grid is a serial loop on v5e/v6e).
    if M >= 512 and M % 16 == 0:
        ntiles, TM = 2, M // 2
    else:
        ntiles, TM = 1, M

    return pl.pallas_call(
        _mm_bias_relu_kernel,
        out_shape=jax.ShapeDtypeStruct((M, Np), jnp.float32),
        grid_spec=pltpu.PrefetchScalarGridSpec(
            num_scalar_prefetch=0,
            grid=(ntiles,),
            in_specs=[
                pl.BlockSpec((TM, K), lambda i: (i, 0)),
                pl.BlockSpec((K, Np), lambda i: (0, 0)),
                pl.BlockSpec((1, Np), lambda i: (0, 0)),
            ],
            out_specs=pl.BlockSpec((TM, Np), lambda i: (i, 0)),
        ),
        compiler_params=pltpu.CompilerParams(
            dimension_semantics=("parallel",),
            vmem_limit_bytes=32 * 1024 * 1024,
        ),
    )(a, w_p, b_p)


def mlp_head(x, w1_p, b1_p, w2_p, b2_p):
    """Fused Linear -> ReLU -> Linear in one pallas_call (fc1 activation stays
    in VMEM, never round-trips HBM)."""
    M, K = x.shape
    Kw, Hd = w1_p.shape
    _, Np2 = w2_p.shape
    assert K == Kw, (K, Kw)

    return pl.pallas_call(
        _mlp_fused_kernel,
        out_shape=jax.ShapeDtypeStruct((M, Np2), jnp.float32),
        grid_spec=pltpu.PrefetchScalarGridSpec(
            num_scalar_prefetch=0,
            grid=(1,),
            in_specs=[
                pl.BlockSpec((M, K), lambda i: (0, 0)),
                pl.BlockSpec((K, Hd), lambda i: (0, 0)),
                pl.BlockSpec((1, Hd), lambda i: (0, 0)),
                pl.BlockSpec((Hd, Np2), lambda i: (0, 0)),
                pl.BlockSpec((1, Np2), lambda i: (0, 0)),
            ],
            out_specs=pl.BlockSpec((M, Np2), lambda i: (0, 0)),
        ),
        compiler_params=pltpu.CompilerParams(
            dimension_semantics=("arbitrary",),
            # fc1 weight (6272x512 f32, ~12.5 MiB) may be double-buffered even
            # for a single grid step; stay under v7x's 64 MiB physical VMEM.
            vmem_limit_bytes=40 * 1024 * 1024,
        ),
    )(x, w1_p, b1_p, w2_p, b2_p)


# ----------------------------------------------------------------------------
# Lightweight XLA glue: space-to-depth + contiguous shifted-window patches
# ----------------------------------------------------------------------------
def _input_to_s2d_nhwc(x_nchw, b):
    """NCHW -> space-to-depth(b) NHWC; depth order (dh, dw, c)."""
    N, C, H, W = x_nchw.shape
    x = x_nchw.reshape(N, C, H // b, b, W // b, b)
    x = jnp.transpose(x, (0, 2, 4, 3, 5, 1))          # (n, Hb, Wb, dh, dw, c)
    return x.reshape(N, H // b, W // b, b * b * C)


def _s2d_nhwc(x, b):
    """NHWC -> space-to-depth(b) NHWC; depth order (dh, dw, c)."""
    N, H, W, C = x.shape
    x = x.reshape(N, H // b, b, W // b, b, C)
    x = jnp.transpose(x, (0, 1, 3, 2, 4, 5))          # (n, Hb, Wb, dh, dw, c)
    return x.reshape(N, H // b, W // b, b * b * C)


def _window_patches(x, k):
    """Stride-1 kxk patches via k*k contiguous shifted slices.
    Feature order (kh, kw, channel)."""
    N, H, W, C = x.shape
    OH, OW = H - k + 1, W - k + 1
    parts = [x[:, i:i + OH, j:j + OW, :] for i in range(k) for j in range(k)]
    return jnp.concatenate(parts, axis=-1)            # (N, OH, OW, k*k*C)


# ----------------------------------------------------------------------------
# One-time parameter preprocessing (all reshapes/permutes/pads hoisted here)
# ----------------------------------------------------------------------------
def prepare_params(params, *, input_hw, action_size):
    """Build the matmul-ready, zero-padded weight set:
      conv1: (O,C,8,8)  -> (64*C, 128) rows ordered (bi,bj, h%4,w%4, c)
             [matches the 2x2 window over the space-to-depth-4 input]
      conv2: (O,32,4,4) -> (2048, 128) rows ordered (bi,bj, h%2,w%2, padded-c)
      conv3: (O,64,3,3) -> (1152, 128) rows ordered (kh,kw, padded-c)
      fc1  : columns permuted from the PyTorch NCHW flatten to the padded-NHWC
             flatten used here -> (7*7*128, 512)
      fc2  : (A,512) -> (512, 128)
    Padded output channels have zero weight columns AND zero bias, so they stay
    exactly zero through ReLU and contribute nothing downstream."""
    arrays = {}

    def pad_cols(m, to):
        return jnp.pad(m, ((0, 0), (0, to - m.shape[1])))

    # conv1 -- 8x8 stride-4 conv expressed as 2x2 stride-1 over s2d-4 input.
    w1 = params["conv1_w"]                                  # (O1, C, 8, 8)
    O1, C = w1.shape[0], w1.shape[1]
    w1 = w1.reshape(O1, C, 2, 4, 2, 4)                      # (o,c,bi,r,bj,s)
    w1 = jnp.transpose(w1, (2, 4, 3, 5, 1, 0)).reshape(64 * C, O1)
    arrays["conv1_w"] = pad_cols(w1, C_PAD)
    arrays["conv1_b"] = pad_cols(params["conv1_b"].reshape(1, O1), C_PAD)

    # conv2 -- 4x4 stride-2 conv expressed as 2x2 stride-1 over s2d-2 of the
    # 128-channel-padded conv1 output.
    w2 = params["conv2_w"]                                  # (O2, 32, 4, 4)
    O2, C2 = w2.shape[0], w2.shape[1]
    w2 = jnp.pad(w2, ((0, 0), (0, C_PAD - C2), (0, 0), (0, 0)))
    w2 = w2.reshape(O2, C_PAD, 2, 2, 2, 2)                  # (o,pc,bi,dh,bj,dw)
    w2 = jnp.transpose(w2, (2, 4, 3, 5, 1, 0)).reshape(4 * 4 * C_PAD, O2)
    arrays["conv2_w"] = pad_cols(w2, C_PAD)
    arrays["conv2_b"] = pad_cols(params["conv2_b"].reshape(1, O2), C_PAD)

    # conv3 -- plain 3x3 stride-1 over 128-channel-padded input.
    w3 = params["conv3_w"]                                  # (O3, 64, 3, 3)
    O3, C3 = w3.shape[0], w3.shape[1]
    w3 = jnp.pad(w3, ((0, 0), (0, C_PAD - C3), (0, 0), (0, 0)))
    w3 = jnp.transpose(w3, (2, 3, 1, 0)).reshape(9 * C_PAD, O3)
    arrays["conv3_w"] = pad_cols(w3, C_PAD)
    arrays["conv3_b"] = pad_cols(params["conv3_b"].reshape(1, O3), C_PAD)

    # spatial size after the conv stack
    h, w = input_hw
    for k, s in ((8, 4), (4, 2), (3, 1)):
        h = (h - k) // s + 1
        w = (w - k) // s + 1

    # fc1 -- permute columns from NCHW flatten (c,y,x) to padded-NHWC flatten
    # (y, x, padded-c), then transpose to (K, hidden).
    hidden = params["fc1_w"].shape[0]
    wf1 = params["fc1_w"].reshape(hidden, O3, h, w)
    wf1 = jnp.pad(wf1, ((0, 0), (0, C_PAD - O3), (0, 0), (0, 0)))
    wf1 = jnp.transpose(wf1, (2, 3, 1, 0)).reshape(h * w * C_PAD, hidden)
    arrays["fc1_w"] = wf1                                   # (h*w*128, hidden)
    arrays["fc1_b"] = params["fc1_b"].reshape(1, hidden)

    # fc2
    np2 = ((action_size + 127) // 128) * 128
    arrays["fc2_w"] = pad_cols(params["fc2_w"].T, np2)      # (hidden, np2)
    arrays["fc2_b"] = pad_cols(params["fc2_b"].reshape(1, action_size), np2)

    meta = {"action_size": int(action_size)}
    return arrays, meta


# ----------------------------------------------------------------------------
# Full Nature_Paper_Conv forward (PyTorch semantics, NCHW input)
# ----------------------------------------------------------------------------
def nature_paper_conv_forward(x_nchw, arrays, *, meta):
    N = x_nchw.shape[0]

    # conv1: NCHW->NHWC + space-to-depth-4 (one cheap transpose), 4 shifted
    # slices for the 2x2 window, one fused matmul+bias+ReLU on the MXU.
    xs = _input_to_s2d_nhwc(x_nchw, 4)                      # (N, 21, 21, 16C)
    p1 = _window_patches(xs, 2)                             # (N, 20, 20, 64C)
    oh1, ow1 = p1.shape[1], p1.shape[2]
    a1 = matmul_bias_relu(p1.reshape(N * oh1 * ow1, -1),
                          arrays["conv1_w"], arrays["conv1_b"])
    a1 = a1.reshape(N, oh1, ow1, C_PAD)                     # channels stay padded

    # conv2: space-to-depth-2 + 4 shifted slices + fused matmul.
    s2 = _s2d_nhwc(a1, 2)                                   # (N, 10, 10, 512)
    p2 = _window_patches(s2, 2)                             # (N, 9, 9, 2048)
    oh2, ow2 = p2.shape[1], p2.shape[2]
    a2 = matmul_bias_relu(p2.reshape(N * oh2 * ow2, -1),
                          arrays["conv2_w"], arrays["conv2_b"])
    a2 = a2.reshape(N, oh2, ow2, C_PAD)

    # conv3: 9 shifted slices + fused matmul.
    p3 = _window_patches(a2, 3)                             # (N, 7, 7, 1152)
    oh3, ow3 = p3.shape[1], p3.shape[2]
    a3 = matmul_bias_relu(p3.reshape(N * oh3 * ow3, -1),
                          arrays["conv3_w"], arrays["conv3_b"])

    # MLP head: fused Linear -> ReLU -> Linear (fc1 activation never hits HBM).
    flat = a3.reshape(N, oh3 * ow3 * C_PAD)                 # (N, 6272)
    out = mlp_head(flat, arrays["fc1_w"], arrays["fc1_b"],
                   arrays["fc2_w"], arrays["fc2_b"])
    return out[:, :meta["action_size"]]


# ----------------------------------------------------------------------------
# Pure-JAX reference (no Pallas) for correctness check
# ----------------------------------------------------------------------------
def reference_forward(x, params):
    def conv(x, w, b, s):
        y = jax.lax.conv_general_dilated(
            x, w, (s, s), "VALID", dimension_numbers=("NCHW", "OIHW", "NCHW"))
        return jax.nn.relu(y + b[None, :, None, None])

    h = conv(x, params["conv1_w"], params["conv1_b"], 4)
    h = conv(h, params["conv2_w"], params["conv2_b"], 2)
    h = conv(h, params["conv3_w"], params["conv3_b"], 1)
    flat = h.reshape(h.shape[0], -1)
    h1 = jax.nn.relu(flat @ params["fc1_w"].T + params["fc1_b"])
    return h1 @ params["fc2_w"].T + params["fc2_b"]


if __name__ == "__main__":
    # The module hard-codes conv_output_size = 64*7*7, which implies 84x84
    # input (standard Atari Nature-DQN setting). Use batch=2, channels=4.
    batch, channels, height, width = 2, 4, 84, 84
    action_size = 6

    key = jax.random.PRNGKey(0)
    ks = jax.random.split(key, 11)
    scale = 0.05
    params = {
        "conv1_w": scale * jax.random.normal(ks[0], (32, channels, 8, 8), jnp.float32),
        "conv1_b": scale * jax.random.normal(ks[1], (32,), jnp.float32),
        "conv2_w": scale * jax.random.normal(ks[2], (64, 32, 4, 4), jnp.float32),
        "conv2_b": scale * jax.random.normal(ks[3], (64,), jnp.float32),
        "conv3_w": scale * jax.random.normal(ks[4], (64, 64, 3, 3), jnp.float32),
        "conv3_b": scale * jax.random.normal(ks[5], (64,), jnp.float32),
        "fc1_w": scale * jax.random.normal(ks[6], (512, 64 * 7 * 7), jnp.float32),
        "fc1_b": scale * jax.random.normal(ks[7], (512,), jnp.float32),
        "fc2_w": scale * jax.random.normal(ks[8], (action_size, 512), jnp.float32),
        "fc2_b": scale * jax.random.normal(ks[9], (action_size,), jnp.float32),
    }
    x = jax.random.normal(ks[10], (batch, channels, height, width), jnp.float32)

    # One-time weight preprocessing (hoisted out of the per-call path).
    arrays, meta = prepare_params(params, input_hw=(height, width),
                                  action_size=action_size)
    forward = jax.jit(functools.partial(nature_paper_conv_forward, meta=meta))

    out = jax.block_until_ready(forward(x, arrays))
    assert out.shape == (batch, action_size), out.shape

    ref = jax.block_until_ready(reference_forward(x, params))
    np.testing.assert_allclose(np.asarray(out), np.asarray(ref),
                               rtol=1e-4, atol=1e-4)

    print("KERNEL_OK")
</pallas_src>

<mosaic_0001>
module attributes {stable_mosaic.version = 11 : i64} {
  func.func @_mm_bias_relu_kernel(%arg0: i32, %arg1: memref<400x256xf32, #tpu.memory_space<vmem>>, %arg2: memref<256x128xf32, #tpu.memory_space<vmem>>, %arg3: memref<1x128xf32, #tpu.memory_space<vmem>>, %arg4: memref<400x128xf32, #tpu.memory_space<vmem>>) attributes {dimension_semantics = [#tpu.dimension_semantics<parallel>], iteration_bounds = array<i64: 2>, scalar_prefetch = 0 : i64, scratch_operands = 0 : i64, tpu.core_type = #tpu.core_type<tc>, window_params = [{transform_indices = @transform_0, window_bounds = array<i64: 400, 256>}, {pipeline_mode = #tpu.pipeline_mode<synchronous>, transform_indices = @transform_1, window_bounds = array<i64: 256, 128>}, {pipeline_mode = #tpu.pipeline_mode<synchronous>, transform_indices = @transform_2, window_bounds = array<i64: 1, 128>}, {transform_indices = @transform_3, window_bounds = array<i64: 400, 128>}]} {
    %c0 = arith.constant 0 : index
    %c0_0 = arith.constant 0 : index
    %0 = vector.load %arg1[%c0, %c0_0] : memref<400x256xf32, #tpu.memory_space<vmem>>, vector<400x256xf32>
    %c0_1 = arith.constant 0 : index
    %c0_2 = arith.constant 0 : index
    %1 = vector.load %arg2[%c0_1, %c0_2] : memref<256x128xf32, #tpu.memory_space<vmem>>, vector<256x128xf32>
    %cst = arith.constant dense<0.000000e+00> : vector<400x128xf32>
    %2 = tpu.matmul %0, %1, %cst {dimension_numbers = #tpu.dot_dimension_numbers<[1], [0], [0], [1], [0, 0, 1, 1], [], []>} : vector<400x256xf32>, vector<256x128xf32>, vector<400x128xf32> -> vector<400x128xf32>
    %c0_3 = arith.constant 0 : index
    %c0_4 = arith.constant 0 : index
    %3 = vector.load %arg3[%c0_3, %c0_4] : memref<1x128xf32, #tpu.memory_space<vmem>>, vector<1x128xf32>
    %4 = vector.broadcast %3 : vector<1x128xf32> to vector<400x128xf32>
    %5 = arith.addf %2, %4 : vector<400x128xf32>
    %cst_5 = arith.constant 0.000000e+00 : f32
    %6 = vector.broadcast %cst_5 : f32 to vector<400x128xf32>
    %7 = arith.maximumf %5, %6 : vector<400x128xf32>
    %c0_6 = arith.constant 0 : index
    %c0_7 = arith.constant 0 : index
    %8 = vector.load %arg4[%c0_6, %c0_7] : memref<400x128xf32, #tpu.memory_space<vmem>>, vector<400x128xf32>
    tpu.vector_store %arg4[%c0_6, %c0_7], %7 {strides = array<i32>} : memref<400x128xf32, #tpu.memory_space<vmem>>, vector<400x128xf32>,
    return
  }
  func.func @transform_0(%arg0: i32) -> (i32, i32) {
    %c0_i32 = arith.constant 0 : i32
    %c0_i32_0 = arith.constant 0 : i32
    return %arg0, %c0_i32 : i32, i32
  }
  func.func @transform_1(%arg0: i32) -> (i32, i32) {
    %c0_i32 = arith.constant 0 : i32
    %c0_i32_0 = arith.constant 0 : i32
    %c0_i32_1 = arith.constant 0 : i32
    return %c0_i32, %c0_i32_0 : i32, i32
  }
  func.func @transform_2(%arg0: i32) -> (i32, i32) {
    %c0_i32 = arith.constant 0 : i32
    %c0_i32_0 = arith.constant 0 : i32
    %c0_i32_1 = arith.constant 0 : i32
    return %c0_i32, %c0_i32_0 : i32, i32
  }
  func.func @transform_3(%arg0: i32) -> (i32, i32) {
    %c0_i32 = arith.constant 0 : i32
    %c0_i32_0 = arith.constant 0 : i32
    return %arg0, %c0_i32 : i32, i32
  }
}

module attributes {stable_mosaic.version = 11 : i64} {
  func.func @_mm_bias_relu_kernel(%arg0: i32, %arg1: memref<162x2048xf32, #tpu.memory_space<vmem>>, %arg2: memref<2048x128xf32, #tpu.memory_space<vmem>>, %arg3: memref<1x128xf32, #tpu.memory_space<vmem>>, %arg4: memref<162x128xf32, #tpu.memory_space<vmem>>) attributes {dimension_semantics = [#tpu.dimension_semantics<parallel>], iteration_bounds = array<i64: 1>, scalar_prefetch = 0 : i64, scratch_operands = 0 : i64, tpu.core_type = #tpu.core_type<tc>, window_params = [{transform_indices = @transform_0, window_bounds = array<i64: 162, 2048>}, {pipeline_mode = #tpu.pipeline_mode<synchronous>, transform_indices = @transform_1, window_bounds = array<i64: 2048, 128>}, {pipeline_mode = #tpu.pipeline_mode<synchronous>, transform_indices = @transform_2, window_bounds = array<i64: 1, 128>}, {transform_indices = @transform_3, window_bounds = array<i64: 162, 128>}]} {
    %c0 = arith.constant 0 : index
    %c0_0 = arith.constant 0 : index
    %0 = vector.load %arg1[%c0, %c0_0] : memref<162x2048xf32, #tpu.memory_space<vmem>>, vector<162x2048xf32>
    %c0_1 = arith.constant 0 : index
    %c0_2 = arith.constant 0 : index
    %1 = vector.load %arg2[%c0_1, %c0_2] : memref<2048x128xf32, #tpu.memory_space<vmem>>, vector<2048x128xf32>
    %cst = arith.constant dense<0.000000e+00> : vector<162x128xf32>
    %2 = tpu.matmul %0, %1, %cst {dimension_numbers = #tpu.dot_dimension_numbers<[1], [0], [0], [1], [0, 0, 1, 1], [], []>} : vector<162x2048xf32>, vector<2048x128xf32>, vector<162x128xf32> -> vector<162x128xf32>
    %c0_3 = arith.constant 0 : index
    %c0_4 = arith.constant 0 : index
    %3 = vector.load %arg3[%c0_3, %c0_4] : memref<1x128xf32, #tpu.memory_space<vmem>>, vector<1x128xf32>
    %4 = vector.broadcast %3 : vector<1x128xf32> to vector<162x128xf32>
    %5 = arith.addf %2, %4 : vector<162x128xf32>
    %cst_5 = arith.constant 0.000000e+00 : f32
    %6 = vector.broadcast %cst_5 : f32 to vector<162x128xf32>
    %7 = arith.maximumf %5, %6 : vector<162x128xf32>
    %c0_6 = arith.constant 0 : index
    %c0_7 = arith.constant 0 : index
    %8 = vector.load %arg4[%c0_6, %c0_7] : memref<162x128xf32, #tpu.memory_space<vmem>>, vector<162x128xf32>
    tpu.vector_store %arg4[%c0_6, %c0_7], %7 {strides = array<i32>} : memref<162x128xf32, #tpu.memory_space<vmem>>, vector<162x128xf32>,
    return
  }
  func.func @transform_0(%arg0: i32) -> (i32, i32) {
    %c0_i32 = arith.constant 0 : i32
    %c0_i32_0 = arith.constant 0 : i32
    return %arg0, %c0_i32 : i32, i32
  }
  func.func @transform_1(%arg0: i32) -> (i32, i32) {
    %c0_i32 = arith.constant 0 : i32
    %c0_i32_0 = arith.constant 0 : i32
    %c0_i32_1 = arith.constant 0 : i32
    return %c0_i32, %c0_i32_0 : i32, i32
  }
  func.func @transform_2(%arg0: i32) -> (i32, i32) {
    %c0_i32 = arith.constant 0 : i32
    %c0_i32_0 = arith.constant 0 : i32
    %c0_i32_1 = arith.constant 0 : i32
    return %c0_i32, %c0_i32_0 : i32, i32
  }
  func.func @transform_3(%arg0: i32) -> (i32, i32) {
    %c0_i32 = arith.constant 0 : i32
    %c0_i32_0 = arith.constant 0 : i32
    return %arg0, %c0_i32 : i32, i32
  }
}

module attributes {stable_mosaic.version = 11 : i64} {
  func.func @_mm_bias_relu_kernel(%arg0: i32, %arg1: memref<98x1152xf32, #tpu.memory_space<vmem>>, %arg2: memref<1152x128xf32, #tpu.memory_space<vmem>>, %arg3: memref<1x128xf32, #tpu.memory_space<vmem>>, %arg4: memref<98x128xf32, #tpu.memory_space<vmem>>) attributes {dimension_semantics = [#tpu.dimension_semantics<parallel>], iteration_bounds = array<i64: 1>, scalar_prefetch = 0 : i64, scratch_operands = 0 : i64, tpu.core_type = #tpu.core_type<tc>, window_params = [{transform_indices = @transform_0, window_bounds = array<i64: 98, 1152>}, {pipeline_mode = #tpu.pipeline_mode<synchronous>, transform_indices = @transform_1, window_bounds = array<i64: 1152, 128>}, {pipeline_mode = #tpu.pipeline_mode<synchronous>, transform_indices = @transform_2, window_bounds = array<i64: 1, 128>}, {transform_indices = @transform_3, window_bounds = array<i64: 98, 128>}]} {
    %c0 = arith.constant 0 : index
    %c0_0 = arith.constant 0 : index
    %0 = vector.load %arg1[%c0, %c0_0] : memref<98x1152xf32, #tpu.memory_space<vmem>>, vector<98x1152xf32>
    %c0_1 = arith.constant 0 : index
    %c0_2 = arith.constant 0 : index
    %1 = vector.load %arg2[%c0_1, %c0_2] : memref<1152x128xf32, #tpu.memory_space<vmem>>, vector<1152x128xf32>
    %cst = arith.constant dense<0.000000e+00> : vector<98x128xf32>
    %2 = tpu.matmul %0, %1, %cst {dimension_numbers = #tpu.dot_dimension_numbers<[1], [0], [0], [1], [0, 0, 1, 1], [], []>} : vector<98x1152xf32>, vector<1152x128xf32>, vector<98x128xf32> -> vector<98x128xf32>
    %c0_3 = arith.constant 0 : index
    %c0_4 = arith.constant 0 : index
    %3 = vector.load %arg3[%c0_3, %c0_4] : memref<1x128xf32, #tpu.memory_space<vmem>>, vector<1x128xf32>
    %4 = vector.broadcast %3 : vector<1x128xf32> to vector<98x128xf32>
    %5 = arith.addf %2, %4 : vector<98x128xf32>
    %cst_5 = arith.constant 0.000000e+00 : f32
    %6 = vector.broadcast %cst_5 : f32 to vector<98x128xf32>
    %7 = arith.maximumf %5, %6 : vector<98x128xf32>
    %c0_6 = arith.constant 0 : index
    %c0_7 = arith.constant 0 : index
    %8 = vector.load %arg4[%c0_6, %c0_7] : memref<98x128xf32, #tpu.memory_space<vmem>>, vector<98x128xf32>
    tpu.vector_store %arg4[%c0_6, %c0_7], %7 {strides = array<i32>} : memref<98x128xf32, #tpu.memory_space<vmem>>, vector<98x128xf32>,
    return
  }
  func.func @transform_0(%arg0: i32) -> (i32, i32) {
    %c0_i32 = arith.constant 0 : i32
    %c0_i32_0 = arith.constant 0 : i32
    return %arg0, %c0_i32 : i32, i32
  }
  func.func @transform_1(%arg0: i32) -> (i32, i32) {
    %c0_i32 = arith.constant 0 : i32
    %c0_i32_0 = arith.constant 0 : i32
    %c0_i32_1 = arith.constant 0 : i32
    return %c0_i32, %c0_i32_0 : i32, i32
  }
  func.func @transform_2(%arg0: i32) -> (i32, i32) {
    %c0_i32 = arith.constant 0 : i32
    %c0_i32_0 = arith.constant 0 : i32
    %c0_i32_1 = arith.constant 0 : i32
    return %c0_i32, %c0_i32_0 : i32, i32
  }
  func.func @transform_3(%arg0: i32) -> (i32, i32) {
    %c0_i32 = arith.constant 0 : i32
    %c0_i32_0 = arith.constant 0 : i32
    return %arg0, %c0_i32 : i32, i32
  }
}

module attributes {stable_mosaic.version = 11 : i64} {
  func.func @_mlp_fused_kernel(%arg0: i32, %arg1: memref<2x6272xf32, #tpu.memory_space<vmem>>, %arg2: memref<6272x512xf32, #tpu.memory_space<vmem>>, %arg3: memref<1x512xf32, #tpu.memory_space<vmem>>, %arg4: memref<512x128xf32, #tpu.memory_space<vmem>>, %arg5: memref<1x128xf32, #tpu.memory_space<vmem>>, %arg6: memref<2x128xf32, #tpu.memory_space<vmem>>) attributes {dimension_semantics = [#tpu.dimension_semantics<arbitrary>], iteration_bounds = array<i64: 1>, scalar_prefetch = 0 : i64, scratch_operands = 0 : i64, tpu.core_type = #tpu.core_type<tc>, window_params = [{pipeline_mode = #tpu.pipeline_mode<synchronous>, transform_indices = @transform_0, window_bounds = array<i64: 2, 6272>}, {pipeline_mode = #tpu.pipeline_mode<synchronous>, transform_indices = @transform_1, window_bounds = array<i64: 6272, 512>}, {pipeline_mode = #tpu.pipeline_mode<synchronous>, transform_indices = @transform_2, window_bounds = array<i64: 1, 512>}, {pipeline_mode = #tpu.pipeline_mode<synchronous>, transform_indices = @transform_3, window_bounds = array<i64: 512, 128>}, {pipeline_mode = #tpu.pipeline_mode<synchronous>, transform_indices = @transform_4, window_bounds = array<i64: 1, 128>}, {pipeline_mode = #tpu.pipeline_mode<synchronous>, transform_indices = @transform_5, window_bounds = array<i64: 2, 128>}]} {
    %c0 = arith.constant 0 : index
    %c0_0 = arith.constant 0 : index
    %0 = vector.load %arg1[%c0, %c0_0] : memref<2x6272xf32, #tpu.memory_space<vmem>>, vector<2x6272xf32>
    %c0_1 = arith.constant 0 : index
    %c0_2 = arith.constant 0 : index
    %1 = vector.load %arg2[%c0_1, %c0_2] : memref<6272x512xf32, #tpu.memory_space<vmem>>, vector<6272x512xf32>
    %cst = arith.constant dense<0.000000e+00> : vector<2x512xf32>
    %2 = tpu.matmul %0, %1, %cst {dimension_numbers = #tpu.dot_dimension_numbers<[1], [0], [0], [1], [0, 0, 1, 1], [], []>} : vector<2x6272xf32>, vector<6272x512xf32>, vector<2x512xf32> -> vector<2x512xf32>
    %c0_3 = arith.constant 0 : index
    %c0_4 = arith.constant 0 : index
    %3 = vector.load %arg3[%c0_3, %c0_4] : memref<1x512xf32, #tpu.memory_space<vmem>>, vector<1x512xf32>
    %4 = vector.broadcast %3 : vector<1x512xf32> to vector<2x512xf32>
    %5 = arith.addf %2, %4 : vector<2x512xf32>
    %cst_5 = arith.constant 0.000000e+00 : f32
    %6 = vector.broadcast %cst_5 : f32 to vector<2x512xf32>
    %7 = arith.maximumf %5, %6 : vector<2x512xf32>
    %c0_6 = arith.constant 0 : index
    %c0_7 = arith.constant 0 : index
    %8 = vector.load %arg4[%c0_6, %c0_7] : memref<512x128xf32, #tpu.memory_space<vmem>>, vector<512x128xf32>
    %cst_8 = arith.constant dense<0.000000e+00> : vector<2x128xf32>
    %9 = tpu.matmul %7, %8, %cst_8 {dimension_numbers = #tpu.dot_dimension_numbers<[1], [0], [0], [1], [0, 0, 1, 1], [], []>} : vector<2x512xf32>, vector<512x128xf32>, vector<2x128xf32> -> vector<2x128xf32>
    %c0_9 = arith.constant 0 : index
    %c0_10 = arith.constant 0 : index
    %10 = vector.load %arg5[%c0_9, %c0_10] : memref<1x128xf32, #tpu.memory_space<vmem>>, vector<1x128xf32>
    %11 = vector.broadcast %10 : vector<1x128xf32> to vector<2x128xf32>
    %12 = arith.addf %9, %11 : vector<2x128xf32>
    %c0_11 = arith.constant 0 : index
    %c0_12 = arith.constant 0 : index
    %13 = vector.load %arg6[%c0_11, %c0_12] : memref<2x128xf32, #tpu.memory_space<vmem>>, vector<2x128xf32>
    tpu.vector_store %arg6[%c0_11, %c0_12], %12 {strides = array<i32>} : memref<2x128xf32, #tpu.memory_space<vmem>>, vector<2x128xf32>,
    return
  }
  func.func @transform_0(%arg0: i32) -> (i32, i32) {
    %c0_i32 = arith.constant 0 : i32
    %c0_i32_0 = arith.constant 0 : i32
    %c0_i32_1 = arith.constant 0 : i32
    return %c0_i32, %c0_i32_0 : i32, i32
  }
  func.func @transform_1(%arg0: i32) -> (i32, i32) {
    %c0_i32 = arith.constant 0 : i32
    %c0_i32_0 = arith.constant 0 : i32
    %c0_i32_1 = arith.constant 0 : i32
    return %c0_i32, %c0_i32_0 : i32, i32
  }
  func.func @transform_2(%arg0: i32) -> (i32, i32) {
    %c0_i32 = arith.constant 0 : i32
    %c0_i32_0 = arith.constant 0 : i32
    %c0_i32_1 = arith.constant 0 : i32
    return %c0_i32, %c0_i32_0 : i32, i32
  }
  func.func @transform_3(%arg0: i32) -> (i32, i32) {
    %c0_i32 = arith.constant 0 : i32
    %c0_i32_0 = arith.constant 0 : i32
    %c0_i32_1 = arith.constant 0 : i32
    return %c0_i32, %c0_i32_0 : i32, i32
  }
  func.func @transform_4(%arg0: i32) -> (i32, i32) {
    %c0_i32 = arith.constant 0 : i32
    %c0_i32_0 = arith.constant 0 : i32
    %c0_i32_1 = arith.constant 0 : i32
    return %c0_i32, %c0_i32_0 : i32, i32
  }
  func.func @transform_5(%arg0: i32) -> (i32, i32) {
    %c0_i32 = arith.constant 0 : i32
    %c0_i32_0 = arith.constant 0 : i32
    %c0_i32_1 = arith.constant 0 : i32
    return %c0_i32, %c0_i32_0 : i32, i32
  }
}

</mosaic_0001>

<llo_original>
// kernel: nature_paper_conv_forward.4
$region0: #{nature_paper_conv_forward.4}
  #allocation0 [shape = 'u32[]', space=smem, size = 0x4, offset = 0x4, fixed_abs, tag = 'smem constant byte address 0x4 - core index']
  #allocation1 [shape = 'u32[144,128]{1,0:T(1,128)}', space=vmem, size = 0x12000, scoped, tag = 'internal scratch']
  %s0 = inlined_call_operand.vmem [shape: f32[800,256], index: 0, kind: input, shape index: {}]
  %s1 = inlined_call_operand.vmem [shape: f32[256,128], index: 1, kind: input, shape index: {}]
  %s2 = inlined_call_operand.vmem [shape: f32[1,128], index: 2, kind: input, shape index: {}]
  %s3 = inlined_call_operand.vmem [shape: f32[800,128], index: 3, kind: output, shape index: {}]
  %s4 = sld [smem:[#allocation0]]
  $region45: #{nature_paper_conv_forward.4} parent=0
    _
  %s6 = ssub.s32 1, %s4
  %s7 = scalar_select 0, %s6, %s4
  loop: start=0, step=1, limit=4
  $region2: #{nature_paper_conv_forward.4} parent=0 // loop_pre_header
    _
  $region3: #{nature_paper_conv_forward.4} parent=0 // loop_header
    %s9 = sphi 0, %s13
    %p10 = scmp.ge.s32.totalorder %s9, 4
    %s19 = sphi 0, %s21
    %s22 = sphi 0, %s19
    %s23 = sphi 0, %s22
    %s39 = sphi 0, %s23
    %s43 = sphi 0, %s43
    %s45 = sphi 0, %s43
    %s46 = sphi 0, %s45
    %s60 = sphi 0, %s46
    %s64 = sphi 0, %s64
    %s66 = sphi 0, %s64
    %s67 = sphi 0, %s66
    %s81 = sphi 0, %s67
    %s87 = sphi 0, %s89
    %s90 = sphi 0, %s87
    %s91 = sphi 0, %s90
    %s107 = sphi 0, %s91
  $region4: #{nature_paper_conv_forward.4} parent=0 // loop_header_branch
    %12 = sbr.rel (%p10) target = $region8
  $region5: #{nature_paper_conv_forward.4} parent=0 // loop_body
    %s14 = ssub.s32 %s9, 1
    %s15 = ssub.s32 %s9, 2
    %s16 = sadd.s32 %s9, 1
    %s17 = ssub.s32 %s9, %s16
    %p18 = scmp.eq.s32.totalorder %s17, 0
    %s20 = sadd.s32 %s19, 1
    %s21 = scalar_select %p18, %s19, %s20
    %p24 = pneg %p18
    %p25 = scmp.eq.s32.totalorder %s9, 1
    %p26 = por %p24, %p25
    %p27 = scmp.ne.s32.totalorder %s19, %s22
    %p28 = scmp.eq.s32.totalorder %s9, 0
    %p29 = por %p27, %p28
    %p30 = scmp.ne.s32.totalorder %s19, %s22
    %p31 = scmp.eq.s32.totalorder %s14, 1
    %p32 = por %p30, %p31
    %p33 = scmp.ne.s32.totalorder %s22, %s23
    %p34 = scmp.eq.s32.totalorder %s14, 0
    %p35 = por %p33, %p34
    %p36 = scmp.ne.s32.totalorder %s22, %s23
    %p37 = scmp.eq.s32.totalorder %s15, 1
    %p38 = por %p36, %p37
    %p40 = scmp.ne.s32.totalorder %s23, %s39
    %p41 = scmp.eq.s32.totalorder %s15, 0
    %p42 = por %p40, %p41
    %s44 = sadd.s32 %s43, 1
    %p47 = scmp.eq.s32.totalorder %s9, 1
    %p48 = scmp.ne.s32.totalorder %s43, %s45
    %p49 = scmp.eq.s32.totalorder %s9, 0
    %p50 = por %p48, %p49
    %p51 = scmp.ne.s32.totalorder %s43, %s45
    %p52 = scmp.eq.s32.totalorder %s14, 1
    %p53 = por %p51, %p52
    %p54 = scmp.ne.s32.totalorder %s45, %s46
    %p55 = scmp.eq.s32.totalorder %s14, 0
    %p56 = por %p54, %p55
    %p57 = scmp.ne.s32.totalorder %s45, %s46
    %p58 = scmp.eq.s32.totalorder %s15, 1
    %p59 = por %p57, %p58
    %p61 = scmp.ne.s32.totalorder %s46, %s60
    %p62 = scmp.eq.s32.totalorder %s15, 0
    %p63 = por %p61, %p62
    %s65 = sadd.s32 %s64, 1
    %p68 = scmp.eq.s32.totalorder %s9, 1
    %p69 = scmp.ne.s32.totalorder %s64, %s66
    %p70 = scmp.eq.s32.totalorder %s9, 0
    %p71 = por %p69, %p70
    %p72 = scmp.ne.s32.totalorder %s64, %s66
    %p73 = scmp.eq.s32.totalorder %s14, 1
    %p74 = por %p72, %p73
    %p75 = scmp.ne.s32.totalorder %s66, %s67
    %p76 = scmp.eq.s32.totalorder %s14, 0
    %p77 = por %p75, %p76
    %p78 = scmp.ne.s32.totalorder %s66, %s67
    %p79 = scmp.eq.s32.totalorder %s15, 1
    %p80 = por %p78, %p79
    %p82 = scmp.ne.s32.totalorder %s67, %s81
    %p83 = scmp.eq.s32.totalorder %s15, 0
    %p84 = por %p82, %p83
    %s85 = ssub.s32 %s9, %s16
    %p86 = scmp.eq.s32.totalorder %s85, 0
    %s88 = sadd.s32 %s87, 1
    %s89 = scalar_select %p86, %s87, %s88
    %p92 = pneg %p86
    %p93 = scmp.eq.s32.totalorder %s9, 1
    %p94 = por %p92, %p93
    %p95 = scmp.ne.s32.totalorder %s87, %s90
    %p96 = scmp.eq.s32.totalorder %s9, 0
    %p97 = por %p95, %p96
    %p98 = scmp.ne.s32.totalorder %s87, %s90
    %p99 = scmp.eq.s32.totalorder %s14, 1
    %p100 = por %p98, %p99
    %p101 = scmp.ne.s32.totalorder %s90, %s91
    %p102 = scmp.eq.s32.totalorder %s14, 0
    %p103 = por %p101, %p102
    %p104 = scmp.ne.s32.totalorder %s90, %s91
    %p105 = scmp.eq.s32.totalorder %s15, 1
    %p106 = por %p104, %p105
    %p108 = scmp.ne.s32.totalorder %s91, %s107
    %p109 = scmp.eq.s32.totalorder %s15, 0
    %p110 = por %p108, %p109
    %p111 = scmp.le.s32.totalorder 1, %s9
    %p112 = scmp.lt.s32.totalorder %s9, 3
    %p113 = pnand %p111, %p112
    %p114 = pneg %p113
    // Predicated region
    $region9: #{nature_paper_conv_forward.4} parent=5 // pred_check
      _
    $region10: #{nature_paper_conv_forward.4} parent=5 // pred_check_branch
      %116 = sbr.rel (%p113) target = $region12
    $region11: #{nature_paper_conv_forward.4} parent=5 // pred_region
      %s117 = ssub.s32 %s9, 1
      // Predicated region
      $region13: #{nature_paper_conv_forward.4} parent=11 // pred_check
        %p118 = pneg %p56
      $region14: #{nature_paper_conv_forward.4} parent=11 // pred_check_branch
        %120 = sbr.rel (%p118) target = $region16
      $region15: #{nature_paper_conv_forward.4} parent=11 // pred_region
        _
      $region16: #{nature_paper_conv_forward.4} parent=11 // pred_fallthru
        _
      // Predicated region
      $region17: #{nature_paper_conv_forward.4} parent=11 // pred_check
        %p121 = pneg %p77
      $region18: #{nature_paper_conv_forward.4} parent=11 // pred_check_branch
        %123 = sbr.rel (%p121) target = $region20
      $region19: #{nature_paper_conv_forward.4} parent=11 // pred_region
        _
      $region20: #{nature_paper_conv_forward.4} parent=11 // pred_fallthru
        _
    $region12: #{nature_paper_conv_forward.4} parent=5 // pred_fallthru
      _
    %p124 = scmp.lt.s32.totalorder %s9, 2
    // Predicated region
    $region21: #{nature_paper_conv_forward.4} parent=5 // pred_check
      %p125 = pneg %p124
    $region22: #{nature_paper_conv_forward.4} parent=5 // pred_check_branch
      %127 = sbr.rel (%p125) target = $region24
    $region23: #{nature_paper_conv_forward.4} parent=5 // pred_region
      // Predicated region
      $region25: #{nature_paper_conv_forward.4} parent=23 // pred_check
        %p128 = pneg %p29
      $region26: #{nature_paper_conv_forward.4} parent=23 // pred_check_branch
        %130 = sbr.rel (%p128) target = $region28
      $region27: #{nature_paper_conv_forward.4} parent=23 // pred_region
        %s131 = smul.u32 50, %s9
        %p132 = scmp.lt.s32.totalorder %s131, 99
        %s133 = scalar_select %p132, %s131, 99
        %s134 = smul.addr %s133, 2
        %s135 = smul.addr %s134, 8
        %s136 = scalar_lea.vmem %s0, %s135
        %s137 = smul.u32 50, %s9
      $region28: #{nature_paper_conv_forward.4} parent=23 // pred_fallthru
        _
    $region24: #{nature_paper_conv_forward.4} parent=5 // pred_fallthru
      _
    %p138 = scmp.le.s32.totalorder 1, %s9
    %p139 = scmp.lt.s32.totalorder %s9, 3
    %p140 = pnand %p138, %p139
    %p141 = pneg %p140
    // Predicated region
    $region29: #{nature_paper_conv_forward.4} parent=5 // pred_check
      _
    $region30: #{nature_paper_conv_forward.4} parent=5 // pred_check_branch
      %143 = sbr.rel (%p140) target = $region32
    $region31: #{nature_paper_conv_forward.4} parent=5 // pred_region
      %s144 = ssub.s32 %s9, 1
      %s145 = smul.u32 50, %s14
      %p146 = scmp.lt.s32.totalorder %s145, 99
      %s147 = scalar_select %p146, %s145, 99
      %s148 = smul.addr %s147, 2
      %s149 = smul.addr %s148, 8
      %s150 = scalar_lea.vmem %s0, %s149
      %p151 = pneg %p35
      %p152 = pneg %p32
      %p153 = pneg %p56
      %p154 = pneg %p53
      %p155 = pneg %p77
      %p156 = pneg %p74
      %p157 = pneg %p103
      %p158 = pneg %p100
      %s159 = smul.u32 50, %s14
      %p160 = scmp.lt.s32.totalorder %s159, 99
      %s161 = scalar_select %p160, %s159, 99
      %s162 = smul.addr %s161, 8
      %s163 = scalar_lea.vmem %s3, %s162
      %s164 = smul.u32 50, %s14
      %p165 = scmp.lt.s32.totalorder %s164, 99
      %s166 = scalar_select %p165, %s164, 99
      %s167 = smul.addr %s166, 2
      %s168 = smul.addr %s167, 8
      %s169 = scalar_lea.vmem %s0, %s168
      %s170 = smul.u32 50, %s14
      %s171 = smul.u32 50, %s14
      %p172 = scmp.lt.s32.totalorder %s171, 99
      %s173 = scalar_select %p172, %s171, 99
      %s174 = smul.addr %s173, 8
      %s175 = scalar_lea.vmem %s3, %s174
      %s176 = smul.u32 50, %s14
      %v177 = vld [vmem:[%s169] sm:$0xff]
      %v178 = vld [vmem:[%s169 + $0x8] sm:$0xff]
      %v179 = vld [vmem:[%s169 + $0x10] sm:$0xff]
      %v180 = vld [vmem:[%s169 + $0x18] sm:$0xff]
      %v181 = vld [vmem:[%s169 + $0x20] sm:$0xff]
      %v182 = vld [vmem:[%s169 + $0x28] sm:$0xff]
      %v183 = vld [vmem:[%s169 + $0x30] sm:$0xff]
      %v184 = vld [vmem:[%s169 + $0x38] sm:$0xff]
      %v185 = vld [vmem:[%s169 + $0x40] sm:$0xff]
      %v186 = vld [vmem:[%s169 + $0x48] sm:$0xff]
      %v187 = vld [vmem:[%s169 + $0x50] sm:$0xff]
      %v188 = vld [vmem:[%s169 + $0x58] sm:$0xff]
      %v189 = vld [vmem:[%s169 + $0x60] sm:$0xff]
      %v190 = vld [vmem:[%s169 + $0x68] sm:$0xff]
      %v191 = vld [vmem:[%s169 + $0x70] sm:$0xff]
      %v192 = vld [vmem:[%s169 + $0x78] sm:$0xff]
      %v193 = vld [vmem:[%s169 + $0x80] sm:$0xff]
      %v194 = vld [vmem:[%s169 + $0x88] sm:$0xff]
      %v195 = vld [vmem:[%s169 + $0x90] sm:$0xff]
      %v196 = vld [vmem:[%s169 + $0x98] sm:$0xff]
      %v197 = vld [vmem:[%s169 + $0xa0] sm:$0xff]
      %v198 = vld [vmem:[%s169 + $0xa8] sm:$0xff]
      %v199 = vld [vmem:[%s169 + $0xb0] sm:$0xff]
      %v200 = vld [vmem:[%s169 + $0xb8] sm:$0xff]
      %v201 = vld [vmem:[%s169 + $0xc0] sm:$0xff]
      %v202 = vld [vmem:[%s169 + $0xc8] sm:$0xff]
      %v203 = vld [vmem:[%s169 + $0xd0] sm:$0xff]
      %v204 = vld [vmem:[%s169 + $0xd8] sm:$0xff]
      %v205 = vld [vmem:[%s169 + $0xe0] sm:$0xff]
      %v206 = vld [vmem:[%s169 + $0xe8] sm:$0xff]
      %v207 = vld [vmem:[%s169 + $0xf0] sm:$0xff]
      %v208 = vld [vmem:[%s169 + $0xf8] sm:$0xff]
      %v209 = vld [vmem:[%s169 + $0x100] sm:$0xff]
      %v210 = vld [vmem:[%s169 + $0x108] sm:$0xff]
      %v211 = vld [vmem:[%s169 + $0x110] sm:$0xff]
      %v212 = vld [vmem:[%s169 + $0x118] sm:$0xff]
      %v213 = vld [vmem:[%s169 + $0x120] sm:$0xff]
      %v214 = vld [vmem:[%s169 + $0x128] sm:$0xff]
      %v215 = vld [vmem:[%s169 + $0x130] sm:$0xff]
      %v216 = vld [vmem:[%s169 + $0x138] sm:$0xff]
      %v217 = vld [vmem:[%s169 + $0x140] sm:$0xff]
      %v218 = vld [vmem:[%s169 + $0x148] sm:$0xff]
      %v219 = vld [vmem:[%s169 + $0x150] sm:$0xff]
      %v220 = vld [vmem:[%s169 + $0x158] sm:$0xff]
      %v221 = vld [vmem:[%s169 + $0x160] sm:$0xff]
      %v222 = vld [vmem:[%s169 + $0x168] sm:$0xff]
      %v223 = vld [vmem:[%s169 + $0x170] sm:$0xff]
      %v224 = vld [vmem:[%s169 + $0x178] sm:$0xff]
      %v225 = vld [vmem:[%s169 + $0x180] sm:$0xff]
      %v226 = vld [vmem:[%s169 + $0x188] sm:$0xff]
      %v227 = vld [vmem:[%s169 + $0x190] sm:$0xff]
      %v228 = vld [vmem:[%s169 + $0x198] sm:$0xff]
      %v229 = vld [vmem:[%s169 + $0x1a0] sm:$0xff]
      %v230 = vld [vmem:[%s169 + $0x1a8] sm:$0xff]
      %v231 = vld [vmem:[%s169 + $0x1b0] sm:$0xff]
      %v232 = vld [vmem:[%s169 + $0x1b8] sm:$0xff]
      %v233 = vld [vmem:[%s169 + $0x1c0] sm:$0xff]
      %v234 = vld [vmem:[%s169 + $0x1c8] sm:$0xff]
      %v235 = vld [vmem:[%s169 + $0x1d0] sm:$0xff]
      %v236 = vld [vmem:[%s169 + $0x1d8] sm:$0xff]
      %v237 = vld [vmem:[%s169 + $0x1e0] sm:$0xff]
      %v238 = vld [vmem:[%s169 + $0x1e8] sm:$0xff]
      %v239 = vld [vmem:[%s169 + $0x1f0] sm:$0xff]
      %v240 = vld [vmem:[%s169 + $0x1f8] sm:$0xff]
      %v241 = vld [vmem:[%s169 + $0x200] sm:$0xff]
      %v242 = vld [vmem:[%s169 + $0x208] sm:$0xff]
      %v243 = vld [vmem:[%s169 + $0x210] sm:$0xff]
      %v244 = vld [vmem:[%s169 + $0x218] sm:$0xff]
      %v245 = vld [vmem:[%s169 + $0x220] sm:$0xff]
      %v246 = vld [vmem:[%s169 + $0x228] sm:$0xff]
      %v247 = vld [vmem:[%s169 + $0x230] sm:$0xff]
      %v248 = vld [vmem:[%s169 + $0x238] sm:$0xff]
      %v249 = vld [vmem:[%s169 + $0x240] sm:$0xff]
      %v250 = vld [vmem:[%s169 + $0x248] sm:$0xff]
      %v251 = vld [vmem:[%s169 + $0x250] sm:$0xff]
      %v252 = vld [vmem:[%s169 + $0x258] sm:$0xff]
      %v253 = vld [vmem:[%s169 + $0x260] sm:$0xff]
      %v254 = vld [vmem:[%s169 + $0x268] sm:$0xff]
      %v255 = vld [vmem:[%s169 + $0x270] sm:$0xff]
      %v256 = vld [vmem:[%s169 + $0x278] sm:$0xff]
      %v257 = vld [vmem:[%s169 + $0x280] sm:$0xff]
      %v258 = vld [vmem:[%s169 + $0x288] sm:$0xff]
      %v259 = vld [vmem:[%s169 + $0x290] sm:$0xff]
      %v260 = vld [vmem:[%s169 + $0x298] sm:$0xff]
      %v261 = vld [vmem:[%s169 + $0x2a0] sm:$0xff]
      %v262 = vld [vmem:[%s169 + $0x2a8] sm:$0xff]
      %v263 = vld [vmem:[%s169 + $0x2b0] sm:$0xff]
      %v264 = vld [vmem:[%s169 + $0x2b8] sm:$0xff]
      %v265 = vld [vmem:[%s169 + $0x2c0] sm:$0xff]
      %v266 = vld [vmem:[%s169 + $0x2c8] sm:$0xff]
      %v267 = vld [vmem:[%s169 + $0x2d0] sm:$0xff]
      %v268 = vld [vmem:[%s169 + $0x2d8] sm:$0xff]
      %v269 = vld [vmem:[%s169 + $0x2e0] sm:$0xff]
      %v270 = vld [vmem:[%s169 + $0x2e8] sm:$0xff]
      %v271 = vld [vmem:[%s169 + $0x2f0] sm:$0xff]
      %v272 = vld [vmem:[%s169 + $0x2f8] sm:$0xff]
      %v273 = vld [vmem:[%s169 + $0x300] sm:$0xff]
      %v274 = vld [vmem:[%s169 + $0x308] sm:$0xff]
      %v275 = vld [vmem:[%s169 + $0x310] sm:$0xff]
      %v276 = vld [vmem:[%s169 + $0x318] sm:$0xff]
      %v277 = vld [vmem:[%s1] sm:$0xff]
      %v278 = vld [vmem:[%s1 + $0x8] sm:$0xff]
      %v279 = vld [vmem:[%s1 + $0x10] sm:$0xff]
      %v280 = vld [vmem:[%s1 + $0x18] sm:$0xff]
      %v281 = vld [vmem:[%s1 + $0x20] sm:$0xff]
      %v282 = vld [vmem:[%s1 + $0x28] sm:$0xff]
      %v283 = vld [vmem:[%s1 + $0x30] sm:$0xff]
      %v284 = vld [vmem:[%s1 + $0x38] sm:$0xff]
      %v285 = vld [vmem:[%s1 + $0x40] sm:$0xff]
      %v286 = vld [vmem:[%s1 + $0x48] sm:$0xff]
      %v287 = vld [vmem:[%s1 + $0x50] sm:$0xff]
      %v288 = vld [vmem:[%s1 + $0x58] sm:$0xff]
      %v289 = vld [vmem:[%s1 + $0x60] sm:$0xff]
      %v290 = vld [vmem:[%s1 + $0x68] sm:$0xff]
      %v291 = vld [vmem:[%s1 + $0x70] sm:$0xff]
      %v292 = vld [vmem:[%s1 + $0x78] sm:$0xff]
      %v293 = vld [vmem:[%s1 + $0x80] sm:$0xff]
      %v294 = vld [vmem:[%s1 + $0x88] sm:$0xff]
      %v295 = vld [vmem:[%s1 + $0x90] sm:$0xff]
      %v296 = vld [vmem:[%s1 + $0x98] sm:$0xff]
      %v297 = vld [vmem:[%s1 + $0xa0] sm:$0xff]
      %v298 = vld [vmem:[%s1 + $0xa8] sm:$0xff]
      %v299 = vld [vmem:[%s1 + $0xb0] sm:$0xff]
      %v300 = vld [vmem:[%s1 + $0xb8] sm:$0xff]
      %v301 = vld [vmem:[%s1 + $0xc0] sm:$0xff]
      %v302 = vld [vmem:[%s1 + $0xc8] sm:$0xff]
      %v303 = vld [vmem:[%s1 + $0xd0] sm:$0xff]
      %v304 = vld [vmem:[%s1 + $0xd8] sm:$0xff]
      %v305 = vld [vmem:[%s1 + $0xe0] sm:$0xff]
      %v306 = vld [vmem:[%s1 + $0xe8] sm:$0xff]
      %v307 = vld [vmem:[%s1 + $0xf0] sm:$0xff]
      %v308 = vld [vmem:[%s1 + $0xf8] sm:$0xff]
      %v309 = vld [vmem:[%s2] sm:$0x1]
      %v311 = vlaneseq
      %v312 = vshrl.u32 %v311, 7
      %v313 = vsub.s32 0, %v312
      %v314 = vrot.slane %v309, %v313
      %316 = vmatprep.subr.mxu0 0.0
      %317 = vmatpush1.msra.mxu0 %v277
      %318 = vmatprep.subr.mxu0 0.0
      %319 = vmatpush1.msra.mxu0 %v278
      %320 = vmatprep.subr.mxu0 0.0
      %321 = vmatpush1.msra.mxu0 %v279
      %322 = vmatprep.subr.mxu0 0.0
      %323 = vmatpush1.msra.mxu0 %v280
      %324 = vmatprep.subr.mxu0 0.0
      %325 = vmatpush1.msra.mxu0 %v281
      %326 = vmatprep.subr.mxu0 0.0
      %327 = vmatpush1.msra.mxu0 %v282
      %328 = vmatprep.subr.mxu0 0.0
      %329 = vmatpush1.msra.mxu0 %v283
      %330 = vmatprep.subr.mxu0 0.0
      %331 = vmatpush1.msra.mxu0 %v284
      %332 = vmatprep.subr.mxu0 0.0
      %333 = vmatpush1.msra.mxu0 %v285
      %334 = vmatprep.subr.mxu0 0.0
      %335 = vmatpush1.msra.mxu0 %v286
      %336 = vmatprep.subr.mxu0 0.0
      %337 = vmatpush1.msra.mxu0 %v287
      %338 = vmatprep.subr.mxu0 0.0
      %339 = vmatpush1.msra.mxu0 %v288
      %340 = vmatprep.subr.mxu0 0.0
      %341 = vmatpush1.msra.mxu0 %v289
      %342 = vmatprep.subr.mxu0 0.0
      %343 = vmatpush1.msra.mxu0 %v290
      %344 = vmatprep.subr.mxu0 0.0
      %345 = vmatpush1.msra.mxu0 %v291
      %346 = vmatprep.subr.mxu0 0.0
      %347 = vmatpush1.msra.mxu0 %v292
      %348 = vmatprep.subr.mxu0 0.0
      %349 = vmatpush1.msra.mxu0 %v293
      %350 = vmatprep.subr.mxu0 0.0
      %351 = vmatpush1.msra.mxu0 %v294
      %352 = vmatprep.subr.mxu0 0.0
      %353 = vmatpush1.msra.mxu0 %v295
      %354 = vmatprep.subr.mxu0 0.0
      %355 = vmatpush1.msra.mxu0 %v296
      %356 = vmatprep.subr.mxu0 0.0
      %357 = vmatpush1.msra.mxu0 %v297
      %358 = vmatprep.subr.mxu0 0.0
      %359 = vmatpush1.msra.mxu0 %v298
      %360 = vmatprep.subr.mxu0 0.0
      %361 = vmatpush1.msra.mxu0 %v299
      %362 = vmatprep.subr.mxu0 0.0
      %363 = vmatpush1.msra.mxu0 %v300
      %364 = vmatprep.subr.mxu0 0.0
      %365 = vmatpush1.msra.mxu0 %v301
      %366 = vmatprep.subr.mxu0 0.0
      %367 = vmatpush1.msra.mxu0 %v302
      %368 = vmatprep.subr.mxu0 0.0
      %369 = vmatpush1.msra.mxu0 %v303
      %370 = vmatprep.subr.mxu0 0.0
      %371 = vmatpush1.msra.mxu0 %v304
      %372 = vmatprep.subr.mxu0 0.0
      %373 = vmatpush1.msra.mxu0 %v305
      %374 = vmatprep.subr.mxu0 0.0
      %375 = vmatpush1.msra.mxu0 %v306
      %376 = vmatprep.subr.mxu0 0.0
      %377 = vmatpush1.msra.mxu0 %v307
      %378 = vmatprep.subr.mxu0 0.0
      %379 = vmatpush1.msra.mxu0 %v308
      %380 = vmatprep.mubr.f32.mxu0 %v178
      %381 = vmatmul.mubr.f32.gmra.mrb[0].mxu0 %v177
      %v382 = vpop.f32.mrb[0].mxu0
      %v383 = vadd.f32 %v314, %v382
      %v384 = vpop.f32.mrb[0].mxu0
      %385 = vmatprep.mubr.f32.mxu0 %v180
      %386 = vmatmul.mubr.f32.gmra.mrb[0].mxu0 %v179
      %v387 = vpop.f32.mrb[0].mxu0
      %v388 = vadd.f32 %v314, %v387
      %v389 = vpop.f32.mrb[0].mxu0
      %390 = vmatprep.mubr.f32.mxu0 %v182
      %391 = vmatmul.mubr.f32.gmra.mrb[0].mxu0 %v181
      %v392 = vpop.f32.mrb[0].mxu0
      %v393 = vadd.f32 %v314, %v392
      %v394 = vpop.f32.mrb[0].mxu0
      %395 = vmatprep.mubr.f32.mxu0 %v184
      %396 = vmatmul.mubr.f32.gmra.mrb[0].mxu0 %v183
      %v397 = vpop.f32.mrb[0].mxu0
      %v398 = vadd.f32 %v314, %v397
      %v399 = vpop.f32.mrb[0].mxu0
      %400 = vmatprep.mubr.f32.mxu0 %v186
      %401 = vmatmul.mubr.f32.gmra.mrb[0].mxu0 %v185
      %v402 = vpop.f32.mrb[0].mxu0
      %v403 = vadd.f32 %v314, %v402
      %v404 = vpop.f32.mrb[0].mxu0
      %405 = vmatprep.mubr.f32.mxu0 %v188
      %406 = vmatmul.mubr.f32.gmra.mrb[0].mxu0 %v187
      %v407 = vpop.f32.mrb[0].mxu0
      %v408 = vadd.f32 %v314, %v407
      %v409 = vpop.f32.mrb[0].mxu0
      %410 = vmatprep.mubr.f32.mxu0 %v190
      %411 = vmatmul.mubr.f32.gmra.mrb[0].mxu0 %v189
      %v412 = vpop.f32.mrb[0].mxu0
      %v413 = vadd.f32 %v314, %v412
      %v414 = vpop.f32.mrb[0].mxu0
      %415 = vmatprep.mubr.f32.mxu0 %v192
      %416 = vmatmul.mubr.f32.gmra.mrb[0].mxu0 %v191
      %v417 = vpop.f32.mrb[0].mxu0
      %v418 = vadd.f32 %v314, %v417
      %v419 = vpop.f32.mrb[0].mxu0
      %420 = vmatprep.mubr.f32.mxu0 %v194
      %421 = vmatmul.mubr.f32.gmra.mrb[0].mxu0 %v193
      %v422 = vpop.f32.mrb[0].mxu0
      %v423 = vadd.f32 %v314, %v422
      %v424 = vpop.f32.mrb[0].mxu0
      %425 = vmatprep.mubr.f32.mxu0 %v196
      %426 = vmatmul.mubr.f32.gmra.mrb[0].mxu0 %v195
      %v427 = vpop.f32.mrb[0].mxu0
      %v428 = vadd.f32 %v314, %v427
      %v429 = vpop.f32.mrb[0].mxu0
      %430 = vmatprep.mubr.f32.mxu0 %v198
      %431 = vmatmul.mubr.f32.gmra.mrb[0].mxu0 %v197
      %v432 = vpop.f32.mrb[0].mxu0
      %v433 = vadd.f32 %v314, %v432
      %v434 = vpop.f32.mrb[0].mxu0
      %435 = vmatprep.mubr.f32.mxu0 %v200
      %436 = vmatmul.mubr.f32.gmra.mrb[0].mxu0 %v199
      %v437 = vpop.f32.mrb[0].mxu0
      %v438 = vadd.f32 %v314, %v437
      %v439 = vpop.f32.mrb[0].mxu0
      %440 = vmatprep.mubr.f32.mxu0 %v202
      %441 = vmatmul.mubr.f32.gmra.mrb[0].mxu0 %v201
      %v442 = vpop.f32.mrb[0].mxu0
      %v443 = vadd.f32 %v314, %v442
      %v444 = vpop.f32.mrb[0].mxu0
      %445 = vmatprep.mubr.f32.mxu0 %v204
      %446 = vmatmul.mubr.f32.gmra.mrb[0].mxu0 %v203
      %v447 = vpop.f32.mrb[0].mxu0
      %v448 = vadd.f32 %v314, %v447
      %v449 = vpop.f32.mrb[0].mxu0
      %450 = vmatprep.mubr.f32.mxu0 %v206
      %451 = vmatmul.mubr.f32.gmra.mrb[0].mxu0 %v205
      %v452 = vpop.f32.mrb[0].mxu0
      %v453 = vadd.f32 %v314, %v452
      %v454 = vpop.f32.mrb[0].mxu0
      %455 = vmatprep.mubr.f32.mxu0 %v208
      %456 = vmatmul.mubr.f32.gmra.mrb[0].mxu0 %v207
      %v457 = vpop.f32.mrb[0].mxu0
      %v458 = vadd.f32 %v314, %v457
      %v459 = vpop.f32.mrb[0].mxu0
      %460 = vmatprep.mubr.f32.mxu0 %v210
      %461 = vmatmul.mubr.f32.gmra.mrb[0].mxu0 %v209
      %v462 = vpop.f32.mrb[0].mxu0
      %v463 = vadd.f32 %v314, %v462
      %v464 = vpop.f32.mrb[0].mxu0
      %465 = vmatprep.mubr.f32.mxu0 %v212
      %466 = vmatmul.mubr.f32.gmra.mrb[0].mxu0 %v211
      %v467 = vpop.f32.mrb[0].mxu0
      %v468 = vadd.f32 %v314, %v467
      %v469 = vpop.f32.mrb[0].mxu0
      %470 = vmatprep.mubr.f32.mxu0 %v214
      %471 = vmatmul.mubr.f32.gmra.mrb[0].mxu0 %v213
      %v472 = vpop.f32.mrb[0].mxu0
      %v473 = vadd.f32 %v314, %v472
      %v474 = vpop.f32.mrb[0].mxu0
      %475 = vmatprep.mubr.f32.mxu0 %v216
      %476 = vmatmul.mubr.f32.gmra.mrb[0].mxu0 %v215
      %v477 = vpop.f32.mrb[0].mxu0
      %v478 = vadd.f32 %v314, %v477
      %v479 = vpop.f32.mrb[0].mxu0
      %480 = vmatprep.mubr.f32.mxu0 %v218
      %481 = vmatmul.mubr.f32.gmra.mrb[0].mxu0 %v217
      %v482 = vpop.f32.mrb[0].mxu0
      %v483 = vadd.f32 %v314, %v482
      %v484 = vpop.f32.mrb[0].mxu0
      %485 = vmatprep.mubr.f32.mxu0 %v220
      %486 = vmatmul.mubr.f32.gmra.mrb[0].mxu0 %v219
      %v487 = vpop.f32.mrb[0].mxu0
      %v488 = vadd.f32 %v314, %v487
      %v489 = vpop.f32.mrb[0].mxu0
      %490 = vmatprep.mubr.f32.mxu0 %v222
      %491 = vmatmul.mubr.f32.gmra.mrb[0].mxu0 %v221
      %v492 = vpop.f32.mrb[0].mxu0
      %v493 = vadd.f32 %v314, %v492
      %v494 = vpop.f32.mrb[0].mxu0
      %495 = vmatprep.mubr.f32.mxu0 %v224
      %496 = vmatmul.mubr.f32.gmra.mrb[0].mxu0 %v223
      %v497 = vpop.f32.mrb[0].mxu0
      %v498 = vadd.f32 %v314, %v497
      %v499 = vpop.f32.mrb[0].mxu0
      %500 = vmatprep.mubr.f32.mxu0 %v226
      %501 = vmatmul.mubr.f32.gmra.mrb[0].mxu0 %v225
      %v502 = vpop.f32.mrb[0].mxu0
      %v503 = vadd.f32 %v314, %v502
      %v504 = vpop.f32.mrb[0].mxu0
      %505 = vmatprep.mubr.f32.mxu0 %v228
      %506 = vmatmul.mubr.f32.gmra.mrb[0].mxu0 %v227
      %v507 = vpop.f32.mrb[0].mxu0
      %v508 = vadd.f32 %v314, %v507
      %v509 = vpop.f32.mrb[0].mxu0
      %510 = vmatprep.mubr.f32.mxu0 %v230
      %511 = vmatmul.mubr.f32.gmra.mrb[0].mxu0 %v229
      %v512 = vpop.f32.mrb[0].mxu0
      %v513 = vadd.f32 %v314, %v512
      %v514 = vpop.f32.mrb[0].mxu0
      %515 = vmatprep.mubr.f32.mxu0 %v232
      %516 = vmatmul.mubr.f32.gmra.mrb[0].mxu0 %v231
      %v517 = vpop.f32.mrb[0].mxu0
      %v518 = vadd.f32 %v314, %v517
      %v519 = vpop.f32.mrb[0].mxu0
      %520 = vmatprep.mubr.f32.mxu0 %v234
      %521 = vmatmul.mubr.f32.gmra.mrb[0].mxu0 %v233
      %v522 = vpop.f32.mrb[0].mxu0
      %v523 = vadd.f32 %v314, %v522
      %v524 = vpop.f32.mrb[0].mxu0
      %525 = vmatprep.mubr.f32.mxu0 %v236
      %526 = vmatmul.mubr.f32.gmra.mrb[0].mxu0 %v235
      %v527 = vpop.f32.mrb[0].mxu0
      %v528 = vadd.f32 %v314, %v527
      %v529 = vpop.f32.mrb[0].mxu0
      %530 = vmatprep.mubr.f32.mxu0 %v238
      %531 = vmatmul.mubr.f32.gmra.mrb[0].mxu0 %v237
      %v532 = vpop.f32.mrb[0].mxu0
      %v533 = vadd.f32 %v314, %v532
      %v534 = vpop.f32.mrb[0].mxu0
      %535 = vmatprep.mubr.f32.mxu0 %v240
      %536 = vmatmul.mubr.f32.gmra.mrb[0].mxu0 %v239
      %v537 = vpop.f32.mrb[0].mxu0
      %v538 = vadd.f32 %v314, %v537
      %v539 = vpop.f32.mrb[0].mxu0
      %540 = vmatprep.mubr.f32.mxu0 %v242
      %541 = vmatmul.mubr.f32.gmra.mrb[0].mxu0 %v241
      %v542 = vpop.f32.mrb[0].mxu0
      %v543 = vadd.f32 %v314, %v542
      %v544 = vpop.f32.mrb[0].mxu0
      %545 = vmatprep.mubr.f32.mxu0 %v244
      %546 = vmatmul.mubr.f32.gmra.mrb[0].mxu0 %v243
      %v547 = vpop.f32.mrb[0].mxu0
      %v548 = vadd.f32 %v314, %v547
      %v549 = vpop.f32.mrb[0].mxu0
      %550 = vmatprep.mubr.f32.mxu0 %v246
      %551 = vmatmul.mubr.f32.gmra.mrb[0].mxu0 %v245
      %v552 = vpop.f32.mrb[0].mxu0
      %v553 = vadd.f32 %v314, %v552
      %v554 = vpop.f32.mrb[0].mxu0
      %555 = vmatprep.mubr.f32.mxu0 %v248
      %556 = vmatmul.mubr.f32.gmra.mrb[0].mxu0 %v247
      %v557 = vpop.f32.mrb[0].mxu0
      %v558 = vadd.f32 %v314, %v557
      %v559 = vpop.f32.mrb[0].mxu0
      %560 = vmatprep.mubr.f32.mxu0 %v250
      %561 = vmatmul.mubr.f32.gmra.mrb[0].mxu0 %v249
      %v562 = vpop.f32.mrb[0].mxu0
      %v563 = vadd.f32 %v314, %v562
      %v564 = vpop.f32.mrb[0].mxu0
      %565 = vmatprep.mubr.f32.mxu0 %v252
      %566 = vmatmul.mubr.f32.gmra.mrb[0].mxu0 %v251
      %v567 = vpop.f32.mrb[0].mxu0
      %v568 = vadd.f32 %v314, %v567
      %v569 = vpop.f32.mrb[0].mxu0
      %570 = vmatprep.mubr.f32.mxu0 %v254
      %571 = vmatmul.mubr.f32.gmra.mrb[0].mxu0 %v253
      %v572 = vpop.f32.mrb[0].mxu0
      %v573 = vadd.f32 %v314, %v572
      %v574 = vpop.f32.mrb[0].mxu0
      %575 = vmatprep.mubr.f32.mxu0 %v256
      %576 = vmatmul.mubr.f32.gmra.mrb[0].mxu0 %v255
      %v577 = vpop.f32.mrb[0].mxu0
      %v578 = vadd.f32 %v314, %v577
      %v579 = vpop.f32.mrb[0].mxu0
      %580 = vmatprep.mubr.f32.mxu0 %v258
      %581 = vmatmul.mubr.f32.gmra.mrb[0].mxu0 %v257
      %v582 = vpop.f32.mrb[0].mxu0
      %v583 = vadd.f32 %v314, %v582
      %v584 = vpop.f32.mrb[0].mxu0
      %585 = vmatprep.mubr.f32.mxu0 %v260
      %586 = vmatmul.mubr.f32.gmra.mrb[0].mxu0 %v259
      %v587 = vpop.f32.mrb[0].mxu0
      %v588 = vadd.f32 %v314, %v587
      %v589 = vpop.f32.mrb[0].mxu0
      %590 = vmatprep.mubr.f32.mxu0 %v262
      %591 = vmatmul.mubr.f32.gmra.mrb[0].mxu0 %v261
      %v592 = vpop.f32.mrb[0].mxu0
      %v593 = vadd.f32 %v314, %v592
      %v594 = vpop.f32.mrb[0].mxu0
      %595 = vmatprep.mubr.f32.mxu0 %v264
      %596 = vmatmul.mubr.f32.gmra.mrb[0].mxu0 %v263
      %v597 = vpop.f32.mrb[0].mxu0
      %v598 = vadd.f32 %v314, %v597
      %v599 = vpop.f32.mrb[0].mxu0
      %600 = vmatprep.mubr.f32.mxu0 %v266
      %601 = vmatmul.mubr.f32.gmra.mrb[0].mxu0 %v265
      %v602 = vpop.f32.mrb[0].mxu0
      %v603 = vadd.f32 %v314, %v602
      %v604 = vpop.f32.mrb[0].mxu0
      %605 = vmatprep.mubr.f32.mxu0 %v268
      %606 = vmatmul.mubr.f32.gmra.mrb[0].mxu0 %v267
      %v607 = vpop.f32.mrb[0].mxu0
      %v608 = vadd.f32 %v314, %v607
      %v609 = vpop.f32.mrb[0].mxu0
      %610 = vmatprep.mubr.f32.mxu0 %v270
      %611 = vmatmul.mubr.f32.gmra.mrb[0].mxu0 %v269
      %v612 = vpop.f32.mrb[0].mxu0
      %v613 = vadd.f32 %v314, %v612
      %v614 = vpop.f32.mrb[0].mxu0
      %615 = vmatprep.mubr.f32.mxu0 %v272
      %616 = vmatmul.mubr.f32.gmra.mrb[0].mxu0 %v271
      %v617 = vpop.f32.mrb[0].mxu0
      %v618 = vadd.f32 %v314, %v617
      %v619 = vpop.f32.mrb[0].mxu0
      %620 = vmatprep.mubr.f32.mxu0 %v274
      %621 = vmatmul.mubr.f32.gmra.mrb[0].mxu0 %v273
      %v622 = vpop.f32.mrb[0].mxu0
      %v623 = vadd.f32 %v314, %v622
      %v624 = vpop.f32.mrb[0].mxu0
      %625 = vmatprep.mubr.f32.mxu0 %v276
      %626 = vmatmul.mubr.f32.gmra.mrb[0].mxu0 %v275
      %v627 = vpop.f32.mrb[0].mxu0
      %v628 = vadd.f32 %v314, %v627
      %v629 = vpop.f32.mrb[0].mxu0
      %630 = vdwg.mxu0
      %v631 = vmax.f32 %v383, 0.0
      %v632 = vmax.f32 %v388, 0.0
      %v633 = vmax.f32 %v393, 0.0
      %v634 = vmax.f32 %v398, 0.0
      %v635 = vmax.f32 %v403, 0.0
      %v636 = vmax.f32 %v408, 0.0
      %v637 = vmax.f32 %v413, 0.0
      %v638 = vmax.f32 %v418, 0.0
      %v639 = vmax.f32 %v423, 0.0
      %v640 = vmax.f32 %v428, 0.0
      %v641 = vmax.f32 %v433, 0.0
      %v642 = vmax.f32 %v438, 0.0
      %v643 = vmax.f32 %v443, 0.0
      %v644 = vmax.f32 %v448, 0.0
      %v645 = vmax.f32 %v453, 0.0
      %v646 = vmax.f32 %v458, 0.0
      %v647 = vmax.f32 %v463, 0.0
      %v648 = vmax.f32 %v468, 0.0
      %v649 = vmax.f32 %v473, 0.0
      %v650 = vmax.f32 %v478, 0.0
      %v651 = vmax.f32 %v483, 0.0
      %v652 = vmax.f32 %v488, 0.0
      %v653 = vmax.f32 %v493, 0.0
      %v654 = vmax.f32 %v498, 0.0
      %v655 = vmax.f32 %v503, 0.0
      %v656 = vmax.f32 %v508, 0.0
      %v657 = vmax.f32 %v513, 0.0
      %v658 = vmax.f32 %v518, 0.0
      %v659 = vmax.f32 %v523, 0.0
      %v660 = vmax.f32 %v528, 0.0
      %v661 = vmax.f32 %v533, 0.0
      %v662 = vmax.f32 %v538, 0.0
      %v663 = vmax.f32 %v543, 0.0
      %v664 = vmax.f32 %v548, 0.0
      %v665 = vmax.f32 %v553, 0.0
      %v666 = vmax.f32 %v558, 0.0
      %v667 = vmax.f32 %v563, 0.0
      %v668 = vmax.f32 %v568, 0.0
      %v669 = vmax.f32 %v573, 0.0
      %v670 = vmax.f32 %v578, 0.0
      %v671 = vmax.f32 %v583, 0.0
      %v672 = vmax.f32 %v588, 0.0
      %v673 = vmax.f32 %v593, 0.0
      %v674 = vmax.f32 %v598, 0.0
      %v675 = vmax.f32 %v603, 0.0
      %v676 = vmax.f32 %v608, 0.0
      %v677 = vmax.f32 %v613, 0.0
      %v678 = vmax.f32 %v618, 0.0
      %v679 = vmax.f32 %v623, 0.0
      %v680 = vmax.f32 %v628, 0.0
      %681 = vst [vmem:[%s175] sm:$0xff] %v631
      %682 = vst [vmem:[%s175 + $0x8] sm:$0xff] %v632
      %683 = vst [vmem:[%s175 + $0x10] sm:$0xff] %v633
      %684 = vst [vmem:[%s175 + $0x18] sm:$0xff] %v634
      %685 = vst [vmem:[%s175 + $0x20] sm:$0xff] %v635
      %686 = vst [vmem:[%s175 + $0x28] sm:$0xff] %v636
      %687 = vst [vmem:[%s175 + $0x30] sm:$0xff] %v637
      %688 = vst [vmem:[%s175 + $0x38] sm:$0xff] %v638
      %689 = vst [vmem:[%s175 + $0x40] sm:$0xff] %v639
      %690 = vst [vmem:[%s175 + $0x48] sm:$0xff] %v640
      %691 = vst [vmem:[%s175 + $0x50] sm:$0xff] %v641
      %692 = vst [vmem:[%s175 + $0x58] sm:$0xff] %v642
      %693 = vst [vmem:[%s175 + $0x60] sm:$0xff] %v643
      %694 = vst [vmem:[%s175 + $0x68] sm:$0xff] %v644
      %695 = vst [vmem:[%s175 + $0x70] sm:$0xff] %v645
      %696 = vst [vmem:[%s175 + $0x78] sm:$0xff] %v646
      %697 = vst [vmem:[%s175 + $0x80] sm:$0xff] %v647
      %698 = vst [vmem:[%s175 + $0x88] sm:$0xff] %v648
      %699 = vst [vmem:[%s175 + $0x90] sm:$0xff] %v649
      %700 = vst [vmem:[%s175 + $0x98] sm:$0xff] %v650
      %701 = vst [vmem:[%s175 + $0xa0] sm:$0xff] %v651
      %702 = vst [vmem:[%s175 + $0xa8] sm:$0xff] %v652
      %703 = vst [vmem:[%s175 + $0xb0] sm:$0xff] %v653
      %704 = vst [vmem:[%s175 + $0xb8] sm:$0xff] %v654
      %705 = vst [vmem:[%s175 + $0xc0] sm:$0xff] %v655
      %706 = vst [vmem:[%s175 + $0xc8] sm:$0xff] %v656
      %707 = vst [vmem:[%s175 + $0xd0] sm:$0xff] %v657
      %708 = vst [vmem:[%s175 + $0xd8] sm:$0xff] %v658
      %709 = vst [vmem:[%s175 + $0xe0] sm:$0xff] %v659
      %710 = vst [vmem:[%s175 + $0xe8] sm:$0xff] %v660
      %711 = vst [vmem:[%s175 + $0xf0] sm:$0xff] %v661
      %712 = vst [vmem:[%s175 + $0xf8] sm:$0xff] %v662
      %713 = vst [vmem:[%s175 + $0x100] sm:$0xff] %v663
      %714 = vst [vmem:[%s175 + $0x108] sm:$0xff] %v664
      %715 = vst [vmem:[%s175 + $0x110] sm:$0xff] %v665
      %716 = vst [vmem:[%s175 + $0x118] sm:$0xff] %v666
      %717 = vst [vmem:[%s175 + $0x120] sm:$0xff] %v667
      %718 = vst [vmem:[%s175 + $0x128] sm:$0xff] %v668
      %719 = vst [vmem:[%s175 + $0x130] sm:$0xff] %v669
      %720 = vst [vmem:[%s175 + $0x138] sm:$0xff] %v670
      %721 = vst [vmem:[%s175 + $0x140] sm:$0xff] %v671
      %722 = vst [vmem:[%s175 + $0x148] sm:$0xff] %v672
      %723 = vst [vmem:[%s175 + $0x150] sm:$0xff] %v673
      %724 = vst [vmem:[%s175 + $0x158] sm:$0xff] %v674
      %725 = vst [vmem:[%s175 + $0x160] sm:$0xff] %v675
      %726 = vst [vmem:[%s175 + $0x168] sm:$0xff] %v676
      %727 = vst [vmem:[%s175 + $0x170] sm:$0xff] %v677
      %728 = vst [vmem:[%s175 + $0x178] sm:$0xff] %v678
      %729 = vst [vmem:[%s175 + $0x180] sm:$0xff] %v679
      %730 = vst [vmem:[%s175 + $0x188] sm:$0xff] %v680
      %s731 = smul.u32 50, %s14
      %p732 = scmp.lt.s32.totalorder %s731, 99
      %s733 = scalar_select %p732, %s731, 99
      %s734 = smul.addr %s733, 8
      %s735 = scalar_lea.vmem %s3, %s734
      // Predicated region
      $region33: #{nature_paper_conv_forward.4} parent=31 // pred_check
        %p736 = pneg %p100
      $region34: #{nature_paper_conv_forward.4} parent=31 // pred_check_branch
        %738 = sbr.rel (%p736) target = $region36
      $region35: #{nature_paper_conv_forward.4} parent=31 // pred_region
        %s739 = smul.u32 50, %s14
      $region36: #{nature_paper_conv_forward.4} parent=31 // pred_fallthru
        _
    $region32: #{nature_paper_conv_forward.4} parent=5 // pred_fallthru
      _
    %p740 = scmp.le.s32.totalorder 2, %s9
    // Predicated region
    $region37: #{nature_paper_conv_forward.4} parent=5 // pred_check
      %p741 = pneg %p740
    $region38: #{nature_paper_conv_forward.4} parent=5 // pred_check_branch
      %743 = sbr.rel (%p741) target = $region40
    $region39: #{nature_paper_conv_forward.4} parent=5 // pred_region
      %s744 = ssub.s32 %s9, 2
      // Predicated region
      $region41: #{nature_paper_conv_forward.4} parent=39 // pred_check
        %p745 = pneg %p106
      $region42: #{nature_paper_conv_forward.4} parent=39 // pred_check_branch
        %747 = sbr.rel (%p745) target = $region44
      $region43: #{nature_paper_conv_forward.4} parent=39 // pred_region
        %s748 = smul.u32 50, %s15
        %p749 = scmp.lt.s32.totalorder %s748, 99
        %s750 = scalar_select %p749, %s748, 99
        %s751 = smul.addr %s750, 8
        %s752 = scalar_lea.vmem %s3, %s751
      $region44: #{nature_paper_conv_forward.4} parent=39 // pred_fallthru
        _
    $region40: #{nature_paper_conv_forward.4} parent=5 // pred_fallthru
      _
  $region6: #{nature_paper_conv_forward.4} parent=0 // loop_footer
    %s13 = sadd.s32 1, %s9
  $region7: #{nature_paper_conv_forward.4} parent=0 // loop_footer_branch
    %8 = sbr.rel target = $region3
  $region8: #{nature_paper_conv_forward.4} parent=0 // loop_exit
    _

// kernel: nature_paper_conv_forward.5
$region0: #{nature_paper_conv_forward.5}
  #allocation0 [shape = 'u32[]', space=smem, size = 0x4, offset = 0x4, fixed_abs, tag = 'smem constant byte address 0x4 - core index']
  #allocation1 [shape = 'u32[144,128]{1,0:T(1,128)}', space=vmem, size = 0x12000, scoped, tag = 'internal scratch']
  %s0 = inlined_call_operand.vmem [shape: f32[162,2048], index: 0, kind: input, shape index: {}]
  %s1 = inlined_call_operand.vmem [shape: f32[2048,128], index: 1, kind: input, shape index: {}]
  %s2 = inlined_call_operand.vmem [shape: f32[1,128], index: 2, kind: input, shape index: {}]
  %s3 = inlined_call_operand.vmem [shape: f32[162,128], index: 3, kind: output, shape index: {}]
  %s4 = sld [smem:[#allocation0]]
  $region22: #{nature_paper_conv_forward.5} parent=0
    _
  %s6 = ssub.s32 1, %s4
  %s7 = scalar_select 0, %s6, %s4
  // Predicated region
  $region2: #{nature_paper_conv_forward.5} parent=0 // pred_check
    _
  $region3: #{nature_paper_conv_forward.5} parent=0 // pred_check_branch
    %9 = sbr.rel (0) target = $region5
  $region4: #{nature_paper_conv_forward.5} parent=0 // pred_region
    _
  $region5: #{nature_paper_conv_forward.5} parent=0 // pred_fallthru
    _
  // Predicated region
  $region6: #{nature_paper_conv_forward.5} parent=0 // pred_check
    _
  $region7: #{nature_paper_conv_forward.5} parent=0 // pred_check_branch
    %11 = sbr.rel (0) target = $region9
  $region8: #{nature_paper_conv_forward.5} parent=0 // pred_region
    _
  $region9: #{nature_paper_conv_forward.5} parent=0 // pred_fallthru
    _
  // Predicated region
  $region10: #{nature_paper_conv_forward.5} parent=0 // pred_check
    _
  $region11: #{nature_paper_conv_forward.5} parent=0 // pred_check_branch
    %13 = sbr.rel (0) target = $region13
  $region12: #{nature_paper_conv_forward.5} parent=0 // pred_region
    _
  $region13: #{nature_paper_conv_forward.5} parent=0 // pred_fallthru
    _
  %v14 = vld [vmem:[%s0] sm:$0xff]
  %v15 = vld [vmem:[%s0 + $0x8] sm:$0xff]
  %v16 = vld [vmem:[%s0 + $0x10] sm:$0xff]
  %v17 = vld [vmem:[%s0 + $0x18] sm:$0xff]
  %v18 = vld [vmem:[%s0 + $0x20] sm:$0xff]
  %v19 = vld [vmem:[%s0 + $0x28] sm:$0xff]
  %v20 = vld [vmem:[%s0 + $0x30] sm:$0xff]
  %v21 = vld [vmem:[%s0 + $0x38] sm:$0xff]
  %v22 = vld [vmem:[%s0 + $0x40] sm:$0xff]
  %v23 = vld [vmem:[%s0 + $0x48] sm:$0xff]
  %v24 = vld [vmem:[%s0 + $0x50] sm:$0xff]
  %v25 = vld [vmem:[%s0 + $0x58] sm:$0xff]
  %v26 = vld [vmem:[%s0 + $0x60] sm:$0xff]
  %v27 = vld [vmem:[%s0 + $0x68] sm:$0xff]
  %v28 = vld [vmem:[%s0 + $0x70] sm:$0xff]
  %v29 = vld [vmem:[%s0 + $0x78] sm:$0xff]
  %v30 = vld [vmem:[%s0 + $0x80] sm:$0xff]
  %v31 = vld [vmem:[%s0 + $0x88] sm:$0xff]
  %v32 = vld [vmem:[%s0 + $0x90] sm:$0xff]
  %v33 = vld [vmem:[%s0 + $0x98] sm:$0xff]
  %v34 = vld [vmem:[%s0 + $0xa0] sm:$0xff]
  %v35 = vld [vmem:[%s0 + $0xa8] sm:$0xff]
  %v36 = vld [vmem:[%s0 + $0xb0] sm:$0xff]
  %v37 = vld [vmem:[%s0 + $0xb8] sm:$0xff]
  %v38 = vld [vmem:[%s0 + $0xc0] sm:$0xff]
  %v39 = vld [vmem:[%s0 + $0xc8] sm:$0xff]
  %v40 = vld [vmem:[%s0 + $0xd0] sm:$0xff]
  %v41 = vld [vmem:[%s0 + $0xd8] sm:$0xff]
  %v42 = vld [vmem:[%s0 + $0xe0] sm:$0xff]
  %v43 = vld [vmem:[%s0 + $0xe8] sm:$0xff]
  %v44 = vld [vmem:[%s0 + $0xf0] sm:$0xff]
  %v45 = vld [vmem:[%s0 + $0xf8] sm:$0xff]
  %v46 = vld [vmem:[%s0 + $0x100] sm:$0xff]
  %v47 = vld [vmem:[%s0 + $0x108] sm:$0xff]
  %v48 = vld [vmem:[%s0 + $0x110] sm:$0xff]
  %v49 = vld [vmem:[%s0 + $0x118] sm:$0xff]
  %v50 = vld [vmem:[%s0 + $0x120] sm:$0xff]
  %v51 = vld [vmem:[%s0 + $0x128] sm:$0xff]
  %v52 = vld [vmem:[%s0 + $0x130] sm:$0xff]
  %v53 = vld [vmem:[%s0 + $0x138] sm:$0xff]
  %v54 = vld [vmem:[%s0 + $0x140] sm:$0xff]
  %v55 = vld [vmem:[%s0 + $0x148] sm:$0xff]
  %v56 = vld [vmem:[%s0 + $0x150] sm:$0xff]
  %v57 = vld [vmem:[%s0 + $0x158] sm:$0xff]
  %v58 = vld [vmem:[%s0 + $0x160] sm:$0xff]
  %v59 = vld [vmem:[%s0 + $0x168] sm:$0xff]
  %v60 = vld [vmem:[%s0 + $0x170] sm:$0xff]
  %v61 = vld [vmem:[%s0 + $0x178] sm:$0xff]
  %v62 = vld [vmem:[%s0 + $0x180] sm:$0xff]
  %v63 = vld [vmem:[%s0 + $0x188] sm:$0xff]
  %v64 = vld [vmem:[%s0 + $0x190] sm:$0xff]
  %v65 = vld [vmem:[%s0 + $0x198] sm:$0xff]
  %v66 = vld [vmem:[%s0 + $0x1a0] sm:$0xff]
  %v67 = vld [vmem:[%s0 + $0x1a8] sm:$0xff]
  %v68 = vld [vmem:[%s0 + $0x1b0] sm:$0xff]
  %v69 = vld [vmem:[%s0 + $0x1b8] sm:$0xff]
  %v70 = vld [vmem:[%s0 + $0x1c0] sm:$0xff]
  %v71 = vld [vmem:[%s0 + $0x1c8] sm:$0xff]
  %v72 = vld [vmem:[%s0 + $0x1d0] sm:$0xff]
  %v73 = vld [vmem:[%s0 + $0x1d8] sm:$0xff]
  %v74 = vld [vmem:[%s0 + $0x1e0] sm:$0xff]
  %v75 = vld [vmem:[%s0 + $0x1e8] sm:$0xff]
  %v76 = vld [vmem:[%s0 + $0x1f0] sm:$0xff]
  %v77 = vld [vmem:[%s0 + $0x1f8] sm:$0xff]
  %v78 = vld [vmem:[%s0 + $0x200] sm:$0xff]
  %v79 = vld [vmem:[%s0 + $0x208] sm:$0xff]
  %v80 = vld [vmem:[%s0 + $0x210] sm:$0xff]
  %v81 = vld [vmem:[%s0 + $0x218] sm:$0xff]
  %v82 = vld [vmem:[%s0 + $0x220] sm:$0xff]
  %v83 = vld [vmem:[%s0 + $0x228] sm:$0xff]
  %v84 = vld [vmem:[%s0 + $0x230] sm:$0xff]
  %v85 = vld [vmem:[%s0 + $0x238] sm:$0xff]
  %v86 = vld [vmem:[%s0 + $0x240] sm:$0xff]
  %v87 = vld [vmem:[%s0 + $0x248] sm:$0xff]
  %v88 = vld [vmem:[%s0 + $0x250] sm:$0xff]
  %v89 = vld [vmem:[%s0 + $0x258] sm:$0xff]
  %v90 = vld [vmem:[%s0 + $0x260] sm:$0xff]
  %v91 = vld [vmem:[%s0 + $0x268] sm:$0xff]
  %v92 = vld [vmem:[%s0 + $0x270] sm:$0xff]
  %v93 = vld [vmem:[%s0 + $0x278] sm:$0xff]
  %v94 = vld [vmem:[%s0 + $0x280] sm:$0xff]
  %v95 = vld [vmem:[%s0 + $0x288] sm:$0xff]
  %v96 = vld [vmem:[%s0 + $0x290] sm:$0xff]
  %v97 = vld [vmem:[%s0 + $0x298] sm:$0xff]
  %v98 = vld [vmem:[%s0 + $0x2a0] sm:$0xff]
  %v99 = vld [vmem:[%s0 + $0x2a8] sm:$0xff]
  %v100 = vld [vmem:[%s0 + $0x2b0] sm:$0xff]
  %v101 = vld [vmem:[%s0 + $0x2b8] sm:$0xff]
  %v102 = vld [vmem:[%s0 + $0x2c0] sm:$0xff]
  %v103 = vld [vmem:[%s0 + $0x2c8] sm:$0xff]
  %v104 = vld [vmem:[%s0 + $0x2d0] sm:$0xff]
  %v105 = vld [vmem:[%s0 + $0x2d8] sm:$0xff]
  %v106 = vld [vmem:[%s0 + $0x2e0] sm:$0xff]
  %v107 = vld [vmem:[%s0 + $0x2e8] sm:$0xff]
  %v108 = vld [vmem:[%s0 + $0x2f0] sm:$0xff]
  %v109 = vld [vmem:[%s0 + $0x2f8] sm:$0xff]
  %v110 = vld [vmem:[%s0 + $0x300] sm:$0xff]
  %v111 = vld [vmem:[%s0 + $0x308] sm:$0xff]
  %v112 = vld [vmem:[%s0 + $0x310] sm:$0xff]
  %v113 = vld [vmem:[%s0 + $0x318] sm:$0xff]
  %v114 = vld [vmem:[%s0 + $0x320] sm:$0xff]
  %v115 = vld [vmem:[%s0 + $0x328] sm:$0xff]
  %v116 = vld [vmem:[%s0 + $0x330] sm:$0xff]
  %v117 = vld [vmem:[%s0 + $0x338] sm:$0xff]
  %v118 = vld [vmem:[%s0 + $0x340] sm:$0xff]
  %v119 = vld [vmem:[%s0 + $0x348] sm:$0xff]
  %v120 = vld [vmem:[%s0 + $0x350] sm:$0xff]
  %v121 = vld [vmem:[%s0 + $0x358] sm:$0xff]
  %v122 = vld [vmem:[%s0 + $0x360] sm:$0xff]
  %v123 = vld [vmem:[%s0 + $0x368] sm:$0xff]
  %v124 = vld [vmem:[%s0 + $0x370] sm:$0xff]
  %v125 = vld [vmem:[%s0 + $0x378] sm:$0xff]
  %v126 = vld [vmem:[%s0 + $0x380] sm:$0xff]
  %v127 = vld [vmem:[%s0 + $0x388] sm:$0xff]
  %v128 = vld [vmem:[%s0 + $0x390] sm:$0xff]
  %v129 = vld [vmem:[%s0 + $0x398] sm:$0xff]
  %v130 = vld [vmem:[%s0 + $0x3a0] sm:$0xff]
  %v131 = vld [vmem:[%s0 + $0x3a8] sm:$0xff]
  %v132 = vld [vmem:[%s0 + $0x3b0] sm:$0xff]
  %v133 = vld [vmem:[%s0 + $0x3b8] sm:$0xff]
  %v134 = vld [vmem:[%s0 + $0x3c0] sm:$0xff]
  %v135 = vld [vmem:[%s0 + $0x3c8] sm:$0xff]
  %v136 = vld [vmem:[%s0 + $0x3d0] sm:$0xff]
  %v137 = vld [vmem:[%s0 + $0x3d8] sm:$0xff]
  %v138 = vld [vmem:[%s0 + $0x3e0] sm:$0xff]
  %v139 = vld [vmem:[%s0 + $0x3e8] sm:$0xff]
  %v140 = vld [vmem:[%s0 + $0x3f0] sm:$0xff]
  %v141 = vld [vmem:[%s0 + $0x3f8] sm:$0xff]
  %v142 = vld [vmem:[%s0 + $0x400] sm:$0xff]
  %v143 = vld [vmem:[%s0 + $0x408] sm:$0xff]
  %v144 = vld [vmem:[%s0 + $0x410] sm:$0xff]
  %v145 = vld [vmem:[%s0 + $0x418] sm:$0xff]
  %v146 = vld [vmem:[%s0 + $0x420] sm:$0xff]
  %v147 = vld [vmem:[%s0 + $0x428] sm:$0xff]
  %v148 = vld [vmem:[%s0 + $0x430] sm:$0xff]
  %v149 = vld [vmem:[%s0 + $0x438] sm:$0xff]
  %v150 = vld [vmem:[%s0 + $0x440] sm:$0xff]
  %v151 = vld [vmem:[%s0 + $0x448] sm:$0xff]
  %v152 = vld [vmem:[%s0 + $0x450] sm:$0xff]
  %v153 = vld [vmem:[%s0 + $0x458] sm:$0xff]
  %v154 = vld [vmem:[%s0 + $0x460] sm:$0xff]
  %v155 = vld [vmem:[%s0 + $0x468] sm:$0xff]
  %v156 = vld [vmem:[%s0 + $0x470] sm:$0xff]
  %v157 = vld [vmem:[%s0 + $0x478] sm:$0xff]
  %v158 = vld [vmem:[%s0 + $0x480] sm:$0xff]
  %v159 = vld [vmem:[%s0 + $0x488] sm:$0xff]
  %v160 = vld [vmem:[%s0 + $0x490] sm:$0xff]
  %v161 = vld [vmem:[%s0 + $0x498] sm:$0xff]
  %v162 = vld [vmem:[%s0 + $0x4a0] sm:$0xff]
  %v163 = vld [vmem:[%s0 + $0x4a8] sm:$0xff]
  %v164 = vld [vmem:[%s0 + $0x4b0] sm:$0xff]
  %v165 = vld [vmem:[%s0 + $0x4b8] sm:$0xff]
  %v166 = vld [vmem:[%s0 + $0x4c0] sm:$0xff]
  %v167 = vld [vmem:[%s0 + $0x4c8] sm:$0xff]
  %v168 = vld [vmem:[%s0 + $0x4d0] sm:$0xff]
  %v169 = vld [vmem:[%s0 + $0x4d8] sm:$0xff]
  %v170 = vld [vmem:[%s0 + $0x4e0] sm:$0xff]
  %v171 = vld [vmem:[%s0 + $0x4e8] sm:$0xff]
  %v172 = vld [vmem:[%s0 + $0x4f0] sm:$0xff]
  %v173 = vld [vmem:[%s0 + $0x4f8] sm:$0xff]
  %v174 = vld [vmem:[%s0 + $0x500] sm:$0xff]
  %v175 = vld [vmem:[%s0 + $0x508] sm:$0xff]
  %v176 = vld [vmem:[%s0 + $0x510] sm:$0xff]
  %v177 = vld [vmem:[%s0 + $0x518] sm:$0xff]
  %v178 = vld [vmem:[%s0 + $0x520] sm:$0xff]
  %v179 = vld [vmem:[%s0 + $0x528] sm:$0xff]
  %v180 = vld [vmem:[%s0 + $0x530] sm:$0xff]
  %v181 = vld [vmem:[%s0 + $0x538] sm:$0xff]
  %v182 = vld [vmem:[%s0 + $0x540] sm:$0xff]
  %v183 = vld [vmem:[%s0 + $0x548] sm:$0xff]
  %v184 = vld [vmem:[%s0 + $0x550] sm:$0xff]
  %v185 = vld [vmem:[%s0 + $0x558] sm:$0xff]
  %v186 = vld [vmem:[%s0 + $0x560] sm:$0xff]
  %v187 = vld [vmem:[%s0 + $0x568] sm:$0xff]
  %v188 = vld [vmem:[%s0 + $0x570] sm:$0xff]
  %v189 = vld [vmem:[%s0 + $0x578] sm:$0xff]
  %v190 = vld [vmem:[%s0 + $0x580] sm:$0xff]
  %v191 = vld [vmem:[%s0 + $0x588] sm:$0xff]
  %v192 = vld [vmem:[%s0 + $0x590] sm:$0xff]
  %v193 = vld [vmem:[%s0 + $0x598] sm:$0xff]
  %v194 = vld [vmem:[%s0 + $0x5a0] sm:$0xff]
  %v195 = vld [vmem:[%s0 + $0x5a8] sm:$0xff]
  %v196 = vld [vmem:[%s0 + $0x5b0] sm:$0xff]
  %v197 = vld [vmem:[%s0 + $0x5b8] sm:$0xff]
  %v198 = vld [vmem:[%s0 + $0x5c0] sm:$0xff]
  %v199 = vld [vmem:[%s0 + $0x5c8] sm:$0xff]
  %v200 = vld [vmem:[%s0 + $0x5d0] sm:$0xff]
  %v201 = vld [vmem:[%s0 + $0x5d8] sm:$0xff]
  %v202 = vld [vmem:[%s0 + $0x5e0] sm:$0xff]
  %v203 = vld [vmem:[%s0 + $0x5e8] sm:$0xff]
  %v204 = vld [vmem:[%s0 + $0x5f0] sm:$0xff]
  %v205 = vld [vmem:[%s0 + $0x5f8] sm:$0xff]
  %v206 = vld [vmem:[%s0 + $0x600] sm:$0xff]
  %v207 = vld [vmem:[%s0 + $0x608] sm:$0xff]
  %v208 = vld [vmem:[%s0 + $0x610] sm:$0xff]
  %v209 = vld [vmem:[%s0 + $0x618] sm:$0xff]
  %v210 = vld [vmem:[%s0 + $0x620] sm:$0xff]
  %v211 = vld [vmem:[%s0 + $0x628] sm:$0xff]
  %v212 = vld [vmem:[%s0 + $0x630] sm:$0xff]
  %v213 = vld [vmem:[%s0 + $0x638] sm:$0xff]
  %v214 = vld [vmem:[%s0 + $0x640] sm:$0xff]
  %v215 = vld [vmem:[%s0 + $0x648] sm:$0xff]
  %v216 = vld [vmem:[%s0 + $0x650] sm:$0xff]
  %v217 = vld [vmem:[%s0 + $0x658] sm:$0xff]
  %v218 = vld [vmem:[%s0 + $0x660] sm:$0xff]
  %v219 = vld [vmem:[%s0 + $0x668] sm:$0xff]
  %v220 = vld [vmem:[%s0 + $0x670] sm:$0xff]
  %v221 = vld [vmem:[%s0 + $0x678] sm:$0xff]
  %v222 = vld [vmem:[%s0 + $0x680] sm:$0xff]
  %v223 = vld [vmem:[%s0 + $0x688] sm:$0xff]
  %v224 = vld [vmem:[%s0 + $0x690] sm:$0xff]
  %v225 = vld [vmem:[%s0 + $0x698] sm:$0xff]
  %v226 = vld [vmem:[%s0 + $0x6a0] sm:$0xff]
  %v227 = vld [vmem:[%s0 + $0x6a8] sm:$0xff]
  %v228 = vld [vmem:[%s0 + $0x6b0] sm:$0xff]
  %v229 = vld [vmem:[%s0 + $0x6b8] sm:$0xff]
  %v230 = vld [vmem:[%s0 + $0x6c0] sm:$0xff]
  %v231 = vld [vmem:[%s0 + $0x6c8] sm:$0xff]
  %v232 = vld [vmem:[%s0 + $0x6d0] sm:$0xff]
  %v233 = vld [vmem:[%s0 + $0x6d8] sm:$0xff]
  %v234 = vld [vmem:[%s0 + $0x6e0] sm:$0xff]
  %v235 = vld [vmem:[%s0 + $0x6e8] sm:$0xff]
  %v236 = vld [vmem:[%s0 + $0x6f0] sm:$0xff]
  %v237 = vld [vmem:[%s0 + $0x6f8] sm:$0xff]
  %v238 = vld [vmem:[%s0 + $0x700] sm:$0xff]
  %v239 = vld [vmem:[%s0 + $0x708] sm:$0xff]
  %v240 = vld [vmem:[%s0 + $0x710] sm:$0xff]
  %v241 = vld [vmem:[%s0 + $0x718] sm:$0xff]
  %v242 = vld [vmem:[%s0 + $0x720] sm:$0xff]
  %v243 = vld [vmem:[%s0 + $0x728] sm:$0xff]
  %v244 = vld [vmem:[%s0 + $0x730] sm:$0xff]
  %v245 = vld [vmem:[%s0 + $0x738] sm:$0xff]
  %v246 = vld [vmem:[%s0 + $0x740] sm:$0xff]
  %v247 = vld [vmem:[%s0 + $0x748] sm:$0xff]
  %v248 = vld [vmem:[%s0 + $0x750] sm:$0xff]
  %v249 = vld [vmem:[%s0 + $0x758] sm:$0xff]
  %v250 = vld [vmem:[%s0 + $0x760] sm:$0xff]
  %v251 = vld [vmem:[%s0 + $0x768] sm:$0xff]
  %v252 = vld [vmem:[%s0 + $0x770] sm:$0xff]
  %v253 = vld [vmem:[%s0 + $0x778] sm:$0xff]
  %v254 = vld [vmem:[%s0 + $0x780] sm:$0xff]
  %v255 = vld [vmem:[%s0 + $0x788] sm:$0xff]
  %v256 = vld [vmem:[%s0 + $0x790] sm:$0xff]
  %v257 = vld [vmem:[%s0 + $0x798] sm:$0xff]
  %v258 = vld [vmem:[%s0 + $0x7a0] sm:$0xff]
  %v259 = vld [vmem:[%s0 + $0x7a8] sm:$0xff]
  %v260 = vld [vmem:[%s0 + $0x7b0] sm:$0xff]
  %v261 = vld [vmem:[%s0 + $0x7b8] sm:$0xff]
  %v262 = vld [vmem:[%s0 + $0x7c0] sm:$0xff]
  %v263 = vld [vmem:[%s0 + $0x7c8] sm:$0xff]
  %v264 = vld [vmem:[%s0 + $0x7d0] sm:$0xff]
  %v265 = vld [vmem:[%s0 + $0x7d8] sm:$0xff]
  %v266 = vld [vmem:[%s0 + $0x7e0] sm:$0xff]
  %v267 = vld [vmem:[%s0 + $0x7e8] sm:$0xff]
  %v268 = vld [vmem:[%s0 + $0x7f0] sm:$0xff]
  %v269 = vld [vmem:[%s0 + $0x7f8] sm:$0xff]
  %v270 = vld [vmem:[%s0 + $0x800] sm:$0xff]
  %v271 = vld [vmem:[%s0 + $0x808] sm:$0xff]
  %v272 = vld [vmem:[%s0 + $0x810] sm:$0xff]
  %v273 = vld [vmem:[%s0 + $0x818] sm:$0xff]
  %v274 = vld [vmem:[%s0 + $0x820] sm:$0xff]
  %v275 = vld [vmem:[%s0 + $0x828] sm:$0xff]
  %v276 = vld [vmem:[%s0 + $0x830] sm:$0xff]
  %v277 = vld [vmem:[%s0 + $0x838] sm:$0xff]
  %v278 = vld [vmem:[%s0 + $0x840] sm:$0xff]
  %v279 = vld [vmem:[%s0 + $0x848] sm:$0xff]
  %v280 = vld [vmem:[%s0 + $0x850] sm:$0xff]
  %v281 = vld [vmem:[%s0 + $0x858] sm:$0xff]
  %v282 = vld [vmem:[%s0 + $0x860] sm:$0xff]
  %v283 = vld [vmem:[%s0 + $0x868] sm:$0xff]
  %v284 = vld [vmem:[%s0 + $0x870] sm:$0xff]
  %v285 = vld [vmem:[%s0 + $0x878] sm:$0xff]
  %v286 = vld [vmem:[%s0 + $0x880] sm:$0xff]
  %v287 = vld [vmem:[%s0 + $0x888] sm:$0xff]
  %v288 = vld [vmem:[%s0 + $0x890] sm:$0xff]
  %v289 = vld [vmem:[%s0 + $0x898] sm:$0xff]
  %v290 = vld [vmem:[%s0 + $0x8a0] sm:$0xff]
  %v291 = vld [vmem:[%s0 + $0x8a8] sm:$0xff]
  %v292 = vld [vmem:[%s0 + $0x8b0] sm:$0xff]
  %v293 = vld [vmem:[%s0 + $0x8b8] sm:$0xff]
  %v294 = vld [vmem:[%s0 + $0x8c0] sm:$0xff]
  %v295 = vld [vmem:[%s0 + $0x8c8] sm:$0xff]
  %v296 = vld [vmem:[%s0 + $0x8d0] sm:$0xff]
  %v297 = vld [vmem:[%s0 + $0x8d8] sm:$0xff]
  %v298 = vld [vmem:[%s0 + $0x8e0] sm:$0xff]
  %v299 = vld [vmem:[%s0 + $0x8e8] sm:$0xff]
  %v300 = vld [vmem:[%s0 + $0x8f0] sm:$0xff]
  %v301 = vld [vmem:[%s0 + $0x8f8] sm:$0xff]
  %v302 = vld [vmem:[%s0 + $0x900] sm:$0xff]
  %v303 = vld [vmem:[%s0 + $0x908] sm:$0xff]
  %v304 = vld [vmem:[%s0 + $0x910] sm:$0xff]
  %v305 = vld [vmem:[%s0 + $0x918] sm:$0xff]
  %v306 = vld [vmem:[%s0 + $0x920] sm:$0xff]
  %v307 = vld [vmem:[%s0 + $0x928] sm:$0xff]
  %v308 = vld [vmem:[%s0 + $0x930] sm:$0xff]
  %v309 = vld [vmem:[%s0 + $0x938] sm:$0xff]
  %v310 = vld [vmem:[%s0 + $0x940] sm:$0xff]
  %v311 = vld [vmem:[%s0 + $0x948] sm:$0xff]
  %v312 = vld [vmem:[%s0 + $0x950] sm:$0xff]
  %v313 = vld [vmem:[%s0 + $0x958] sm:$0xff]
  %v314 = vld [vmem:[%s0 + $0x960] sm:$0xff]
  %v315 = vld [vmem:[%s0 + $0x968] sm:$0xff]
  %v316 = vld [vmem:[%s0 + $0x970] sm:$0xff]
  %v317 = vld [vmem:[%s0 + $0x978] sm:$0xff]
  %v318 = vld [vmem:[%s0 + $0x980] sm:$0xff]
  %v319 = vld [vmem:[%s0 + $0x988] sm:$0xff]
  %v320 = vld [vmem:[%s0 + $0x990] sm:$0xff]
  %v321 = vld [vmem:[%s0 + $0x998] sm:$0xff]
  %v322 = vld [vmem:[%s0 + $0x9a0] sm:$0xff]
  %v323 = vld [vmem:[%s0 + $0x9a8] sm:$0xff]
  %v324 = vld [vmem:[%s0 + $0x9b0] sm:$0xff]
  %v325 = vld [vmem:[%s0 + $0x9b8] sm:$0xff]
  %v326 = vld [vmem:[%s0 + $0x9c0] sm:$0xff]
  %v327 = vld [vmem:[%s0 + $0x9c8] sm:$0xff]
  %v328 = vld [vmem:[%s0 + $0x9d0] sm:$0xff]
  %v329 = vld [vmem:[%s0 + $0x9d8] sm:$0xff]
  %v330 = vld [vmem:[%s0 + $0x9e0] sm:$0xff]
  %v331 = vld [vmem:[%s0 + $0x9e8] sm:$0xff]
  %v332 = vld [vmem:[%s0 + $0x9f0] sm:$0xff]
  %v333 = vld [vmem:[%s0 + $0x9f8] sm:$0xff]
  %v334 = vld [vmem:[%s0 + $0xa00] sm:$0x3]
  %v335 = vld [vmem:[%s0 + $0xa08] sm:$0x3]
  %v336 = vld [vmem:[%s0 + $0xa10] sm:$0x3]
  %v337 = vld [vmem:[%s0 + $0xa18] sm:$0x3]
  %v338 = vld [vmem:[%s0 + $0xa20] sm:$0x3]
  %v339 = vld [vmem:[%s0 + $0xa28] sm:$0x3]
  %v340 = vld [vmem:[%s0 + $0xa30] sm:$0x3]
  %v341 = vld [vmem:[%s0 + $0xa38] sm:$0x3]
  %v342 = vld [vmem:[%s0 + $0xa40] sm:$0x3]
  %v343 = vld [vmem:[%s0 + $0xa48] sm:$0x3]
  %v344 = vld [vmem:[%s0 + $0xa50] sm:$0x3]
  %v345 = vld [vmem:[%s0 + $0xa58] sm:$0x3]
  %v346 = vld [vmem:[%s0 + $0xa60] sm:$0x3]
  %v347 = vld [vmem:[%s0 + $0xa68] sm:$0x3]
  %v348 = vld [vmem:[%s0 + $0xa70] sm:$0x3]
  %v349 = vld [vmem:[%s0 + $0xa78] sm:$0x3]
  %v350 = vld [vmem:[%s1] sm:$0xff]
  %v351 = vld [vmem:[%s1 + $0x8] sm:$0xff]
  %v352 = vld [vmem:[%s1 + $0x10] sm:$0xff]
  %v353 = vld [vmem:[%s1 + $0x18] sm:$0xff]
  %v354 = vld [vmem:[%s1 + $0x20] sm:$0xff]
  %v355 = vld [vmem:[%s1 + $0x28] sm:$0xff]
  %v356 = vld [vmem:[%s1 + $0x30] sm:$0xff]
  %v357 = vld [vmem:[%s1 + $0x38] sm:$0xff]
  %v358 = vld [vmem:[%s1 + $0x40] sm:$0xff]
  %v359 = vld [vmem:[%s1 + $0x48] sm:$0xff]
  %v360 = vld [vmem:[%s1 + $0x50] sm:$0xff]
  %v361 = vld [vmem:[%s1 + $0x58] sm:$0xff]
  %v362 = vld [vmem:[%s1 + $0x60] sm:$0xff]
  %v363 = vld [vmem:[%s1 + $0x68] sm:$0xff]
  %v364 = vld [vmem:[%s1 + $0x70] sm:$0xff]
  %v365 = vld [vmem:[%s1 + $0x78] sm:$0xff]
  %v366 = vld [vmem:[%s1 + $0x80] sm:$0xff]
  %v367 = vld [vmem:[%s1 + $0x88] sm:$0xff]
  %v368 = vld [vmem:[%s1 + $0x90] sm:$0xff]
  %v369 = vld [vmem:[%s1 + $0x98] sm:$0xff]
  %v370 = vld [vmem:[%s1 + $0xa0] sm:$0xff]
  %v371 = vld [vmem:[%s1 + $0xa8] sm:$0xff]
  %v372 = vld [vmem:[%s1 + $0xb0] sm:$0xff]
  %v373 = vld [vmem:[%s1 + $0xb8] sm:$0xff]
  %v374 = vld [vmem:[%s1 + $0xc0] sm:$0xff]
  %v375 = vld [vmem:[%s1 + $0xc8] sm:$0xff]
  %v376 = vld [vmem:[%s1 + $0xd0] sm:$0xff]
  %v377 = vld [vmem:[%s1 + $0xd8] sm:$0xff]
  %v378 = vld [vmem:[%s1 + $0xe0] sm:$0xff]
  %v379 = vld [vmem:[%s1 + $0xe8] sm:$0xff]
  %v380 = vld [vmem:[%s1 + $0xf0] sm:$0xff]
  %v381 = vld [vmem:[%s1 + $0xf8] sm:$0xff]
  %v382 = vld [vmem:[%s1 + $0x100] sm:$0xff]
  %v383 = vld [vmem:[%s1 + $0x108] sm:$0xff]
  %v384 = vld [vmem:[%s1 + $0x110] sm:$0xff]
  %v385 = vld [vmem:[%s1 + $0x118] sm:$0xff]
  %v386 = vld [vmem:[%s1 + $0x120] sm:$0xff]
  %v387 = vld [vmem:[%s1 + $0x128] sm:$0xff]
  %v388 = vld [vmem:[%s1 + $0x130] sm:$0xff]
  %v389 = vld [vmem:[%s1 + $0x138] sm:$0xff]
  %v390 = vld [vmem:[%s1 + $0x140] sm:$0xff]
  %v391 = vld [vmem:[%s1 + $0x148] sm:$0xff]
  %v392 = vld [vmem:[%s1 + $0x150] sm:$0xff]
  %v393 = vld [vmem:[%s1 + $0x158] sm:$0xff]
  %v394 = vld [vmem:[%s1 + $0x160] sm:$0xff]
  %v395 = vld [vmem:[%s1 + $0x168] sm:$0xff]
  %v396 = vld [vmem:[%s1 + $0x170] sm:$0xff]
  %v397 = vld [vmem:[%s1 + $0x178] sm:$0xff]
  %v398 = vld [vmem:[%s1 + $0x180] sm:$0xff]
  %v399 = vld [vmem:[%s1 + $0x188] sm:$0xff]
  %v400 = vld [vmem:[%s1 + $0x190] sm:$0xff]
  %v401 = vld [vmem:[%s1 + $0x198] sm:$0xff]
  %v402 = vld [vmem:[%s1 + $0x1a0] sm:$0xff]
  %v403 = vld [vmem:[%s1 + $0x1a8] sm:$0xff]
  %v404 = vld [vmem:[%s1 + $0x1b0] sm:$0xff]
  %v405 = vld [vmem:[%s1 + $0x1b8] sm:$0xff]
  %v406 = vld [vmem:[%s1 + $0x1c0] sm:$0xff]
  %v407 = vld [vmem:[%s1 + $0x1c8] sm:$0xff]
  %v408 = vld [vmem:[%s1 + $0x1d0] sm:$0xff]
  %v409 = vld [vmem:[%s1 + $0x1d8] sm:$0xff]
  %v410 = vld [vmem:[%s1 + $0x1e0] sm:$0xff]
  %v411 = vld [vmem:[%s1 + $0x1e8] sm:$0xff]
  %v412 = vld [vmem:[%s1 + $0x1f0] sm:$0xff]
  %v413 = vld [vmem:[%s1 + $0x1f8] sm:$0xff]
  %v414 = vld [vmem:[%s1 + $0x200] sm:$0xff]
  %v415 = vld [vmem:[%s1 + $0x208] sm:$0xff]
  %v416 = vld [vmem:[%s1 + $0x210] sm:$0xff]
  %v417 = vld [vmem:[%s1 + $0x218] sm:$0xff]
  %v418 = vld [vmem:[%s1 + $0x220] sm:$0xff]
  %v419 = vld [vmem:[%s1 + $0x228] sm:$0xff]
  %v420 = vld [vmem:[%s1 + $0x230] sm:$0xff]
  %v421 = vld [vmem:[%s1 + $0x238] sm:$0xff]
  %v422 = vld [vmem:[%s1 + $0x240] sm:$0xff]
  %v423 = vld [vmem:[%s1 + $0x248] sm:$0xff]
  %v424 = vld [vmem:[%s1 + $0x250] sm:$0xff]
  %v425 = vld [vmem:[%s1 + $0x258] sm:$0xff]
  %v426 = vld [vmem:[%s1 + $0x260] sm:$0xff]
  %v427 = vld [vmem:[%s1 + $0x268] sm:$0xff]
  %v428 = vld [vmem:[%s1 + $0x270] sm:$0xff]
  %v429 = vld [vmem:[%s1 + $0x278] sm:$0xff]
  %v430 = vld [vmem:[%s1 + $0x280] sm:$0xff]
  %v431 = vld [vmem:[%s1 + $0x288] sm:$0xff]
  %v432 = vld [vmem:[%s1 + $0x290] sm:$0xff]
  %v433 = vld [vmem:[%s1 + $0x298] sm:$0xff]
  %v434 = vld [vmem:[%s1 + $0x2a0] sm:$0xff]
  %v435 = vld [vmem:[%s1 + $0x2a8] sm:$0xff]
  %v436 = vld [vmem:[%s1 + $0x2b0] sm:$0xff]
  %v437 = vld [vmem:[%s1 + $0x2b8] sm:$0xff]
  %v438 = vld [vmem:[%s1 + $0x2c0] sm:$0xff]
  %v439 = vld [vmem:[%s1 + $0x2c8] sm:$0xff]
  %v440 = vld [vmem:[%s1 + $0x2d0] sm:$0xff]
  %v441 = vld [vmem:[%s1 + $0x2d8] sm:$0xff]
  %v442 = vld [vmem:[%s1 + $0x2e0] sm:$0xff]
  %v443 = vld [vmem:[%s1 + $0x2e8] sm:$0xff]
  %v444 = vld [vmem:[%s1 + $0x2f0] sm:$0xff]
  %v445 = vld [vmem:[%s1 + $0x2f8] sm:$0xff]
  %v446 = vld [vmem:[%s1 + $0x300] sm:$0xff]
  %v447 = vld [vmem:[%s1 + $0x308] sm:$0xff]
  %v448 = vld [vmem:[%s1 + $0x310] sm:$0xff]
  %v449 = vld [vmem:[%s1 + $0x318] sm:$0xff]
  %v450 = vld [vmem:[%s1 + $0x320] sm:$0xff]
  %v451 = vld [vmem:[%s1 + $0x328] sm:$0xff]
  %v452 = vld [vmem:[%s1 + $0x330] sm:$0xff]
  %v453 = vld [vmem:[%s1 + $0x338] sm:$0xff]
  %v454 = vld [vmem:[%s1 + $0x340] sm:$0xff]
  %v455 = vld [vmem:[%s1 + $0x348] sm:$0xff]
  %v456 = vld [vmem:[%s1 + $0x350] sm:$0xff]
  %v457 = vld [vmem:[%s1 + $0x358] sm:$0xff]
  %v458 = vld [vmem:[%s1 + $0x360] sm:$0xff]
  %v459 = vld [vmem:[%s1 + $0x368] sm:$0xff]
  %v460 = vld [vmem:[%s1 + $0x370] sm:$0xff]
  %v461 = vld [vmem:[%s1 + $0x378] sm:$0xff]
  %v462 = vld [vmem:[%s1 + $0x380] sm:$0xff]
  %v463 = vld [vmem:[%s1 + $0x388] sm:$0xff]
  %v464 = vld [vmem:[%s1 + $0x390] sm:$0xff]
  %v465 = vld [vmem:[%s1 + $0x398] sm:$0xff]
  %v466 = vld [vmem:[%s1 + $0x3a0] sm:$0xff]
  %v467 = vld [vmem:[%s1 + $0x3a8] sm:$0xff]
  %v468 = vld [vmem:[%s1 + $0x3b0] sm:$0xff]
  %v469 = vld [vmem:[%s1 + $0x3b8] sm:$0xff]
  %v470 = vld [vmem:[%s1 + $0x3c0] sm:$0xff]
  %v471 = vld [vmem:[%s1 + $0x3c8] sm:$0xff]
  %v472 = vld [vmem:[%s1 + $0x3d0] sm:$0xff]
  %v473 = vld [vmem:[%s1 + $0x3d8] sm:$0xff]
  %v474 = vld [vmem:[%s1 + $0x3e0] sm:$0xff]
  %v475 = vld [vmem:[%s1 + $0x3e8] sm:$0xff]
  %v476 = vld [vmem:[%s1 + $0x3f0] sm:$0xff]
  %v477 = vld [vmem:[%s1 + $0x3f8] sm:$0xff]
  %v478 = vld [vmem:[%s1 + $0x400] sm:$0xff]
  %v479 = vld [vmem:[%s1 + $0x408] sm:$0xff]
  %v480 = vld [vmem:[%s1 + $0x410] sm:$0xff]
  %v481 = vld [vmem:[%s1 + $0x418] sm:$0xff]
  %v482 = vld [vmem:[%s1 + $0x420] sm:$0xff]
  %v483 = vld [vmem:[%s1 + $0x428] sm:$0xff]
  %v484 = vld [vmem:[%s1 + $0x430] sm:$0xff]
  %v485 = vld [vmem:[%s1 + $0x438] sm:$0xff]
  %v486 = vld [vmem:[%s1 + $0x440] sm:$0xff]
  %v487 = vld [vmem:[%s1 + $0x448] sm:$0xff]
  %v488 = vld [vmem:[%s1 + $0x450] sm:$0xff]
  %v489 = vld [vmem:[%s1 + $0x458] sm:$0xff]
  %v490 = vld [vmem:[%s1 + $0x460] sm:$0xff]
  %v491 = vld [vmem:[%s1 + $0x468] sm:$0xff]
  %v492 = vld [vmem:[%s1 + $0x470] sm:$0xff]
  %v493 = vld [vmem:[%s1 + $0x478] sm:$0xff]
  %v494 = vld [vmem:[%s1 + $0x480] sm:$0xff]
  %v495 = vld [vmem:[%s1 + $0x488] sm:$0xff]
  %v496 = vld [vmem:[%s1 + $0x490] sm:$0xff]
  %v497 = vld [vmem:[%s1 + $0x498] sm:$0xff]
  %v498 = vld [vmem:[%s1 + $0x4a0] sm:$0xff]
  %v499 = vld [vmem:[%s1 + $0x4a8] sm:$0xff]
  %v500 = vld [vmem:[%s1 + $0x4b0] sm:$0xff]
  %v501 = vld [vmem:[%s1 + $0x4b8] sm:$0xff]
  %v502 = vld [vmem:[%s1 + $0x4c0] sm:$0xff]
  %v503 = vld [vmem:[%s1 + $0x4c8] sm:$0xff]
  %v504 = vld [vmem:[%s1 + $0x4d0] sm:$0xff]
  %v505 = vld [vmem:[%s1 + $0x4d8] sm:$0xff]
  %v506 = vld [vmem:[%s1 + $0x4e0] sm:$0xff]
  %v507 = vld [vmem:[%s1 + $0x4e8] sm:$0xff]
  %v508 = vld [vmem:[%s1 + $0x4f0] sm:$0xff]
  %v509 = vld [vmem:[%s1 + $0x4f8] sm:$0xff]
  %v510 = vld [vmem:[%s1 + $0x500] sm:$0xff]
  %v511 = vld [vmem:[%s1 + $0x508] sm:$0xff]
  %v512 = vld [vmem:[%s1 + $0x510] sm:$0xff]
  %v513 = vld [vmem:[%s1 + $0x518] sm:$0xff]
  %v514 = vld [vmem:[%s1 + $0x520] sm:$0xff]
  %v515 = vld [vmem:[%s1 + $0x528] sm:$0xff]
  %v516 = vld [vmem:[%s1 + $0x530] sm:$0xff]
  %v517 = vld [vmem:[%s1 + $0x538] sm:$0xff]
  %v518 = vld [vmem:[%s1 + $0x540] sm:$0xff]
  %v519 = vld [vmem:[%s1 + $0x548] sm:$0xff]
  %v520 = vld [vmem:[%s1 + $0x550] sm:$0xff]
  %v521 = vld [vmem:[%s1 + $0x558] sm:$0xff]
  %v522 = vld [vmem:[%s1 + $0x560] sm:$0xff]
  %v523 = vld [vmem:[%s1 + $0x568] sm:$0xff]
  %v524 = vld [vmem:[%s1 + $0x570] sm:$0xff]
  %v525 = vld [vmem:[%s1 + $0x578] sm:$0xff]
  %v526 = vld [vmem:[%s1 + $0x580] sm:$0xff]
  %v527 = vld [vmem:[%s1 + $0x588] sm:$0xff]
  %v528 = vld [vmem:[%s1 + $0x590] sm:$0xff]
  %v529 = vld [vmem:[%s1 + $0x598] sm:$0xff]
  %v530 = vld [vmem:[%s1 + $0x5a0] sm:$0xff]
  %v531 = vld [vmem:[%s1 + $0x5a8] sm:$0xff]
  %v532 = vld [vmem:[%s1 + $0x5b0] sm:$0xff]
  %v533 = vld [vmem:[%s1 + $0x5b8] sm:$0xff]
  %v534 = vld [vmem:[%s1 + $0x5c0] sm:$0xff]
  %v535 = vld [vmem:[%s1 + $0x5c8] sm:$0xff]
  %v536 = vld [vmem:[%s1 + $0x5d0] sm:$0xff]
  %v537 = vld [vmem:[%s1 + $0x5d8] sm:$0xff]
  %v538 = vld [vmem:[%s1 + $0x5e0] sm:$0xff]
  %v539 = vld [vmem:[%s1 + $0x5e8] sm:$0xff]
  %v540 = vld [vmem:[%s1 + $0x5f0] sm:$0xff]
  %v541 = vld [vmem:[%s1 + $0x5f8] sm:$0xff]
  %v542 = vld [vmem:[%s1 + $0x600] sm:$0xff]
  %v543 = vld [vmem:[%s1 + $0x608] sm:$0xff]
  %v544 = vld [vmem:[%s1 + $0x610] sm:$0xff]
  %v545 = vld [vmem:[%s1 + $0x618] sm:$0xff]
  %v546 = vld [vmem:[%s1 + $0x620] sm:$0xff]
  %v547 = vld [vmem:[%s1 + $0x628] sm:$0xff]
  %v548 = vld [vmem:[%s1 + $0x630] sm:$0xff]
  %v549 = vld [vmem:[%s1 + $0x638] sm:$0xff]
  %v550 = vld [vmem:[%s1 + $0x640] sm:$0xff]
  %v551 = vld [vmem:[%s1 + $0x648] sm:$0xff]
  %v552 = vld [vmem:[%s1 + $0x650] sm:$0xff]
  %v553 = vld [vmem:[%s1 + $0x658] sm:$0xff]
  %v554 = vld [vmem:[%s1 + $0x660] sm:$0xff]
  %v555 = vld [vmem:[%s1 + $0x668] sm:$0xff]
  %v556 = vld [vmem:[%s1 + $0x670] sm:$0xff]
  %v557 = vld [vmem:[%s1 + $0x678] sm:$0xff]
  %v558 = vld [vmem:[%s1 + $0x680] sm:$0xff]
  %v559 = vld [vmem:[%s1 + $0x688] sm:$0xff]
  %v560 = vld [vmem:[%s1 + $0x690] sm:$0xff]
  %v561 = vld [vmem:[%s1 + $0x698] sm:$0xff]
  %v562 = vld [vmem:[%s1 + $0x6a0] sm:$0xff]
  %v563 = vld [vmem:[%s1 + $0x6a8] sm:$0xff]
  %v564 = vld [vmem:[%s1 + $0x6b0] sm:$0xff]
  %v565 = vld [vmem:[%s1 + $0x6b8] sm:$0xff]
  %v566 = vld [vmem:[%s1 + $0x6c0] sm:$0xff]
  %v567 = vld [vmem:[%s1 + $0x6c8] sm:$0xff]
  %v568 = vld [vmem:[%s1 + $0x6d0] sm:$0xff]
  %v569 = vld [vmem:[%s1 + $0x6d8] sm:$0xff]
  %v570 = vld [vmem:[%s1 + $0x6e0] sm:$0xff]
  %v571 = vld [vmem:[%s1 + $0x6e8] sm:$0xff]
  %v572 = vld [vmem:[%s1 + $0x6f0] sm:$0xff]
  %v573 = vld [vmem:[%s1 + $0x6f8] sm:$0xff]
  %v574 = vld [vmem:[%s1 + $0x700] sm:$0xff]
  %v575 = vld [vmem:[%s1 + $0x708] sm:$0xff]
  %v576 = vld [vmem:[%s1 + $0x710] sm:$0xff]
  %v577 = vld [vmem:[%s1 + $0x718] sm:$0xff]
  %v578 = vld [vmem:[%s1 + $0x720] sm:$0xff]
  %v579 = vld [vmem:[%s1 + $0x728] sm:$0xff]
  %v580 = vld [vmem:[%s1 + $0x730] sm:$0xff]
  %v581 = vld [vmem:[%s1 + $0x738] sm:$0xff]
  %v582 = vld [vmem:[%s1 + $0x740] sm:$0xff]
  %v583 = vld [vmem:[%s1 + $0x748] sm:$0xff]
  %v584 = vld [vmem:[%s1 + $0x750] sm:$0xff]
  %v585 = vld [vmem:[%s1 + $0x758] sm:$0xff]
  %v586 = vld [vmem:[%s1 + $0x760] sm:$0xff]
  %v587 = vld [vmem:[%s1 + $0x768] sm:$0xff]
  %v588 = vld [vmem:[%s1 + $0x770] sm:$0xff]
  %v589 = vld [vmem:[%s1 + $0x778] sm:$0xff]
  %v590 = vld [vmem:[%s1 + $0x780] sm:$0xff]
  %v591 = vld [vmem:[%s1 + $0x788] sm:$0xff]
  %v592 = vld [vmem:[%s1 + $0x790] sm:$0xff]
  %v593 = vld [vmem:[%s1 + $0x798] sm:$0xff]
  %v594 = vld [vmem:[%s1 + $0x7a0] sm:$0xff]
  %v595 = vld [vmem:[%s1 + $0x7a8] sm:$0xff]
  %v596 = vld [vmem:[%s1 + $0x7b0] sm:$0xff]
  %v597 = vld [vmem:[%s1 + $0x7b8] sm:$0xff]
  %v598 = vld [vmem:[%s1 + $0x7c0] sm:$0xff]
  %v599 = vld [vmem:[%s1 + $0x7c8] sm:$0xff]
  %v600 = vld [vmem:[%s1 + $0x7d0] sm:$0xff]
  %v601 = vld [vmem:[%s1 + $0x7d8] sm:$0xff]
  %v602 = vld [vmem:[%s1 + $0x7e0] sm:$0xff]
  %v603 = vld [vmem:[%s1 + $0x7e8] sm:$0xff]
  %v604 = vld [vmem:[%s1 + $0x7f0] sm:$0xff]
  %v605 = vld [vmem:[%s1 + $0x7f8] sm:$0xff]
  %v606 = vld [vmem:[%s2] sm:$0x1]
  %v608 = vlaneseq
  %v609 = vshrl.u32 %v608, 7
  %v610 = vsub.s32 0, %v609
  %v611 = vrot.slane %v606, %v610
  %613 = vmatprep.subr.mxu0 0.0
  %614 = vmatpush1.msra.mxu0 %v350
  %615 = vmatprep.subr.mxu0 0.0
  %616 = vmatpush1.msra.mxu0 %v351
  %617 = vmatprep.subr.mxu0 0.0
  %618 = vmatpush1.msra.mxu0 %v352
  %619 = vmatprep.subr.mxu0 0.0
  %620 = vmatpush1.msra.mxu0 %v353
  %621 = vmatprep.subr.mxu0 0.0
  %622 = vmatpush1.msra.mxu0 %v354
  %623 = vmatprep.subr.mxu0 0.0
  %624 = vmatpush1.msra.mxu0 %v355
  %625 = vmatprep.subr.mxu0 0.0
  %626 = vmatpush1.msra.mxu0 %v356
  %627 = vmatprep.subr.mxu0 0.0
  %628 = vmatpush1.msra.mxu0 %v357
  %629 = vmatprep.subr.mxu0 0.0
  %630 = vmatpush1.msra.mxu0 %v358
  %631 = vmatprep.subr.mxu0 0.0
  %632 = vmatpush1.msra.mxu0 %v359
  %633 = vmatprep.subr.mxu0 0.0
  %634 = vmatpush1.msra.mxu0 %v360
  %635 = vmatprep.subr.mxu0 0.0
  %636 = vmatpush1.msra.mxu0 %v361
  %637 = vmatprep.subr.mxu0 0.0
  %638 = vmatpush1.msra.mxu0 %v362
  %639 = vmatprep.subr.mxu0 0.0
  %640 = vmatpush1.msra.mxu0 %v363
  %641 = vmatprep.subr.mxu0 0.0
  %642 = vmatpush1.msra.mxu0 %v364
  %643 = vmatprep.subr.mxu0 0.0
  %644 = vmatpush1.msra.mxu0 %v365
  %645 = vmatprep.subr.mxu0 0.0
  %646 = vmatpush1.msra.mxu0 %v366
  %647 = vmatprep.subr.mxu0 0.0
  %648 = vmatpush1.msra.mxu0 %v367
  %649 = vmatprep.subr.mxu0 0.0
  %650 = vmatpush1.msra.mxu0 %v368
  %651 = vmatprep.subr.mxu0 0.0
  %652 = vmatpush1.msra.mxu0 %v369
  %653 = vmatprep.subr.mxu0 0.0
  %654 = vmatpush1.msra.mxu0 %v370
  %655 = vmatprep.subr.mxu0 0.0
  %656 = vmatpush1.msra.mxu0 %v371
  %657 = vmatprep.subr.mxu0 0.0
  %658 = vmatpush1.msra.mxu0 %v372
  %659 = vmatprep.subr.mxu0 0.0
  %660 = vmatpush1.msra.mxu0 %v373
  %661 = vmatprep.subr.mxu0 0.0
  %662 = vmatpush1.msra.mxu0 %v374
  %663 = vmatprep.subr.mxu0 0.0
  %664 = vmatpush1.msra.mxu0 %v375
  %665 = vmatprep.subr.mxu0 0.0
  %666 = vmatpush1.msra.mxu0 %v376
  %667 = vmatprep.subr.mxu0 0.0
  %668 = vmatpush1.msra.mxu0 %v377
  %669 = vmatprep.subr.mxu0 0.0
  %670 = vmatpush1.msra.mxu0 %v378
  %671 = vmatprep.subr.mxu0 0.0
  %672 = vmatpush1.msra.mxu0 %v379
  %673 = vmatprep.subr.mxu0 0.0
  %674 = vmatpush1.msra.mxu0 %v380
  %675 = vmatprep.subr.mxu0 0.0
  %676 = vmatpush1.msra.mxu0 %v381
  %677 = vmatprep.mubr.f32.mxu0 %v15
  %678 = vmatmul.mubr.f32.gmra.mrb[0].mxu0 %v14
  %v679 = vpop.f32.mrb[0].mxu0
  %v680 = vadd.f32 %v611, %v679
  %v681 = vpop.f32.mrb[0].mxu0
  %682 = vmatprep.mubr.f32.mxu0 %v31
  %683 = vmatmul.mubr.f32.gmra.mrb[0].mxu0 %v30
  %v684 = vpop.f32.mrb[0].mxu0
  %v685 = vadd.f32 %v611, %v684
  %v686 = vpop.f32.mrb[0].mxu0
  %687 = vmatprep.mubr.f32.mxu0 %v47
  %688 = vmatmul.mubr.f32.gmra.mrb[0].mxu0 %v46
  %v689 = vpop.f32.mrb[0].mxu0
  %v690 = vadd.f32 %v611, %v689
  %v691 = vpop.f32.mrb[0].mxu0
  %692 = vmatprep.mubr.f32.mxu0 %v63
  %693 = vmatmul.mubr.f32.gmra.mrb[0].mxu0 %v62
  %v694 = vpop.f32.mrb[0].mxu0
  %v695 = vadd.f32 %v611, %v694
  %v696 = vpop.f32.mrb[0].mxu0
  %697 = vmatprep.mubr.f32.mxu0 %v79
  %698 = vmatmul.mubr.f32.gmra.mrb[0].mxu0 %v78
  %v699 = vpop.f32.mrb[0].mxu0
  %v700 = vadd.f32 %v611, %v699
  %v701 = vpop.f32.mrb[0].mxu0
  %702 = vmatprep.mubr.f32.mxu0 %v95
  %703 = vmatmul.mubr.f32.gmra.mrb[0].mxu0 %v94
  %v704 = vpop.f32.mrb[0].mxu0
  %v705 = vadd.f32 %v611, %v704
  %v706 = vpop.f32.mrb[0].mxu0
  %707 = vmatprep.mubr.f32.mxu0 %v111
  %708 = vmatmul.mubr.f32.gmra.mrb[0].mxu0 %v110
  %v709 = vpop.f32.mrb[0].mxu0
  %v710 = vadd.f32 %v611, %v709
  %v711 = vpop.f32.mrb[0].mxu0
  %712 = vmatprep.mubr.f32.mxu0 %v127
  %713 = vmatmul.mubr.f32.gmra.mrb[0].mxu0 %v126
  %v714 = vpop.f32.mrb[0].mxu0
  %v715 = vadd.f32 %v611, %v714
  %v716 = vpop.f32.mrb[0].mxu0
  %717 = vmatprep.mubr.f32.mxu0 %v143
  %718 = vmatmul.mubr.f32.gmra.mrb[0].mxu0 %v142
  %v719 = vpop.f32.mrb[0].mxu0
  %v720 = vadd.f32 %v611, %v719
  %v721 = vpop.f32.mrb[0].mxu0
  %722 = vmatprep.mubr.f32.mxu0 %v159
  %723 = vmatmul.mubr.f32.gmra.mrb[0].mxu0 %v158
  %v724 = vpop.f32.mrb[0].mxu0
  %v725 = vadd.f32 %v611, %v724
  %v726 = vpop.f32.mrb[0].mxu0
  %727 = vmatprep.mubr.f32.mxu0 %v175
  %728 = vmatmul.mubr.f32.gmra.mrb[0].mxu0 %v174
  %v729 = vpop.f32.mrb[0].mxu0
  %v730 = vadd.f32 %v611, %v729
  %v731 = vpop.f32.mrb[0].mxu0
  %732 = vmatprep.mubr.f32.mxu0 %v191
  %733 = vmatmul.mubr.f32.gmra.mrb[0].mxu0 %v190
  %v734 = vpop.f32.mrb[0].mxu0
  %v735 = vadd.f32 %v611, %v734
  %v736 = vpop.f32.mrb[0].mxu0
  %737 = vmatprep.mubr.f32.mxu0 %v207
  %738 = vmatmul.mubr.f32.gmra.mrb[0].mxu0 %v206
  %v739 = vpop.f32.mrb[0].mxu0
  %v740 = vadd.f32 %v611, %v739
  %v741 = vpop.f32.mrb[0].mxu0
  %742 = vmatprep.mubr.f32.mxu0 %v223
  %743 = vmatmul.mubr.f32.gmra.mrb[0].mxu0 %v222
  %v744 = vpop.f32.mrb[0].mxu0
  %v745 = vadd.f32 %v611, %v744
  %v746 = vpop.f32.mrb[0].mxu0
  %747 = vmatprep.mubr.f32.mxu0 %v239
  %748 = vmatmul.mubr.f32.gmra.mrb[0].mxu0 %v238
  %v749 = vpop.f32.mrb[0].mxu0
  %v750 = vadd.f32 %v611, %v749
  %v751 = vpop.f32.mrb[0].mxu0
  %752 = vmatprep.mubr.f32.mxu0 %v255
  %753 = vmatmul.mubr.f32.gmra.mrb[0].mxu0 %v254
  %v754 = vpop.f32.mrb[0].mxu0
  %v755 = vadd.f32 %v611, %v754
  %v756 = vpop.f32.mrb[0].mxu0
  %757 = vmatprep.mubr.f32.mxu0 %v271
  %758 = vmatmul.mubr.f32.gmra.mrb[0].mxu0 %v270
  %v759 = vpop.f32.mrb[0].mxu0
  %v760 = vadd.f32 %v611, %v759
  %v761 = vpop.f32.mrb[0].mxu0
  %762 = vmatprep.mubr.f32.mxu0 %v287
  %763 = vmatmul.mubr.f32.gmra.mrb[0].mxu0 %v286
  %v764 = vpop.f32.mrb[0].mxu0
  %v765 = vadd.f32 %v611, %v764
  %v766 = vpop.f32.mrb[0].mxu0
  %767 = vmatprep.mubr.f32.mxu0 %v303
  %768 = vmatmul.mubr.f32.gmra.mrb[0].mxu0 %v302
  %v769 = vpop.f32.mrb[0].mxu0
  %v770 = vadd.f32 %v611, %v769
  %v771 = vpop.f32.mrb[0].mxu0
  %772 = vmatprep.mubr.f32.mxu0 %v319
  %773 = vmatmul.mubr.f32.gmra.mrb[0].mxu0 %v318
  %v774 = vpop.f32.mrb[0].mxu0
  %v775 = vadd.f32 %v611, %v774
  %v776 = vpop.f32.mrb[0].mxu0
  %777 = vmatprep.mubr.f32.mxu0 %v335
  %778 = vmatmul.mubr.f32.gmra.mrb[0].mxu0 %v334
  %v779 = vpop.f32.mrb[0].mxu0
  %v780 = vadd.f32 %v611, %v779
  %v781 = vpop.f32.mrb[0].mxu0
  %782 = vdwg.mxu0
  %783 = vmatprep.subr.mxu0 0.0
  %784 = vmatpush1.msra.mxu0 %v382
  %785 = vmatprep.subr.mxu0 0.0
  %786 = vmatpush1.msra.mxu0 %v383
  %787 = vmatprep.subr.mxu0 0.0
  %788 = vmatpush1.msra.mxu0 %v384
  %789 = vmatprep.subr.mxu0 0.0
  %790 = vmatpush1.msra.mxu0 %v385
  %791 = vmatprep.subr.mxu0 0.0
  %792 = vmatpush1.msra.mxu0 %v386
  %793 = vmatprep.subr.mxu0 0.0
  %794 = vmatpush1.msra.mxu0 %v387
  %795 = vmatprep.subr.mxu0 0.0
  %796 = vmatpush1.msra.mxu0 %v388
  %797 = vmatprep.subr.mxu0 0.0
  %798 = vmatpush1.msra.mxu0 %v389
  %799 = vmatprep.subr.mxu0 0.0
  %800 = vmatpush1.msra.mxu0 %v390
  %801 = vmatprep.subr.mxu0 0.0
  %802 = vmatpush1.msra.mxu0 %v391
  %803 = vmatprep.subr.mxu0 0.0
  %804 = vmatpush1.msra.mxu0 %v392
  %805 = vmatprep.subr.mxu0 0.0
  %806 = vmatpush1.msra.mxu0 %v393
  %807 = vmatprep.subr.mxu0 0.0
  %808 = vmatpush1.msra.mxu0 %v394
  %809 = vmatprep.subr.mxu0 0.0
  %810 = vmatpush1.msra.mxu0 %v395
  %811 = vmatprep.subr.mxu0 0.0
  %812 = vmatpush1.msra.mxu0 %v396
  %813 = vmatprep.subr.mxu0 0.0
  %814 = vmatpush1.msra.mxu0 %v397
  %815 = vmatprep.subr.mxu0 0.0
  %816 = vmatpush1.msra.mxu0 %v398
  %817 = vmatprep.subr.mxu0 0.0
  %818 = vmatpush1.msra.mxu0 %v399
  %819 = vmatprep.subr.mxu0 0.0
  %820 = vmatpush1.msra.mxu0 %v400
  %821 = vmatprep.subr.mxu0 0.0
  %822 = vmatpush1.msra.mxu0 %v401
  %823 = vmatprep.subr.mxu0 0.0
  %824 = vmatpush1.msra.mxu0 %v402
  %825 = vmatprep.subr.mxu0 0.0
  %826 = vmatpush1.msra.mxu0 %v403
  %827 = vmatprep.subr.mxu0 0.0
  %828 = vmatpush1.msra.mxu0 %v404
  %829 = vmatprep.subr.mxu0 0.0
  %830 = vmatpush1.msra.mxu0 %v405
  %831 = vmatprep.subr.mxu0 0.0
  %832 = vmatpush1.msra.mxu0 %v406
  %833 = vmatprep.subr.mxu0 0.0
  %834 = vmatpush1.msra.mxu0 %v407
  %835 = vmatprep.subr.mxu0 0.0
  %836 = vmatpush1.msra.mxu0 %v408
  %837 = vmatprep.subr.mxu0 0.0
  %838 = vmatpush1.msra.mxu0 %v409
  %839 = vmatprep.subr.mxu0 0.0
  %840 = vmatpush1.msra.mxu0 %v410
  %841 = vmatprep.subr.mxu0 0.0
  %842 = vmatpush1.msra.mxu0 %v411
  %843 = vmatprep.subr.mxu0 0.0
  %844 = vmatpush1.msra.mxu0 %v412
  %845 = vmatprep.subr.mxu0 0.0
  %846 = vmatpush1.msra.mxu0 %v413
  %847 = vmatprep.mubr.f32.mxu0 %v17
  %848 = vmatmul.mubr.f32.gmra.mrb[0].mxu0 %v16
  %v849 = vpop.f32.mrb[0].mxu0
  %v850 = vadd.f32 %v680, %v849
  %v851 = vpop.f32.mrb[0].mxu0
  %852 = vmatprep.mubr.f32.mxu0 %v33
  %853 = vmatmul.mubr.f32.gmra.mrb[0].mxu0 %v32
  %v854 = vpop.f32.mrb[0].mxu0
  %v855 = vadd.f32 %v685, %v854
  %v856 = vpop.f32.mrb[0].mxu0
  %857 = vmatprep.mubr.f32.mxu0 %v49
  %858 = vmatmul.mubr.f32.gmra.mrb[0].mxu0 %v48
  %v859 = vpop.f32.mrb[0].mxu0
  %v860 = vadd.f32 %v690, %v859
  %v861 = vpop.f32.mrb[0].mxu0
  %862 = vmatprep.mubr.f32.mxu0 %v65
  %863 = vmatmul.mubr.f32.gmra.mrb[0].mxu0 %v64
  %v864 = vpop.f32.mrb[0].mxu0
  %v865 = vadd.f32 %v695, %v864
  %v866 = vpop.f32.mrb[0].mxu0
  %867 = vmatprep.mubr.f32.mxu0 %v81
  %868 = vmatmul.mubr.f32.gmra.mrb[0].mxu0 %v80
  %v869 = vpop.f32.mrb[0].mxu0
  %v870 = vadd.f32 %v700, %v869
  %v871 = vpop.f32.mrb[0].mxu0
  %872 = vmatprep.mubr.f32.mxu0 %v97
  %873 = vmatmul.mubr.f32.gmra.mrb[0].mxu0 %v96
  %v874 = vpop.f32.mrb[0].mxu0
  %v875 = vadd.f32 %v705, %v874
  %v876 = vpop.f32.mrb[0].mxu0
  %877 = vmatprep.mubr.f32.mxu0 %v113
  %878 = vmatmul.mubr.f32.gmra.mrb[0].mxu0 %v112
  %v879 = vpop.f32.mrb[0].mxu0
  %v880 = vadd.f32 %v710, %v879
  %v881 = vpop.f32.mrb[0].mxu0
  %882 = vmatprep.mubr.f32.mxu0 %v129
  %883 = vmatmul.mubr.f32.gmra.mrb[0].mxu0 %v128
  %v884 = vpop.f32.mrb[0].mxu0
  %v885 = vadd.f32 %v715, %v884
  %v886 = vpop.f32.mrb[0].mxu0
  %887 = vmatprep.mubr.f32.mxu0 %v145
  %888 = vmatmul.mubr.f32.gmra.mrb[0].mxu0 %v144
  %v889 = vpop.f32.mrb[0].mxu0
  %v890 = vadd.f32 %v720, %v889
  %v891 = vpop.f32.mrb[0].mxu0
  %892 = vmatprep.mubr.f32.mxu0 %v161
  %893 = vmatmul.mubr.f32.gmra.mrb[0].mxu0 %v160
  %v894 = vpop.f32.mrb[0].mxu0
  %v895 = vadd.f32 %v725, %v894
  %v896 = vpop.f32.mrb[0].mxu0
  %897 = vmatprep.mubr.f32.mxu0 %v177
  %898 = vmatmul.mubr.f32.gmra.mrb[0].mxu0 %v176
  %v899 = vpop.f32.mrb[0].mxu0
  %v900 = vadd.f32 %v730, %v899
  %v901 = vpop.f32.mrb[0].mxu0
  %902 = vmatprep.mubr.f32.mxu0 %v193
  %903 = vmatmul.mubr.f32.gmra.mrb[0].mxu0 %v192
  %v904 = vpop.f32.mrb[0].mxu0
  %v905 = vadd.f32 %v735, %v904
  %v906 = vpop.f32.mrb[0].mxu0
  %907 = vmatprep.mubr.f32.mxu0 %v209
  %908 = vmatmul.mubr.f32.gmra.mrb[0].mxu0 %v208
  %v909 = vpop.f32.mrb[0].mxu0
  %v910 = vadd.f32 %v740, %v909
  %v911 = vpop.f32.mrb[0].mxu0
  %912 = vmatprep.mubr.f32.mxu0 %v225
  %913 = vmatmul.mubr.f32.gmra.mrb[0].mxu0 %v224
  %v914 = vpop.f32.mrb[0].mxu0
  %v915 = vadd.f32 %v745, %v914
  %v916 = vpop.f32.mrb[0].mxu0
  %917 = vmatprep.mubr.f32.mxu0 %v241
  %918 = vmatmul.mubr.f32.gmra.mrb[0].mxu0 %v240
  %v919 = vpop.f32.mrb[0].mxu0
  %v920 = vadd.f32 %v750, %v919
  %v921 = vpop.f32.mrb[0].mxu0
  %922 = vmatprep.mubr.f32.mxu0 %v257
  %923 = vmatmul.mubr.f32.gmra.mrb[0].mxu0 %v256
  %v924 = vpop.f32.mrb[0].mxu0
  %v925 = vadd.f32 %v755, %v924
  %v926 = vpop.f32.mrb[0].mxu0
  %927 = vmatprep.mubr.f32.mxu0 %v273
  %928 = vmatmul.mubr.f32.gmra.mrb[0].mxu0 %v272
  %v929 = vpop.f32.mrb[0].mxu0
  %v930 = vadd.f32 %v760, %v929
  %v931 = vpop.f32.mrb[0].mxu0
  %932 = vmatprep.mubr.f32.mxu0 %v289
  %933 = vmatmul.mubr.f32.gmra.mrb[0].mxu0 %v288
  %v934 = vpop.f32.mrb[0].mxu0
  %v935 = vadd.f32 %v765, %v934
  %v936 = vpop.f32.mrb[0].mxu0
  %937 = vmatprep.mubr.f32.mxu0 %v305
  %938 = vmatmul.mubr.f32.gmra.mrb[0].mxu0 %v304
  %v939 = vpop.f32.mrb[0].mxu0
  %v940 = vadd.f32 %v770, %v939
  %v941 = vpop.f32.mrb[0].mxu0
  %942 = vmatprep.mubr.f32.mxu0 %v321
  %943 = vmatmul.mubr.f32.gmra.mrb[0].mxu0 %v320
  %v944 = vpop.f32.mrb[0].mxu0
  %v945 = vadd.f32 %v775, %v944
  %v946 = vpop.f32.mrb[0].mxu0
  %947 = vmatprep.mubr.f32.mxu0 %v337
  %948 = vmatmul.mubr.f32.gmra.mrb[0].mxu0 %v336
  %v949 = vpop.f32.mrb[0].mxu0
  %v950 = vadd.f32 %v780, %v949
  %v951 = vpop.f32.mrb[0].mxu0
  %952 = vdwg.mxu0
  %953 = vmatprep.subr.mxu0 0.0
  %954 = vmatpush1.msra.mxu0 %v414
  %955 = vmatprep.subr.mxu0 0.0
  %956 = vmatpush1.msra.mxu0 %v415
  %957 = vmatprep.subr.mxu0 0.0
  %958 = vmatpush1.msra.mxu0 %v416
  %959 = vmatprep.subr.mxu0 0.0
  %960 = vmatpush1.msra.mxu0 %v417
  %961 = vmatprep.subr.mxu0 0.0
  %962 = vmatpush1.msra.mxu0 %v418
  %963 = vmatprep.subr.mxu0 0.0
  %964 = vmatpush1.msra.mxu0 %v419
  %965 = vmatprep.subr.mxu0 0.0
  %966 = vmatpush1.msra.mxu0 %v420
  %967 = vmatprep.subr.mxu0 0.0
  %968 = vmatpush1.msra.mxu0 %v421
  %969 = vmatprep.subr.mxu0 0.0
  %970 = vmatpush1.msra.mxu0 %v422
  %971 = vmatprep.subr.mxu0 0.0
  %972 = vmatpush1.msra.mxu0 %v423
  %973 = vmatprep.subr.mxu0 0.0
  %974 = vmatpush1.msra.mxu0 %v424
  %975 = vmatprep.subr.mxu0 0.0
  %976 = vmatpush1.msra.mxu0 %v425
  %977 = vmatprep.subr.mxu0 0.0
  %978 = vmatpush1.msra.mxu0 %v426
  %979 = vmatprep.subr.mxu0 0.0
  %980 = vmatpush1.msra.mxu0 %v427
  %981 = vmatprep.subr.mxu0 0.0
  %982 = vmatpush1.msra.mxu0 %v428
  %983 = vmatprep.subr.mxu0 0.0
  %984 = vmatpush1.msra.mxu0 %v429
  %985 = vmatprep.subr.mxu0 0.0
  %986 = vmatpush1.msra.mxu0 %v430
  %987 = vmatprep.subr.mxu0 0.0
  %988 = vmatpush1.msra.mxu0 %v431
  %989 = vmatprep.subr.mxu0 0.0
  %990 = vmatpush1.msra.mxu0 %v432
  %991 = vmatprep.subr.mxu0 0.0
  %992 = vmatpush1.msra.mxu0 %v433
  %993 = vmatprep.subr.mxu0 0.0
  %994 = vmatpush1.msra.mxu0 %v434
  %995 = vmatprep.subr.mxu0 0.0
  %996 = vmatpush1.msra.mxu0 %v435
  %997 = vmatprep.subr.mxu0 0.0
  %998 = vmatpush1.msra.mxu0 %v436
  %999 = vmatprep.subr.mxu0 0.0
  %1000 = vmatpush1.msra.mxu0 %v437
  %1001 = vmatprep.subr.mxu0 0.0
  %1002 = vmatpush1.msra.mxu0 %v438
  %1003 = vmatprep.subr.mxu0 0.0
  %1004 = vmatpush1.msra.mxu0 %v439
  %1005 = vmatprep.subr.mxu0 0.0
  %1006 = vmatpush1.msra.mxu0 %v440
  %1007 = vmatprep.subr.mxu0 0.0
  %1008 = vmatpush1.msra.mxu0 %v441
  %1009 = vmatprep.subr.mxu0 0.0
  %1010 = vmatpush1.msra.mxu0 %v442
  %1011 = vmatprep.subr.mxu0 0.0
  %1012 = vmatpush1.msra.mxu0 %v443
  %1013 = vmatprep.subr.mxu0 0.0
  %1014 = vmatpush1.msra.mxu0 %v444
  %1015 = vmatprep.subr.mxu0 0.0
  %1016 = vmatpush1.msra.mxu0 %v445
  %1017 = vmatprep.mubr.f32.mxu0 %v19
  %1018 = vmatmul.mubr.f32.gmra.mrb[0].mxu0 %v18
  %v1019 = vpop.f32.mrb[0].mxu0
  %v1020 = vadd.f32 %v850, %v1019
  %v1021 = vpop.f32.mrb[0].mxu0
  %1022 = vmatprep.mubr.f32.mxu0 %v35
  %1023 = vmatmul.mubr.f32.gmra.mrb[0].mxu0 %v34
  %v1024 = vpop.f32.mrb[0].mxu0
  %v1025 = vadd.f32 %v855, %v1024
  %v1026 = vpop.f32.mrb[0].mxu0
  %1027 = vmatprep.mubr.f32.mxu0 %v51
  %1028 = vmatmul.mubr.f32.gmra.mrb[0].mxu0 %v50
  %v1029 = vpop.f32.mrb[0].mxu0
  %v1030 = vadd.f32 %v860, %v1029
  %v1031 = vpop.f32.mrb[0].mxu0
  %1032 = vmatprep.mubr.f32.mxu0 %v67
  %1033 = vmatmul.mubr.f32.gmra.mrb[0].mxu0 %v66
  %v1034 = vpop.f32.mrb[0].mxu0
  %v1035 = vadd.f32 %v865, %v1034
  %v1036 = vpop.f32.mrb[0].mxu0
  %1037 = vmatprep.mubr.f32.mxu0 %v83
  %1038 = vmatmul.mubr.f32.gmra.mrb[0].mxu0 %v82
  %v1039 = vpop.f32.mrb[0].mxu0
  %v1040 = vadd.f32 %v870, %v1039
  %v1041 = vpop.f32.mrb[0].mxu0
  %1042 = vmatprep.mubr.f32.mxu0 %v99
  %1043 = vmatmul.mubr.f32.gmra.mrb[0].mxu0 %v98
  %v1044 = vpop.f32.mrb[0].mxu0
  %v1045 = vadd.f32 %v875, %v1044
  %v1046 = vpop.f32.mrb[0].mxu0
  %1047 = vmatprep.mubr.f32.mxu0 %v115
  %1048 = vmatmul.mubr.f32.gmra.mrb[0].mxu0 %v114
  %v1049 = vpop.f32.mrb[0].mxu0
  %v1050 = vadd.f32 %v880, %v1049
  %v1051 = vpop.f32.mrb[0].mxu0
  %1052 = vmatprep.mubr.f32.mxu0 %v131
  %1053 = vmatmul.mubr.f32.gmra.mrb[0].mxu0 %v130
  %v1054 = vpop.f32.mrb[0].mxu0
  %v1055 = vadd.f32 %v885, %v1054
  %v1056 = vpop.f32.mrb[0].mxu0
  %1057 = vmatprep.mubr.f32.mxu0 %v147
  %1058 = vmatmul.mubr.f32.gmra.mrb[0].mxu0 %v146
  %v1059 = vpop.f32.mrb[0].mxu0
  %v1060 = vadd.f32 %v890, %v1059
  %v1061 = vpop.f32.mrb[0].mxu0
  %1062 = vmatprep.mubr.f32.mxu0 %v163
  %1063 = vmatmul.mubr.f32.gmra.mrb[0].mxu0 %v162
  %v1064 = vpop.f32.mrb[0].mxu0
  %v1065 = vadd.f32 %v895, %v1064
  %v1066 = vpop.f32.mrb[0].mxu0
  %1067 = vmatprep.mubr.f32.mxu0 %v179
  %1068 = vmatmul.mubr.f32.gmra.mrb[0].mxu0 %v178
  %v1069 = vpop.f32.mrb[0].mxu0
  %v1070 = vadd.f32 %v900, %v1069
  %v1071 = vpop.f32.mrb[0].mxu0
  %1072 = vmatprep.mubr.f32.mxu0 %v195
  %1073 = vmatmul.mubr.f32.gmra.mrb[0].mxu0 %v194
  %v1074 = vpop.f32.mrb[0].mxu0
  %v1075 = vadd.f32 %v905, %v1074
  %v1076 = vpop.f32.mrb[0].mxu0
  %1077 = vmatprep.mubr.f32.mxu0 %v211
  %1078 = vmatmul.mubr.f32.gmra.mrb[0].mxu0 %v210
  %v1079 = vpop.f32.mrb[0].mxu0
  %v1080 = vadd.f32 %v910, %v1079
  %v1081 = vpop.f32.mrb[0].mxu0
  %1082 = vmatprep.mubr.f32.mxu0 %v227
  %1083 = vmatmul.mubr.f32.gmra.mrb[0].mxu0 %v226
  %v1084 = vpop.f32.mrb[0].mxu0
  %v1085 = vadd.f32 %v915, %v1084
  %v1086 = vpop.f32.mrb[0].mxu0
  %1087 = vmatprep.mubr.f32.mxu0 %v243
  %1088 = vmatmul.mubr.f32.gmra.mrb[0].mxu0 %v242
  %v1089 = vpop.f32.mrb[0].mxu0
  %v1090 = vadd.f32 %v920, %v1089
  %v1091 = vpop.f32.mrb[0].mxu0
  %1092 = vmatprep.mubr.f32.mxu0 %v259
  %1093 = vmatmul.mubr.f32.gmra.mrb[0].mxu0 %v258
  %v1094 = vpop.f32.mrb[0].mxu0
  %v1095 = vadd.f32 %v925, %v1094
  %v1096 = vpop.f32.mrb[0].mxu0
  %1097 = vmatprep.mubr.f32.mxu0 %v275
  %1098 = vmatmul.mubr.f32.gmra.mrb[0].mxu0 %v274
  %v1099 = vpop.f32.mrb[0].mxu0
  %v1100 = vadd.f32 %v930, %v1099
  %v1101 = vpop.f32.mrb[0].mxu0
  %1102 = vmatprep.mubr.f32.mxu0 %v291
  %1103 = vmatmul.mubr.f32.gmra.mrb[0].mxu0 %v290
  %v1104 = vpop.f32.mrb[0].mxu0
  %v1105 = vadd.f32 %v935, %v1104
  %v1106 = vpop.f32.mrb[0].mxu0
  %1107 = vmatprep.mubr.f32.mxu0 %v307
  %1108 = vmatmul.mubr.f32.gmra.mrb[0].mxu0 %v306
  %v1109 = vpop.f32.mrb[0].mxu0
  %v1110 = vadd.f32 %v940, %v1109
  %v1111 = vpop.f32.mrb[0].mxu0
  %1112 = vmatprep.mubr.f32.mxu0 %v323
  %1113 = vmatmul.mubr.f32.gmra.mrb[0].mxu0 %v322
  %v1114 = vpop.f32.mrb[0].mxu0
  %v1115 = vadd.f32 %v945, %v1114
  %v1116 = vpop.f32.mrb[0].mxu0
  %1117 = vmatprep.mubr.f32.mxu0 %v339
  %1118 = vmatmul.mubr.f32.gmra.mrb[0].mxu0 %v338
  %v1119 = vpop.f32.mrb[0].mxu0
  %v1120 = vadd.f32 %v950, %v1119
  %v1121 = vpop.f32.mrb[0].mxu0
  %1122 = vdwg.mxu0
  %1123 = vmatprep.subr.mxu0 0.0
  %1124 = vmatpush1.msra.mxu0 %v446
  %1125 = vmatprep.subr.mxu0 0.0
  %1126 = vmatpush1.msra.mxu0 %v447
  %1127 = vmatprep.subr.mxu0 0.0
  %1128 = vmatpush1.msra.mxu0 %v448
  %1129 = vmatprep.subr.mxu0 0.0
  %1130 = vmatpush1.msra.mxu0 %v449
  %1131 = vmatprep.subr.mxu0 0.0
  %1132 = vmatpush1.msra.mxu0 %v450
  %1133 = vmatprep.subr.mxu0 0.0
  %1134 = vmatpush1.msra.mxu0 %v451
  %1135 = vmatprep.subr.mxu0 0.0
  %1136 = vmatpush1.msra.mxu0 %v452
  %1137 = vmatprep.subr.mxu0 0.0
  %1138 = vmatpush1.msra.mxu0 %v453
  %1139 = vmatprep.subr.mxu0 0.0
  %1140 = vmatpush1.msra.mxu0 %v454
  %1141 = vmatprep.subr.mxu0 0.0
  %1142 = vmatpush1.msra.mxu0 %v455
  %1143 = vmatprep.subr.mxu0 0.0
  %1144 = vmatpush1.msra.mxu0 %v456
  %1145 = vmatprep.subr.mxu0 0.0
  %1146 = vmatpush1.msra.mxu0 %v457
  %1147 = vmatprep.subr.mxu0 0.0
  %1148 = vmatpush1.msra.mxu0 %v458
  %1149 = vmatprep.subr.mxu0 0.0
  %1150 = vmatpush1.msra.mxu0 %v459
  %1151 = vmatprep.subr.mxu0 0.0
  %1152 = vmatpush1.msra.mxu0 %v460
  %1153 = vmatprep.subr.mxu0 0.0
  %1154 = vmatpush1.msra.mxu0 %v461
  %1155 = vmatprep.subr.mxu0 0.0
  %1156 = vmatpush1.msra.mxu0 %v462
  %1157 = vmatprep.subr.mxu0 0.0
  %1158 = vmatpush1.msra.mxu0 %v463
  %1159 = vmatprep.subr.mxu0 0.0
  %1160 = vmatpush1.msra.mxu0 %v464
  %1161 = vmatprep.subr.mxu0 0.0
  %1162 = vmatpush1.msra.mxu0 %v465
  %1163 = vmatprep.subr.mxu0 0.0
  %1164 = vmatpush1.msra.mxu0 %v466
  %1165 = vmatprep.subr.mxu0 0.0
  %1166 = vmatpush1.msra.mxu0 %v467
  %1167 = vmatprep.subr.mxu0 0.0
  %1168 = vmatpush1.msra.mxu0 %v468
  %1169 = vmatprep.subr.mxu0 0.0
  %1170 = vmatpush1.msra.mxu0 %v469
  %1171 = vmatprep.subr.mxu0 0.0
  %1172 = vmatpush1.msra.mxu0 %v470
  %1173 = vmatprep.subr.mxu0 0.0
  %1174 = vmatpush1.msra.mxu0 %v471
  %1175 = vmatprep.subr.mxu0 0.0
  %1176 = vmatpush1.msra.mxu0 %v472
  %1177 = vmatprep.subr.mxu0 0.0
  %1178 = vmatpush1.msra.mxu0 %v473
  %1179 = vmatprep.subr.mxu0 0.0
  %1180 = vmatpush1.msra.mxu0 %v474
  %1181 = vmatprep.subr.mxu0 0.0
  %1182 = vmatpush1.msra.mxu0 %v475
  %1183 = vmatprep.subr.mxu0 0.0
  %1184 = vmatpush1.msra.mxu0 %v476
  %1185 = vmatprep.subr.mxu0 0.0
  %1186 = vmatpush1.msra.mxu0 %v477
  %1187 = vmatprep.mubr.f32.mxu0 %v21
  %1188 = vmatmul.mubr.f32.gmra.mrb[0].mxu0 %v20
  %v1189 = vpop.f32.mrb[0].mxu0
  %v1190 = vadd.f32 %v1020, %v1189
  %v1191 = vpop.f32.mrb[0].mxu0
  %1192 = vmatprep.mubr.f32.mxu0 %v37
  %1193 = vmatmul.mubr.f32.gmra.mrb[0].mxu0 %v36
  %v1194 = vpop.f32.mrb[0].mxu0
  %v1195 = vadd.f32 %v1025, %v1194
  %v1196 = vpop.f32.mrb[0].mxu0
  %1197 = vmatprep.mubr.f32.mxu0 %v53
  %1198 = vmatmul.mubr.f32.gmra.mrb[0].mxu0 %v52
  %v1199 = vpop.f32.mrb[0].mxu0
  %v1200 = vadd.f32 %v1030, %v1199
  %v1201 = vpop.f32.mrb[0].mxu0
  %1202 = vmatprep.mubr.f32.mxu0 %v69
  %1203 = vmatmul.mubr.f32.gmra.mrb[0].mxu0 %v68
  %v1204 = vpop.f32.mrb[0].mxu0
  %v1205 = vadd.f32 %v1035, %v1204
  %v1206 = vpop.f32.mrb[0].mxu0
  %1207 = vmatprep.mubr.f32.mxu0 %v85
  %1208 = vmatmul.mubr.f32.gmra.mrb[0].mxu0 %v84
  %v1209 = vpop.f32.mrb[0].mxu0
  %v1210 = vadd.f32 %v1040, %v1209
  %v1211 = vpop.f32.mrb[0].mxu0
  %1212 = vmatprep.mubr.f32.mxu0 %v101
  %1213 = vmatmul.mubr.f32.gmra.mrb[0].mxu0 %v100
  %v1214 = vpop.f32.mrb[0].mxu0
  %v1215 = vadd.f32 %v1045, %v1214
  %v1216 = vpop.f32.mrb[0].mxu0
  %1217 = vmatprep.mubr.f32.mxu0 %v117
  %1218 = vmatmul.mubr.f32.gmra.mrb[0].mxu0 %v116
  %v1219 = vpop.f32.mrb[0].mxu0
  %v1220 = vadd.f32 %v1050, %v1219
  %v1221 = vpop.f32.mrb[0].mxu0
  %1222 = vmatprep.mubr.f32.mxu0 %v133
  %1223 = vmatmul.mubr.f32.gmra.mrb[0].mxu0 %v132
  %v1224 = vpop.f32.mrb[0].mxu0
  %v1225 = vadd.f32 %v1055, %v1224
  %v1226 = vpop.f32.mrb[0].mxu0
  %1227 = vmatprep.mubr.f32.mxu0 %v149
  %1228 = vmatmul.mubr.f32.gmra.mrb[0].mxu0 %v148
  %v1229 = vpop.f32.mrb[0].mxu0
  %v1230 = vadd.f32 %v1060, %v1229
  %v1231 = vpop.f32.mrb[0].mxu0
  %1232 = vmatprep.mubr.f32.mxu0 %v165
  %1233 = vmatmul.mubr.f32.gmra.mrb[0].mxu0 %v164
  %v1234 = vpop.f32.mrb[0].mxu0
  %v1235 = vadd.f32 %v1065, %v1234
  %v1236 = vpop.f32.mrb[0].mxu0
  %1237 = vmatprep.mubr.f32.mxu0 %v181
  %1238 = vmatmul.mubr.f32.gmra.mrb[0].mxu0 %v180
  %v1239 = vpop.f32.mrb[0].mxu0
  %v1240 = vadd.f32 %v1070, %v1239
  %v1241 = vpop.f32.mrb[0].mxu0
  %1242 = vmatprep.mubr.f32.mxu0 %v197
  %1243 = vmatmul.mubr.f32.gmra.mrb[0].mxu0 %v196
  %v1244 = vpop.f32.mrb[0].mxu0
  %v1245 = vadd.f32 %v1075, %v1244
  %v1246 = vpop.f32.mrb[0].mxu0
  %1247 = vmatprep.mubr.f32.mxu0 %v213
  %1248 = vmatmul.mubr.f32.gmra.mrb[0].mxu0 %v212
  %v1249 = vpop.f32.mrb[0].mxu0
  %v1250 = vadd.f32 %v1080, %v1249
  %v1251 = vpop.f32.mrb[0].mxu0
  %1252 = vmatprep.mubr.f32.mxu0 %v229
  %1253 = vmatmul.mubr.f32.gmra.mrb[0].mxu0 %v228
  %v1254 = vpop.f32.mrb[0].mxu0
  %v1255 = vadd.f32 %v1085, %v1254
  %v1256 = vpop.f32.mrb[0].mxu0
  %1257 = vmatprep.mubr.f32.mxu0 %v245
  %1258 = vmatmul.mubr.f32.gmra.mrb[0].mxu0 %v244
  %v1259 = vpop.f32.mrb[0].mxu0
  %v1260 = vadd.f32 %v1090, %v1259
  %v1261 = vpop.f32.mrb[0].mxu0
  %1262 = vmatprep.mubr.f32.mxu0 %v261
  %1263 = vmatmul.mubr.f32.gmra.mrb[0].mxu0 %v260
  %v1264 = vpop.f32.mrb[0].mxu0
  %v1265 = vadd.f32 %v1095, %v1264
  %v1266 = vpop.f32.mrb[0].mxu0
  %1267 = vmatprep.mubr.f32.mxu0 %v277
  %1268 = vmatmul.mubr.f32.gmra.mrb[0].mxu0 %v276
  %v1269 = vpop.f32.mrb[0].mxu0
  %v1270 = vadd.f32 %v1100, %v1269
  %v1271 = vpop.f32.mrb[0].mxu0
  %1272 = vmatprep.mubr.f32.mxu0 %v293
  %1273 = vmatmul.mubr.f32.gmra.mrb[0].mxu0 %v292
  %v1274 = vpop.f32.mrb[0].mxu0
  %v1275 = vadd.f32 %v1105, %v1274
  %v1276 = vpop.f32.mrb[0].mxu0
  %1277 = vmatprep.mubr.f32.mxu0 %v309
  %1278 = vmatmul.mubr.f32.gmra.mrb[0].mxu0 %v308
  %v1279 = vpop.f32.mrb[0].mxu0
  %v1280 = vadd.f32 %v1110, %v1279
  %v1281 = vpop.f32.mrb[0].mxu0
  %1282 = vmatprep.mubr.f32.mxu0 %v325
  %1283 = vmatmul.mubr.f32.gmra.mrb[0].mxu0 %v324
  %v1284 = vpop.f32.mrb[0].mxu0
  %v1285 = vadd.f32 %v1115, %v1284
  %v1286 = vpop.f32.mrb[0].mxu0
  %1287 = vmatprep.mubr.f32.mxu0 %v341
  %1288 = vmatmul.mubr.f32.gmra.mrb[0].mxu0 %v340
  %v1289 = vpop.f32.mrb[0].mxu0
  %v1290 = vadd.f32 %v1120, %v1289
  %v1291 = vpop.f32.mrb[0].mxu0
  %1292 = vdwg.mxu0
  %1293 = vmatprep.subr.mxu0 0.0
  %1294 = vmatpush1.msra.mxu0 %v478
  %1295 = vmatprep.subr.mxu0 0.0
  %1296 = vmatpush1.msra.mxu0 %v479
  %1297 = vmatprep.subr.mxu0 0.0
  %1298 = vmatpush1.msra.mxu0 %v480
  %1299 = vmatprep.subr.mxu0 0.0
  %1300 = vmatpush1.msra.mxu0 %v481
  %1301 = vmatprep.subr.mxu0 0.0
  %1302 = vmatpush1.msra.mxu0 %v482
  %1303 = vmatprep.subr.mxu0 0.0
  %1304 = vmatpush1.msra.mxu0 %v483
  %1305 = vmatprep.subr.mxu0 0.0
  %1306 = vmatpush1.msra.mxu0 %v484
  %1307 = vmatprep.subr.mxu0 0.0
  %1308 = vmatpush1.msra.mxu0 %v485
  %1309 = vmatprep.subr.mxu0 0.0
  %1310 = vmatpush1.msra.mxu0 %v486
  %1311 = vmatprep.subr.mxu0 0.0
  %1312 = vmatpush1.msra.mxu0 %v487
  %1313 = vmatprep.subr.mxu0 0.0
  %1314 = vmatpush1.msra.mxu0 %v488
  %1315 = vmatprep.subr.mxu0 0.0
  %1316 = vmatpush1.msra.mxu0 %v489
  %1317 = vmatprep.subr.mxu0 0.0
  %1318 = vmatpush1.msra.mxu0 %v490
  %1319 = vmatprep.subr.mxu0 0.0
  %1320 = vmatpush1.msra.mxu0 %v491
  %1321 = vmatprep.subr.mxu0 0.0
  %1322 = vmatpush1.msra.mxu0 %v492
  %1323 = vmatprep.subr.mxu0 0.0
  %1324 = vmatpush1.msra.mxu0 %v493
  %1325 = vmatprep.subr.mxu0 0.0
  %1326 = vmatpush1.msra.mxu0 %v494
  %1327 = vmatprep.subr.mxu0 0.0
  %1328 = vmatpush1.msra.mxu0 %v495
  %1329 = vmatprep.subr.mxu0 0.0
  %1330 = vmatpush1.msra.mxu0 %v496
  %1331 = vmatprep.subr.mxu0 0.0
  %1332 = vmatpush1.msra.mxu0 %v497
  %1333 = vmatprep.subr.mxu0 0.0
  %1334 = vmatpush1.msra.mxu0 %v498
  %1335 = vmatprep.subr.mxu0 0.0
  %1336 = vmatpush1.msra.mxu0 %v499
  %1337 = vmatprep.subr.mxu0 0.0
  %1338 = vmatpush1.msra.mxu0 %v500
  %1339 = vmatprep.subr.mxu0 0.0
  %1340 = vmatpush1.msra.mxu0 %v501
  %1341 = vmatprep.subr.mxu0 0.0
  %1342 = vmatpush1.msra.mxu0 %v502
  %1343 = vmatprep.subr.mxu0 0.0
  %1344 = vmatpush1.msra.mxu0 %v503
  %1345 = vmatprep.subr.mxu0 0.0
  %1346 = vmatpush1.msra.mxu0 %v504
  %1347 = vmatprep.subr.mxu0 0.0
  %1348 = vmatpush1.msra.mxu0 %v505
  %1349 = vmatprep.subr.mxu0 0.0
  %1350 = vmatpush1.msra.mxu0 %v506
  %1351 = vmatprep.subr.mxu0 0.0
  %1352 = vmatpush1.msra.mxu0 %v507
  %1353 = vmatprep.subr.mxu0 0.0
  %1354 = vmatpush1.msra.mxu0 %v508
  %1355 = vmatprep.subr.mxu0 0.0
  %1356 = vmatpush1.msra.mxu0 %v509
  %1357 = vmatprep.mubr.f32.mxu0 %v23
  %1358 = vmatmul.mubr.f32.gmra.mrb[0].mxu0 %v22
  %v1359 = vpop.f32.mrb[0].mxu0
  %v1360 = vadd.f32 %v1190, %v1359
  %v1361 = vpop.f32.mrb[0].mxu0
  %1362 = vmatprep.mubr.f32.mxu0 %v39
  %1363 = vmatmul.mubr.f32.gmra.mrb[0].mxu0 %v38
  %v1364 = vpop.f32.mrb[0].mxu0
  %v1365 = vadd.f32 %v1195, %v1364
  %v1366 = vpop.f32.mrb[0].mxu0
  %1367 = vmatprep.mubr.f32.mxu0 %v55
  %1368 = vmatmul.mubr.f32.gmra.mrb[0].mxu0 %v54
  %v1369 = vpop.f32.mrb[0].mxu0
  %v1370 = vadd.f32 %v1200, %v1369
  %v1371 = vpop.f32.mrb[0].mxu0
  %1372 = vmatprep.mubr.f32.mxu0 %v71
  %1373 = vmatmul.mubr.f32.gmra.mrb[0].mxu0 %v70
  %v1374 = vpop.f32.mrb[0].mxu0
  %v1375 = vadd.f32 %v1205, %v1374
  %v1376 = vpop.f32.mrb[0].mxu0
  %1377 = vmatprep.mubr.f32.mxu0 %v87
  %1378 = vmatmul.mubr.f32.gmra.mrb[0].mxu0 %v86
  %v1379 = vpop.f32.mrb[0].mxu0
  %v1380 = vadd.f32 %v1210, %v1379
  %v1381 = vpop.f32.mrb[0].mxu0
  %1382 = vmatprep.mubr.f32.mxu0 %v103
  %1383 = vmatmul.mubr.f32.gmra.mrb[0].mxu0 %v102
  %v1384 = vpop.f32.mrb[0].mxu0
  %v1385 = vadd.f32 %v1215, %v1384
  %v1386 = vpop.f32.mrb[0].mxu0
  %1387 = vmatprep.mubr.f32.mxu0 %v119
  %1388 = vmatmul.mubr.f32.gmra.mrb[0].mxu0 %v118
  %v1389 = vpop.f32.mrb[0].mxu0
  %v1390 = vadd.f32 %v1220, %v1389
  %v1391 = vpop.f32.mrb[0].mxu0
  %1392 = vmatprep.mubr.f32.mxu0 %v135
  %1393 = vmatmul.mubr.f32.gmra.mrb[0].mxu0 %v134
  %v1394 = vpop.f32.mrb[0].mxu0
  %v1395 = vadd.f32 %v1225, %v1394
  %v1396 = vpop.f32.mrb[0].mxu0
  %1397 = vmatprep.mubr.f32.mxu0 %v151
  %1398 = vmatmul.mubr.f32.gmra.mrb[0].mxu0 %v150
  %v1399 = vpop.f32.mrb[0].mxu0
  %v1400 = vadd.f32 %v1230, %v1399
  %v1401 = vpop.f32.mrb[0].mxu0
  %1402 = vmatprep.mubr.f32.mxu0 %v167
  %1403 = vmatmul.mubr.f32.gmra.mrb[0].mxu0 %v166
  %v1404 = vpop.f32.mrb[0].mxu0
  %v1405 = vadd.f32 %v1235, %v1404
  %v1406 = vpop.f32.mrb[0].mxu0
  %1407 = vmatprep.mubr.f32.mxu0 %v183
  %1408 = vmatmul.mubr.f32.gmra.mrb[0].mxu0 %v182
  %v1409 = vpop.f32.mrb[0].mxu0
  %v1410 = vadd.f32 %v1240, %v1409
  %v1411 = vpop.f32.mrb[0].mxu0
  %1412 = vmatprep.mubr.f32.mxu0 %v199
  %1413 = vmatmul.mubr.f32.gmra.mrb[0].mxu0 %v198
  %v1414 = vpop.f32.mrb[0].mxu0
  %v1415 = vadd.f32 %v1245, %v1414
  %v1416 = vpop.f32.mrb[0].mxu0
  %1417 = vmatprep.mubr.f32.mxu0 %v215
  %1418 = vmatmul.mubr.f32.gmra.mrb[0].mxu0 %v214
  %v1419 = vpop.f32.mrb[0].mxu0
  %v1420 = vadd.f32 %v1250, %v1419
  %v1421 = vpop.f32.mrb[0].mxu0
  %1422 = vmatprep.mubr.f32.mxu0 %v231
  %1423 = vmatmul.mubr.f32.gmra.mrb[0].mxu0 %v230
  %v1424 = vpop.f32.mrb[0].mxu0
  %v1425 = vadd.f32 %v1255, %v1424
  %v1426 = vpop.f32.mrb[0].mxu0
  %1427 = vmatprep.mubr.f32.mxu0 %v247
  %1428 = vmatmul.mubr.f32.gmra.mrb[0].mxu0 %v246
  %v1429 = vpop.f32.mrb[0].mxu0
  %v1430 = vadd.f32 %v1260, %v1429
  %v1431 = vpop.f32.mrb[0].mxu0
  %1432 = vmatprep.mubr.f32.mxu0 %v263
  %1433 = vmatmul.mubr.f32.gmra.mrb[0].mxu0 %v262
  %v1434 = vpop.f32.mrb[0].mxu0
  %v1435 = vadd.f32 %v1265, %v1434
  %v1436 = vpop.f32.mrb[0].mxu0
  %1437 = vmatprep.mubr.f32.mxu0 %v279
  %1438 = vmatmul.mubr.f32.gmra.mrb[0].mxu0 %v278
  %v1439 = vpop.f32.mrb[0].mxu0
  %v1440 = vadd.f32 %v1270, %v1439
  %v1441 = vpop.f32.mrb[0].mxu0
  %1442 = vmatprep.mubr.f32.mxu0 %v295
  %1443 = vmatmul.mubr.f32.gmra.mrb[0].mxu0 %v294
  %v1444 = vpop.f32.mrb[0].mxu0
  %v1445 = vadd.f32 %v1275, %v1444
  %v1446 = vpop.f32.mrb[0].mxu0
  %1447 = vmatprep.mubr.f32.mxu0 %v311
  %1448 = vmatmul.mubr.f32.gmra.mrb[0].mxu0 %v310
  %v1449 = vpop.f32.mrb[0].mxu0
  %v1450 = vadd.f32 %v1280, %v1449
  %v1451 = vpop.f32.mrb[0].mxu0
  %1452 = vmatprep.mubr.f32.mxu0 %v327
  %1453 = vmatmul.mubr.f32.gmra.mrb[0].mxu0 %v326
  %v1454 = vpop.f32.mrb[0].mxu0
  %v1455 = vadd.f32 %v1285, %v1454
  %v1456 = vpop.f32.mrb[0].mxu0
  %1457 = vmatprep.mubr.f32.mxu0 %v343
  %1458 = vmatmul.mubr.f32.gmra.mrb[0].mxu0 %v342
  %v1459 = vpop.f32.mrb[0].mxu0
  %v1460 = vadd.f32 %v1290, %v1459
  %v1461 = vpop.f32.mrb[0].mxu0
  %1462 = vdwg.mxu0
  %1463 = vmatprep.subr.mxu0 0.0
  %1464 = vmatpush1.msra.mxu0 %v510
  %1465 = vmatprep.subr.mxu0 0.0
  %1466 = vmatpush1.msra.mxu0 %v511
  %1467 = vmatprep.subr.mxu0 0.0
  %1468 = vmatpush1.msra.mxu0 %v512
  %1469 = vmatprep.subr.mxu0 0.0
  %1470 = vmatpush1.msra.mxu0 %v513
  %1471 = vmatprep.subr.mxu0 0.0
  %1472 = vmatpush1.msra.mxu0 %v514
  %1473 = vmatprep.subr.mxu0 0.0
  %1474 = vmatpush1.msra.mxu0 %v515
  %1475 = vmatprep.subr.mxu0 0.0
  %1476 = vmatpush1.msra.mxu0 %v516
  %1477 = vmatprep.subr.mxu0 0.0
  %1478 = vmatpush1.msra.mxu0 %v517
  %1479 = vmatprep.subr.mxu0 0.0
  %1480 = vmatpush1.msra.mxu0 %v518
  %1481 = vmatprep.subr.mxu0 0.0
  %1482 = vmatpush1.msra.mxu0 %v519
  %1483 = vmatprep.subr.mxu0 0.0
  %1484 = vmatpush1.msra.mxu0 %v520
  %1485 = vmatprep.subr.mxu0 0.0
  %1486 = vmatpush1.msra.mxu0 %v521
  %1487 = vmatprep.subr.mxu0 0.0
  %1488 = vmatpush1.msra.mxu0 %v522
  %1489 = vmatprep.subr.mxu0 0.0
  %1490 = vmatpush1.msra.mxu0 %v523
  %1491 = vmatprep.subr.mxu0 0.0
  %1492 = vmatpush1.msra.mxu0 %v524
  %1493 = vmatprep.subr.mxu0 0.0
  %1494 = vmatpush1.msra.mxu0 %v525
  %1495 = vmatprep.subr.mxu0 0.0
  %1496 = vmatpush1.msra.mxu0 %v526
  %1497 = vmatprep.subr.mxu0 0.0
  %1498 = vmatpush1.msra.mxu0 %v527
  %1499 = vmatprep.subr.mxu0 0.0
  %1500 = vmatpush1.msra.mxu0 %v528
  %1501 = vmatprep.subr.mxu0 0.0
  %1502 = vmatpush1.msra.mxu0 %v529
  %1503 = vmatprep.subr.mxu0 0.0
  %1504 = vmatpush1.msra.mxu0 %v530
  %1505 = vmatprep.subr.mxu0 0.0
  %1506 = vmatpush1.msra.mxu0 %v531
  %1507 = vmatprep.subr.mxu0 0.0
  %1508 = vmatpush1.msra.mxu0 %v532
  %1509 = vmatprep.subr.mxu0 0.0
  %1510 = vmatpush1.msra.mxu0 %v533
  %1511 = vmatprep.subr.mxu0 0.0
  %1512 = vmatpush1.msra.mxu0 %v534
  %1513 = vmatprep.subr.mxu0 0.0
  %1514 = vmatpush1.msra.mxu0 %v535
  %1515 = vmatprep.subr.mxu0 0.0
  %1516 = vmatpush1.msra.mxu0 %v536
  %1517 = vmatprep.subr.mxu0 0.0
  %1518 = vmatpush1.msra.mxu0 %v537
  %1519 = vmatprep.subr.mxu0 0.0
  %1520 = vmatpush1.msra.mxu0 %v538
  %1521 = vmatprep.subr.mxu0 0.0
  %1522 = vmatpush1.msra.mxu0 %v539
  %1523 = vmatprep.subr.mxu0 0.0
  %1524 = vmatpush1.msra.mxu0 %v540
  %1525 = vmatprep.subr.mxu0 0.0
  %1526 = vmatpush1.msra.mxu0 %v541
  %1527 = vmatprep.mubr.f32.mxu0 %v25
  %1528 = vmatmul.mubr.f32.gmra.mrb[0].mxu0 %v24
  %v1529 = vpop.f32.mrb[0].mxu0
  %v1530 = vadd.f32 %v1360, %v1529
  %v1531 = vpop.f32.mrb[0].mxu0
  %1532 = vmatprep.mubr.f32.mxu0 %v41
  %1533 = vmatmul.mubr.f32.gmra.mrb[0].mxu0 %v40
  %v1534 = vpop.f32.mrb[0].mxu0
  %v1535 = vadd.f32 %v1365, %v1534
  %v1536 = vpop.f32.mrb[0].mxu0
  %1537 = vmatprep.mubr.f32.mxu0 %v57
  %1538 = vmatmul.mubr.f32.gmra.mrb[0].mxu0 %v56
  %v1539 = vpop.f32.mrb[0].mxu0
  %v1540 = vadd.f32 %v1370, %v1539
  %v1541 = vpop.f32.mrb[0].mxu0
  %1542 = vmatprep.mubr.f32.mxu0 %v73
  %1543 = vmatmul.mubr.f32.gmra.mrb[0].mxu0 %v72
  %v1544 = vpop.f32.mrb[0].mxu0
  %v1545 = vadd.f32 %v1375, %v1544
  %v1546 = vpop.f32.mrb[0].mxu0
  %1547 = vmatprep.mubr.f32.mxu0 %v89
  %1548 = vmatmul.mubr.f32.gmra.mrb[0].mxu0 %v88
  %v1549 = vpop.f32.mrb[0].mxu0
  %v1550 = vadd.f32 %v1380, %v1549
  %v1551 = vpop.f32.mrb[0].mxu0
  %1552 = vmatprep.mubr.f32.mxu0 %v105
  %1553 = vmatmul.mubr.f32.gmra.mrb[0].mxu0 %v104
  %v1554 = vpop.f32.mrb[0].mxu0
  %v1555 = vadd.f32 %v1385, %v1554
  %v1556 = vpop.f32.mrb[0].mxu0
  %1557 = vmatprep.mubr.f32.mxu0 %v121
  %1558 = vmatmul.mubr.f32.gmra.mrb[0].mxu0 %v120
  %v1559 = vpop.f32.mrb[0].mxu0
  %v1560 = vadd.f32 %v1390, %v1559
  %v1561 = vpop.f32.mrb[0].mxu0
  %1562 = vmatprep.mubr.f32.mxu0 %v137
  %1563 = vmatmul.mubr.f32.gmra.mrb[0].mxu0 %v136
  %v1564 = vpop.f32.mrb[0].mxu0
  %v1565 = vadd.f32 %v1395, %v1564
  %v1566 = vpop.f32.mrb[0].mxu0
  %1567 = vmatprep.mubr.f32.mxu0 %v153
  %1568 = vmatmul.mubr.f32.gmra.mrb[0].mxu0 %v152
  %v1569 = vpop.f32.mrb[0].mxu0
  %v1570 = vadd.f32 %v1400, %v1569
  %v1571 = vpop.f32.mrb[0].mxu0
  %1572 = vmatprep.mubr.f32.mxu0 %v169
  %1573 = vmatmul.mubr.f32.gmra.mrb[0].mxu0 %v168
  %v1574 = vpop.f32.mrb[0].mxu0
  %v1575 = vadd.f32 %v1405, %v1574
  %v1576 = vpop.f32.mrb[0].mxu0
  %1577 = vmatprep.mubr.f32.mxu0 %v185
  %1578 = vmatmul.mubr.f32.gmra.mrb[0].mxu0 %v184
  %v1579 = vpop.f32.mrb[0].mxu0
  %v1580 = vadd.f32 %v1410, %v1579
  %v1581 = vpop.f32.mrb[0].mxu0
  %1582 = vmatprep.mubr.f32.mxu0 %v201
  %1583 = vmatmul.mubr.f32.gmra.mrb[0].mxu0 %v200
  %v1584 = vpop.f32.mrb[0].mxu0
  %v1585 = vadd.f32 %v1415, %v1584
  %v1586 = vpop.f32.mrb[0].mxu0
  %1587 = vmatprep.mubr.f32.mxu0 %v217
  %1588 = vmatmul.mubr.f32.gmra.mrb[0].mxu0 %v216
  %v1589 = vpop.f32.mrb[0].mxu0
  %v1590 = vadd.f32 %v1420, %v1589
  %v1591 = vpop.f32.mrb[0].mxu0
  %1592 = vmatprep.mubr.f32.mxu0 %v233
  %1593 = vmatmul.mubr.f32.gmra.mrb[0].mxu0 %v232
  %v1594 = vpop.f32.mrb[0].mxu0
  %v1595 = vadd.f32 %v1425, %v1594
  %v1596 = vpop.f32.mrb[0].mxu0
  %1597 = vmatprep.mubr.f32.mxu0 %v249
  %1598 = vmatmul.mubr.f32.gmra.mrb[0].mxu0 %v248
  %v1599 = vpop.f32.mrb[0].mxu0
  %v1600 = vadd.f32 %v1430, %v1599
  %v1601 = vpop.f32.mrb[0].mxu0
  %1602 = vmatprep.mubr.f32.mxu0 %v265
  %1603 = vmatmul.mubr.f32.gmra.mrb[0].mxu0 %v264
  %v1604 = vpop.f32.mrb[0].mxu0
  %v1605 = vadd.f32 %v1435, %v1604
  %v1606 = vpop.f32.mrb[0].mxu0
  %1607 = vmatprep.mubr.f32.mxu0 %v281
  %1608 = vmatmul.mubr.f32.gmra.mrb[0].mxu0 %v280
  %v1609 = vpop.f32.mrb[0].mxu0
  %v1610 = vadd.f32 %v1440, %v1609
  %v1611 = vpop.f32.mrb[0].mxu0
  %1612 = vmatprep.mubr.f32.mxu0 %v297
  %1613 = vmatmul.mubr.f32.gmra.mrb[0].mxu0 %v296
  %v1614 = vpop.f32.mrb[0].mxu0
  %v1615 = vadd.f32 %v1445, %v1614
  %v1616 = vpop.f32.mrb[0].mxu0
  %1617 = vmatprep.mubr.f32.mxu0 %v313
  %1618 = vmatmul.mubr.f32.gmra.mrb[0].mxu0 %v312
  %v1619 = vpop.f32.mrb[0].mxu0
  %v1620 = vadd.f32 %v1450, %v1619
  %v1621 = vpop.f32.mrb[0].mxu0
  %1622 = vmatprep.mubr.f32.mxu0 %v329
  %1623 = vmatmul.mubr.f32.gmra.mrb[0].mxu0 %v328
  %v1624 = vpop.f32.mrb[0].mxu0
  %v1625 = vadd.f32 %v1455, %v1624
  %v1626 = vpop.f32.mrb[0].mxu0
  %1627 = vmatprep.mubr.f32.mxu0 %v345
  %1628 = vmatmul.mubr.f32.gmra.mrb[0].mxu0 %v344
  %v1629 = vpop.f32.mrb[0].mxu0
  %v1630 = vadd.f32 %v1460, %v1629
  %v1631 = vpop.f32.mrb[0].mxu0
  %1632 = vdwg.mxu0
  %1633 = vmatprep.subr.mxu0 0.0
  %1634 = vmatpush1.msra.mxu0 %v542
  %1635 = vmatprep.subr.mxu0 0.0
  %1636 = vmatpush1.msra.mxu0 %v543
  %1637 = vmatprep.subr.mxu0 0.0
  %1638 = vmatpush1.msra.mxu0 %v544
  %1639 = vmatprep.subr.mxu0 0.0
  %1640 = vmatpush1.msra.mxu0 %v545
  %1641 = vmatprep.subr.mxu0 0.0
  %1642 = vmatpush1.msra.mxu0 %v546
  %1643 = vmatprep.subr.mxu0 0.0
  %1644 = vmatpush1.msra.mxu0 %v547
  %1645 = vmatprep.subr.mxu0 0.0
  %1646 = vmatpush1.msra.mxu0 %v548
  %1647 = vmatprep.subr.mxu0 0.0
  %1648 = vmatpush1.msra.mxu0 %v549
  %1649 = vmatprep.subr.mxu0 0.0
  %1650 = vmatpush1.msra.mxu0 %v550
  %1651 = vmatprep.subr.mxu0 0.0
  %1652 = vmatpush1.msra.mxu0 %v551
  %1653 = vmatprep.subr.mxu0 0.0
  %1654 = vmatpush1.msra.mxu0 %v552
  %1655 = vmatprep.subr.mxu0 0.0
  %1656 = vmatpush1.msra.mxu0 %v553
  %1657 = vmatprep.subr.mxu0 0.0
  %1658 = vmatpush1.msra.mxu0 %v554
  %1659 = vmatprep.subr.mxu0 0.0
  %1660 = vmatpush1.msra.mxu0 %v555
  %1661 = vmatprep.subr.mxu0 0.0
  %1662 = vmatpush1.msra.mxu0 %v556
  %1663 = vmatprep.subr.mxu0 0.0
  %1664 = vmatpush1.msra.mxu0 %v557
  %1665 = vmatprep.subr.mxu0 0.0
  %1666 = vmatpush1.msra.mxu0 %v558
  %1667 = vmatprep.subr.mxu0 0.0
  %1668 = vmatpush1.msra.mxu0 %v559
  %1669 = vmatprep.subr.mxu0 0.0
  %1670 = vmatpush1.msra.mxu0 %v560
  %1671 = vmatprep.subr.mxu0 0.0
  %1672 = vmatpush1.msra.mxu0 %v561
  %1673 = vmatprep.subr.mxu0 0.0
  %1674 = vmatpush1.msra.mxu0 %v562
  %1675 = vmatprep.subr.mxu0 0.0
  %1676 = vmatpush1.msra.mxu0 %v563
  %1677 = vmatprep.subr.mxu0 0.0
  %1678 = vmatpush1.msra.mxu0 %v564
  %1679 = vmatprep.subr.mxu0 0.0
  %1680 = vmatpush1.msra.mxu0 %v565
  %1681 = vmatprep.subr.mxu0 0.0
  %1682 = vmatpush1.msra.mxu0 %v566
  %1683 = vmatprep.subr.mxu0 0.0
  %1684 = vmatpush1.msra.mxu0 %v567
  %1685 = vmatprep.subr.mxu0 0.0
  %1686 = vmatpush1.msra.mxu0 %v568
  %1687 = vmatprep.subr.mxu0 0.0
  %1688 = vmatpush1.msra.mxu0 %v569
  %1689 = vmatprep.subr.mxu0 0.0
  %1690 = vmatpush1.msra.mxu0 %v570
  %1691 = vmatprep.subr.mxu0 0.0
  %1692 = vmatpush1.msra.mxu0 %v571
  %1693 = vmatprep.subr.mxu0 0.0
  %1694 = vmatpush1.msra.mxu0 %v572
  %1695 = vmatprep.subr.mxu0 0.0
  %1696 = vmatpush1.msra.mxu0 %v573
  %1697 = vmatprep.mubr.f32.mxu0 %v27
  %1698 = vmatmul.mubr.f32.gmra.mrb[0].mxu0 %v26
  %v1699 = vpop.f32.mrb[0].mxu0
  %v1700 = vadd.f32 %v1530, %v1699
  %v1701 = vpop.f32.mrb[0].mxu0
  %1702 = vmatprep.mubr.f32.mxu0 %v43
  %1703 = vmatmul.mubr.f32.gmra.mrb[0].mxu0 %v42
  %v1704 = vpop.f32.mrb[0].mxu0
  %v1705 = vadd.f32 %v1535, %v1704
  %v1706 = vpop.f32.mrb[0].mxu0
  %1707 = vmatprep.mubr.f32.mxu0 %v59
  %1708 = vmatmul.mubr.f32.gmra.mrb[0].mxu0 %v58
  %v1709 = vpop.f32.mrb[0].mxu0
  %v1710 = vadd.f32 %v1540, %v1709
  %v1711 = vpop.f32.mrb[0].mxu0
  %1712 = vmatprep.mubr.f32.mxu0 %v75
  %1713 = vmatmul.mubr.f32.gmra.mrb[0].mxu0 %v74
  %v1714 = vpop.f32.mrb[0].mxu0
  %v1715 = vadd.f32 %v1545, %v1714
  %v1716 = vpop.f32.mrb[0].mxu0
  %1717 = vmatprep.mubr.f32.mxu0 %v91
  %1718 = vmatmul.mubr.f32.gmra.mrb[0].mxu0 %v90
  %v1719 = vpop.f32.mrb[0].mxu0
  %v1720 = vadd.f32 %v1550, %v1719
  %v1721 = vpop.f32.mrb[0].mxu0
  %1722 = vmatprep.mubr.f32.mxu0 %v107
  %1723 = vmatmul.mubr.f32.gmra.mrb[0].mxu0 %v106
  %v1724 = vpop.f32.mrb[0].mxu0
  %v1725 = vadd.f32 %v1555, %v1724
  %v1726 = vpop.f32.mrb[0].mxu0
  %1727 = vmatprep.mubr.f32.mxu0 %v123
  %1728 = vmatmul.mubr.f32.gmra.mrb[0].mxu0 %v122
  %v1729 = vpop.f32.mrb[0].mxu0
  %v1730 = vadd.f32 %v1560, %v1729
  %v1731 = vpop.f32.mrb[0].mxu0
  %1732 = vmatprep.mubr.f32.mxu0 %v139
  %1733 = vmatmul.mubr.f32.gmra.mrb[0].mxu0 %v138
  %v1734 = vpop.f32.mrb[0].mxu0
  %v1735 = vadd.f32 %v1565, %v1734
  %v1736 = vpop.f32.mrb[0].mxu0
  %1737 = vmatprep.mubr.f32.mxu0 %v155
  %1738 = vmatmul.mubr.f32.gmra.mrb[0].mxu0 %v154
  %v1739 = vpop.f32.mrb[0].mxu0
  %v1740 = vadd.f32 %v1570, %v1739
  %v1741 = vpop.f32.mrb[0].mxu0
  %1742 = vmatprep.mubr.f32.mxu0 %v171
  %1743 = vmatmul.mubr.f32.gmra.mrb[0].mxu0 %v170
  %v1744 = vpop.f32.mrb[0].mxu0
  %v1745 = vadd.f32 %v1575, %v1744
  %v1746 = vpop.f32.mrb[0].mxu0
  %1747 = vmatprep.mubr.f32.mxu0 %v187
  %1748 = vmatmul.mubr.f32.gmra.mrb[0].mxu0 %v186
  %v1749 = vpop.f32.mrb[0].mxu0
  %v1750 = vadd.f32 %v1580, %v1749
  %v1751 = vpop.f32.mrb[0].mxu0
  %1752 = vmatprep.mubr.f32.mxu0 %v203
  %1753 = vmatmul.mubr.f32.gmra.mrb[0].mxu0 %v202
  %v1754 = vpop.f32.mrb[0].mxu0
  %v1755 = vadd.f32 %v1585, %v1754
  %v1756 = vpop.f32.mrb[0].mxu0
  %1757 = vmatprep.mubr.f32.mxu0 %v219
  %1758 = vmatmul.mubr.f32.gmra.mrb[0].mxu0 %v218
  %v1759 = vpop.f32.mrb[0].mxu0
  %v1760 = vadd.f32 %v1590, %v1759
  %v1761 = vpop.f32.mrb[0].mxu0
  %1762 = vmatprep.mubr.f32.mxu0 %v235
  %1763 = vmatmul.mubr.f32.gmra.mrb[0].mxu0 %v234
  %v1764 = vpop.f32.mrb[0].mxu0
  %v1765 = vadd.f32 %v1595, %v1764
  %v1766 = vpop.f32.mrb[0].mxu0
  %1767 = vmatprep.mubr.f32.mxu0 %v251
  %1768 = vmatmul.mubr.f32.gmra.mrb[0].mxu0 %v250
  %v1769 = vpop.f32.mrb[0].mxu0
  %v1770 = vadd.f32 %v1600, %v1769
  %v1771 = vpop.f32.mrb[0].mxu0
  %1772 = vmatprep.mubr.f32.mxu0 %v267
  %1773 = vmatmul.mubr.f32.gmra.mrb[0].mxu0 %v266
  %v1774 = vpop.f32.mrb[0].mxu0
  %v1775 = vadd.f32 %v1605, %v1774
  %v1776 = vpop.f32.mrb[0].mxu0
  %1777 = vmatprep.mubr.f32.mxu0 %v283
  %1778 = vmatmul.mubr.f32.gmra.mrb[0].mxu0 %v282
  %v1779 = vpop.f32.mrb[0].mxu0
  %v1780 = vadd.f32 %v1610, %v1779
  %v1781 = vpop.f32.mrb[0].mxu0
  %1782 = vmatprep.mubr.f32.mxu0 %v299
  %1783 = vmatmul.mubr.f32.gmra.mrb[0].mxu0 %v298
  %v1784 = vpop.f32.mrb[0].mxu0
  %v1785 = vadd.f32 %v1615, %v1784
  %v1786 = vpop.f32.mrb[0].mxu0
  %1787 = vmatprep.mubr.f32.mxu0 %v315
  %1788 = vmatmul.mubr.f32.gmra.mrb[0].mxu0 %v314
  %v1789 = vpop.f32.mrb[0].mxu0
  %v1790 = vadd.f32 %v1620, %v1789
  %v1791 = vpop.f32.mrb[0].mxu0
  %1792 = vmatprep.mubr.f32.mxu0 %v331
  %1793 = vmatmul.mubr.f32.gmra.mrb[0].mxu0 %v330
  %v1794 = vpop.f32.mrb[0].mxu0
  %v1795 = vadd.f32 %v1625, %v1794
  %v1796 = vpop.f32.mrb[0].mxu0
  %1797 = vmatprep.mubr.f32.mxu0 %v347
  %1798 = vmatmul.mubr.f32.gmra.mrb[0].mxu0 %v346
  %v1799 = vpop.f32.mrb[0].mxu0
  %v1800 = vadd.f32 %v1630, %v1799
  %v1801 = vpop.f32.mrb[0].mxu0
  %1802 = vdwg.mxu0
  %1803 = vmatprep.subr.mxu0 0.0
  %1804 = vmatpush1.msra.mxu0 %v574
  %1805 = vmatprep.subr.mxu0 0.0
  %1806 = vmatpush1.msra.mxu0 %v575
  %1807 = vmatprep.subr.mxu0 0.0
  %1808 = vmatpush1.msra.mxu0 %v576
  %1809 = vmatprep.subr.mxu0 0.0
  %1810 = vmatpush1.msra.mxu0 %v577
  %1811 = vmatprep.subr.mxu0 0.0
  %1812 = vmatpush1.msra.mxu0 %v578
  %1813 = vmatprep.subr.mxu0 0.0
  %1814 = vmatpush1.msra.mxu0 %v579
  %1815 = vmatprep.subr.mxu0 0.0
  %1816 = vmatpush1.msra.mxu0 %v580
  %1817 = vmatprep.subr.mxu0 0.0
  %1818 = vmatpush1.msra.mxu0 %v581
  %1819 = vmatprep.subr.mxu0 0.0
  %1820 = vmatpush1.msra.mxu0 %v582
  %1821 = vmatprep.subr.mxu0 0.0
  %1822 = vmatpush1.msra.mxu0 %v583
  %1823 = vmatprep.subr.mxu0 0.0
  %1824 = vmatpush1.msra.mxu0 %v584
  %1825 = vmatprep.subr.mxu0 0.0
  %1826 = vmatpush1.msra.mxu0 %v585
  %1827 = vmatprep.subr.mxu0 0.0
  %1828 = vmatpush1.msra.mxu0 %v586
  %1829 = vmatprep.subr.mxu0 0.0
  %1830 = vmatpush1.msra.mxu0 %v587
  %1831 = vmatprep.subr.mxu0 0.0
  %1832 = vmatpush1.msra.mxu0 %v588
  %1833 = vmatprep.subr.mxu0 0.0
  %1834 = vmatpush1.msra.mxu0 %v589
  %1835 = vmatprep.subr.mxu0 0.0
  %1836 = vmatpush1.msra.mxu0 %v590
  %1837 = vmatprep.subr.mxu0 0.0
  %1838 = vmatpush1.msra.mxu0 %v591
  %1839 = vmatprep.subr.mxu0 0.0
  %1840 = vmatpush1.msra.mxu0 %v592
  %1841 = vmatprep.subr.mxu0 0.0
  %1842 = vmatpush1.msra.mxu0 %v593
  %1843 = vmatprep.subr.mxu0 0.0
  %1844 = vmatpush1.msra.mxu0 %v594
  %1845 = vmatprep.subr.mxu0 0.0
  %1846 = vmatpush1.msra.mxu0 %v595
  %1847 = vmatprep.subr.mxu0 0.0
  %1848 = vmatpush1.msra.mxu0 %v596
  %1849 = vmatprep.subr.mxu0 0.0
  %1850 = vmatpush1.msra.mxu0 %v597
  %1851 = vmatprep.subr.mxu0 0.0
  %1852 = vmatpush1.msra.mxu0 %v598
  %1853 = vmatprep.subr.mxu0 0.0
  %1854 = vmatpush1.msra.mxu0 %v599
  %1855 = vmatprep.subr.mxu0 0.0
  %1856 = vmatpush1.msra.mxu0 %v600
  %1857 = vmatprep.subr.mxu0 0.0
  %1858 = vmatpush1.msra.mxu0 %v601
  %1859 = vmatprep.subr.mxu0 0.0
  %1860 = vmatpush1.msra.mxu0 %v602
  %1861 = vmatprep.subr.mxu0 0.0
  %1862 = vmatpush1.msra.mxu0 %v603
  %1863 = vmatprep.subr.mxu0 0.0
  %1864 = vmatpush1.msra.mxu0 %v604
  %1865 = vmatprep.subr.mxu0 0.0
  %1866 = vmatpush1.msra.mxu0 %v605
  %1867 = vmatprep.mubr.f32.mxu0 %v29
  %1868 = vmatmul.mubr.f32.gmra.mrb[0].mxu0 %v28
  %v1869 = vpop.f32.mrb[0].mxu0
  %v1870 = vadd.f32 %v1700, %v1869
  %v1871 = vpop.f32.mrb[0].mxu0
  %1872 = vmatprep.mubr.f32.mxu0 %v45
  %1873 = vmatmul.mubr.f32.gmra.mrb[0].mxu0 %v44
  %v1874 = vpop.f32.mrb[0].mxu0
  %v1875 = vadd.f32 %v1705, %v1874
  %v1876 = vpop.f32.mrb[0].mxu0
  %1877 = vmatprep.mubr.f32.mxu0 %v61
  %1878 = vmatmul.mubr.f32.gmra.mrb[0].mxu0 %v60
  %v1879 = vpop.f32.mrb[0].mxu0
  %v1880 = vadd.f32 %v1710, %v1879
  %v1881 = vpop.f32.mrb[0].mxu0
  %1882 = vmatprep.mubr.f32.mxu0 %v77
  %1883 = vmatmul.mubr.f32.gmra.mrb[0].mxu0 %v76
  %v1884 = vpop.f32.mrb[0].mxu0
  %v1885 = vadd.f32 %v1715, %v1884
  %v1886 = vpop.f32.mrb[0].mxu0
  %1887 = vmatprep.mubr.f32.mxu0 %v93
  %1888 = vmatmul.mubr.f32.gmra.mrb[0].mxu0 %v92
  %v1889 = vpop.f32.mrb[0].mxu0
  %v1890 = vadd.f32 %v1720, %v1889
  %v1891 = vpop.f32.mrb[0].mxu0
  %1892 = vmatprep.mubr.f32.mxu0 %v109
  %1893 = vmatmul.mubr.f32.gmra.mrb[0].mxu0 %v108
  %v1894 = vpop.f32.mrb[0].mxu0
  %v1895 = vadd.f32 %v1725, %v1894
  %v1896 = vpop.f32.mrb[0].mxu0
  %1897 = vmatprep.mubr.f32.mxu0 %v125
  %1898 = vmatmul.mubr.f32.gmra.mrb[0].mxu0 %v124
  %v1899 = vpop.f32.mrb[0].mxu0
  %v1900 = vadd.f32 %v1730, %v1899
  %v1901 = vpop.f32.mrb[0].mxu0
  %1902 = vmatprep.mubr.f32.mxu0 %v141
  %1903 = vmatmul.mubr.f32.gmra.mrb[0].mxu0 %v140
  %v1904 = vpop.f32.mrb[0].mxu0
  %v1905 = vadd.f32 %v1735, %v1904
  %v1906 = vpop.f32.mrb[0].mxu0
  %1907 = vmatprep.mubr.f32.mxu0 %v157
  %1908 = vmatmul.mubr.f32.gmra.mrb[0].mxu0 %v156
  %v1909 = vpop.f32.mrb[0].mxu0
  %v1910 = vadd.f32 %v1740, %v1909
  %v1911 = vpop.f32.mrb[0].mxu0
  %1912 = vmatprep.mubr.f32.mxu0 %v173
  %1913 = vmatmul.mubr.f32.gmra.mrb[0].mxu0 %v172
  %v1914 = vpop.f32.mrb[0].mxu0
  %v1915 = vadd.f32 %v1745, %v1914
  %v1916 = vpop.f32.mrb[0].mxu0
  %1917 = vmatprep.mubr.f32.mxu0 %v189
  %1918 = vmatmul.mubr.f32.gmra.mrb[0].mxu0 %v188
  %v1919 = vpop.f32.mrb[0].mxu0
  %v1920 = vadd.f32 %v1750, %v1919
  %v1921 = vpop.f32.mrb[0].mxu0
  %1922 = vmatprep.mubr.f32.mxu0 %v205
  %1923 = vmatmul.mubr.f32.gmra.mrb[0].mxu0 %v204
  %v1924 = vpop.f32.mrb[0].mxu0
  %v1925 = vadd.f32 %v1755, %v1924
  %v1926 = vpop.f32.mrb[0].mxu0
  %1927 = vmatprep.mubr.f32.mxu0 %v221
  %1928 = vmatmul.mubr.f32.gmra.mrb[0].mxu0 %v220
  %v1929 = vpop.f32.mrb[0].mxu0
  %v1930 = vadd.f32 %v1760, %v1929
  %v1931 = vpop.f32.mrb[0].mxu0
  %1932 = vmatprep.mubr.f32.mxu0 %v237
  %1933 = vmatmul.mubr.f32.gmra.mrb[0].mxu0 %v236
  %v1934 = vpop.f32.mrb[0].mxu0
  %v1935 = vadd.f32 %v1765, %v1934
  %v1936 = vpop.f32.mrb[0].mxu0
  %1937 = vmatprep.mubr.f32.mxu0 %v253
  %1938 = vmatmul.mubr.f32.gmra.mrb[0].mxu0 %v252
  %v1939 = vpop.f32.mrb[0].mxu0
  %v1940 = vadd.f32 %v1770, %v1939
  %v1941 = vpop.f32.mrb[0].mxu0
  %1942 = vmatprep.mubr.f32.mxu0 %v269
  %1943 = vmatmul.mubr.f32.gmra.mrb[0].mxu0 %v268
  %v1944 = vpop.f32.mrb[0].mxu0
  %v1945 = vadd.f32 %v1775, %v1944
  %v1946 = vpop.f32.mrb[0].mxu0
  %1947 = vmatprep.mubr.f32.mxu0 %v285
  %1948 = vmatmul.mubr.f32.gmra.mrb[0].mxu0 %v284
  %v1949 = vpop.f32.mrb[0].mxu0
  %v1950 = vadd.f32 %v1780, %v1949
  %v1951 = vpop.f32.mrb[0].mxu0
  %1952 = vmatprep.mubr.f32.mxu0 %v301
  %1953 = vmatmul.mubr.f32.gmra.mrb[0].mxu0 %v300
  %v1954 = vpop.f32.mrb[0].mxu0
  %v1955 = vadd.f32 %v1785, %v1954
  %v1956 = vpop.f32.mrb[0].mxu0
  %1957 = vmatprep.mubr.f32.mxu0 %v317
  %1958 = vmatmul.mubr.f32.gmra.mrb[0].mxu0 %v316
  %v1959 = vpop.f32.mrb[0].mxu0
  %v1960 = vadd.f32 %v1790, %v1959
  %v1961 = vpop.f32.mrb[0].mxu0
  %1962 = vmatprep.mubr.f32.mxu0 %v333
  %1963 = vmatmul.mubr.f32.gmra.mrb[0].mxu0 %v332
  %v1964 = vpop.f32.mrb[0].mxu0
  %v1965 = vadd.f32 %v1795, %v1964
  %v1966 = vpop.f32.mrb[0].mxu0
  %1967 = vmatprep.mubr.f32.mxu0 %v349
  %1968 = vmatmul.mubr.f32.gmra.mrb[0].mxu0 %v348
  %v1969 = vpop.f32.mrb[0].mxu0
  %v1970 = vadd.f32 %v1800, %v1969
  %v1971 = vpop.f32.mrb[0].mxu0
  %1972 = vdwg.mxu0
  %v1973 = vmax.f32 %v1870, 0.0
  %v1974 = vmax.f32 %v1875, 0.0
  %v1975 = vmax.f32 %v1880, 0.0
  %v1976 = vmax.f32 %v1885, 0.0
  %v1977 = vmax.f32 %v1890, 0.0
  %v1978 = vmax.f32 %v1895, 0.0
  %v1979 = vmax.f32 %v1900, 0.0
  %v1980 = vmax.f32 %v1905, 0.0
  %v1981 = vmax.f32 %v1910, 0.0
  %v1982 = vmax.f32 %v1915, 0.0
  %v1983 = vmax.f32 %v1920, 0.0
  %v1984 = vmax.f32 %v1925, 0.0
  %v1985 = vmax.f32 %v1930, 0.0
  %v1986 = vmax.f32 %v1935, 0.0
  %v1987 = vmax.f32 %v1940, 0.0
  %v1988 = vmax.f32 %v1945, 0.0
  %v1989 = vmax.f32 %v1950, 0.0
  %v1990 = vmax.f32 %v1955, 0.0
  %v1991 = vmax.f32 %v1960, 0.0
  %v1992 = vmax.f32 %v1965, 0.0
  %v1993 = vmax.f32 %v1970, 0.0
  %1994 = vst [vmem:[%s3] sm:$0xff] %v1973
  %1995 = vst [vmem:[%s3 + $0x8] sm:$0xff] %v1974
  %1996 = vst [vmem:[%s3 + $0x10] sm:$0xff] %v1975
  %1997 = vst [vmem:[%s3 + $0x18] sm:$0xff] %v1976
  %1998 = vst [vmem:[%s3 + $0x20] sm:$0xff] %v1977
  %1999 = vst [vmem:[%s3 + $0x28] sm:$0xff] %v1978
  %2000 = vst [vmem:[%s3 + $0x30] sm:$0xff] %v1979
  %2001 = vst [vmem:[%s3 + $0x38] sm:$0xff] %v1980
  %2002 = vst [vmem:[%s3 + $0x40] sm:$0xff] %v1981
  %2003 = vst [vmem:[%s3 + $0x48] sm:$0xff] %v1982
  %2004 = vst [vmem:[%s3 + $0x50] sm:$0xff] %v1983
  %2005 = vst [vmem:[%s3 + $0x58] sm:$0xff] %v1984
  %2006 = vst [vmem:[%s3 + $0x60] sm:$0xff] %v1985
  %2007 = vst [vmem:[%s3 + $0x68] sm:$0xff] %v1986
  %2008 = vst [vmem:[%s3 + $0x70] sm:$0xff] %v1987
  %2009 = vst [vmem:[%s3 + $0x78] sm:$0xff] %v1988
  %2010 = vst [vmem:[%s3 + $0x80] sm:$0xff] %v1989
  %2011 = vst [vmem:[%s3 + $0x88] sm:$0xff] %v1990
  %2012 = vst [vmem:[%s3 + $0x90] sm:$0xff] %v1991
  %2013 = vst [vmem:[%s3 + $0x98] sm:$0xff] %v1992
  %2014 = vst [vmem:[%s3 + $0xa0] sm:$0x3] %v1993
  // Predicated region
  $region14: #{nature_paper_conv_forward.5} parent=0 // pred_check
    _
  $region15: #{nature_paper_conv_forward.5} parent=0 // pred_check_branch
    %2016 = sbr.rel (0) target = $region17
  $region16: #{nature_paper_conv_forward.5} parent=0 // pred_region
    _
  $region17: #{nature_paper_conv_forward.5} parent=0 // pred_fallthru
    _
  // Predicated region
  $region18: #{nature_paper_conv_forward.5} parent=0 // pred_check
    _
  $region19: #{nature_paper_conv_forward.5} parent=0 // pred_check_branch
    %2018 = sbr.rel (0) target = $region21
  $region20: #{nature_paper_conv_forward.5} parent=0 // pred_region
    _
  $region21: #{nature_paper_conv_forward.5} parent=0 // pred_fallthru
    _

// kernel: nature_paper_conv_forward.6
$region0: #{nature_paper_conv_forward.6}
  #allocation0 [shape = 'u32[]', space=smem, size = 0x4, offset = 0x4, fixed_abs, tag = 'smem constant byte address 0x4 - core index']
  #allocation1 [shape = 'u32[144,128]{1,0:T(1,128)}', space=vmem, size = 0x12000, scoped, tag = 'internal scratch']
  %s0 = inlined_call_operand.vmem [shape: f32[98,1152], index: 0, kind: input, shape index: {}]
  %s1 = inlined_call_operand.vmem [shape: f32[1152,128], index: 1, kind: input, shape index: {}]
  %s2 = inlined_call_operand.vmem [shape: f32[1,128], index: 2, kind: input, shape index: {}]
  %s3 = inlined_call_operand.vmem [shape: f32[98,128], index: 3, kind: output, shape index: {}]
  %s4 = sld [smem:[#allocation0]]
  $region22: #{nature_paper_conv_forward.6} parent=0
    _
  %s6 = ssub.s32 1, %s4
  %s7 = scalar_select 0, %s6, %s4
  // Predicated region
  $region2: #{nature_paper_conv_forward.6} parent=0 // pred_check
    _
  $region3: #{nature_paper_conv_forward.6} parent=0 // pred_check_branch
    %9 = sbr.rel (0) target = $region5
  $region4: #{nature_paper_conv_forward.6} parent=0 // pred_region
    _
  $region5: #{nature_paper_conv_forward.6} parent=0 // pred_fallthru
    _
  // Predicated region
  $region6: #{nature_paper_conv_forward.6} parent=0 // pred_check
    _
  $region7: #{nature_paper_conv_forward.6} parent=0 // pred_check_branch
    %11 = sbr.rel (0) target = $region9
  $region8: #{nature_paper_conv_forward.6} parent=0 // pred_region
    _
  $region9: #{nature_paper_conv_forward.6} parent=0 // pred_fallthru
    _
  // Predicated region
  $region10: #{nature_paper_conv_forward.6} parent=0 // pred_check
    _
  $region11: #{nature_paper_conv_forward.6} parent=0 // pred_check_branch
    %13 = sbr.rel (0) target = $region13
  $region12: #{nature_paper_conv_forward.6} parent=0 // pred_region
    _
  $region13: #{nature_paper_conv_forward.6} parent=0 // pred_fallthru
    _
  %v14 = vld [vmem:[%s0] sm:$0xff]
  %v15 = vld [vmem:[%s0 + $0x8] sm:$0xff]
  %v16 = vld [vmem:[%s0 + $0x10] sm:$0xff]
  %v17 = vld [vmem:[%s0 + $0x18] sm:$0xff]
  %v18 = vld [vmem:[%s0 + $0x20] sm:$0xff]
  %v19 = vld [vmem:[%s0 + $0x28] sm:$0xff]
  %v20 = vld [vmem:[%s0 + $0x30] sm:$0xff]
  %v21 = vld [vmem:[%s0 + $0x38] sm:$0xff]
  %v22 = vld [vmem:[%s0 + $0x40] sm:$0xff]
  %v23 = vld [vmem:[%s0 + $0x48] sm:$0xff]
  %v24 = vld [vmem:[%s0 + $0x50] sm:$0xff]
  %v25 = vld [vmem:[%s0 + $0x58] sm:$0xff]
  %v26 = vld [vmem:[%s0 + $0x60] sm:$0xff]
  %v27 = vld [vmem:[%s0 + $0x68] sm:$0xff]
  %v28 = vld [vmem:[%s0 + $0x70] sm:$0xff]
  %v29 = vld [vmem:[%s0 + $0x78] sm:$0xff]
  %v30 = vld [vmem:[%s0 + $0x80] sm:$0xff]
  %v31 = vld [vmem:[%s0 + $0x88] sm:$0xff]
  %v32 = vld [vmem:[%s0 + $0x90] sm:$0xff]
  %v33 = vld [vmem:[%s0 + $0x98] sm:$0xff]
  %v34 = vld [vmem:[%s0 + $0xa0] sm:$0xff]
  %v35 = vld [vmem:[%s0 + $0xa8] sm:$0xff]
  %v36 = vld [vmem:[%s0 + $0xb0] sm:$0xff]
  %v37 = vld [vmem:[%s0 + $0xb8] sm:$0xff]
  %v38 = vld [vmem:[%s0 + $0xc0] sm:$0xff]
  %v39 = vld [vmem:[%s0 + $0xc8] sm:$0xff]
  %v40 = vld [vmem:[%s0 + $0xd0] sm:$0xff]
  %v41 = vld [vmem:[%s0 + $0xd8] sm:$0xff]
  %v42 = vld [vmem:[%s0 + $0xe0] sm:$0xff]
  %v43 = vld [vmem:[%s0 + $0xe8] sm:$0xff]
  %v44 = vld [vmem:[%s0 + $0xf0] sm:$0xff]
  %v45 = vld [vmem:[%s0 + $0xf8] sm:$0xff]
  %v46 = vld [vmem:[%s0 + $0x100] sm:$0xff]
  %v47 = vld [vmem:[%s0 + $0x108] sm:$0xff]
  %v48 = vld [vmem:[%s0 + $0x110] sm:$0xff]
  %v49 = vld [vmem:[%s0 + $0x118] sm:$0xff]
  %v50 = vld [vmem:[%s0 + $0x120] sm:$0xff]
  %v51 = vld [vmem:[%s0 + $0x128] sm:$0xff]
  %v52 = vld [vmem:[%s0 + $0x130] sm:$0xff]
  %v53 = vld [vmem:[%s0 + $0x138] sm:$0xff]
  %v54 = vld [vmem:[%s0 + $0x140] sm:$0xff]
  %v55 = vld [vmem:[%s0 + $0x148] sm:$0xff]
  %v56 = vld [vmem:[%s0 + $0x150] sm:$0xff]
  %v57 = vld [vmem:[%s0 + $0x158] sm:$0xff]
  %v58 = vld [vmem:[%s0 + $0x160] sm:$0xff]
  %v59 = vld [vmem:[%s0 + $0x168] sm:$0xff]
  %v60 = vld [vmem:[%s0 + $0x170] sm:$0xff]
  %v61 = vld [vmem:[%s0 + $0x178] sm:$0xff]
  %v62 = vld [vmem:[%s0 + $0x180] sm:$0xff]
  %v63 = vld [vmem:[%s0 + $0x188] sm:$0xff]
  %v64 = vld [vmem:[%s0 + $0x190] sm:$0xff]
  %v65 = vld [vmem:[%s0 + $0x198] sm:$0xff]
  %v66 = vld [vmem:[%s0 + $0x1a0] sm:$0xff]
  %v67 = vld [vmem:[%s0 + $0x1a8] sm:$0xff]
  %v68 = vld [vmem:[%s0 + $0x1b0] sm:$0xff]
  %v69 = vld [vmem:[%s0 + $0x1b8] sm:$0xff]
  %v70 = vld [vmem:[%s0 + $0x1c0] sm:$0xff]
  %v71 = vld [vmem:[%s0 + $0x1c8] sm:$0xff]
  %v72 = vld [vmem:[%s0 + $0x1d0] sm:$0xff]
  %v73 = vld [vmem:[%s0 + $0x1d8] sm:$0xff]
  %v74 = vld [vmem:[%s0 + $0x1e0] sm:$0xff]
  %v75 = vld [vmem:[%s0 + $0x1e8] sm:$0xff]
  %v76 = vld [vmem:[%s0 + $0x1f0] sm:$0xff]
  %v77 = vld [vmem:[%s0 + $0x1f8] sm:$0xff]
  %v78 = vld [vmem:[%s0 + $0x200] sm:$0xff]
  %v79 = vld [vmem:[%s0 + $0x208] sm:$0xff]
  %v80 = vld [vmem:[%s0 + $0x210] sm:$0xff]
  %v81 = vld [vmem:[%s0 + $0x218] sm:$0xff]
  %v82 = vld [vmem:[%s0 + $0x220] sm:$0xff]
  %v83 = vld [vmem:[%s0 + $0x228] sm:$0xff]
  %v84 = vld [vmem:[%s0 + $0x230] sm:$0xff]
  %v85 = vld [vmem:[%s0 + $0x238] sm:$0xff]
  %v86 = vld [vmem:[%s0 + $0x240] sm:$0xff]
  %v87 = vld [vmem:[%s0 + $0x248] sm:$0xff]
  %v88 = vld [vmem:[%s0 + $0x250] sm:$0xff]
  %v89 = vld [vmem:[%s0 + $0x258] sm:$0xff]
  %v90 = vld [vmem:[%s0 + $0x260] sm:$0xff]
  %v91 = vld [vmem:[%s0 + $0x268] sm:$0xff]
  %v92 = vld [vmem:[%s0 + $0x270] sm:$0xff]
  %v93 = vld [vmem:[%s0 + $0x278] sm:$0xff]
  %v94 = vld [vmem:[%s0 + $0x280] sm:$0xff]
  %v95 = vld [vmem:[%s0 + $0x288] sm:$0xff]
  %v96 = vld [vmem:[%s0 + $0x290] sm:$0xff]
  %v97 = vld [vmem:[%s0 + $0x298] sm:$0xff]
  %v98 = vld [vmem:[%s0 + $0x2a0] sm:$0xff]
  %v99 = vld [vmem:[%s0 + $0x2a8] sm:$0xff]
  %v100 = vld [vmem:[%s0 + $0x2b0] sm:$0xff]
  %v101 = vld [vmem:[%s0 + $0x2b8] sm:$0xff]
  %v102 = vld [vmem:[%s0 + $0x2c0] sm:$0xff]
  %v103 = vld [vmem:[%s0 + $0x2c8] sm:$0xff]
  %v104 = vld [vmem:[%s0 + $0x2d0] sm:$0xff]
  %v105 = vld [vmem:[%s0 + $0x2d8] sm:$0xff]
  %v106 = vld [vmem:[%s0 + $0x2e0] sm:$0xff]
  %v107 = vld [vmem:[%s0 + $0x2e8] sm:$0xff]
  %v108 = vld [vmem:[%s0 + $0x2f0] sm:$0xff]
  %v109 = vld [vmem:[%s0 + $0x2f8] sm:$0xff]
  %v110 = vld [vmem:[%s0 + $0x300] sm:$0xff]
  %v111 = vld [vmem:[%s0 + $0x308] sm:$0xff]
  %v112 = vld [vmem:[%s0 + $0x310] sm:$0xff]
  %v113 = vld [vmem:[%s0 + $0x318] sm:$0xff]
  %v114 = vld [vmem:[%s0 + $0x320] sm:$0xff]
  %v115 = vld [vmem:[%s0 + $0x328] sm:$0xff]
  %v116 = vld [vmem:[%s0 + $0x330] sm:$0xff]
  %v117 = vld [vmem:[%s0 + $0x338] sm:$0xff]
  %v118 = vld [vmem:[%s0 + $0x340] sm:$0xff]
  %v119 = vld [vmem:[%s0 + $0x348] sm:$0xff]
  %v120 = vld [vmem:[%s0 + $0x350] sm:$0xff]
  %v121 = vld [vmem:[%s0 + $0x358] sm:$0xff]
  %v122 = vld [vmem:[%s0 + $0x360] sm:$0x3]
  %v123 = vld [vmem:[%s0 + $0x368] sm:$0x3]
  %v124 = vld [vmem:[%s0 + $0x370] sm:$0x3]
  %v125 = vld [vmem:[%s0 + $0x378] sm:$0x3]
  %v126 = vld [vmem:[%s0 + $0x380] sm:$0x3]
  %v127 = vld [vmem:[%s0 + $0x388] sm:$0x3]
  %v128 = vld [vmem:[%s0 + $0x390] sm:$0x3]
  %v129 = vld [vmem:[%s0 + $0x398] sm:$0x3]
  %v130 = vld [vmem:[%s0 + $0x3a0] sm:$0x3]
  %v131 = vld [vmem:[%s1] sm:$0xff]
  %v132 = vld [vmem:[%s1 + $0x8] sm:$0xff]
  %v133 = vld [vmem:[%s1 + $0x10] sm:$0xff]
  %v134 = vld [vmem:[%s1 + $0x18] sm:$0xff]
  %v135 = vld [vmem:[%s1 + $0x20] sm:$0xff]
  %v136 = vld [vmem:[%s1 + $0x28] sm:$0xff]
  %v137 = vld [vmem:[%s1 + $0x30] sm:$0xff]
  %v138 = vld [vmem:[%s1 + $0x38] sm:$0xff]
  %v139 = vld [vmem:[%s1 + $0x40] sm:$0xff]
  %v140 = vld [vmem:[%s1 + $0x48] sm:$0xff]
  %v141 = vld [vmem:[%s1 + $0x50] sm:$0xff]
  %v142 = vld [vmem:[%s1 + $0x58] sm:$0xff]
  %v143 = vld [vmem:[%s1 + $0x60] sm:$0xff]
  %v144 = vld [vmem:[%s1 + $0x68] sm:$0xff]
  %v145 = vld [vmem:[%s1 + $0x70] sm:$0xff]
  %v146 = vld [vmem:[%s1 + $0x78] sm:$0xff]
  %v147 = vld [vmem:[%s1 + $0x80] sm:$0xff]
  %v148 = vld [vmem:[%s1 + $0x88] sm:$0xff]
  %v149 = vld [vmem:[%s1 + $0x90] sm:$0xff]
  %v150 = vld [vmem:[%s1 + $0x98] sm:$0xff]
  %v151 = vld [vmem:[%s1 + $0xa0] sm:$0xff]
  %v152 = vld [vmem:[%s1 + $0xa8] sm:$0xff]
  %v153 = vld [vmem:[%s1 + $0xb0] sm:$0xff]
  %v154 = vld [vmem:[%s1 + $0xb8] sm:$0xff]
  %v155 = vld [vmem:[%s1 + $0xc0] sm:$0xff]
  %v156 = vld [vmem:[%s1 + $0xc8] sm:$0xff]
  %v157 = vld [vmem:[%s1 + $0xd0] sm:$0xff]
  %v158 = vld [vmem:[%s1 + $0xd8] sm:$0xff]
  %v159 = vld [vmem:[%s1 + $0xe0] sm:$0xff]
  %v160 = vld [vmem:[%s1 + $0xe8] sm:$0xff]
  %v161 = vld [vmem:[%s1 + $0xf0] sm:$0xff]
  %v162 = vld [vmem:[%s1 + $0xf8] sm:$0xff]
  %v163 = vld [vmem:[%s1 + $0x100] sm:$0xff]
  %v164 = vld [vmem:[%s1 + $0x108] sm:$0xff]
  %v165 = vld [vmem:[%s1 + $0x110] sm:$0xff]
  %v166 = vld [vmem:[%s1 + $0x118] sm:$0xff]
  %v167 = vld [vmem:[%s1 + $0x120] sm:$0xff]
  %v168 = vld [vmem:[%s1 + $0x128] sm:$0xff]
  %v169 = vld [vmem:[%s1 + $0x130] sm:$0xff]
  %v170 = vld [vmem:[%s1 + $0x138] sm:$0xff]
  %v171 = vld [vmem:[%s1 + $0x140] sm:$0xff]
  %v172 = vld [vmem:[%s1 + $0x148] sm:$0xff]
  %v173 = vld [vmem:[%s1 + $0x150] sm:$0xff]
  %v174 = vld [vmem:[%s1 + $0x158] sm:$0xff]
  %v175 = vld [vmem:[%s1 + $0x160] sm:$0xff]
  %v176 = vld [vmem:[%s1 + $0x168] sm:$0xff]
  %v177 = vld [vmem:[%s1 + $0x170] sm:$0xff]
  %v178 = vld [vmem:[%s1 + $0x178] sm:$0xff]
  %v179 = vld [vmem:[%s1 + $0x180] sm:$0xff]
  %v180 = vld [vmem:[%s1 + $0x188] sm:$0xff]
  %v181 = vld [vmem:[%s1 + $0x190] sm:$0xff]
  %v182 = vld [vmem:[%s1 + $0x198] sm:$0xff]
  %v183 = vld [vmem:[%s1 + $0x1a0] sm:$0xff]
  %v184 = vld [vmem:[%s1 + $0x1a8] sm:$0xff]
  %v185 = vld [vmem:[%s1 + $0x1b0] sm:$0xff]
  %v186 = vld [vmem:[%s1 + $0x1b8] sm:$0xff]
  %v187 = vld [vmem:[%s1 + $0x1c0] sm:$0xff]
  %v188 = vld [vmem:[%s1 + $0x1c8] sm:$0xff]
  %v189 = vld [vmem:[%s1 + $0x1d0] sm:$0xff]
  %v190 = vld [vmem:[%s1 + $0x1d8] sm:$0xff]
  %v191 = vld [vmem:[%s1 + $0x1e0] sm:$0xff]
  %v192 = vld [vmem:[%s1 + $0x1e8] sm:$0xff]
  %v193 = vld [vmem:[%s1 + $0x1f0] sm:$0xff]
  %v194 = vld [vmem:[%s1 + $0x1f8] sm:$0xff]
  %v195 = vld [vmem:[%s1 + $0x200] sm:$0xff]
  %v196 = vld [vmem:[%s1 + $0x208] sm:$0xff]
  %v197 = vld [vmem:[%s1 + $0x210] sm:$0xff]
  %v198 = vld [vmem:[%s1 + $0x218] sm:$0xff]
  %v199 = vld [vmem:[%s1 + $0x220] sm:$0xff]
  %v200 = vld [vmem:[%s1 + $0x228] sm:$0xff]
  %v201 = vld [vmem:[%s1 + $0x230] sm:$0xff]
  %v202 = vld [vmem:[%s1 + $0x238] sm:$0xff]
  %v203 = vld [vmem:[%s1 + $0x240] sm:$0xff]
  %v204 = vld [vmem:[%s1 + $0x248] sm:$0xff]
  %v205 = vld [vmem:[%s1 + $0x250] sm:$0xff]
  %v206 = vld [vmem:[%s1 + $0x258] sm:$0xff]
  %v207 = vld [vmem:[%s1 + $0x260] sm:$0xff]
  %v208 = vld [vmem:[%s1 + $0x268] sm:$0xff]
  %v209 = vld [vmem:[%s1 + $0x270] sm:$0xff]
  %v210 = vld [vmem:[%s1 + $0x278] sm:$0xff]
  %v211 = vld [vmem:[%s1 + $0x280] sm:$0xff]
  %v212 = vld [vmem:[%s1 + $0x288] sm:$0xff]
  %v213 = vld [vmem:[%s1 + $0x290] sm:$0xff]
  %v214 = vld [vmem:[%s1 + $0x298] sm:$0xff]
  %v215 = vld [vmem:[%s1 + $0x2a0] sm:$0xff]
  %v216 = vld [vmem:[%s1 + $0x2a8] sm:$0xff]
  %v217 = vld [vmem:[%s1 + $0x2b0] sm:$0xff]
  %v218 = vld [vmem:[%s1 + $0x2b8] sm:$0xff]
  %v219 = vld [vmem:[%s1 + $0x2c0] sm:$0xff]
  %v220 = vld [vmem:[%s1 + $0x2c8] sm:$0xff]
  %v221 = vld [vmem:[%s1 + $0x2d0] sm:$0xff]
  %v222 = vld [vmem:[%s1 + $0x2d8] sm:$0xff]
  %v223 = vld [vmem:[%s1 + $0x2e0] sm:$0xff]
  %v224 = vld [vmem:[%s1 + $0x2e8] sm:$0xff]
  %v225 = vld [vmem:[%s1 + $0x2f0] sm:$0xff]
  %v226 = vld [vmem:[%s1 + $0x2f8] sm:$0xff]
  %v227 = vld [vmem:[%s1 + $0x300] sm:$0xff]
  %v228 = vld [vmem:[%s1 + $0x308] sm:$0xff]
  %v229 = vld [vmem:[%s1 + $0x310] sm:$0xff]
  %v230 = vld [vmem:[%s1 + $0x318] sm:$0xff]
  %v231 = vld [vmem:[%s1 + $0x320] sm:$0xff]
  %v232 = vld [vmem:[%s1 + $0x328] sm:$0xff]
  %v233 = vld [vmem:[%s1 + $0x330] sm:$0xff]
  %v234 = vld [vmem:[%s1 + $0x338] sm:$0xff]
  %v235 = vld [vmem:[%s1 + $0x340] sm:$0xff]
  %v236 = vld [vmem:[%s1 + $0x348] sm:$0xff]
  %v237 = vld [vmem:[%s1 + $0x350] sm:$0xff]
  %v238 = vld [vmem:[%s1 + $0x358] sm:$0xff]
  %v239 = vld [vmem:[%s1 + $0x360] sm:$0xff]
  %v240 = vld [vmem:[%s1 + $0x368] sm:$0xff]
  %v241 = vld [vmem:[%s1 + $0x370] sm:$0xff]
  %v242 = vld [vmem:[%s1 + $0x378] sm:$0xff]
  %v243 = vld [vmem:[%s1 + $0x380] sm:$0xff]
  %v244 = vld [vmem:[%s1 + $0x388] sm:$0xff]
  %v245 = vld [vmem:[%s1 + $0x390] sm:$0xff]
  %v246 = vld [vmem:[%s1 + $0x398] sm:$0xff]
  %v247 = vld [vmem:[%s1 + $0x3a0] sm:$0xff]
  %v248 = vld [vmem:[%s1 + $0x3a8] sm:$0xff]
  %v249 = vld [vmem:[%s1 + $0x3b0] sm:$0xff]
  %v250 = vld [vmem:[%s1 + $0x3b8] sm:$0xff]
  %v251 = vld [vmem:[%s1 + $0x3c0] sm:$0xff]
  %v252 = vld [vmem:[%s1 + $0x3c8] sm:$0xff]
  %v253 = vld [vmem:[%s1 + $0x3d0] sm:$0xff]
  %v254 = vld [vmem:[%s1 + $0x3d8] sm:$0xff]
  %v255 = vld [vmem:[%s1 + $0x3e0] sm:$0xff]
  %v256 = vld [vmem:[%s1 + $0x3e8] sm:$0xff]
  %v257 = vld [vmem:[%s1 + $0x3f0] sm:$0xff]
  %v258 = vld [vmem:[%s1 + $0x3f8] sm:$0xff]
  %v259 = vld [vmem:[%s1 + $0x400] sm:$0xff]
  %v260 = vld [vmem:[%s1 + $0x408] sm:$0xff]
  %v261 = vld [vmem:[%s1 + $0x410] sm:$0xff]
  %v262 = vld [vmem:[%s1 + $0x418] sm:$0xff]
  %v263 = vld [vmem:[%s1 + $0x420] sm:$0xff]
  %v264 = vld [vmem:[%s1 + $0x428] sm:$0xff]
  %v265 = vld [vmem:[%s1 + $0x430] sm:$0xff]
  %v266 = vld [vmem:[%s1 + $0x438] sm:$0xff]
  %v267 = vld [vmem:[%s1 + $0x440] sm:$0xff]
  %v268 = vld [vmem:[%s1 + $0x448] sm:$0xff]
  %v269 = vld [vmem:[%s1 + $0x450] sm:$0xff]
  %v270 = vld [vmem:[%s1 + $0x458] sm:$0xff]
  %v271 = vld [vmem:[%s1 + $0x460] sm:$0xff]
  %v272 = vld [vmem:[%s1 + $0x468] sm:$0xff]
  %v273 = vld [vmem:[%s1 + $0x470] sm:$0xff]
  %v274 = vld [vmem:[%s1 + $0x478] sm:$0xff]
  %v275 = vld [vmem:[%s2] sm:$0x1]
  %v277 = vlaneseq
  %v278 = vshrl.u32 %v277, 7
  %v279 = vsub.s32 0, %v278
  %v280 = vrot.slane %v275, %v279
  %282 = vmatprep.subr.mxu0 0.0
  %283 = vmatpush1.msra.mxu0 %v131
  %284 = vmatprep.subr.mxu0 0.0
  %285 = vmatpush1.msra.mxu0 %v132
  %286 = vmatprep.subr.mxu0 0.0
  %287 = vmatpush1.msra.mxu0 %v133
  %288 = vmatprep.subr.mxu0 0.0
  %289 = vmatpush1.msra.mxu0 %v134
  %290 = vmatprep.subr.mxu0 0.0
  %291 = vmatpush1.msra.mxu0 %v135
  %292 = vmatprep.subr.mxu0 0.0
  %293 = vmatpush1.msra.mxu0 %v136
  %294 = vmatprep.subr.mxu0 0.0
  %295 = vmatpush1.msra.mxu0 %v137
  %296 = vmatprep.subr.mxu0 0.0
  %297 = vmatpush1.msra.mxu0 %v138
  %298 = vmatprep.subr.mxu0 0.0
  %299 = vmatpush1.msra.mxu0 %v139
  %300 = vmatprep.subr.mxu0 0.0
  %301 = vmatpush1.msra.mxu0 %v140
  %302 = vmatprep.subr.mxu0 0.0
  %303 = vmatpush1.msra.mxu0 %v141
  %304 = vmatprep.subr.mxu0 0.0
  %305 = vmatpush1.msra.mxu0 %v142
  %306 = vmatprep.subr.mxu0 0.0
  %307 = vmatpush1.msra.mxu0 %v143
  %308 = vmatprep.subr.mxu0 0.0
  %309 = vmatpush1.msra.mxu0 %v144
  %310 = vmatprep.subr.mxu0 0.0
  %311 = vmatpush1.msra.mxu0 %v145
  %312 = vmatprep.subr.mxu0 0.0
  %313 = vmatpush1.msra.mxu0 %v146
  %314 = vmatprep.subr.mxu0 0.0
  %315 = vmatpush1.msra.mxu0 %v147
  %316 = vmatprep.subr.mxu0 0.0
  %317 = vmatpush1.msra.mxu0 %v148
  %318 = vmatprep.subr.mxu0 0.0
  %319 = vmatpush1.msra.mxu0 %v149
  %320 = vmatprep.subr.mxu0 0.0
  %321 = vmatpush1.msra.mxu0 %v150
  %322 = vmatprep.subr.mxu0 0.0
  %323 = vmatpush1.msra.mxu0 %v151
  %324 = vmatprep.subr.mxu0 0.0
  %325 = vmatpush1.msra.mxu0 %v152
  %326 = vmatprep.subr.mxu0 0.0
  %327 = vmatpush1.msra.mxu0 %v153
  %328 = vmatprep.subr.mxu0 0.0
  %329 = vmatpush1.msra.mxu0 %v154
  %330 = vmatprep.subr.mxu0 0.0
  %331 = vmatpush1.msra.mxu0 %v155
  %332 = vmatprep.subr.mxu0 0.0
  %333 = vmatpush1.msra.mxu0 %v156
  %334 = vmatprep.subr.mxu0 0.0
  %335 = vmatpush1.msra.mxu0 %v157
  %336 = vmatprep.subr.mxu0 0.0
  %337 = vmatpush1.msra.mxu0 %v158
  %338 = vmatprep.subr.mxu0 0.0
  %339 = vmatpush1.msra.mxu0 %v159
  %340 = vmatprep.subr.mxu0 0.0
  %341 = vmatpush1.msra.mxu0 %v160
  %342 = vmatprep.subr.mxu0 0.0
  %343 = vmatpush1.msra.mxu0 %v161
  %344 = vmatprep.subr.mxu0 0.0
  %345 = vmatpush1.msra.mxu0 %v162
  %346 = vmatprep.mubr.f32.mxu0 %v15
  %347 = vmatmul.mubr.f32.gmra.mrb[0].mxu0 %v14
  %v348 = vpop.f32.mrb[0].mxu0
  %v349 = vadd.f32 %v280, %v348
  %v350 = vpop.f32.mrb[0].mxu0
  %351 = vmatprep.mubr.f32.mxu0 %v24
  %352 = vmatmul.mubr.f32.gmra.mrb[0].mxu0 %v23
  %v353 = vpop.f32.mrb[0].mxu0
  %v354 = vadd.f32 %v280, %v353
  %v355 = vpop.f32.mrb[0].mxu0
  %356 = vmatprep.mubr.f32.mxu0 %v33
  %357 = vmatmul.mubr.f32.gmra.mrb[0].mxu0 %v32
  %v358 = vpop.f32.mrb[0].mxu0
  %v359 = vadd.f32 %v280, %v358
  %v360 = vpop.f32.mrb[0].mxu0
  %361 = vmatprep.mubr.f32.mxu0 %v42
  %362 = vmatmul.mubr.f32.gmra.mrb[0].mxu0 %v41
  %v363 = vpop.f32.mrb[0].mxu0
  %v364 = vadd.f32 %v280, %v363
  %v365 = vpop.f32.mrb[0].mxu0
  %366 = vmatprep.mubr.f32.mxu0 %v51
  %367 = vmatmul.mubr.f32.gmra.mrb[0].mxu0 %v50
  %v368 = vpop.f32.mrb[0].mxu0
  %v369 = vadd.f32 %v280, %v368
  %v370 = vpop.f32.mrb[0].mxu0
  %371 = vmatprep.mubr.f32.mxu0 %v60
  %372 = vmatmul.mubr.f32.gmra.mrb[0].mxu0 %v59
  %v373 = vpop.f32.mrb[0].mxu0
  %v374 = vadd.f32 %v280, %v373
  %v375 = vpop.f32.mrb[0].mxu0
  %376 = vmatprep.mubr.f32.mxu0 %v69
  %377 = vmatmul.mubr.f32.gmra.mrb[0].mxu0 %v68
  %v378 = vpop.f32.mrb[0].mxu0
  %v379 = vadd.f32 %v280, %v378
  %v380 = vpop.f32.mrb[0].mxu0
  %381 = vmatprep.mubr.f32.mxu0 %v78
  %382 = vmatmul.mubr.f32.gmra.mrb[0].mxu0 %v77
  %v383 = vpop.f32.mrb[0].mxu0
  %v384 = vadd.f32 %v280, %v383
  %v385 = vpop.f32.mrb[0].mxu0
  %386 = vmatprep.mubr.f32.mxu0 %v87
  %387 = vmatmul.mubr.f32.gmra.mrb[0].mxu0 %v86
  %v388 = vpop.f32.mrb[0].mxu0
  %v389 = vadd.f32 %v280, %v388
  %v390 = vpop.f32.mrb[0].mxu0
  %391 = vmatprep.mubr.f32.mxu0 %v96
  %392 = vmatmul.mubr.f32.gmra.mrb[0].mxu0 %v95
  %v393 = vpop.f32.mrb[0].mxu0
  %v394 = vadd.f32 %v280, %v393
  %v395 = vpop.f32.mrb[0].mxu0
  %396 = vmatprep.mubr.f32.mxu0 %v105
  %397 = vmatmul.mubr.f32.gmra.mrb[0].mxu0 %v104
  %v398 = vpop.f32.mrb[0].mxu0
  %v399 = vadd.f32 %v280, %v398
  %v400 = vpop.f32.mrb[0].mxu0
  %401 = vmatprep.mubr.f32.mxu0 %v114
  %402 = vmatmul.mubr.f32.gmra.mrb[0].mxu0 %v113
  %v403 = vpop.f32.mrb[0].mxu0
  %v404 = vadd.f32 %v280, %v403
  %v405 = vpop.f32.mrb[0].mxu0
  %406 = vmatprep.mubr.f32.mxu0 %v123
  %407 = vmatmul.mubr.f32.gmra.mrb[0].mxu0 %v122
  %v408 = vpop.f32.mrb[0].mxu0
  %v409 = vadd.f32 %v280, %v408
  %v410 = vpop.f32.mrb[0].mxu0
  %411 = vdwg.mxu0
  %412 = vmatprep.subr.mxu0 0.0
  %413 = vmatpush1.msra.mxu0 %v163
  %414 = vmatprep.subr.mxu0 0.0
  %415 = vmatpush1.msra.mxu0 %v164
  %416 = vmatprep.subr.mxu0 0.0
  %417 = vmatpush1.msra.mxu0 %v165
  %418 = vmatprep.subr.mxu0 0.0
  %419 = vmatpush1.msra.mxu0 %v166
  %420 = vmatprep.subr.mxu0 0.0
  %421 = vmatpush1.msra.mxu0 %v167
  %422 = vmatprep.subr.mxu0 0.0
  %423 = vmatpush1.msra.mxu0 %v168
  %424 = vmatprep.subr.mxu0 0.0
  %425 = vmatpush1.msra.mxu0 %v169
  %426 = vmatprep.subr.mxu0 0.0
  %427 = vmatpush1.msra.mxu0 %v170
  %428 = vmatprep.subr.mxu0 0.0
  %429 = vmatpush1.msra.mxu0 %v171
  %430 = vmatprep.subr.mxu0 0.0
  %431 = vmatpush1.msra.mxu0 %v172
  %432 = vmatprep.subr.mxu0 0.0
  %433 = vmatpush1.msra.mxu0 %v173
  %434 = vmatprep.subr.mxu0 0.0
  %435 = vmatpush1.msra.mxu0 %v174
  %436 = vmatprep.subr.mxu0 0.0
  %437 = vmatpush1.msra.mxu0 %v175
  %438 = vmatprep.subr.mxu0 0.0
  %439 = vmatpush1.msra.mxu0 %v176
  %440 = vmatprep.subr.mxu0 0.0
  %441 = vmatpush1.msra.mxu0 %v177
  %442 = vmatprep.subr.mxu0 0.0
  %443 = vmatpush1.msra.mxu0 %v178
  %444 = vmatprep.subr.mxu0 0.0
  %445 = vmatpush1.msra.mxu0 %v179
  %446 = vmatprep.subr.mxu0 0.0
  %447 = vmatpush1.msra.mxu0 %v180
  %448 = vmatprep.subr.mxu0 0.0
  %449 = vmatpush1.msra.mxu0 %v181
  %450 = vmatprep.subr.mxu0 0.0
  %451 = vmatpush1.msra.mxu0 %v182
  %452 = vmatprep.subr.mxu0 0.0
  %453 = vmatpush1.msra.mxu0 %v183
  %454 = vmatprep.subr.mxu0 0.0
  %455 = vmatpush1.msra.mxu0 %v184
  %456 = vmatprep.subr.mxu0 0.0
  %457 = vmatpush1.msra.mxu0 %v185
  %458 = vmatprep.subr.mxu0 0.0
  %459 = vmatpush1.msra.mxu0 %v186
  %460 = vmatprep.subr.mxu0 0.0
  %461 = vmatpush1.msra.mxu0 %v187
  %462 = vmatprep.subr.mxu0 0.0
  %463 = vmatpush1.msra.mxu0 %v188
  %464 = vmatprep.subr.mxu0 0.0
  %465 = vmatpush1.msra.mxu0 %v189
  %466 = vmatprep.subr.mxu0 0.0
  %467 = vmatpush1.msra.mxu0 %v190
  %468 = vmatprep.subr.mxu0 0.0
  %469 = vmatpush1.msra.mxu0 %v191
  %470 = vmatprep.subr.mxu0 0.0
  %471 = vmatpush1.msra.mxu0 %v192
  %472 = vmatprep.subr.mxu0 0.0
  %473 = vmatpush1.msra.mxu0 %v193
  %474 = vmatprep.subr.mxu0 0.0
  %475 = vmatpush1.msra.mxu0 %v194
  %476 = vmatprep.mubr.f32.mxu0 %v17
  %477 = vmatmul.mubr.f32.gmra.mrb[0].mxu0 %v16
  %v478 = vpop.f32.mrb[0].mxu0
  %v479 = vadd.f32 %v349, %v478
  %v480 = vpop.f32.mrb[0].mxu0
  %481 = vmatprep.mubr.f32.mxu0 %v26
  %482 = vmatmul.mubr.f32.gmra.mrb[0].mxu0 %v25
  %v483 = vpop.f32.mrb[0].mxu0
  %v484 = vadd.f32 %v354, %v483
  %v485 = vpop.f32.mrb[0].mxu0
  %486 = vmatprep.mubr.f32.mxu0 %v35
  %487 = vmatmul.mubr.f32.gmra.mrb[0].mxu0 %v34
  %v488 = vpop.f32.mrb[0].mxu0
  %v489 = vadd.f32 %v359, %v488
  %v490 = vpop.f32.mrb[0].mxu0
  %491 = vmatprep.mubr.f32.mxu0 %v44
  %492 = vmatmul.mubr.f32.gmra.mrb[0].mxu0 %v43
  %v493 = vpop.f32.mrb[0].mxu0
  %v494 = vadd.f32 %v364, %v493
  %v495 = vpop.f32.mrb[0].mxu0
  %496 = vmatprep.mubr.f32.mxu0 %v53
  %497 = vmatmul.mubr.f32.gmra.mrb[0].mxu0 %v52
  %v498 = vpop.f32.mrb[0].mxu0
  %v499 = vadd.f32 %v369, %v498
  %v500 = vpop.f32.mrb[0].mxu0
  %501 = vmatprep.mubr.f32.mxu0 %v62
  %502 = vmatmul.mubr.f32.gmra.mrb[0].mxu0 %v61
  %v503 = vpop.f32.mrb[0].mxu0
  %v504 = vadd.f32 %v374, %v503
  %v505 = vpop.f32.mrb[0].mxu0
  %506 = vmatprep.mubr.f32.mxu0 %v71
  %507 = vmatmul.mubr.f32.gmra.mrb[0].mxu0 %v70
  %v508 = vpop.f32.mrb[0].mxu0
  %v509 = vadd.f32 %v379, %v508
  %v510 = vpop.f32.mrb[0].mxu0
  %511 = vmatprep.mubr.f32.mxu0 %v80
  %512 = vmatmul.mubr.f32.gmra.mrb[0].mxu0 %v79
  %v513 = vpop.f32.mrb[0].mxu0
  %v514 = vadd.f32 %v384, %v513
  %v515 = vpop.f32.mrb[0].mxu0
  %516 = vmatprep.mubr.f32.mxu0 %v89
  %517 = vmatmul.mubr.f32.gmra.mrb[0].mxu0 %v88
  %v518 = vpop.f32.mrb[0].mxu0
  %v519 = vadd.f32 %v389, %v518
  %v520 = vpop.f32.mrb[0].mxu0
  %521 = vmatprep.mubr.f32.mxu0 %v98
  %522 = vmatmul.mubr.f32.gmra.mrb[0].mxu0 %v97
  %v523 = vpop.f32.mrb[0].mxu0
  %v524 = vadd.f32 %v394, %v523
  %v525 = vpop.f32.mrb[0].mxu0
  %526 = vmatprep.mubr.f32.mxu0 %v107
  %527 = vmatmul.mubr.f32.gmra.mrb[0].mxu0 %v106
  %v528 = vpop.f32.mrb[0].mxu0
  %v529 = vadd.f32 %v399, %v528
  %v530 = vpop.f32.mrb[0].mxu0
  %531 = vmatprep.mubr.f32.mxu0 %v116
  %532 = vmatmul.mubr.f32.gmra.mrb[0].mxu0 %v115
  %v533 = vpop.f32.mrb[0].mxu0
  %v534 = vadd.f32 %v404, %v533
  %v535 = vpop.f32.mrb[0].mxu0
  %536 = vmatprep.mubr.f32.mxu0 %v125
  %537 = vmatmul.mubr.f32.gmra.mrb[0].mxu0 %v124
  %v538 = vpop.f32.mrb[0].mxu0
  %v539 = vadd.f32 %v409, %v538
  %v540 = vpop.f32.mrb[0].mxu0
  %541 = vdwg.mxu0
  %542 = vmatprep.subr.mxu0 0.0
  %543 = vmatpush1.msra.mxu0 %v195
  %544 = vmatprep.subr.mxu0 0.0
  %545 = vmatpush1.msra.mxu0 %v196
  %546 = vmatprep.subr.mxu0 0.0
  %547 = vmatpush1.msra.mxu0 %v197
  %548 = vmatprep.subr.mxu0 0.0
  %549 = vmatpush1.msra.mxu0 %v198
  %550 = vmatprep.subr.mxu0 0.0
  %551 = vmatpush1.msra.mxu0 %v199
  %552 = vmatprep.subr.mxu0 0.0
  %553 = vmatpush1.msra.mxu0 %v200
  %554 = vmatprep.subr.mxu0 0.0
  %555 = vmatpush1.msra.mxu0 %v201
  %556 = vmatprep.subr.mxu0 0.0
  %557 = vmatpush1.msra.mxu0 %v202
  %558 = vmatprep.subr.mxu0 0.0
  %559 = vmatpush1.msra.mxu0 %v203
  %560 = vmatprep.subr.mxu0 0.0
  %561 = vmatpush1.msra.mxu0 %v204
  %562 = vmatprep.subr.mxu0 0.0
  %563 = vmatpush1.msra.mxu0 %v205
  %564 = vmatprep.subr.mxu0 0.0
  %565 = vmatpush1.msra.mxu0 %v206
  %566 = vmatprep.subr.mxu0 0.0
  %567 = vmatpush1.msra.mxu0 %v207
  %568 = vmatprep.subr.mxu0 0.0
  %569 = vmatpush1.msra.mxu0 %v208
  %570 = vmatprep.subr.mxu0 0.0
  %571 = vmatpush1.msra.mxu0 %v209
  %572 = vmatprep.subr.mxu0 0.0
  %573 = vmatpush1.msra.mxu0 %v210
  %574 = vmatprep.subr.mxu0 0.0
  %575 = vmatpush1.msra.mxu0 %v211
  %576 = vmatprep.subr.mxu0 0.0
  %577 = vmatpush1.msra.mxu0 %v212
  %578 = vmatprep.subr.mxu0 0.0
  %579 = vmatpush1.msra.mxu0 %v213
  %580 = vmatprep.subr.mxu0 0.0
  %581 = vmatpush1.msra.mxu0 %v214
  %582 = vmatprep.subr.mxu0 0.0
  %583 = vmatpush1.msra.mxu0 %v215
  %584 = vmatprep.subr.mxu0 0.0
  %585 = vmatpush1.msra.mxu0 %v216
  %586 = vmatprep.subr.mxu0 0.0
  %587 = vmatpush1.msra.mxu0 %v217
  %588 = vmatprep.subr.mxu0 0.0
  %589 = vmatpush1.msra.mxu0 %v218
  %590 = vmatprep.subr.mxu0 0.0
  %591 = vmatpush1.msra.mxu0 %v219
  %592 = vmatprep.subr.mxu0 0.0
  %593 = vmatpush1.msra.mxu0 %v220
  %594 = vmatprep.subr.mxu0 0.0
  %595 = vmatpush1.msra.mxu0 %v221
  %596 = vmatprep.subr.mxu0 0.0
  %597 = vmatpush1.msra.mxu0 %v222
  %598 = vmatprep.subr.mxu0 0.0
  %599 = vmatpush1.msra.mxu0 %v223
  %600 = vmatprep.subr.mxu0 0.0
  %601 = vmatpush1.msra.mxu0 %v224
  %602 = vmatprep.subr.mxu0 0.0
  %603 = vmatpush1.msra.mxu0 %v225
  %604 = vmatprep.subr.mxu0 0.0
  %605 = vmatpush1.msra.mxu0 %v226
  %606 = vmatprep.mubr.f32.mxu0 %v19
  %607 = vmatmul.mubr.f32.gmra.mrb[0].mxu0 %v18
  %v608 = vpop.f32.mrb[0].mxu0
  %v609 = vadd.f32 %v479, %v608
  %v610 = vpop.f32.mrb[0].mxu0
  %611 = vmatprep.mubr.f32.mxu0 %v28
  %612 = vmatmul.mubr.f32.gmra.mrb[0].mxu0 %v27
  %v613 = vpop.f32.mrb[0].mxu0
  %v614 = vadd.f32 %v484, %v613
  %v615 = vpop.f32.mrb[0].mxu0
  %616 = vmatprep.mubr.f32.mxu0 %v37
  %617 = vmatmul.mubr.f32.gmra.mrb[0].mxu0 %v36
  %v618 = vpop.f32.mrb[0].mxu0
  %v619 = vadd.f32 %v489, %v618
  %v620 = vpop.f32.mrb[0].mxu0
  %621 = vmatprep.mubr.f32.mxu0 %v46
  %622 = vmatmul.mubr.f32.gmra.mrb[0].mxu0 %v45
  %v623 = vpop.f32.mrb[0].mxu0
  %v624 = vadd.f32 %v494, %v623
  %v625 = vpop.f32.mrb[0].mxu0
  %626 = vmatprep.mubr.f32.mxu0 %v55
  %627 = vmatmul.mubr.f32.gmra.mrb[0].mxu0 %v54
  %v628 = vpop.f32.mrb[0].mxu0
  %v629 = vadd.f32 %v499, %v628
  %v630 = vpop.f32.mrb[0].mxu0
  %631 = vmatprep.mubr.f32.mxu0 %v64
  %632 = vmatmul.mubr.f32.gmra.mrb[0].mxu0 %v63
  %v633 = vpop.f32.mrb[0].mxu0
  %v634 = vadd.f32 %v504, %v633
  %v635 = vpop.f32.mrb[0].mxu0
  %636 = vmatprep.mubr.f32.mxu0 %v73
  %637 = vmatmul.mubr.f32.gmra.mrb[0].mxu0 %v72
  %v638 = vpop.f32.mrb[0].mxu0
  %v639 = vadd.f32 %v509, %v638
  %v640 = vpop.f32.mrb[0].mxu0
  %641 = vmatprep.mubr.f32.mxu0 %v82
  %642 = vmatmul.mubr.f32.gmra.mrb[0].mxu0 %v81
  %v643 = vpop.f32.mrb[0].mxu0
  %v644 = vadd.f32 %v514, %v643
  %v645 = vpop.f32.mrb[0].mxu0
  %646 = vmatprep.mubr.f32.mxu0 %v91
  %647 = vmatmul.mubr.f32.gmra.mrb[0].mxu0 %v90
  %v648 = vpop.f32.mrb[0].mxu0
  %v649 = vadd.f32 %v519, %v648
  %v650 = vpop.f32.mrb[0].mxu0
  %651 = vmatprep.mubr.f32.mxu0 %v100
  %652 = vmatmul.mubr.f32.gmra.mrb[0].mxu0 %v99
  %v653 = vpop.f32.mrb[0].mxu0
  %v654 = vadd.f32 %v524, %v653
  %v655 = vpop.f32.mrb[0].mxu0
  %656 = vmatprep.mubr.f32.mxu0 %v109
  %657 = vmatmul.mubr.f32.gmra.mrb[0].mxu0 %v108
  %v658 = vpop.f32.mrb[0].mxu0
  %v659 = vadd.f32 %v529, %v658
  %v660 = vpop.f32.mrb[0].mxu0
  %661 = vmatprep.mubr.f32.mxu0 %v118
  %662 = vmatmul.mubr.f32.gmra.mrb[0].mxu0 %v117
  %v663 = vpop.f32.mrb[0].mxu0
  %v664 = vadd.f32 %v534, %v663
  %v665 = vpop.f32.mrb[0].mxu0
  %666 = vmatprep.mubr.f32.mxu0 %v127
  %667 = vmatmul.mubr.f32.gmra.mrb[0].mxu0 %v126
  %v668 = vpop.f32.mrb[0].mxu0
  %v669 = vadd.f32 %v539, %v668
  %v670 = vpop.f32.mrb[0].mxu0
  %671 = vdwg.mxu0
  %672 = vmatprep.subr.mxu0 0.0
  %673 = vmatpush1.msra.mxu0 %v227
  %674 = vmatprep.subr.mxu0 0.0
  %675 = vmatpush1.msra.mxu0 %v228
  %676 = vmatprep.subr.mxu0 0.0
  %677 = vmatpush1.msra.mxu0 %v229
  %678 = vmatprep.subr.mxu0 0.0
  %679 = vmatpush1.msra.mxu0 %v230
  %680 = vmatprep.subr.mxu0 0.0
  %681 = vmatpush1.msra.mxu0 %v231
  %682 = vmatprep.subr.mxu0 0.0
  %683 = vmatpush1.msra.mxu0 %v232
  %684 = vmatprep.subr.mxu0 0.0
  %685 = vmatpush1.msra.mxu0 %v233
  %686 = vmatprep.subr.mxu0 0.0
  %687 = vmatpush1.msra.mxu0 %v234
  %688 = vmatprep.subr.mxu0 0.0
  %689 = vmatpush1.msra.mxu0 %v235
  %690 = vmatprep.subr.mxu0 0.0
  %691 = vmatpush1.msra.mxu0 %v236
  %692 = vmatprep.subr.mxu0 0.0
  %693 = vmatpush1.msra.mxu0 %v237
  %694 = vmatprep.subr.mxu0 0.0
  %695 = vmatpush1.msra.mxu0 %v238
  %696 = vmatprep.subr.mxu0 0.0
  %697 = vmatpush1.msra.mxu0 %v239
  %698 = vmatprep.subr.mxu0 0.0
  %699 = vmatpush1.msra.mxu0 %v240
  %700 = vmatprep.subr.mxu0 0.0
  %701 = vmatpush1.msra.mxu0 %v241
  %702 = vmatprep.subr.mxu0 0.0
  %703 = vmatpush1.msra.mxu0 %v242
  %704 = vmatprep.subr.mxu0 0.0
  %705 = vmatpush1.msra.mxu0 %v243
  %706 = vmatprep.subr.mxu0 0.0
  %707 = vmatpush1.msra.mxu0 %v244
  %708 = vmatprep.subr.mxu0 0.0
  %709 = vmatpush1.msra.mxu0 %v245
  %710 = vmatprep.subr.mxu0 0.0
  %711 = vmatpush1.msra.mxu0 %v246
  %712 = vmatprep.subr.mxu0 0.0
  %713 = vmatpush1.msra.mxu0 %v247
  %714 = vmatprep.subr.mxu0 0.0
  %715 = vmatpush1.msra.mxu0 %v248
  %716 = vmatprep.subr.mxu0 0.0
  %717 = vmatpush1.msra.mxu0 %v249
  %718 = vmatprep.subr.mxu0 0.0
  %719 = vmatpush1.msra.mxu0 %v250
  %720 = vmatprep.subr.mxu0 0.0
  %721 = vmatpush1.msra.mxu0 %v251
  %722 = vmatprep.subr.mxu0 0.0
  %723 = vmatpush1.msra.mxu0 %v252
  %724 = vmatprep.subr.mxu0 0.0
  %725 = vmatpush1.msra.mxu0 %v253
  %726 = vmatprep.subr.mxu0 0.0
  %727 = vmatpush1.msra.mxu0 %v254
  %728 = vmatprep.subr.mxu0 0.0
  %729 = vmatpush1.msra.mxu0 %v255
  %730 = vmatprep.subr.mxu0 0.0
  %731 = vmatpush1.msra.mxu0 %v256
  %732 = vmatprep.subr.mxu0 0.0
  %733 = vmatpush1.msra.mxu0 %v257
  %734 = vmatprep.subr.mxu0 0.0
  %735 = vmatpush1.msra.mxu0 %v258
  %736 = vmatprep.mubr.f32.mxu0 %v21
  %737 = vmatmul.mubr.f32.gmra.mrb[0].mxu0 %v20
  %v738 = vpop.f32.mrb[0].mxu0
  %v739 = vadd.f32 %v609, %v738
  %v740 = vpop.f32.mrb[0].mxu0
  %741 = vmatprep.mubr.f32.mxu0 %v30
  %742 = vmatmul.mubr.f32.gmra.mrb[0].mxu0 %v29
  %v743 = vpop.f32.mrb[0].mxu0
  %v744 = vadd.f32 %v614, %v743
  %v745 = vpop.f32.mrb[0].mxu0
  %746 = vmatprep.mubr.f32.mxu0 %v39
  %747 = vmatmul.mubr.f32.gmra.mrb[0].mxu0 %v38
  %v748 = vpop.f32.mrb[0].mxu0
  %v749 = vadd.f32 %v619, %v748
  %v750 = vpop.f32.mrb[0].mxu0
  %751 = vmatprep.mubr.f32.mxu0 %v48
  %752 = vmatmul.mubr.f32.gmra.mrb[0].mxu0 %v47
  %v753 = vpop.f32.mrb[0].mxu0
  %v754 = vadd.f32 %v624, %v753
  %v755 = vpop.f32.mrb[0].mxu0
  %756 = vmatprep.mubr.f32.mxu0 %v57
  %757 = vmatmul.mubr.f32.gmra.mrb[0].mxu0 %v56
  %v758 = vpop.f32.mrb[0].mxu0
  %v759 = vadd.f32 %v629, %v758
  %v760 = vpop.f32.mrb[0].mxu0
  %761 = vmatprep.mubr.f32.mxu0 %v66
  %762 = vmatmul.mubr.f32.gmra.mrb[0].mxu0 %v65
  %v763 = vpop.f32.mrb[0].mxu0
  %v764 = vadd.f32 %v634, %v763
  %v765 = vpop.f32.mrb[0].mxu0
  %766 = vmatprep.mubr.f32.mxu0 %v75
  %767 = vmatmul.mubr.f32.gmra.mrb[0].mxu0 %v74
  %v768 = vpop.f32.mrb[0].mxu0
  %v769 = vadd.f32 %v639, %v768
  %v770 = vpop.f32.mrb[0].mxu0
  %771 = vmatprep.mubr.f32.mxu0 %v84
  %772 = vmatmul.mubr.f32.gmra.mrb[0].mxu0 %v83
  %v773 = vpop.f32.mrb[0].mxu0
  %v774 = vadd.f32 %v644, %v773
  %v775 = vpop.f32.mrb[0].mxu0
  %776 = vmatprep.mubr.f32.mxu0 %v93
  %777 = vmatmul.mubr.f32.gmra.mrb[0].mxu0 %v92
  %v778 = vpop.f32.mrb[0].mxu0
  %v779 = vadd.f32 %v649, %v778
  %v780 = vpop.f32.mrb[0].mxu0
  %781 = vmatprep.mubr.f32.mxu0 %v102
  %782 = vmatmul.mubr.f32.gmra.mrb[0].mxu0 %v101
  %v783 = vpop.f32.mrb[0].mxu0
  %v784 = vadd.f32 %v654, %v783
  %v785 = vpop.f32.mrb[0].mxu0
  %786 = vmatprep.mubr.f32.mxu0 %v111
  %787 = vmatmul.mubr.f32.gmra.mrb[0].mxu0 %v110
  %v788 = vpop.f32.mrb[0].mxu0
  %v789 = vadd.f32 %v659, %v788
  %v790 = vpop.f32.mrb[0].mxu0
  %791 = vmatprep.mubr.f32.mxu0 %v120
  %792 = vmatmul.mubr.f32.gmra.mrb[0].mxu0 %v119
  %v793 = vpop.f32.mrb[0].mxu0
  %v794 = vadd.f32 %v664, %v793
  %v795 = vpop.f32.mrb[0].mxu0
  %796 = vmatprep.mubr.f32.mxu0 %v129
  %797 = vmatmul.mubr.f32.gmra.mrb[0].mxu0 %v128
  %v798 = vpop.f32.mrb[0].mxu0
  %v799 = vadd.f32 %v669, %v798
  %v800 = vpop.f32.mrb[0].mxu0
  %801 = vdwg.mxu0
  %802 = vmatprep.subr.mxu0 0.0
  %803 = vmatpush1.msra.mxu0 %v259
  %804 = vmatprep.subr.mxu0 0.0
  %805 = vmatpush1.msra.mxu0 %v260
  %806 = vmatprep.subr.mxu0 0.0
  %807 = vmatpush1.msra.mxu0 %v261
  %808 = vmatprep.subr.mxu0 0.0
  %809 = vmatpush1.msra.mxu0 %v262
  %810 = vmatprep.subr.mxu0 0.0
  %811 = vmatpush1.msra.mxu0 %v263
  %812 = vmatprep.subr.mxu0 0.0
  %813 = vmatpush1.msra.mxu0 %v264
  %814 = vmatprep.subr.mxu0 0.0
  %815 = vmatpush1.msra.mxu0 %v265
  %816 = vmatprep.subr.mxu0 0.0
  %817 = vmatpush1.msra.mxu0 %v266
  %818 = vmatprep.subr.mxu0 0.0
  %819 = vmatpush1.msra.mxu0 %v267
  %820 = vmatprep.subr.mxu0 0.0
  %821 = vmatpush1.msra.mxu0 %v268
  %822 = vmatprep.subr.mxu0 0.0
  %823 = vmatpush1.msra.mxu0 %v269
  %824 = vmatprep.subr.mxu0 0.0
  %825 = vmatpush1.msra.mxu0 %v270
  %826 = vmatprep.subr.mxu0 0.0
  %827 = vmatpush1.msra.mxu0 %v271
  %828 = vmatprep.subr.mxu0 0.0
  %829 = vmatpush1.msra.mxu0 %v272
  %830 = vmatprep.subr.mxu0 0.0
  %831 = vmatpush1.msra.mxu0 %v273
  %832 = vmatprep.subr.mxu0 0.0
  %833 = vmatpush1.msra.mxu0 %v274
  %834 = vmatprep.subr.mxu0 0.0
  %835 = vmatpush1.msra.mxu0 0.0
  %836 = vmatprep.subr.mxu0 0.0
  %837 = vmatpush1.msra.mxu0 0.0
  %838 = vmatprep.subr.mxu0 0.0
  %839 = vmatpush1.msra.mxu0 0.0
  %840 = vmatprep.subr.mxu0 0.0
  %841 = vmatpush1.msra.mxu0 0.0
  %842 = vmatprep.subr.mxu0 0.0
  %843 = vmatpush1.msra.mxu0 0.0
  %844 = vmatprep.subr.mxu0 0.0
  %845 = vmatpush1.msra.mxu0 0.0
  %846 = vmatprep.subr.mxu0 0.0
  %847 = vmatpush1.msra.mxu0 0.0
  %848 = vmatprep.subr.mxu0 0.0
  %849 = vmatpush1.msra.mxu0 0.0
  %850 = vmatprep.subr.mxu0 0.0
  %851 = vmatpush1.msra.mxu0 0.0
  %852 = vmatprep.subr.mxu0 0.0
  %853 = vmatpush1.msra.mxu0 0.0
  %854 = vmatprep.subr.mxu0 0.0
  %855 = vmatpush1.msra.mxu0 0.0
  %856 = vmatprep.subr.mxu0 0.0
  %857 = vmatpush1.msra.mxu0 0.0
  %858 = vmatprep.subr.mxu0 0.0
  %859 = vmatpush1.msra.mxu0 0.0
  %860 = vmatprep.subr.mxu0 0.0
  %861 = vmatpush1.msra.mxu0 0.0
  %862 = vmatprep.subr.mxu0 0.0
  %863 = vmatpush1.msra.mxu0 0.0
  %864 = vmatprep.subr.mxu0 0.0
  %865 = vmatpush1.msra.mxu0 0.0
  %866 = vmatprep.mubr.f32.mxu0 0.0
  %867 = vmatmul.mubr.f32.gmra.mrb[0].mxu0 %v22
  %v868 = vpop.f32.mrb[0].mxu0
  %v869 = vadd.f32 %v739, %v868
  %v870 = vpop.f32.mrb[0].mxu0
  %871 = vmatprep.mubr.f32.mxu0 0.0
  %872 = vmatmul.mubr.f32.gmra.mrb[0].mxu0 %v31
  %v873 = vpop.f32.mrb[0].mxu0
  %v874 = vadd.f32 %v744, %v873
  %v875 = vpop.f32.mrb[0].mxu0
  %876 = vmatprep.mubr.f32.mxu0 0.0
  %877 = vmatmul.mubr.f32.gmra.mrb[0].mxu0 %v40
  %v878 = vpop.f32.mrb[0].mxu0
  %v879 = vadd.f32 %v749, %v878
  %v880 = vpop.f32.mrb[0].mxu0
  %881 = vmatprep.mubr.f32.mxu0 0.0
  %882 = vmatmul.mubr.f32.gmra.mrb[0].mxu0 %v49
  %v883 = vpop.f32.mrb[0].mxu0
  %v884 = vadd.f32 %v754, %v883
  %v885 = vpop.f32.mrb[0].mxu0
  %886 = vmatprep.mubr.f32.mxu0 0.0
  %887 = vmatmul.mubr.f32.gmra.mrb[0].mxu0 %v58
  %v888 = vpop.f32.mrb[0].mxu0
  %v889 = vadd.f32 %v759, %v888
  %v890 = vpop.f32.mrb[0].mxu0
  %891 = vmatprep.mubr.f32.mxu0 0.0
  %892 = vmatmul.mubr.f32.gmra.mrb[0].mxu0 %v67
  %v893 = vpop.f32.mrb[0].mxu0
  %v894 = vadd.f32 %v764, %v893
  %v895 = vpop.f32.mrb[0].mxu0
  %896 = vmatprep.mubr.f32.mxu0 0.0
  %897 = vmatmul.mubr.f32.gmra.mrb[0].mxu0 %v76
  %v898 = vpop.f32.mrb[0].mxu0
  %v899 = vadd.f32 %v769, %v898
  %v900 = vpop.f32.mrb[0].mxu0
  %901 = vmatprep.mubr.f32.mxu0 0.0
  %902 = vmatmul.mubr.f32.gmra.mrb[0].mxu0 %v85
  %v903 = vpop.f32.mrb[0].mxu0
  %v904 = vadd.f32 %v774, %v903
  %v905 = vpop.f32.mrb[0].mxu0
  %906 = vmatprep.mubr.f32.mxu0 0.0
  %907 = vmatmul.mubr.f32.gmra.mrb[0].mxu0 %v94
  %v908 = vpop.f32.mrb[0].mxu0
  %v909 = vadd.f32 %v779, %v908
  %v910 = vpop.f32.mrb[0].mxu0
  %911 = vmatprep.mubr.f32.mxu0 0.0
  %912 = vmatmul.mubr.f32.gmra.mrb[0].mxu0 %v103
  %v913 = vpop.f32.mrb[0].mxu0
  %v914 = vadd.f32 %v784, %v913
  %v915 = vpop.f32.mrb[0].mxu0
  %916 = vmatprep.mubr.f32.mxu0 0.0
  %917 = vmatmul.mubr.f32.gmra.mrb[0].mxu0 %v112
  %v918 = vpop.f32.mrb[0].mxu0
  %v919 = vadd.f32 %v789, %v918
  %v920 = vpop.f32.mrb[0].mxu0
  %921 = vmatprep.mubr.f32.mxu0 0.0
  %922 = vmatmul.mubr.f32.gmra.mrb[0].mxu0 %v121
  %v923 = vpop.f32.mrb[0].mxu0
  %v924 = vadd.f32 %v794, %v923
  %v925 = vpop.f32.mrb[0].mxu0
  %926 = vmatprep.mubr.f32.mxu0 0.0
  %927 = vmatmul.mubr.f32.gmra.mrb[0].mxu0 %v130
  %v928 = vpop.f32.mrb[0].mxu0
  %v929 = vadd.f32 %v799, %v928
  %v930 = vpop.f32.mrb[0].mxu0
  %931 = vdwg.mxu0
  %v932 = vmax.f32 %v869, 0.0
  %v933 = vmax.f32 %v874, 0.0
  %v934 = vmax.f32 %v879, 0.0
  %v935 = vmax.f32 %v884, 0.0
  %v936 = vmax.f32 %v889, 0.0
  %v937 = vmax.f32 %v894, 0.0
  %v938 = vmax.f32 %v899, 0.0
  %v939 = vmax.f32 %v904, 0.0
  %v940 = vmax.f32 %v909, 0.0
  %v941 = vmax.f32 %v914, 0.0
  %v942 = vmax.f32 %v919, 0.0
  %v943 = vmax.f32 %v924, 0.0
  %v944 = vmax.f32 %v929, 0.0
  %945 = vst [vmem:[%s3] sm:$0xff] %v932
  %946 = vst [vmem:[%s3 + $0x8] sm:$0xff] %v933
  %947 = vst [vmem:[%s3 + $0x10] sm:$0xff] %v934
  %948 = vst [vmem:[%s3 + $0x18] sm:$0xff] %v935
  %949 = vst [vmem:[%s3 + $0x20] sm:$0xff] %v936
  %950 = vst [vmem:[%s3 + $0x28] sm:$0xff] %v937
  %951 = vst [vmem:[%s3 + $0x30] sm:$0xff] %v938
  %952 = vst [vmem:[%s3 + $0x38] sm:$0xff] %v939
  %953 = vst [vmem:[%s3 + $0x40] sm:$0xff] %v940
  %954 = vst [vmem:[%s3 + $0x48] sm:$0xff] %v941
  %955 = vst [vmem:[%s3 + $0x50] sm:$0xff] %v942
  %956 = vst [vmem:[%s3 + $0x58] sm:$0xff] %v943
  %957 = vst [vmem:[%s3 + $0x60] sm:$0x3] %v944
  // Predicated region
  $region14: #{nature_paper_conv_forward.6} parent=0 // pred_check
    _
  $region15: #{nature_paper_conv_forward.6} parent=0 // pred_check_branch
    %959 = sbr.rel (0) target = $region17
  $region16: #{nature_paper_conv_forward.6} parent=0 // pred_region
    _
  $region17: #{nature_paper_conv_forward.6} parent=0 // pred_fallthru
    _
  // Predicated region
  $region18: #{nature_paper_conv_forward.6} parent=0 // pred_check
    _
  $region19: #{nature_paper_conv_forward.6} parent=0 // pred_check_branch
    %961 = sbr.rel (0) target = $region21
  $region20: #{nature_paper_conv_forward.6} parent=0 // pred_region
    _
  $region21: #{nature_paper_conv_forward.6} parent=0 // pred_fallthru
    _

// kernel: nature_paper_conv_forward.7
$region0: #{nature_paper_conv_forward.7}
  #allocation0 [shape = 'u32[]', space=smem, size = 0x4, offset = 0x4, fixed_abs, tag = 'smem constant byte address 0x4 - core index']
  #allocation1 [shape = 'u32[144,128]{1,0:T(1,128)}', space=vmem, size = 0x12000, scoped, tag = 'internal scratch']
  %s0 = inlined_call_operand.vmem [shape: f32[2,6272], index: 0, kind: input, shape index: {}]
  %s1 = inlined_call_operand.vmem [shape: f32[6272,512], index: 1, kind: input, shape index: {}]
  %s2 = inlined_call_operand.vmem [shape: f32[1,512], index: 2, kind: input, shape index: {}]
  %s3 = inlined_call_operand.vmem [shape: f32[512,128], index: 3, kind: input, shape index: {}]
  %s4 = inlined_call_operand.vmem [shape: f32[1,128], index: 4, kind: input, shape index: {}]
  %s5 = inlined_call_operand.hbm [shape: f32[2,128], index: 5, kind: output, shape index: {}]
  %s6 = sld [smem:[#allocation0]]
  $region30: #{nature_paper_conv_forward.7} parent=0
    _
  %s8 = ssub.s32 1, %s6
  %s9 = scalar_select 0, %s8, %s6
  $region1: #{nature_paper_conv_forward.7} parent=0
    #allocation2 [shape = 'u8[1024]{0}', space=vmem, size = 0x400, scoped, tag = 'output window, operand 0, single buffered']
    #allocation3 [shape = 's32[1]{0}', space=sflag, size = 0x4, scoped, tag = 'scoped memory for nature_paper_conv_forward.7']
    %10 = vsyncpa [#allocation3], 0
    // Predicated region
    $region2: #{nature_paper_conv_forward.7} parent=1 // pred_check
      _
    $region3: #{nature_paper_conv_forward.7} parent=1 // pred_check_branch
      %12 = sbr.rel (0) target = $region5
    $region4: #{nature_paper_conv_forward.7} parent=1 // pred_region
      _
    $region5: #{nature_paper_conv_forward.7} parent=1 // pred_fallthru
      _
    // Predicated region
    $region6: #{nature_paper_conv_forward.7} parent=1 // pred_check
      _
    $region7: #{nature_paper_conv_forward.7} parent=1 // pred_check_branch
      %14 = sbr.rel (0) target = $region9
    $region8: #{nature_paper_conv_forward.7} parent=1 // pred_region
      _
    $region9: #{nature_paper_conv_forward.7} parent=1 // pred_fallthru
      _
    // Predicated region
    $region10: #{nature_paper_conv_forward.7} parent=1 // pred_check
      _
    $region11: #{nature_paper_conv_forward.7} parent=1 // pred_check_branch
      %16 = sbr.rel (0) target = $region13
    $region12: #{nature_paper_conv_forward.7} parent=1 // pred_region
      _
    $region13: #{nature_paper_conv_forward.7} parent=1 // pred_fallthru
      _
    // Predicated region
    $region14: #{nature_paper_conv_forward.7} parent=1 // pred_check
      _
    $region15: #{nature_paper_conv_forward.7} parent=1 // pred_check_branch
      %18 = sbr.rel (0) target = $region17
    $region16: #{nature_paper_conv_forward.7} parent=1 // pred_region
      _
    $region17: #{nature_paper_conv_forward.7} parent=1 // pred_fallthru
      _
    // Predicated region
    $region18: #{nature_paper_conv_forward.7} parent=1 // pred_check
      _
    $region19: #{nature_paper_conv_forward.7} parent=1 // pred_check_branch
      %20 = sbr.rel (0) target = $region21
    $region20: #{nature_paper_conv_forward.7} parent=1 // pred_region
      _
    $region21: #{nature_paper_conv_forward.7} parent=1 // pred_fallthru
      _
    %v21 = vld [vmem:[%s0] sm:$0xff]
    %v22 = vld [vmem:[%s0 + $0x8] sm:$0xff]
    %v23 = vld [vmem:[%s0 + $0x10] sm:$0xff]
    %v24 = vld [vmem:[%s0 + $0x18] sm:$0xff]
    %v25 = vld [vmem:[%s0 + $0x20] sm:$0xff]
    %v26 = vld [vmem:[%s0 + $0x28] sm:$0xff]
    %v27 = vld [vmem:[%s0 + $0x30] sm:$0xff]
    %v28 = vld [vmem:[%s0 + $0x38] sm:$0xff]
    %v29 = vld [vmem:[%s0 + $0x40] sm:$0xff]
    %v30 = vld [vmem:[%s0 + $0x48] sm:$0xff]
    %v31 = vld [vmem:[%s0 + $0x50] sm:$0xff]
    %v32 = vld [vmem:[%s0 + $0x58] sm:$0xff]
    %v33 = vld [vmem:[%s0 + $0x60] sm:$0x3]
    %v34 = vld [vmem:[%s1] sm:$0xff]
    %v35 = vld [vmem:[%s1 + $0x8] sm:$0xff]
    %v36 = vld [vmem:[%s1 + $0x10] sm:$0xff]
    %v37 = vld [vmem:[%s1 + $0x18] sm:$0xff]
    %v38 = vld [vmem:[%s1 + $0x20] sm:$0xff]
    %v39 = vld [vmem:[%s1 + $0x28] sm:$0xff]
    %v40 = vld [vmem:[%s1 + $0x30] sm:$0xff]
    %v41 = vld [vmem:[%s1 + $0x38] sm:$0xff]
    %v42 = vld [vmem:[%s1 + $0x40] sm:$0xff]
    %v43 = vld [vmem:[%s1 + $0x48] sm:$0xff]
    %v44 = vld [vmem:[%s1 + $0x50] sm:$0xff]
    %v45 = vld [vmem:[%s1 + $0x58] sm:$0xff]
    %v46 = vld [vmem:[%s1 + $0x60] sm:$0xff]
    %v47 = vld [vmem:[%s1 + $0x68] sm:$0xff]
    %v48 = vld [vmem:[%s1 + $0x70] sm:$0xff]
    %v49 = vld [vmem:[%s1 + $0x78] sm:$0xff]
    %v50 = vld [vmem:[%s1 + $0x80] sm:$0xff]
    %v51 = vld [vmem:[%s1 + $0x88] sm:$0xff]
    %v52 = vld [vmem:[%s1 + $0x90] sm:$0xff]
    %v53 = vld [vmem:[%s1 + $0x98] sm:$0xff]
    %v54 = vld [vmem:[%s1 + $0xa0] sm:$0xff]
    %v55 = vld [vmem:[%s1 + $0xa8] sm:$0xff]
    %v56 = vld [vmem:[%s1 + $0xb0] sm:$0xff]
    %v57 = vld [vmem:[%s1 + $0xb8] sm:$0xff]
    %v58 = vld [vmem:[%s1 + $0xc0] sm:$0xff]
    %v59 = vld [vmem:[%s1 + $0xc8] sm:$0xff]
    %v60 = vld [vmem:[%s1 + $0xd0] sm:$0xff]
    %v61 = vld [vmem:[%s1 + $0xd8] sm:$0xff]
    %v62 = vld [vmem:[%s1 + $0xe0] sm:$0xff]
    %v63 = vld [vmem:[%s1 + $0xe8] sm:$0xff]
    %v64 = vld [vmem:[%s1 + $0xf0] sm:$0xff]
    %v65 = vld [vmem:[%s1 + $0xf8] sm:$0xff]
    %v66 = vld [vmem:[%s1 + $0x100] sm:$0xff]
    %v67 = vld [vmem:[%s1 + $0x108] sm:$0xff]
    %v68 = vld [vmem:[%s1 + $0x110] sm:$0xff]
    %v69 = vld [vmem:[%s1 + $0x118] sm:$0xff]
    %v70 = vld [vmem:[%s1 + $0x120] sm:$0xff]
    %v71 = vld [vmem:[%s1 + $0x128] sm:$0xff]
    %v72 = vld [vmem:[%s1 + $0x130] sm:$0xff]
    %v73 = vld [vmem:[%s1 + $0x138] sm:$0xff]
    %v74 = vld [vmem:[%s1 + $0x140] sm:$0xff]
    %v75 = vld [vmem:[%s1 + $0x148] sm:$0xff]
    %v76 = vld [vmem:[%s1 + $0x150] sm:$0xff]
    %v77 = vld [vmem:[%s1 + $0x158] sm:$0xff]
    %v78 = vld [vmem:[%s1 + $0x160] sm:$0xff]
    %v79 = vld [vmem:[%s1 + $0x168] sm:$0xff]
    %v80 = vld [vmem:[%s1 + $0x170] sm:$0xff]
    %v81 = vld [vmem:[%s1 + $0x178] sm:$0xff]
    %v82 = vld [vmem:[%s1 + $0x180] sm:$0xff]
    %v83 = vld [vmem:[%s1 + $0x188] sm:$0xff]
    %v84 = vld [vmem:[%s1 + $0x190] sm:$0xff]
    %v85 = vld [vmem:[%s1 + $0x198] sm:$0xff]
    %v86 = vld [vmem:[%s1 + $0x1a0] sm:$0xff]
    %v87 = vld [vmem:[%s1 + $0x1a8] sm:$0xff]
    %v88 = vld [vmem:[%s1 + $0x1b0] sm:$0xff]
    %v89 = vld [vmem:[%s1 + $0x1b8] sm:$0xff]
    %v90 = vld [vmem:[%s1 + $0x1c0] sm:$0xff]
    %v91 = vld [vmem:[%s1 + $0x1c8] sm:$0xff]
    %v92 = vld [vmem:[%s1 + $0x1d0] sm:$0xff]
    %v93 = vld [vmem:[%s1 + $0x1d8] sm:$0xff]
    %v94 = vld [vmem:[%s1 + $0x1e0] sm:$0xff]
    %v95 = vld [vmem:[%s1 + $0x1e8] sm:$0xff]
    %v96 = vld [vmem:[%s1 + $0x1f0] sm:$0xff]
    %v97 = vld [vmem:[%s1 + $0x1f8] sm:$0xff]
    %v98 = vld [vmem:[%s1 + $0x200] sm:$0xff]
    %v99 = vld [vmem:[%s1 + $0x208] sm:$0xff]
    %v100 = vld [vmem:[%s1 + $0x210] sm:$0xff]
    %v101 = vld [vmem:[%s1 + $0x218] sm:$0xff]
    %v102 = vld [vmem:[%s1 + $0x220] sm:$0xff]
    %v103 = vld [vmem:[%s1 + $0x228] sm:$0xff]
    %v104 = vld [vmem:[%s1 + $0x230] sm:$0xff]
    %v105 = vld [vmem:[%s1 + $0x238] sm:$0xff]
    %v106 = vld [vmem:[%s1 + $0x240] sm:$0xff]
    %v107 = vld [vmem:[%s1 + $0x248] sm:$0xff]
    %v108 = vld [vmem:[%s1 + $0x250] sm:$0xff]
    %v109 = vld [vmem:[%s1 + $0x258] sm:$0xff]
    %v110 = vld [vmem:[%s1 + $0x260] sm:$0xff]
    %v111 = vld [vmem:[%s1 + $0x268] sm:$0xff]
    %v112 = vld [vmem:[%s1 + $0x270] sm:$0xff]
    %v113 = vld [vmem:[%s1 + $0x278] sm:$0xff]
    %v114 = vld [vmem:[%s1 + $0x280] sm:$0xff]
    %v115 = vld [vmem:[%s1 + $0x288] sm:$0xff]
    %v116 = vld [vmem:[%s1 + $0x290] sm:$0xff]
    %v117 = vld [vmem:[%s1 + $0x298] sm:$0xff]
    %v118 = vld [vmem:[%s1 + $0x2a0] sm:$0xff]
    %v119 = vld [vmem:[%s1 + $0x2a8] sm:$0xff]
    %v120 = vld [vmem:[%s1 + $0x2b0] sm:$0xff]
    %v121 = vld [vmem:[%s1 + $0x2b8] sm:$0xff]
    %v122 = vld [vmem:[%s1 + $0x2c0] sm:$0xff]
    %v123 = vld [vmem:[%s1 + $0x2c8] sm:$0xff]
    %v124 = vld [vmem:[%s1 + $0x2d0] sm:$0xff]
    %v125 = vld [vmem:[%s1 + $0x2d8] sm:$0xff]
    %v126 = vld [vmem:[%s1 + $0x2e0] sm:$0xff]
    %v127 = vld [vmem:[%s1 + $0x2e8] sm:$0xff]
    %v128 = vld [vmem:[%s1 + $0x2f0] sm:$0xff]
    %v129 = vld [vmem:[%s1 + $0x2f8] sm:$0xff]
    %v130 = vld [vmem:[%s1 + $0x300] sm:$0xff]
    %v131 = vld [vmem:[%s1 + $0x308] sm:$0xff]
    %v132 = vld [vmem:[%s1 + $0x310] sm:$0xff]
    %v133 = vld [vmem:[%s1 + $0x318] sm:$0xff]
    %v134 = vld [vmem:[%s1 + $0x320] sm:$0xff]
    %v135 = vld [vmem:[%s1 + $0x328] sm:$0xff]
    %v136 = vld [vmem:[%s1 + $0x330] sm:$0xff]
    %v137 = vld [vmem:[%s1 + $0x338] sm:$0xff]
    %v138 = vld [vmem:[%s1 + $0x340] sm:$0xff]
    %v139 = vld [vmem:[%s1 + $0x348] sm:$0xff]
    %v140 = vld [vmem:[%s1 + $0x350] sm:$0xff]
    %v141 = vld [vmem:[%s1 + $0x358] sm:$0xff]
    %v142 = vld [vmem:[%s1 + $0x360] sm:$0xff]
    %v143 = vld [vmem:[%s1 + $0x368] sm:$0xff]
    %v144 = vld [vmem:[%s1 + $0x370] sm:$0xff]
    %v145 = vld [vmem:[%s1 + $0x378] sm:$0xff]
    %v146 = vld [vmem:[%s1 + $0x380] sm:$0xff]
    %v147 = vld [vmem:[%s1 + $0x388] sm:$0xff]
    %v148 = vld [vmem:[%s1 + $0x390] sm:$0xff]
    %v149 = vld [vmem:[%s1 + $0x398] sm:$0xff]
    %v150 = vld [vmem:[%s1 + $0x3a0] sm:$0xff]
    %v151 = vld [vmem:[%s1 + $0x3a8] sm:$0xff]
    %v152 = vld [vmem:[%s1 + $0x3b0] sm:$0xff]
    %v153 = vld [vmem:[%s1 + $0x3b8] sm:$0xff]
    %v154 = vld [vmem:[%s1 + $0x3c0] sm:$0xff]
    %v155 = vld [vmem:[%s1 + $0x3c8] sm:$0xff]
    %v156 = vld [vmem:[%s1 + $0x3d0] sm:$0xff]
    %v157 = vld [vmem:[%s1 + $0x3d8] sm:$0xff]
    %v158 = vld [vmem:[%s1 + $0x3e0] sm:$0xff]
    %v159 = vld [vmem:[%s1 + $0x3e8] sm:$0xff]
    %v160 = vld [vmem:[%s1 + $0x3f0] sm:$0xff]
    %v161 = vld [vmem:[%s1 + $0x3f8] sm:$0xff]
    %v162 = vld [vmem:[%s1 + $0x400] sm:$0xff]
    %v163 = vld [vmem:[%s1 + $0x408] sm:$0xff]
    %v164 = vld [vmem:[%s1 + $0x410] sm:$0xff]
    %v165 = vld [vmem:[%s1 + $0x418] sm:$0xff]
    %v166 = vld [vmem:[%s1 + $0x420] sm:$0xff]
    %v167 = vld [vmem:[%s1 + $0x428] sm:$0xff]
    %v168 = vld [vmem:[%s1 + $0x430] sm:$0xff]
    %v169 = vld [vmem:[%s1 + $0x438] sm:$0xff]
    %v170 = vld [vmem:[%s1 + $0x440] sm:$0xff]
    %v171 = vld [vmem:[%s1 + $0x448] sm:$0xff]
    %v172 = vld [vmem:[%s1 + $0x450] sm:$0xff]
    %v173 = vld [vmem:[%s1 + $0x458] sm:$0xff]
    %v174 = vld [vmem:[%s1 + $0x460] sm:$0xff]
    %v175 = vld [vmem:[%s1 + $0x468] sm:$0xff]
    %v176 = vld [vmem:[%s1 + $0x470] sm:$0xff]
    %v177 = vld [vmem:[%s1 + $0x478] sm:$0xff]
    %v178 = vld [vmem:[%s1 + $0x480] sm:$0xff]
    %v179 = vld [vmem:[%s1 + $0x488] sm:$0xff]
    %v180 = vld [vmem:[%s1 + $0x490] sm:$0xff]
    %v181 = vld [vmem:[%s1 + $0x498] sm:$0xff]
    %v182 = vld [vmem:[%s1 + $0x4a0] sm:$0xff]
    %v183 = vld [vmem:[%s1 + $0x4a8] sm:$0xff]
    %v184 = vld [vmem:[%s1 + $0x4b0] sm:$0xff]
    %v185 = vld [vmem:[%s1 + $0x4b8] sm:$0xff]
    %v186 = vld [vmem:[%s1 + $0x4c0] sm:$0xff]
    %v187 = vld [vmem:[%s1 + $0x4c8] sm:$0xff]
    %v188 = vld [vmem:[%s1 + $0x4d0] sm:$0xff]
    %v189 = vld [vmem:[%s1 + $0x4d8] sm:$0xff]
    %v190 = vld [vmem:[%s1 + $0x4e0] sm:$0xff]
    %v191 = vld [vmem:[%s1 + $0x4e8] sm:$0xff]
    %v192 = vld [vmem:[%s1 + $0x4f0] sm:$0xff]
    %v193 = vld [vmem:[%s1 + $0x4f8] sm:$0xff]
    %v194 = vld [vmem:[%s1 + $0x500] sm:$0xff]
    %v195 = vld [vmem:[%s1 + $0x508] sm:$0xff]
    %v196 = vld [vmem:[%s1 + $0x510] sm:$0xff]
    %v197 = vld [vmem:[%s1 + $0x518] sm:$0xff]
    %v198 = vld [vmem:[%s1 + $0x520] sm:$0xff]
    %v199 = vld [vmem:[%s1 + $0x528] sm:$0xff]
    %v200 = vld [vmem:[%s1 + $0x530] sm:$0xff]
    %v201 = vld [vmem:[%s1 + $0x538] sm:$0xff]
    %v202 = vld [vmem:[%s1 + $0x540] sm:$0xff]
    %v203 = vld [vmem:[%s1 + $0x548] sm:$0xff]
    %v204 = vld [vmem:[%s1 + $0x550] sm:$0xff]
    %v205 = vld [vmem:[%s1 + $0x558] sm:$0xff]
    %v206 = vld [vmem:[%s1 + $0x560] sm:$0xff]
    %v207 = vld [vmem:[%s1 + $0x568] sm:$0xff]
    %v208 = vld [vmem:[%s1 + $0x570] sm:$0xff]
    %v209 = vld [vmem:[%s1 + $0x578] sm:$0xff]
    %v210 = vld [vmem:[%s1 + $0x580] sm:$0xff]
    %v211 = vld [vmem:[%s1 + $0x588] sm:$0xff]
    %v212 = vld [vmem:[%s1 + $0x590] sm:$0xff]
    %v213 = vld [vmem:[%s1 + $0x598] sm:$0xff]
    %v214 = vld [vmem:[%s1 + $0x5a0] sm:$0xff]
    %v215 = vld [vmem:[%s1 + $0x5a8] sm:$0xff]
    %v216 = vld [vmem:[%s1 + $0x5b0] sm:$0xff]
    %v217 = vld [vmem:[%s1 + $0x5b8] sm:$0xff]
    %v218 = vld [vmem:[%s1 + $0x5c0] sm:$0xff]
    %v219 = vld [vmem:[%s1 + $0x5c8] sm:$0xff]
    %v220 = vld [vmem:[%s1 + $0x5d0] sm:$0xff]
    %v221 = vld [vmem:[%s1 + $0x5d8] sm:$0xff]
    %v222 = vld [vmem:[%s1 + $0x5e0] sm:$0xff]
    %v223 = vld [vmem:[%s1 + $0x5e8] sm:$0xff]
    %v224 = vld [vmem:[%s1 + $0x5f0] sm:$0xff]
    %v225 = vld [vmem:[%s1 + $0x5f8] sm:$0xff]
    %v226 = vld [vmem:[%s1 + $0x600] sm:$0xff]
    %v227 = vld [vmem:[%s1 + $0x608] sm:$0xff]
    %v228 = vld [vmem:[%s1 + $0x610] sm:$0xff]
    %v229 = vld [vmem:[%s1 + $0x618] sm:$0xff]
    %v230 = vld [vmem:[%s1 + $0x620] sm:$0xff]
    %v231 = vld [vmem:[%s1 + $0x628] sm:$0xff]
    %v232 = vld [vmem:[%s1 + $0x630] sm:$0xff]
    %v233 = vld [vmem:[%s1 + $0x638] sm:$0xff]
    %v234 = vld [vmem:[%s1 + $0x640] sm:$0xff]
    %v235 = vld [vmem:[%s1 + $0x648] sm:$0xff]
    %v236 = vld [vmem:[%s1 + $0x650] sm:$0xff]
    %v237 = vld [vmem:[%s1 + $0x658] sm:$0xff]
    %v238 = vld [vmem:[%s1 + $0x660] sm:$0xff]
    %v239 = vld [vmem:[%s1 + $0x668] sm:$0xff]
    %v240 = vld [vmem:[%s1 + $0x670] sm:$0xff]
    %v241 = vld [vmem:[%s1 + $0x678] sm:$0xff]
    %v242 = vld [vmem:[%s1 + $0x680] sm:$0xff]
    %v243 = vld [vmem:[%s1 + $0x688] sm:$0xff]
    %v244 = vld [vmem:[%s1 + $0x690] sm:$0xff]
    %v245 = vld [vmem:[%s1 + $0x698] sm:$0xff]
    %v246 = vld [vmem:[%s1 + $0x6a0] sm:$0xff]
    %v247 = vld [vmem:[%s1 + $0x6a8] sm:$0xff]
    %v248 = vld [vmem:[%s1 + $0x6b0] sm:$0xff]
    %v249 = vld [vmem:[%s1 + $0x6b8] sm:$0xff]
    %v250 = vld [vmem:[%s1 + $0x6c0] sm:$0xff]
    %v251 = vld [vmem:[%s1 + $0x6c8] sm:$0xff]
    %v252 = vld [vmem:[%s1 + $0x6d0] sm:$0xff]
    %v253 = vld [vmem:[%s1 + $0x6d8] sm:$0xff]
    %v254 = vld [vmem:[%s1 + $0x6e0] sm:$0xff]
    %v255 = vld [vmem:[%s1 + $0x6e8] sm:$0xff]
    %v256 = vld [vmem:[%s1 + $0x6f0] sm:$0xff]
    %v257 = vld [vmem:[%s1 + $0x6f8] sm:$0xff]
    %v258 = vld [vmem:[%s1 + $0x700] sm:$0xff]
    %v259 = vld [vmem:[%s1 + $0x708] sm:$0xff]
    %v260 = vld [vmem:[%s1 + $0x710] sm:$0xff]
    %v261 = vld [vmem:[%s1 + $0x718] sm:$0xff]
    %v262 = vld [vmem:[%s1 + $0x720] sm:$0xff]
    %v263 = vld [vmem:[%s1 + $0x728] sm:$0xff]
    %v264 = vld [vmem:[%s1 + $0x730] sm:$0xff]
    %v265 = vld [vmem:[%s1 + $0x738] sm:$0xff]
    %v266 = vld [vmem:[%s1 + $0x740] sm:$0xff]
    %v267 = vld [vmem:[%s1 + $0x748] sm:$0xff]
    %v268 = vld [vmem:[%s1 + $0x750] sm:$0xff]
    %v269 = vld [vmem:[%s1 + $0x758] sm:$0xff]
    %v270 = vld [vmem:[%s1 + $0x760] sm:$0xff]
    %v271 = vld [vmem:[%s1 + $0x768] sm:$0xff]
    %v272 = vld [vmem:[%s1 + $0x770] sm:$0xff]
    %v273 = vld [vmem:[%s1 + $0x778] sm:$0xff]
    %v274 = vld [vmem:[%s1 + $0x780] sm:$0xff]
    %v275 = vld [vmem:[%s1 + $0x788] sm:$0xff]
    %v276 = vld [vmem:[%s1 + $0x790] sm:$0xff]
    %v277 = vld [vmem:[%s1 + $0x798] sm:$0xff]
    %v278 = vld [vmem:[%s1 + $0x7a0] sm:$0xff]
    %v279 = vld [vmem:[%s1 + $0x7a8] sm:$0xff]
    %v280 = vld [vmem:[%s1 + $0x7b0] sm:$0xff]
    %v281 = vld [vmem:[%s1 + $0x7b8] sm:$0xff]
    %v282 = vld [vmem:[%s1 + $0x7c0] sm:$0xff]
    %v283 = vld [vmem:[%s1 + $0x7c8] sm:$0xff]
    %v284 = vld [vmem:[%s1 + $0x7d0] sm:$0xff]
    %v285 = vld [vmem:[%s1 + $0x7d8] sm:$0xff]
    %v286 = vld [vmem:[%s1 + $0x7e0] sm:$0xff]
    %v287 = vld [vmem:[%s1 + $0x7e8] sm:$0xff]
    %v288 = vld [vmem:[%s1 + $0x7f0] sm:$0xff]
    %v289 = vld [vmem:[%s1 + $0x7f8] sm:$0xff]
    %v290 = vld [vmem:[%s1 + $0x800] sm:$0xff]
    %v291 = vld [vmem:[%s1 + $0x808] sm:$0xff]
    %v292 = vld [vmem:[%s1 + $0x810] sm:$0xff]
    %v293 = vld [vmem:[%s1 + $0x818] sm:$0xff]
    %v294 = vld [vmem:[%s1 + $0x820] sm:$0xff]
    %v295 = vld [vmem:[%s1 + $0x828] sm:$0xff]
    %v296 = vld [vmem:[%s1 + $0x830] sm:$0xff]
    %v297 = vld [vmem:[%s1 + $0x838] sm:$0xff]
    %v298 = vld [vmem:[%s1 + $0x840] sm:$0xff]
    %v299 = vld [vmem:[%s1 + $0x848] sm:$0xff]
    %v300 = vld [vmem:[%s1 + $0x850] sm:$0xff]
    %v301 = vld [vmem:[%s1 + $0x858] sm:$0xff]
    %v302 = vld [vmem:[%s1 + $0x860] sm:$0xff]
    %v303 = vld [vmem:[%s1 + $0x868] sm:$0xff]
    %v304 = vld [vmem:[%s1 + $0x870] sm:$0xff]
    %v305 = vld [vmem:[%s1 + $0x878] sm:$0xff]
    %v306 = vld [vmem:[%s1 + $0x880] sm:$0xff]
    %v307 = vld [vmem:[%s1 + $0x888] sm:$0xff]
    %v308 = vld [vmem:[%s1 + $0x890] sm:$0xff]
    %v309 = vld [vmem:[%s1 + $0x898] sm:$0xff]
    %v310 = vld [vmem:[%s1 + $0x8a0] sm:$0xff]
    %v311 = vld [vmem:[%s1 + $0x8a8] sm:$0xff]
    %v312 = vld [vmem:[%s1 + $0x8b0] sm:$0xff]
    %v313 = vld [vmem:[%s1 + $0x8b8] sm:$0xff]
    %v314 = vld [vmem:[%s1 + $0x8c0] sm:$0xff]
    %v315 = vld [vmem:[%s1 + $0x8c8] sm:$0xff]
    %v316 = vld [vmem:[%s1 + $0x8d0] sm:$0xff]
    %v317 = vld [vmem:[%s1 + $0x8d8] sm:$0xff]
    %v318 = vld [vmem:[%s1 + $0x8e0] sm:$0xff]
    %v319 = vld [vmem:[%s1 + $0x8e8] sm:$0xff]
    %v320 = vld [vmem:[%s1 + $0x8f0] sm:$0xff]
    %v321 = vld [vmem:[%s1 + $0x8f8] sm:$0xff]
    %v322 = vld [vmem:[%s1 + $0x900] sm:$0xff]
    %v323 = vld [vmem:[%s1 + $0x908] sm:$0xff]
    %v324 = vld [vmem:[%s1 + $0x910] sm:$0xff]
    %v325 = vld [vmem:[%s1 + $0x918] sm:$0xff]
    %v326 = vld [vmem:[%s1 + $0x920] sm:$0xff]
    %v327 = vld [vmem:[%s1 + $0x928] sm:$0xff]
    %v328 = vld [vmem:[%s1 + $0x930] sm:$0xff]
    %v329 = vld [vmem:[%s1 + $0x938] sm:$0xff]
    %v330 = vld [vmem:[%s1 + $0x940] sm:$0xff]
    %v331 = vld [vmem:[%s1 + $0x948] sm:$0xff]
    %v332 = vld [vmem:[%s1 + $0x950] sm:$0xff]
    %v333 = vld [vmem:[%s1 + $0x958] sm:$0xff]
    %v334 = vld [vmem:[%s1 + $0x960] sm:$0xff]
    %v335 = vld [vmem:[%s1 + $0x968] sm:$0xff]
    %v336 = vld [vmem:[%s1 + $0x970] sm:$0xff]
    %v337 = vld [vmem:[%s1 + $0x978] sm:$0xff]
    %v338 = vld [vmem:[%s1 + $0x980] sm:$0xff]
    %v339 = vld [vmem:[%s1 + $0x988] sm:$0xff]
    %v340 = vld [vmem:[%s1 + $0x990] sm:$0xff]
    %v341 = vld [vmem:[%s1 + $0x998] sm:$0xff]
    %v342 = vld [vmem:[%s1 + $0x9a0] sm:$0xff]
    %v343 = vld [vmem:[%s1 + $0x9a8] sm:$0xff]
    %v344 = vld [vmem:[%s1 + $0x9b0] sm:$0xff]
    %v345 = vld [vmem:[%s1 + $0x9b8] sm:$0xff]
    %v346 = vld [vmem:[%s1 + $0x9c0] sm:$0xff]
    %v347 = vld [vmem:[%s1 + $0x9c8] sm:$0xff]
    %v348 = vld [vmem:[%s1 + $0x9d0] sm:$0xff]
    %v349 = vld [vmem:[%s1 + $0x9d8] sm:$0xff]
    %v350 = vld [vmem:[%s1 + $0x9e0] sm:$0xff]
    %v351 = vld [vmem:[%s1 + $0x9e8] sm:$0xff]
    %v352 = vld [vmem:[%s1 + $0x9f0] sm:$0xff]
    %v353 = vld [vmem:[%s1 + $0x9f8] sm:$0xff]
    %v354 = vld [vmem:[%s1 + $0xa00] sm:$0xff]
    %v355 = vld [vmem:[%s1 + $0xa08] sm:$0xff]
    %v356 = vld [vmem:[%s1 + $0xa10] sm:$0xff]
    %v357 = vld [vmem:[%s1 + $0xa18] sm:$0xff]
    %v358 = vld [vmem:[%s1 + $0xa20] sm:$0xff]
    %v359 = vld [vmem:[%s1 + $0xa28] sm:$0xff]
    %v360 = vld [vmem:[%s1 + $0xa30] sm:$0xff]
    %v361 = vld [vmem:[%s1 + $0xa38] sm:$0xff]
    %v362 = vld [vmem:[%s1 + $0xa40] sm:$0xff]
    %v363 = vld [vmem:[%s1 + $0xa48] sm:$0xff]
    %v364 = vld [vmem:[%s1 + $0xa50] sm:$0xff]
    %v365 = vld [vmem:[%s1 + $0xa58] sm:$0xff]
    %v366 = vld [vmem:[%s1 + $0xa60] sm:$0xff]
    %v367 = vld [vmem:[%s1 + $0xa68] sm:$0xff]
    %v368 = vld [vmem:[%s1 + $0xa70] sm:$0xff]
    %v369 = vld [vmem:[%s1 + $0xa78] sm:$0xff]
    %v370 = vld [vmem:[%s1 + $0xa80] sm:$0xff]
    %v371 = vld [vmem:[%s1 + $0xa88] sm:$0xff]
    %v372 = vld [vmem:[%s1 + $0xa90] sm:$0xff]
    %v373 = vld [vmem:[%s1 + $0xa98] sm:$0xff]
    %v374 = vld [vmem:[%s1 + $0xaa0] sm:$0xff]
    %v375 = vld [vmem:[%s1 + $0xaa8] sm:$0xff]
    %v376 = vld [vmem:[%s1 + $0xab0] sm:$0xff]
    %v377 = vld [vmem:[%s1 + $0xab8] sm:$0xff]
    %v378 = vld [vmem:[%s1 + $0xac0] sm:$0xff]
    %v379 = vld [vmem:[%s1 + $0xac8] sm:$0xff]
    %v380 = vld [vmem:[%s1 + $0xad0] sm:$0xff]
    %v381 = vld [vmem:[%s1 + $0xad8] sm:$0xff]
    %v382 = vld [vmem:[%s1 + $0xae0] sm:$0xff]
    %v383 = vld [vmem:[%s1 + $0xae8] sm:$0xff]
    %v384 = vld [vmem:[%s1 + $0xaf0] sm:$0xff]
    %v385 = vld [vmem:[%s1 + $0xaf8] sm:$0xff]
    %v386 = vld [vmem:[%s1 + $0xb00] sm:$0xff]
    %v387 = vld [vmem:[%s1 + $0xb08] sm:$0xff]
    %v388 = vld [vmem:[%s1 + $0xb10] sm:$0xff]
    %v389 = vld [vmem:[%s1 + $0xb18] sm:$0xff]
    %v390 = vld [vmem:[%s1 + $0xb20] sm:$0xff]
    %v391 = vld [vmem:[%s1 + $0xb28] sm:$0xff]
    %v392 = vld [vmem:[%s1 + $0xb30] sm:$0xff]
    %v393 = vld [vmem:[%s1 + $0xb38] sm:$0xff]
    %v394 = vld [vmem:[%s1 + $0xb40] sm:$0xff]
    %v395 = vld [vmem:[%s1 + $0xb48] sm:$0xff]
    %v396 = vld [vmem:[%s1 + $0xb50] sm:$0xff]
    %v397 = vld [vmem:[%s1 + $0xb58] sm:$0xff]
    %v398 = vld [vmem:[%s1 + $0xb60] sm:$0xff]
    %v399 = vld [vmem:[%s1 + $0xb68] sm:$0xff]
    %v400 = vld [vmem:[%s1 + $0xb70] sm:$0xff]
    %v401 = vld [vmem:[%s1 + $0xb78] sm:$0xff]
    %v402 = vld [vmem:[%s1 + $0xb80] sm:$0xff]
    %v403 = vld [vmem:[%s1 + $0xb88] sm:$0xff]
    %v404 = vld [vmem:[%s1 + $0xb90] sm:$0xff]
    %v405 = vld [vmem:[%s1 + $0xb98] sm:$0xff]
    %v406 = vld [vmem:[%s1 + $0xba0] sm:$0xff]
    %v407 = vld [vmem:[%s1 + $0xba8] sm:$0xff]
    %v408 = vld [vmem:[%s1 + $0xbb0] sm:$0xff]
    %v409 = vld [vmem:[%s1 + $0xbb8] sm:$0xff]
    %v410 = vld [vmem:[%s1 + $0xbc0] sm:$0xff]
    %v411 = vld [vmem:[%s1 + $0xbc8] sm:$0xff]
    %v412 = vld [vmem:[%s1 + $0xbd0] sm:$0xff]
    %v413 = vld [vmem:[%s1 + $0xbd8] sm:$0xff]
    %v414 = vld [vmem:[%s1 + $0xbe0] sm:$0xff]
    %v415 = vld [vmem:[%s1 + $0xbe8] sm:$0xff]
    %v416 = vld [vmem:[%s1 + $0xbf0] sm:$0xff]
    %v417 = vld [vmem:[%s1 + $0xbf8] sm:$0xff]
    %v418 = vld [vmem:[%s1 + $0xc00] sm:$0xff]
    %v419 = vld [vmem:[%s1 + $0xc08] sm:$0xff]
    %v420 = vld [vmem:[%s1 + $0xc10] sm:$0xff]
    %v421 = vld [vmem:[%s1 + $0xc18] sm:$0xff]
    %v422 = vld [vmem:[%s1 + $0xc20] sm:$0xff]
    %v423 = vld [vmem:[%s1 + $0xc28] sm:$0xff]
    %v424 = vld [vmem:[%s1 + $0xc30] sm:$0xff]
    %v425 = vld [vmem:[%s1 + $0xc38] sm:$0xff]
    %v426 = vld [vmem:[%s1 + $0xc40] sm:$0xff]
    %v427 = vld [vmem:[%s1 + $0xc48] sm:$0xff]
    %v428 = vld [vmem:[%s1 + $0xc50] sm:$0xff]
    %v429 = vld [vmem:[%s1 + $0xc58] sm:$0xff]
    %v430 = vld [vmem:[%s1 + $0xc60] sm:$0xff]
    %v431 = vld [vmem:[%s1 + $0xc68] sm:$0xff]
    %v432 = vld [vmem:[%s1 + $0xc70] sm:$0xff]
    %v433 = vld [vmem:[%s1 + $0xc78] sm:$0xff]
    %v434 = vld [vmem:[%s1 + $0xc80] sm:$0xff]
    %v435 = vld [vmem:[%s1 + $0xc88] sm:$0xff]
    %v436 = vld [vmem:[%s1 + $0xc90] sm:$0xff]
    %v437 = vld [vmem:[%s1 + $0xc98] sm:$0xff]
    %v438 = vld [vmem:[%s1 + $0xca0] sm:$0xff]
    %v439 = vld [vmem:[%s1 + $0xca8] sm:$0xff]
    %v440 = vld [vmem:[%s1 + $0xcb0] sm:$0xff]
    %v441 = vld [vmem:[%s1 + $0xcb8] sm:$0xff]
    %v442 = vld [vmem:[%s1 + $0xcc0] sm:$0xff]
    %v443 = vld [vmem:[%s1 + $0xcc8] sm:$0xff]
    %v444 = vld [vmem:[%s1 + $0xcd0] sm:$0xff]
    %v445 = vld [vmem:[%s1 + $0xcd8] sm:$0xff]
    %v446 = vld [vmem:[%s1 + $0xce0] sm:$0xff]
    %v447 = vld [vmem:[%s1 + $0xce8] sm:$0xff]
    %v448 = vld [vmem:[%s1 + $0xcf0] sm:$0xff]
    %v449 = vld [vmem:[%s1 + $0xcf8] sm:$0xff]
    %v450 = vld [vmem:[%s1 + $0xd00] sm:$0xff]
    %v451 = vld [vmem:[%s1 + $0xd08] sm:$0xff]
    %v452 = vld [vmem:[%s1 + $0xd10] sm:$0xff]
    %v453 = vld [vmem:[%s1 + $0xd18] sm:$0xff]
    %v454 = vld [vmem:[%s1 + $0xd20] sm:$0xff]
    %v455 = vld [vmem:[%s1 + $0xd28] sm:$0xff]
    %v456 = vld [vmem:[%s1 + $0xd30] sm:$0xff]
    %v457 = vld [vmem:[%s1 + $0xd38] sm:$0xff]
    %v458 = vld [vmem:[%s1 + $0xd40] sm:$0xff]
    %v459 = vld [vmem:[%s1 + $0xd48] sm:$0xff]
    %v460 = vld [vmem:[%s1 + $0xd50] sm:$0xff]
    %v461 = vld [vmem:[%s1 + $0xd58] sm:$0xff]
    %v462 = vld [vmem:[%s1 + $0xd60] sm:$0xff]
    %v463 = vld [vmem:[%s1 + $0xd68] sm:$0xff]
    %v464 = vld [vmem:[%s1 + $0xd70] sm:$0xff]
    %v465 = vld [vmem:[%s1 + $0xd78] sm:$0xff]
    %v466 = vld [vmem:[%s1 + $0xd80] sm:$0xff]
    %v467 = vld [vmem:[%s1 + $0xd88] sm:$0xff]
    %v468 = vld [vmem:[%s1 + $0xd90] sm:$0xff]
    %v469 = vld [vmem:[%s1 + $0xd98] sm:$0xff]
    %v470 = vld [vmem:[%s1 + $0xda0] sm:$0xff]
    %v471 = vld [vmem:[%s1 + $0xda8] sm:$0xff]
    %v472 = vld [vmem:[%s1 + $0xdb0] sm:$0xff]
    %v473 = vld [vmem:[%s1 + $0xdb8] sm:$0xff]
    %v474 = vld [vmem:[%s1 + $0xdc0] sm:$0xff]
    %v475 = vld [vmem:[%s1 + $0xdc8] sm:$0xff]
    %v476 = vld [vmem:[%s1 + $0xdd0] sm:$0xff]
    %v477 = vld [vmem:[%s1 + $0xdd8] sm:$0xff]
    %v478 = vld [vmem:[%s1 + $0xde0] sm:$0xff]
    %v479 = vld [vmem:[%s1 + $0xde8] sm:$0xff]
    %v480 = vld [vmem:[%s1 + $0xdf0] sm:$0xff]
    %v481 = vld [vmem:[%s1 + $0xdf8] sm:$0xff]
    %v482 = vld [vmem:[%s1 + $0xe00] sm:$0xff]
    %v483 = vld [vmem:[%s1 + $0xe08] sm:$0xff]
    %v484 = vld [vmem:[%s1 + $0xe10] sm:$0xff]
    %v485 = vld [vmem:[%s1 + $0xe18] sm:$0xff]
    %v486 = vld [vmem:[%s1 + $0xe20] sm:$0xff]
    %v487 = vld [vmem:[%s1 + $0xe28] sm:$0xff]
    %v488 = vld [vmem:[%s1 + $0xe30] sm:$0xff]
    %v489 = vld [vmem:[%s1 + $0xe38] sm:$0xff]
    %v490 = vld [vmem:[%s1 + $0xe40] sm:$0xff]
    %v491 = vld [vmem:[%s1 + $0xe48] sm:$0xff]
    %v492 = vld [vmem:[%s1 + $0xe50] sm:$0xff]
    %v493 = vld [vmem:[%s1 + $0xe58] sm:$0xff]
    %v494 = vld [vmem:[%s1 + $0xe60] sm:$0xff]
    %v495 = vld [vmem:[%s1 + $0xe68] sm:$0xff]
    %v496 = vld [vmem:[%s1 + $0xe70] sm:$0xff]
    %v497 = vld [vmem:[%s1 + $0xe78] sm:$0xff]
    %v498 = vld [vmem:[%s1 + $0xe80] sm:$0xff]
    %v499 = vld [vmem:[%s1 + $0xe88] sm:$0xff]
    %v500 = vld [vmem:[%s1 + $0xe90] sm:$0xff]
    %v501 = vld [vmem:[%s1 + $0xe98] sm:$0xff]
    %v502 = vld [vmem:[%s1 + $0xea0] sm:$0xff]
    %v503 = vld [vmem:[%s1 + $0xea8] sm:$0xff]
    %v504 = vld [vmem:[%s1 + $0xeb0] sm:$0xff]
    %v505 = vld [vmem:[%s1 + $0xeb8] sm:$0xff]
    %v506 = vld [vmem:[%s1 + $0xec0] sm:$0xff]
    %v507 = vld [vmem:[%s1 + $0xec8] sm:$0xff]
    %v508 = vld [vmem:[%s1 + $0xed0] sm:$0xff]
    %v509 = vld [vmem:[%s1 + $0xed8] sm:$0xff]
    %v510 = vld [vmem:[%s1 + $0xee0] sm:$0xff]
    %v511 = vld [vmem:[%s1 + $0xee8] sm:$0xff]
    %v512 = vld [vmem:[%s1 + $0xef0] sm:$0xff]
    %v513 = vld [vmem:[%s1 + $0xef8] sm:$0xff]
    %v514 = vld [vmem:[%s1 + $0xf00] sm:$0xff]
    %v515 = vld [vmem:[%s1 + $0xf08] sm:$0xff]
    %v516 = vld [vmem:[%s1 + $0xf10] sm:$0xff]
    %v517 = vld [vmem:[%s1 + $0xf18] sm:$0xff]
    %v518 = vld [vmem:[%s1 + $0xf20] sm:$0xff]
    %v519 = vld [vmem:[%s1 + $0xf28] sm:$0xff]
    %v520 = vld [vmem:[%s1 + $0xf30] sm:$0xff]
    %v521 = vld [vmem:[%s1 + $0xf38] sm:$0xff]
    %v522 = vld [vmem:[%s1 + $0xf40] sm:$0xff]
    %v523 = vld [vmem:[%s1 + $0xf48] sm:$0xff]
    %v524 = vld [vmem:[%s1 + $0xf50] sm:$0xff]
    %v525 = vld [vmem:[%s1 + $0xf58] sm:$0xff]
    %v526 = vld [vmem:[%s1 + $0xf60] sm:$0xff]
    %v527 = vld [vmem:[%s1 + $0xf68] sm:$0xff]
    %v528 = vld [vmem:[%s1 + $0xf70] sm:$0xff]
    %v529 = vld [vmem:[%s1 + $0xf78] sm:$0xff]
    %v530 = vld [vmem:[%s1 + $0xf80] sm:$0xff]
    %v531 = vld [vmem:[%s1 + $0xf88] sm:$0xff]
    %v532 = vld [vmem:[%s1 + $0xf90] sm:$0xff]
    %v533 = vld [vmem:[%s1 + $0xf98] sm:$0xff]
    %v534 = vld [vmem:[%s1 + $0xfa0] sm:$0xff]
    %v535 = vld [vmem:[%s1 + $0xfa8] sm:$0xff]
    %v536 = vld [vmem:[%s1 + $0xfb0] sm:$0xff]
    %v537 = vld [vmem:[%s1 + $0xfb8] sm:$0xff]
    %v538 = vld [vmem:[%s1 + $0xfc0] sm:$0xff]
    %v539 = vld [vmem:[%s1 + $0xfc8] sm:$0xff]
    %v540 = vld [vmem:[%s1 + $0xfd0] sm:$0xff]
    %v541 = vld [vmem:[%s1 + $0xfd8] sm:$0xff]
    %v542 = vld [vmem:[%s1 + $0xfe0] sm:$0xff]
    %v543 = vld [vmem:[%s1 + $0xfe8] sm:$0xff]
    %v544 = vld [vmem:[%s1 + $0xff0] sm:$0xff]
    %v545 = vld [vmem:[%s1 + $0xff8] sm:$0xff]
    %v546 = vld [vmem:[%s1 + $0x1000] sm:$0xff]
    %v547 = vld [vmem:[%s1 + $0x1008] sm:$0xff]
    %v548 = vld [vmem:[%s1 + $0x1010] sm:$0xff]
    %v549 = vld [vmem:[%s1 + $0x1018] sm:$0xff]
    %v550 = vld [vmem:[%s1 + $0x1020] sm:$0xff]
    %v551 = vld [vmem:[%s1 + $0x1028] sm:$0xff]
    %v552 = vld [vmem:[%s1 + $0x1030] sm:$0xff]
    %v553 = vld [vmem:[%s1 + $0x1038] sm:$0xff]
    %v554 = vld [vmem:[%s1 + $0x1040] sm:$0xff]
    %v555 = vld [vmem:[%s1 + $0x1048] sm:$0xff]
    %v556 = vld [vmem:[%s1 + $0x1050] sm:$0xff]
    %v557 = vld [vmem:[%s1 + $0x1058] sm:$0xff]
    %v558 = vld [vmem:[%s1 + $0x1060] sm:$0xff]
    %v559 = vld [vmem:[%s1 + $0x1068] sm:$0xff]
    %v560 = vld [vmem:[%s1 + $0x1070] sm:$0xff]
    %v561 = vld [vmem:[%s1 + $0x1078] sm:$0xff]
    %v562 = vld [vmem:[%s1 + $0x1080] sm:$0xff]
    %v563 = vld [vmem:[%s1 + $0x1088] sm:$0xff]
    %v564 = vld [vmem:[%s1 + $0x1090] sm:$0xff]
    %v565 = vld [vmem:[%s1 + $0x1098] sm:$0xff]
    %v566 = vld [vmem:[%s1 + $0x10a0] sm:$0xff]
    %v567 = vld [vmem:[%s1 + $0x10a8] sm:$0xff]
    %v568 = vld [vmem:[%s1 + $0x10b0] sm:$0xff]
    %v569 = vld [vmem:[%s1 + $0x10b8] sm:$0xff]
    %v570 = vld [vmem:[%s1 + $0x10c0] sm:$0xff]
    %v571 = vld [vmem:[%s1 + $0x10c8] sm:$0xff]
    %v572 = vld [vmem:[%s1 + $0x10d0] sm:$0xff]
    %v573 = vld [vmem:[%s1 + $0x10d8] sm:$0xff]
    %v574 = vld [vmem:[%s1 + $0x10e0] sm:$0xff]
    %v575 = vld [vmem:[%s1 + $0x10e8] sm:$0xff]
    %v576 = vld [vmem:[%s1 + $0x10f0] sm:$0xff]
    %v577 = vld [vmem:[%s1 + $0x10f8] sm:$0xff]
    %v578 = vld [vmem:[%s1 + $0x1100] sm:$0xff]
    %v579 = vld [vmem:[%s1 + $0x1108] sm:$0xff]
    %v580 = vld [vmem:[%s1 + $0x1110] sm:$0xff]
    %v581 = vld [vmem:[%s1 + $0x1118] sm:$0xff]
    %v582 = vld [vmem:[%s1 + $0x1120] sm:$0xff]
    %v583 = vld [vmem:[%s1 + $0x1128] sm:$0xff]
    %v584 = vld [vmem:[%s1 + $0x1130] sm:$0xff]
    %v585 = vld [vmem:[%s1 + $0x1138] sm:$0xff]
    %v586 = vld [vmem:[%s1 + $0x1140] sm:$0xff]
    %v587 = vld [vmem:[%s1 + $0x1148] sm:$0xff]
    %v588 = vld [vmem:[%s1 + $0x1150] sm:$0xff]
    %v589 = vld [vmem:[%s1 + $0x1158] sm:$0xff]
    %v590 = vld [vmem:[%s1 + $0x1160] sm:$0xff]
    %v591 = vld [vmem:[%s1 + $0x1168] sm:$0xff]
    %v592 = vld [vmem:[%s1 + $0x1170] sm:$0xff]
    %v593 = vld [vmem:[%s1 + $0x1178] sm:$0xff]
    %v594 = vld [vmem:[%s1 + $0x1180] sm:$0xff]
    %v595 = vld [vmem:[%s1 + $0x1188] sm:$0xff]
    %v596 = vld [vmem:[%s1 + $0x1190] sm:$0xff]
    %v597 = vld [vmem:[%s1 + $0x1198] sm:$0xff]
    %v598 = vld [vmem:[%s1 + $0x11a0] sm:$0xff]
    %v599 = vld [vmem:[%s1 + $0x11a8] sm:$0xff]
    %v600 = vld [vmem:[%s1 + $0x11b0] sm:$0xff]
    %v601 = vld [vmem:[%s1 + $0x11b8] sm:$0xff]
    %v602 = vld [vmem:[%s1 + $0x11c0] sm:$0xff]
    %v603 = vld [vmem:[%s1 + $0x11c8] sm:$0xff]
    %v604 = vld [vmem:[%s1 + $0x11d0] sm:$0xff]
    %v605 = vld [vmem:[%s1 + $0x11d8] sm:$0xff]
    %v606 = vld [vmem:[%s1 + $0x11e0] sm:$0xff]
    %v607 = vld [vmem:[%s1 + $0x11e8] sm:$0xff]
    %v608 = vld [vmem:[%s1 + $0x11f0] sm:$0xff]
    %v609 = vld [vmem:[%s1 + $0x11f8] sm:$0xff]
    %v610 = vld [vmem:[%s1 + $0x1200] sm:$0xff]
    %v611 = vld [vmem:[%s1 + $0x1208] sm:$0xff]
    %v612 = vld [vmem:[%s1 + $0x1210] sm:$0xff]
    %v613 = vld [vmem:[%s1 + $0x1218] sm:$0xff]
    %v614 = vld [vmem:[%s1 + $0x1220] sm:$0xff]
    %v615 = vld [vmem:[%s1 + $0x1228] sm:$0xff]
    %v616 = vld [vmem:[%s1 + $0x1230] sm:$0xff]
    %v617 = vld [vmem:[%s1 + $0x1238] sm:$0xff]
    %v618 = vld [vmem:[%s1 + $0x1240] sm:$0xff]
    %v619 = vld [vmem:[%s1 + $0x1248] sm:$0xff]
    %v620 = vld [vmem:[%s1 + $0x1250] sm:$0xff]
    %v621 = vld [vmem:[%s1 + $0x1258] sm:$0xff]
    %v622 = vld [vmem:[%s1 + $0x1260] sm:$0xff]
    %v623 = vld [vmem:[%s1 + $0x1268] sm:$0xff]
    %v624 = vld [vmem:[%s1 + $0x1270] sm:$0xff]
    %v625 = vld [vmem:[%s1 + $0x1278] sm:$0xff]
    %v626 = vld [vmem:[%s1 + $0x1280] sm:$0xff]
    %v627 = vld [vmem:[%s1 + $0x1288] sm:$0xff]
    %v628 = vld [vmem:[%s1 + $0x1290] sm:$0xff]
    %v629 = vld [vmem:[%s1 + $0x1298] sm:$0xff]
    %v630 = vld [vmem:[%s1 + $0x12a0] sm:$0xff]
    %v631 = vld [vmem:[%s1 + $0x12a8] sm:$0xff]
    %v632 = vld [vmem:[%s1 + $0x12b0] sm:$0xff]
    %v633 = vld [vmem:[%s1 + $0x12b8] sm:$0xff]
    %v634 = vld [vmem:[%s1 + $0x12c0] sm:$0xff]
    %v635 = vld [vmem:[%s1 + $0x12c8] sm:$0xff]
    %v636 = vld [vmem:[%s1 + $0x12d0] sm:$0xff]
    %v637 = vld [vmem:[%s1 + $0x12d8] sm:$0xff]
    %v638 = vld [vmem:[%s1 + $0x12e0] sm:$0xff]
    %v639 = vld [vmem:[%s1 + $0x12e8] sm:$0xff]
    %v640 = vld [vmem:[%s1 + $0x12f0] sm:$0xff]
    %v641 = vld [vmem:[%s1 + $0x12f8] sm:$0xff]
    %v642 = vld [vmem:[%s1 + $0x1300] sm:$0xff]
    %v643 = vld [vmem:[%s1 + $0x1308] sm:$0xff]
    %v644 = vld [vmem:[%s1 + $0x1310] sm:$0xff]
    %v645 = vld [vmem:[%s1 + $0x1318] sm:$0xff]
    %v646 = vld [vmem:[%s1 + $0x1320] sm:$0xff]
    %v647 = vld [vmem:[%s1 + $0x1328] sm:$0xff]
    %v648 = vld [vmem:[%s1 + $0x1330] sm:$0xff]
    %v649 = vld [vmem:[%s1 + $0x1338] sm:$0xff]
    %v650 = vld [vmem:[%s1 + $0x1340] sm:$0xff]
    %v651 = vld [vmem:[%s1 + $0x1348] sm:$0xff]
    %v652 = vld [vmem:[%s1 + $0x1350] sm:$0xff]
    %v653 = vld [vmem:[%s1 + $0x1358] sm:$0xff]
    %v654 = vld [vmem:[%s1 + $0x1360] sm:$0xff]
    %v655 = vld [vmem:[%s1 + $0x1368] sm:$0xff]
    %v656 = vld [vmem:[%s1 + $0x1370] sm:$0xff]
    %v657 = vld [vmem:[%s1 + $0x1378] sm:$0xff]
    %v658 = vld [vmem:[%s1 + $0x1380] sm:$0xff]
    %v659 = vld [vmem:[%s1 + $0x1388] sm:$0xff]
    %v660 = vld [vmem:[%s1 + $0x1390] sm:$0xff]
    %v661 = vld [vmem:[%s1 + $0x1398] sm:$0xff]
    %v662 = vld [vmem:[%s1 + $0x13a0] sm:$0xff]
    %v663 = vld [vmem:[%s1 + $0x13a8] sm:$0xff]
    %v664 = vld [vmem:[%s1 + $0x13b0] sm:$0xff]
    %v665 = vld [vmem:[%s1 + $0x13b8] sm:$0xff]
    %v666 = vld [vmem:[%s1 + $0x13c0] sm:$0xff]
    %v667 = vld [vmem:[%s1 + $0x13c8] sm:$0xff]
    %v668 = vld [vmem:[%s1 + $0x13d0] sm:$0xff]
    %v669 = vld [vmem:[%s1 + $0x13d8] sm:$0xff]
    %v670 = vld [vmem:[%s1 + $0x13e0] sm:$0xff]
    %v671 = vld [vmem:[%s1 + $0x13e8] sm:$0xff]
    %v672 = vld [vmem:[%s1 + $0x13f0] sm:$0xff]
    %v673 = vld [vmem:[%s1 + $0x13f8] sm:$0xff]
    %v674 = vld [vmem:[%s1 + $0x1400] sm:$0xff]
    %v675 = vld [vmem:[%s1 + $0x1408] sm:$0xff]
    %v676 = vld [vmem:[%s1 + $0x1410] sm:$0xff]
    %v677 = vld [vmem:[%s1 + $0x1418] sm:$0xff]
    %v678 = vld [vmem:[%s1 + $0x1420] sm:$0xff]
    %v679 = vld [vmem:[%s1 + $0x1428] sm:$0xff]
    %v680 = vld [vmem:[%s1 + $0x1430] sm:$0xff]
    %v681 = vld [vmem:[%s1 + $0x1438] sm:$0xff]
    %v682 = vld [vmem:[%s1 + $0x1440] sm:$0xff]
    %v683 = vld [vmem:[%s1 + $0x1448] sm:$0xff]
    %v684 = vld [vmem:[%s1 + $0x1450] sm:$0xff]
    %v685 = vld [vmem:[%s1 + $0x1458] sm:$0xff]
    %v686 = vld [vmem:[%s1 + $0x1460] sm:$0xff]
    %v687 = vld [vmem:[%s1 + $0x1468] sm:$0xff]
    %v688 = vld [vmem:[%s1 + $0x1470] sm:$0xff]
    %v689 = vld [vmem:[%s1 + $0x1478] sm:$0xff]
    %v690 = vld [vmem:[%s1 + $0x1480] sm:$0xff]
    %v691 = vld [vmem:[%s1 + $0x1488] sm:$0xff]
    %v692 = vld [vmem:[%s1 + $0x1490] sm:$0xff]
    %v693 = vld [vmem:[%s1 + $0x1498] sm:$0xff]
    %v694 = vld [vmem:[%s1 + $0x14a0] sm:$0xff]
    %v695 = vld [vmem:[%s1 + $0x14a8] sm:$0xff]
    %v696 = vld [vmem:[%s1 + $0x14b0] sm:$0xff]
    %v697 = vld [vmem:[%s1 + $0x14b8] sm:$0xff]
    %v698 = vld [vmem:[%s1 + $0x14c0] sm:$0xff]
    %v699 = vld [vmem:[%s1 + $0x14c8] sm:$0xff]
    %v700 = vld [vmem:[%s1 + $0x14d0] sm:$0xff]
    %v701 = vld [vmem:[%s1 + $0x14d8] sm:$0xff]
    %v702 = vld [vmem:[%s1 + $0x14e0] sm:$0xff]
    %v703 = vld [vmem:[%s1 + $0x14e8] sm:$0xff]
    %v704 = vld [vmem:[%s1 + $0x14f0] sm:$0xff]
    %v705 = vld [vmem:[%s1 + $0x14f8] sm:$0xff]
    %v706 = vld [vmem:[%s1 + $0x1500] sm:$0xff]
    %v707 = vld [vmem:[%s1 + $0x1508] sm:$0xff]
    %v708 = vld [vmem:[%s1 + $0x1510] sm:$0xff]
    %v709 = vld [vmem:[%s1 + $0x1518] sm:$0xff]
    %v710 = vld [vmem:[%s1 + $0x1520] sm:$0xff]
    %v711 = vld [vmem:[%s1 + $0x1528] sm:$0xff]
    %v712 = vld [vmem:[%s1 + $0x1530] sm:$0xff]
    %v713 = vld [vmem:[%s1 + $0x1538] sm:$0xff]
    %v714 = vld [vmem:[%s1 + $0x1540] sm:$0xff]
    %v715 = vld [vmem:[%s1 + $0x1548] sm:$0xff]
    %v716 = vld [vmem:[%s1 + $0x1550] sm:$0xff]
    %v717 = vld [vmem:[%s1 + $0x1558] sm:$0xff]
    %v718 = vld [vmem:[%s1 + $0x1560] sm:$0xff]
    %v719 = vld [vmem:[%s1 + $0x1568] sm:$0xff]
    %v720 = vld [vmem:[%s1 + $0x1570] sm:$0xff]
    %v721 = vld [vmem:[%s1 + $0x1578] sm:$0xff]
    %v722 = vld [vmem:[%s1 + $0x1580] sm:$0xff]
    %v723 = vld [vmem:[%s1 + $0x1588] sm:$0xff]
    %v724 = vld [vmem:[%s1 + $0x1590] sm:$0xff]
    %v725 = vld [vmem:[%s1 + $0x1598] sm:$0xff]
    %v726 = vld [vmem:[%s1 + $0x15a0] sm:$0xff]
    %v727 = vld [vmem:[%s1 + $0x15a8] sm:$0xff]
    %v728 = vld [vmem:[%s1 + $0x15b0] sm:$0xff]
    %v729 = vld [vmem:[%s1 + $0x15b8] sm:$0xff]
    %v730 = vld [vmem:[%s1 + $0x15c0] sm:$0xff]
    %v731 = vld [vmem:[%s1 + $0x15c8] sm:$0xff]
    %v732 = vld [vmem:[%s1 + $0x15d0] sm:$0xff]
    %v733 = vld [vmem:[%s1 + $0x15d8] sm:$0xff]
    %v734 = vld [vmem:[%s1 + $0x15e0] sm:$0xff]
    %v735 = vld [vmem:[%s1 + $0x15e8] sm:$0xff]
    %v736 = vld [vmem:[%s1 + $0x15f0] sm:$0xff]
    %v737 = vld [vmem:[%s1 + $0x15f8] sm:$0xff]
    %v738 = vld [vmem:[%s1 + $0x1600] sm:$0xff]
    %v739 = vld [vmem:[%s1 + $0x1608] sm:$0xff]
    %v740 = vld [vmem:[%s1 + $0x1610] sm:$0xff]
    %v741 = vld [vmem:[%s1 + $0x1618] sm:$0xff]
    %v742 = vld [vmem:[%s1 + $0x1620] sm:$0xff]
    %v743 = vld [vmem:[%s1 + $0x1628] sm:$0xff]
    %v744 = vld [vmem:[%s1 + $0x1630] sm:$0xff]
    %v745 = vld [vmem:[%s1 + $0x1638] sm:$0xff]
    %v746 = vld [vmem:[%s1 + $0x1640] sm:$0xff]
    %v747 = vld [vmem:[%s1 + $0x1648] sm:$0xff]
    %v748 = vld [vmem:[%s1 + $0x1650] sm:$0xff]
    %v749 = vld [vmem:[%s1 + $0x1658] sm:$0xff]
    %v750 = vld [vmem:[%s1 + $0x1660] sm:$0xff]
    %v751 = vld [vmem:[%s1 + $0x1668] sm:$0xff]
    %v752 = vld [vmem:[%s1 + $0x1670] sm:$0xff]
    %v753 = vld [vmem:[%s1 + $0x1678] sm:$0xff]
    %v754 = vld [vmem:[%s1 + $0x1680] sm:$0xff]
    %v755 = vld [vmem:[%s1 + $0x1688] sm:$0xff]
    %v756 = vld [vmem:[%s1 + $0x1690] sm:$0xff]
    %v757 = vld [vmem:[%s1 + $0x1698] sm:$0xff]
    %v758 = vld [vmem:[%s1 + $0x16a0] sm:$0xff]
    %v759 = vld [vmem:[%s1 + $0x16a8] sm:$0xff]
    %v760 = vld [vmem:[%s1 + $0x16b0] sm:$0xff]
    %v761 = vld [vmem:[%s1 + $0x16b8] sm:$0xff]
    %v762 = vld [vmem:[%s1 + $0x16c0] sm:$0xff]
    %v763 = vld [vmem:[%s1 + $0x16c8] sm:$0xff]
    %v764 = vld [vmem:[%s1 + $0x16d0] sm:$0xff]
    %v765 = vld [vmem:[%s1 + $0x16d8] sm:$0xff]
    %v766 = vld [vmem:[%s1 + $0x16e0] sm:$0xff]
    %v767 = vld [vmem:[%s1 + $0x16e8] sm:$0xff]
    %v768 = vld [vmem:[%s1 + $0x16f0] sm:$0xff]
    %v769 = vld [vmem:[%s1 + $0x16f8] sm:$0xff]
    %v770 = vld [vmem:[%s1 + $0x1700] sm:$0xff]
    %v771 = vld [vmem:[%s1 + $0x1708] sm:$0xff]
    %v772 = vld [vmem:[%s1 + $0x1710] sm:$0xff]
    %v773 = vld [vmem:[%s1 + $0x1718] sm:$0xff]
    %v774 = vld [vmem:[%s1 + $0x1720] sm:$0xff]
    %v775 = vld [vmem:[%s1 + $0x1728] sm:$0xff]
    %v776 = vld [vmem:[%s1 + $0x1730] sm:$0xff]
    %v777 = vld [vmem:[%s1 + $0x1738] sm:$0xff]
    %v778 = vld [vmem:[%s1 + $0x1740] sm:$0xff]
    %v779 = vld [vmem:[%s1 + $0x1748] sm:$0xff]
    %v780 = vld [vmem:[%s1 + $0x1750] sm:$0xff]
    %v781 = vld [vmem:[%s1 + $0x1758] sm:$0xff]
    %v782 = vld [vmem:[%s1 + $0x1760] sm:$0xff]
    %v783 = vld [vmem:[%s1 + $0x1768] sm:$0xff]
    %v784 = vld [vmem:[%s1 + $0x1770] sm:$0xff]
    %v785 = vld [vmem:[%s1 + $0x1778] sm:$0xff]
    %v786 = vld [vmem:[%s1 + $0x1780] sm:$0xff]
    %v787 = vld [vmem:[%s1 + $0x1788] sm:$0xff]
    %v788 = vld [vmem:[%s1 + $0x1790] sm:$0xff]
    %v789 = vld [vmem:[%s1 + $0x1798] sm:$0xff]
    %v790 = vld [vmem:[%s1 + $0x17a0] sm:$0xff]
    %v791 = vld [vmem:[%s1 + $0x17a8] sm:$0xff]
    %v792 = vld [vmem:[%s1 + $0x17b0] sm:$0xff]
    %v793 = vld [vmem:[%s1 + $0x17b8] sm:$0xff]
    %v794 = vld [vmem:[%s1 + $0x17c0] sm:$0xff]
    %v795 = vld [vmem:[%s1 + $0x17c8] sm:$0xff]
    %v796 = vld [vmem:[%s1 + $0x17d0] sm:$0xff]
    %v797 = vld [vmem:[%s1 + $0x17d8] sm:$0xff]
    %v798 = vld [vmem:[%s1 + $0x17e0] sm:$0xff]
    %v799 = vld [vmem:[%s1 + $0x17e8] sm:$0xff]
    %v800 = vld [vmem:[%s1 + $0x17f0] sm:$0xff]
    %v801 = vld [vmem:[%s1 + $0x17f8] sm:$0xff]
    %v802 = vld [vmem:[%s1 + $0x1800] sm:$0xff]
    %v803 = vld [vmem:[%s1 + $0x1808] sm:$0xff]
    %v804 = vld [vmem:[%s1 + $0x1810] sm:$0xff]
    %v805 = vld [vmem:[%s1 + $0x1818] sm:$0xff]
    %v806 = vld [vmem:[%s1 + $0x1820] sm:$0xff]
    %v807 = vld [vmem:[%s1 + $0x1828] sm:$0xff]
    %v808 = vld [vmem:[%s1 + $0x1830] sm:$0xff]
    %v809 = vld [vmem:[%s1 + $0x1838] sm:$0xff]
    %v810 = vld [vmem:[%s1 + $0x1840] sm:$0xff]
    %v811 = vld [vmem:[%s1 + $0x1848] sm:$0xff]
    %v812 = vld [vmem:[%s1 + $0x1850] sm:$0xff]
    %v813 = vld [vmem:[%s1 + $0x1858] sm:$0xff]
    %v814 = vld [vmem:[%s1 + $0x1860] sm:$0xff]
    %v815 = vld [vmem:[%s1 + $0x1868] sm:$0xff]
    %v816 = vld [vmem:[%s1 + $0x1870] sm:$0xff]
    %v817 = vld [vmem:[%s1 + $0x1878] sm:$0xff]
    %v818 = vld [vmem:[%s1 + $0x1880] sm:$0xff]
    %v819 = vld [vmem:[%s1 + $0x1888] sm:$0xff]
    %v820 = vld [vmem:[%s1 + $0x1890] sm:$0xff]
    %v821 = vld [vmem:[%s1 + $0x1898] sm:$0xff]
    %v822 = vld [vmem:[%s1 + $0x18a0] sm:$0xff]
    %v823 = vld [vmem:[%s1 + $0x18a8] sm:$0xff]
    %v824 = vld [vmem:[%s1 + $0x18b0] sm:$0xff]
    %v825 = vld [vmem:[%s1 + $0x18b8] sm:$0xff]
    %v826 = vld [vmem:[%s1 + $0x18c0] sm:$0xff]
    %v827 = vld [vmem:[%s1 + $0x18c8] sm:$0xff]
    %v828 = vld [vmem:[%s1 + $0x18d0] sm:$0xff]
    %v829 = vld [vmem:[%s1 + $0x18d8] sm:$0xff]
    %v830 = vld [vmem:[%s1 + $0x18e0] sm:$0xff]
    %v831 = vld [vmem:[%s1 + $0x18e8] sm:$0xff]
    %v832 = vld [vmem:[%s1 + $0x18f0] sm:$0xff]
    %v833 = vld [vmem:[%s1 + $0x18f8] sm:$0xff]
    %v834 = vld [vmem:[%s1 + $0x1900] sm:$0xff]
    %v835 = vld [vmem:[%s1 + $0x1908] sm:$0xff]
    %v836 = vld [vmem:[%s1 + $0x1910] sm:$0xff]
    %v837 = vld [vmem:[%s1 + $0x1918] sm:$0xff]
    %v838 = vld [vmem:[%s1 + $0x1920] sm:$0xff]
    %v839 = vld [vmem:[%s1 + $0x1928] sm:$0xff]
    %v840 = vld [vmem:[%s1 + $0x1930] sm:$0xff]
    %v841 = vld [vmem:[%s1 + $0x1938] sm:$0xff]
    %v842 = vld [vmem:[%s1 + $0x1940] sm:$0xff]
    %v843 = vld [vmem:[%s1 + $0x1948] sm:$0xff]
    %v844 = vld [vmem:[%s1 + $0x1950] sm:$0xff]
    %v845 = vld [vmem:[%s1 + $0x1958] sm:$0xff]
    %v846 = vld [vmem:[%s1 + $0x1960] sm:$0xff]
    %v847 = vld [vmem:[%s1 + $0x1968] sm:$0xff]
    %v848 = vld [vmem:[%s1 + $0x1970] sm:$0xff]
    %v849 = vld [vmem:[%s1 + $0x1978] sm:$0xff]
    %v850 = vld [vmem:[%s1 + $0x1980] sm:$0xff]
    %v851 = vld [vmem:[%s1 + $0x1988] sm:$0xff]
    %v852 = vld [vmem:[%s1 + $0x1990] sm:$0xff]
    %v853 = vld [vmem:[%s1 + $0x1998] sm:$0xff]
    %v854 = vld [vmem:[%s1 + $0x19a0] sm:$0xff]
    %v855 = vld [vmem:[%s1 + $0x19a8] sm:$0xff]
    %v856 = vld [vmem:[%s1 + $0x19b0] sm:$0xff]
    %v857 = vld [vmem:[%s1 + $0x19b8] sm:$0xff]
    %v858 = vld [vmem:[%s1 + $0x19c0] sm:$0xff]
    %v859 = vld [vmem:[%s1 + $0x19c8] sm:$0xff]
    %v860 = vld [vmem:[%s1 + $0x19d0] sm:$0xff]
    %v861 = vld [vmem:[%s1 + $0x19d8] sm:$0xff]
    %v862 = vld [vmem:[%s1 + $0x19e0] sm:$0xff]
    %v863 = vld [vmem:[%s1 + $0x19e8] sm:$0xff]
    %v864 = vld [vmem:[%s1 + $0x19f0] sm:$0xff]
    %v865 = vld [vmem:[%s1 + $0x19f8] sm:$0xff]
    %v866 = vld [vmem:[%s1 + $0x1a00] sm:$0xff]
    %v867 = vld [vmem:[%s1 + $0x1a08] sm:$0xff]
    %v868 = vld [vmem:[%s1 + $0x1a10] sm:$0xff]
    %v869 = vld [vmem:[%s1 + $0x1a18] sm:$0xff]
    %v870 = vld [vmem:[%s1 + $0x1a20] sm:$0xff]
    %v871 = vld [vmem:[%s1 + $0x1a28] sm:$0xff]
    %v872 = vld [vmem:[%s1 + $0x1a30] sm:$0xff]
    %v873 = vld [vmem:[%s1 + $0x1a38] sm:$0xff]
    %v874 = vld [vmem:[%s1 + $0x1a40] sm:$0xff]
    %v875 = vld [vmem:[%s1 + $0x1a48] sm:$0xff]
    %v876 = vld [vmem:[%s1 + $0x1a50] sm:$0xff]
    %v877 = vld [vmem:[%s1 + $0x1a58] sm:$0xff]
    %v878 = vld [vmem:[%s1 + $0x1a60] sm:$0xff]
    %v879 = vld [vmem:[%s1 + $0x1a68] sm:$0xff]
    %v880 = vld [vmem:[%s1 + $0x1a70] sm:$0xff]
    %v881 = vld [vmem:[%s1 + $0x1a78] sm:$0xff]
    %v882 = vld [vmem:[%s1 + $0x1a80] sm:$0xff]
    %v883 = vld [vmem:[%s1 + $0x1a88] sm:$0xff]
    %v884 = vld [vmem:[%s1 + $0x1a90] sm:$0xff]
    %v885 = vld [vmem:[%s1 + $0x1a98] sm:$0xff]
    %v886 = vld [vmem:[%s1 + $0x1aa0] sm:$0xff]
    %v887 = vld [vmem:[%s1 + $0x1aa8] sm:$0xff]
    %v888 = vld [vmem:[%s1 + $0x1ab0] sm:$0xff]
    %v889 = vld [vmem:[%s1 + $0x1ab8] sm:$0xff]
    %v890 = vld [vmem:[%s1 + $0x1ac0] sm:$0xff]
    %v891 = vld [vmem:[%s1 + $0x1ac8] sm:$0xff]
    %v892 = vld [vmem:[%s1 + $0x1ad0] sm:$0xff]
    %v893 = vld [vmem:[%s1 + $0x1ad8] sm:$0xff]
    %v894 = vld [vmem:[%s1 + $0x1ae0] sm:$0xff]
    %v895 = vld [vmem:[%s1 + $0x1ae8] sm:$0xff]
    %v896 = vld [vmem:[%s1 + $0x1af0] sm:$0xff]
    %v897 = vld [vmem:[%s1 + $0x1af8] sm:$0xff]
    %v898 = vld [vmem:[%s1 + $0x1b00] sm:$0xff]
    %v899 = vld [vmem:[%s1 + $0x1b08] sm:$0xff]
    %v900 = vld [vmem:[%s1 + $0x1b10] sm:$0xff]
    %v901 = vld [vmem:[%s1 + $0x1b18] sm:$0xff]
    %v902 = vld [vmem:[%s1 + $0x1b20] sm:$0xff]
    %v903 = vld [vmem:[%s1 + $0x1b28] sm:$0xff]
    %v904 = vld [vmem:[%s1 + $0x1b30] sm:$0xff]
    %v905 = vld [vmem:[%s1 + $0x1b38] sm:$0xff]
    %v906 = vld [vmem:[%s1 + $0x1b40] sm:$0xff]
    %v907 = vld [vmem:[%s1 + $0x1b48] sm:$0xff]
    %v908 = vld [vmem:[%s1 + $0x1b50] sm:$0xff]
    %v909 = vld [vmem:[%s1 + $0x1b58] sm:$0xff]
    %v910 = vld [vmem:[%s1 + $0x1b60] sm:$0xff]
    %v911 = vld [vmem:[%s1 + $0x1b68] sm:$0xff]
    %v912 = vld [vmem:[%s1 + $0x1b70] sm:$0xff]
    %v913 = vld [vmem:[%s1 + $0x1b78] sm:$0xff]
    %v914 = vld [vmem:[%s1 + $0x1b80] sm:$0xff]
    %v915 = vld [vmem:[%s1 + $0x1b88] sm:$0xff]
    %v916 = vld [vmem:[%s1 + $0x1b90] sm:$0xff]
    %v917 = vld [vmem:[%s1 + $0x1b98] sm:$0xff]
    %v918 = vld [vmem:[%s1 + $0x1ba0] sm:$0xff]
    %v919 = vld [vmem:[%s1 + $0x1ba8] sm:$0xff]
    %v920 = vld [vmem:[%s1 + $0x1bb0] sm:$0xff]
    %v921 = vld [vmem:[%s1 + $0x1bb8] sm:$0xff]
    %v922 = vld [vmem:[%s1 + $0x1bc0] sm:$0xff]
    %v923 = vld [vmem:[%s1 + $0x1bc8] sm:$0xff]
    %v924 = vld [vmem:[%s1 + $0x1bd0] sm:$0xff]
    %v925 = vld [vmem:[%s1 + $0x1bd8] sm:$0xff]
    %v926 = vld [vmem:[%s1 + $0x1be0] sm:$0xff]
    %v927 = vld [vmem:[%s1 + $0x1be8] sm:$0xff]
    %v928 = vld [vmem:[%s1 + $0x1bf0] sm:$0xff]
    %v929 = vld [vmem:[%s1 + $0x1bf8] sm:$0xff]
    %v930 = vld [vmem:[%s1 + $0x1c00] sm:$0xff]
    %v931 = vld [vmem:[%s1 + $0x1c08] sm:$0xff]
    %v932 = vld [vmem:[%s1 + $0x1c10] sm:$0xff]
    %v933 = vld [vmem:[%s1 + $0x1c18] sm:$0xff]
    %v934 = vld [vmem:[%s1 + $0x1c20] sm:$0xff]
    %v935 = vld [vmem:[%s1 + $0x1c28] sm:$0xff]
    %v936 = vld [vmem:[%s1 + $0x1c30] sm:$0xff]
    %v937 = vld [vmem:[%s1 + $0x1c38] sm:$0xff]
    %v938 = vld [vmem:[%s1 + $0x1c40] sm:$0xff]
    %v939 = vld [vmem:[%s1 + $0x1c48] sm:$0xff]
    %v940 = vld [vmem:[%s1 + $0x1c50] sm:$0xff]
    %v941 = vld [vmem:[%s1 + $0x1c58] sm:$0xff]
    %v942 = vld [vmem:[%s1 + $0x1c60] sm:$0xff]
    %v943 = vld [vmem:[%s1 + $0x1c68] sm:$0xff]
    %v944 = vld [vmem:[%s1 + $0x1c70] sm:$0xff]
    %v945 = vld [vmem:[%s1 + $0x1c78] sm:$0xff]
    %v946 = vld [vmem:[%s1 + $0x1c80] sm:$0xff]
    %v947 = vld [vmem:[%s1 + $0x1c88] sm:$0xff]
    %v948 = vld [vmem:[%s1 + $0x1c90] sm:$0xff]
    %v949 = vld [vmem:[%s1 + $0x1c98] sm:$0xff]
    %v950 = vld [vmem:[%s1 + $0x1ca0] sm:$0xff]
    %v951 = vld [vmem:[%s1 + $0x1ca8] sm:$0xff]
    %v952 = vld [vmem:[%s1 + $0x1cb0] sm:$0xff]
    %v953 = vld [vmem:[%s1 + $0x1cb8] sm:$0xff]
    %v954 = vld [vmem:[%s1 + $0x1cc0] sm:$0xff]
    %v955 = vld [vmem:[%s1 + $0x1cc8] sm:$0xff]
    %v956 = vld [vmem:[%s1 + $0x1cd0] sm:$0xff]
    %v957 = vld [vmem:[%s1 + $0x1cd8] sm:$0xff]
    %v958 = vld [vmem:[%s1 + $0x1ce0] sm:$0xff]
    %v959 = vld [vmem:[%s1 + $0x1ce8] sm:$0xff]
    %v960 = vld [vmem:[%s1 + $0x1cf0] sm:$0xff]
    %v961 = vld [vmem:[%s1 + $0x1cf8] sm:$0xff]
    %v962 = vld [vmem:[%s1 + $0x1d00] sm:$0xff]
    %v963 = vld [vmem:[%s1 + $0x1d08] sm:$0xff]
    %v964 = vld [vmem:[%s1 + $0x1d10] sm:$0xff]
    %v965 = vld [vmem:[%s1 + $0x1d18] sm:$0xff]
    %v966 = vld [vmem:[%s1 + $0x1d20] sm:$0xff]
    %v967 = vld [vmem:[%s1 + $0x1d28] sm:$0xff]
    %v968 = vld [vmem:[%s1 + $0x1d30] sm:$0xff]
    %v969 = vld [vmem:[%s1 + $0x1d38] sm:$0xff]
    %v970 = vld [vmem:[%s1 + $0x1d40] sm:$0xff]
    %v971 = vld [vmem:[%s1 + $0x1d48] sm:$0xff]
    %v972 = vld [vmem:[%s1 + $0x1d50] sm:$0xff]
    %v973 = vld [vmem:[%s1 + $0x1d58] sm:$0xff]
    %v974 = vld [vmem:[%s1 + $0x1d60] sm:$0xff]
    %v975 = vld [vmem:[%s1 + $0x1d68] sm:$0xff]
    %v976 = vld [vmem:[%s1 + $0x1d70] sm:$0xff]
    %v977 = vld [vmem:[%s1 + $0x1d78] sm:$0xff]
    %v978 = vld [vmem:[%s1 + $0x1d80] sm:$0xff]
    %v979 = vld [vmem:[%s1 + $0x1d88] sm:$0xff]
    %v980 = vld [vmem:[%s1 + $0x1d90] sm:$0xff]
    %v981 = vld [vmem:[%s1 + $0x1d98] sm:$0xff]
    %v982 = vld [vmem:[%s1 + $0x1da0] sm:$0xff]
    %v983 = vld [vmem:[%s1 + $0x1da8] sm:$0xff]
    %v984 = vld [vmem:[%s1 + $0x1db0] sm:$0xff]
    %v985 = vld [vmem:[%s1 + $0x1db8] sm:$0xff]
    %v986 = vld [vmem:[%s1 + $0x1dc0] sm:$0xff]
    %v987 = vld [vmem:[%s1 + $0x1dc8] sm:$0xff]
    %v988 = vld [vmem:[%s1 + $0x1dd0] sm:$0xff]
    %v989 = vld [vmem:[%s1 + $0x1dd8] sm:$0xff]
    %v990 = vld [vmem:[%s1 + $0x1de0] sm:$0xff]
    %v991 = vld [vmem:[%s1 + $0x1de8] sm:$0xff]
    %v992 = vld [vmem:[%s1 + $0x1df0] sm:$0xff]
    %v993 = vld [vmem:[%s1 + $0x1df8] sm:$0xff]
    %v994 = vld [vmem:[%s1 + $0x1e00] sm:$0xff]
    %v995 = vld [vmem:[%s1 + $0x1e08] sm:$0xff]
    %v996 = vld [vmem:[%s1 + $0x1e10] sm:$0xff]
    %v997 = vld [vmem:[%s1 + $0x1e18] sm:$0xff]
    %v998 = vld [vmem:[%s1 + $0x1e20] sm:$0xff]
    %v999 = vld [vmem:[%s1 + $0x1e28] sm:$0xff]
    %v1000 = vld [vmem:[%s1 + $0x1e30] sm:$0xff]
    %v1001 = vld [vmem:[%s1 + $0x1e38] sm:$0xff]
    %v1002 = vld [vmem:[%s1 + $0x1e40] sm:$0xff]
    %v1003 = vld [vmem:[%s1 + $0x1e48] sm:$0xff]
    %v1004 = vld [vmem:[%s1 + $0x1e50] sm:$0xff]
    %v1005 = vld [vmem:[%s1 + $0x1e58] sm:$0xff]
    %v1006 = vld [vmem:[%s1 + $0x1e60] sm:$0xff]
    %v1007 = vld [vmem:[%s1 + $0x1e68] sm:$0xff]
    %v1008 = vld [vmem:[%s1 + $0x1e70] sm:$0xff]
    %v1009 = vld [vmem:[%s1 + $0x1e78] sm:$0xff]
    %v1010 = vld [vmem:[%s1 + $0x1e80] sm:$0xff]
    %v1011 = vld [vmem:[%s1 + $0x1e88] sm:$0xff]
    %v1012 = vld [vmem:[%s1 + $0x1e90] sm:$0xff]
    %v1013 = vld [vmem:[%s1 + $0x1e98] sm:$0xff]
    %v1014 = vld [vmem:[%s1 + $0x1ea0] sm:$0xff]
    %v1015 = vld [vmem:[%s1 + $0x1ea8] sm:$0xff]
    %v1016 = vld [vmem:[%s1 + $0x1eb0] sm:$0xff]
    %v1017 = vld [vmem:[%s1 + $0x1eb8] sm:$0xff]
    %v1018 = vld [vmem:[%s1 + $0x1ec0] sm:$0xff]
    %v1019 = vld [vmem:[%s1 + $0x1ec8] sm:$0xff]
    %v1020 = vld [vmem:[%s1 + $0x1ed0] sm:$0xff]
    %v1021 = vld [vmem:[%s1 + $0x1ed8] sm:$0xff]
    %v1022 = vld [vmem:[%s1 + $0x1ee0] sm:$0xff]
    %v1023 = vld [vmem:[%s1 + $0x1ee8] sm:$0xff]
    %v1024 = vld [vmem:[%s1 + $0x1ef0] sm:$0xff]
    %v1025 = vld [vmem:[%s1 + $0x1ef8] sm:$0xff]
    %v1026 = vld [vmem:[%s1 + $0x1f00] sm:$0xff]
    %v1027 = vld [vmem:[%s1 + $0x1f08] sm:$0xff]
    %v1028 = vld [vmem:[%s1 + $0x1f10] sm:$0xff]
    %v1029 = vld [vmem:[%s1 + $0x1f18] sm:$0xff]
    %v1030 = vld [vmem:[%s1 + $0x1f20] sm:$0xff]
    %v1031 = vld [vmem:[%s1 + $0x1f28] sm:$0xff]
    %v1032 = vld [vmem:[%s1 + $0x1f30] sm:$0xff]
    %v1033 = vld [vmem:[%s1 + $0x1f38] sm:$0xff]
    %v1034 = vld [vmem:[%s1 + $0x1f40] sm:$0xff]
    %v1035 = vld [vmem:[%s1 + $0x1f48] sm:$0xff]
    %v1036 = vld [vmem:[%s1 + $0x1f50] sm:$0xff]
    %v1037 = vld [vmem:[%s1 + $0x1f58] sm:$0xff]
    %v1038 = vld [vmem:[%s1 + $0x1f60] sm:$0xff]
    %v1039 = vld [vmem:[%s1 + $0x1f68] sm:$0xff]
    %v1040 = vld [vmem:[%s1 + $0x1f70] sm:$0xff]
    %v1041 = vld [vmem:[%s1 + $0x1f78] sm:$0xff]
    %v1042 = vld [vmem:[%s1 + $0x1f80] sm:$0xff]
    %v1043 = vld [vmem:[%s1 + $0x1f88] sm:$0xff]
    %v1044 = vld [vmem:[%s1 + $0x1f90] sm:$0xff]
    %v1045 = vld [vmem:[%s1 + $0x1f98] sm:$0xff]
    %v1046 = vld [vmem:[%s1 + $0x1fa0] sm:$0xff]
    %v1047 = vld [vmem:[%s1 + $0x1fa8] sm:$0xff]
    %v1048 = vld [vmem:[%s1 + $0x1fb0] sm:$0xff]
    %v1049 = vld [vmem:[%s1 + $0x1fb8] sm:$0xff]
    %v1050 = vld [vmem:[%s1 + $0x1fc0] sm:$0xff]
    %v1051 = vld [vmem:[%s1 + $0x1fc8] sm:$0xff]
    %v1052 = vld [vmem:[%s1 + $0x1fd0] sm:$0xff]
    %v1053 = vld [vmem:[%s1 + $0x1fd8] sm:$0xff]
    %v1054 = vld [vmem:[%s1 + $0x1fe0] sm:$0xff]
    %v1055 = vld [vmem:[%s1 + $0x1fe8] sm:$0xff]
    %v1056 = vld [vmem:[%s1 + $0x1ff0] sm:$0xff]
    %v1057 = vld [vmem:[%s1 + $0x1ff8] sm:$0xff]
    %v1058 = vld [vmem:[%s1 + $0x2000] sm:$0xff]
    %v1059 = vld [vmem:[%s1 + $0x2008] sm:$0xff]
    %v1060 = vld [vmem:[%s1 + $0x2010] sm:$0xff]
    %v1061 = vld [vmem:[%s1 + $0x2018] sm:$0xff]
    %v1062 = vld [vmem:[%s1 + $0x2020] sm:$0xff]
    %v1063 = vld [vmem:[%s1 + $0x2028] sm:$0xff]
    %v1064 = vld [vmem:[%s1 + $0x2030] sm:$0xff]
    %v1065 = vld [vmem:[%s1 + $0x2038] sm:$0xff]
    %v1066 = vld [vmem:[%s1 + $0x2040] sm:$0xff]
    %v1067 = vld [vmem:[%s1 + $0x2048] sm:$0xff]
    %v1068 = vld [vmem:[%s1 + $0x2050] sm:$0xff]
    %v1069 = vld [vmem:[%s1 + $0x2058] sm:$0xff]
    %v1070 = vld [vmem:[%s1 + $0x2060] sm:$0xff]
    %v1071 = vld [vmem:[%s1 + $0x2068] sm:$0xff]
    %v1072 = vld [vmem:[%s1 + $0x2070] sm:$0xff]
    %v1073 = vld [vmem:[%s1 + $0x2078] sm:$0xff]
    %v1074 = vld [vmem:[%s1 + $0x2080] sm:$0xff]
    %v1075 = vld [vmem:[%s1 + $0x2088] sm:$0xff]
    %v1076 = vld [vmem:[%s1 + $0x2090] sm:$0xff]
    %v1077 = vld [vmem:[%s1 + $0x2098] sm:$0xff]
    %v1078 = vld [vmem:[%s1 + $0x20a0] sm:$0xff]
    %v1079 = vld [vmem:[%s1 + $0x20a8] sm:$0xff]
    %v1080 = vld [vmem:[%s1 + $0x20b0] sm:$0xff]
    %v1081 = vld [vmem:[%s1 + $0x20b8] sm:$0xff]
    %v1082 = vld [vmem:[%s1 + $0x20c0] sm:$0xff]
    %v1083 = vld [vmem:[%s1 + $0x20c8] sm:$0xff]
    %v1084 = vld [vmem:[%s1 + $0x20d0] sm:$0xff]
    %v1085 = vld [vmem:[%s1 + $0x20d8] sm:$0xff]
    %v1086 = vld [vmem:[%s1 + $0x20e0] sm:$0xff]
    %v1087 = vld [vmem:[%s1 + $0x20e8] sm:$0xff]
    %v1088 = vld [vmem:[%s1 + $0x20f0] sm:$0xff]
    %v1089 = vld [vmem:[%s1 + $0x20f8] sm:$0xff]
    %v1090 = vld [vmem:[%s1 + $0x2100] sm:$0xff]
    %v1091 = vld [vmem:[%s1 + $0x2108] sm:$0xff]
    %v1092 = vld [vmem:[%s1 + $0x2110] sm:$0xff]
    %v1093 = vld [vmem:[%s1 + $0x2118] sm:$0xff]
    %v1094 = vld [vmem:[%s1 + $0x2120] sm:$0xff]
    %v1095 = vld [vmem:[%s1 + $0x2128] sm:$0xff]
    %v1096 = vld [vmem:[%s1 + $0x2130] sm:$0xff]
    %v1097 = vld [vmem:[%s1 + $0x2138] sm:$0xff]
    %v1098 = vld [vmem:[%s1 + $0x2140] sm:$0xff]
    %v1099 = vld [vmem:[%s1 + $0x2148] sm:$0xff]
    %v1100 = vld [vmem:[%s1 + $0x2150] sm:$0xff]
    %v1101 = vld [vmem:[%s1 + $0x2158] sm:$0xff]
    %v1102 = vld [vmem:[%s1 + $0x2160] sm:$0xff]
    %v1103 = vld [vmem:[%s1 + $0x2168] sm:$0xff]
    %v1104 = vld [vmem:[%s1 + $0x2170] sm:$0xff]
    %v1105 = vld [vmem:[%s1 + $0x2178] sm:$0xff]
    %v1106 = vld [vmem:[%s1 + $0x2180] sm:$0xff]
    %v1107 = vld [vmem:[%s1 + $0x2188] sm:$0xff]
    %v1108 = vld [vmem:[%s1 + $0x2190] sm:$0xff]
    %v1109 = vld [vmem:[%s1 + $0x2198] sm:$0xff]
    %v1110 = vld [vmem:[%s1 + $0x21a0] sm:$0xff]
    %v1111 = vld [vmem:[%s1 + $0x21a8] sm:$0xff]
    %v1112 = vld [vmem:[%s1 + $0x21b0] sm:$0xff]
    %v1113 = vld [vmem:[%s1 + $0x21b8] sm:$0xff]
    %v1114 = vld [vmem:[%s1 + $0x21c0] sm:$0xff]
    %v1115 = vld [vmem:[%s1 + $0x21c8] sm:$0xff]
    %v1116 = vld [vmem:[%s1 + $0x21d0] sm:$0xff]
    %v1117 = vld [vmem:[%s1 + $0x21d8] sm:$0xff]
    %v1118 = vld [vmem:[%s1 + $0x21e0] sm:$0xff]
    %v1119 = vld [vmem:[%s1 + $0x21e8] sm:$0xff]
    %v1120 = vld [vmem:[%s1 + $0x21f0] sm:$0xff]
    %v1121 = vld [vmem:[%s1 + $0x21f8] sm:$0xff]
    %v1122 = vld [vmem:[%s1 + $0x2200] sm:$0xff]
    %v1123 = vld [vmem:[%s1 + $0x2208] sm:$0xff]
    %v1124 = vld [vmem:[%s1 + $0x2210] sm:$0xff]
    %v1125 = vld [vmem:[%s1 + $0x2218] sm:$0xff]
    %v1126 = vld [vmem:[%s1 + $0x2220] sm:$0xff]
    %v1127 = vld [vmem:[%s1 + $0x2228] sm:$0xff]
    %v1128 = vld [vmem:[%s1 + $0x2230] sm:$0xff]
    %v1129 = vld [vmem:[%s1 + $0x2238] sm:$0xff]
    %v1130 = vld [vmem:[%s1 + $0x2240] sm:$0xff]
    %v1131 = vld [vmem:[%s1 + $0x2248] sm:$0xff]
    %v1132 = vld [vmem:[%s1 + $0x2250] sm:$0xff]
    %v1133 = vld [vmem:[%s1 + $0x2258] sm:$0xff]
    %v1134 = vld [vmem:[%s1 + $0x2260] sm:$0xff]
    %v1135 = vld [vmem:[%s1 + $0x2268] sm:$0xff]
    %v1136 = vld [vmem:[%s1 + $0x2270] sm:$0xff]
    %v1137 = vld [vmem:[%s1 + $0x2278] sm:$0xff]
    %v1138 = vld [vmem:[%s1 + $0x2280] sm:$0xff]
    %v1139 = vld [vmem:[%s1 + $0x2288] sm:$0xff]
    %v1140 = vld [vmem:[%s1 + $0x2290] sm:$0xff]
    %v1141 = vld [vmem:[%s1 + $0x2298] sm:$0xff]
    %v1142 = vld [vmem:[%s1 + $0x22a0] sm:$0xff]
    %v1143 = vld [vmem:[%s1 + $0x22a8] sm:$0xff]
    %v1144 = vld [vmem:[%s1 + $0x22b0] sm:$0xff]
    %v1145 = vld [vmem:[%s1 + $0x22b8] sm:$0xff]
    %v1146 = vld [vmem:[%s1 + $0x22c0] sm:$0xff]
    %v1147 = vld [vmem:[%s1 + $0x22c8] sm:$0xff]
    %v1148 = vld [vmem:[%s1 + $0x22d0] sm:$0xff]
    %v1149 = vld [vmem:[%s1 + $0x22d8] sm:$0xff]
    %v1150 = vld [vmem:[%s1 + $0x22e0] sm:$0xff]
    %v1151 = vld [vmem:[%s1 + $0x22e8] sm:$0xff]
    %v1152 = vld [vmem:[%s1 + $0x22f0] sm:$0xff]
    %v1153 = vld [vmem:[%s1 + $0x22f8] sm:$0xff]
    %v1154 = vld [vmem:[%s1 + $0x2300] sm:$0xff]
    %v1155 = vld [vmem:[%s1 + $0x2308] sm:$0xff]
    %v1156 = vld [vmem:[%s1 + $0x2310] sm:$0xff]
    %v1157 = vld [vmem:[%s1 + $0x2318] sm:$0xff]
    %v1158 = vld [vmem:[%s1 + $0x2320] sm:$0xff]
    %v1159 = vld [vmem:[%s1 + $0x2328] sm:$0xff]
    %v1160 = vld [vmem:[%s1 + $0x2330] sm:$0xff]
    %v1161 = vld [vmem:[%s1 + $0x2338] sm:$0xff]
    %v1162 = vld [vmem:[%s1 + $0x2340] sm:$0xff]
    %v1163 = vld [vmem:[%s1 + $0x2348] sm:$0xff]
    %v1164 = vld [vmem:[%s1 + $0x2350] sm:$0xff]
    %v1165 = vld [vmem:[%s1 + $0x2358] sm:$0xff]
    %v1166 = vld [vmem:[%s1 + $0x2360] sm:$0xff]
    %v1167 = vld [vmem:[%s1 + $0x2368] sm:$0xff]
    %v1168 = vld [vmem:[%s1 + $0x2370] sm:$0xff]
    %v1169 = vld [vmem:[%s1 + $0x2378] sm:$0xff]
    %v1170 = vld [vmem:[%s1 + $0x2380] sm:$0xff]
    %v1171 = vld [vmem:[%s1 + $0x2388] sm:$0xff]
    %v1172 = vld [vmem:[%s1 + $0x2390] sm:$0xff]
    %v1173 = vld [vmem:[%s1 + $0x2398] sm:$0xff]
    %v1174 = vld [vmem:[%s1 + $0x23a0] sm:$0xff]
    %v1175 = vld [vmem:[%s1 + $0x23a8] sm:$0xff]
    %v1176 = vld [vmem:[%s1 + $0x23b0] sm:$0xff]
    %v1177 = vld [vmem:[%s1 + $0x23b8] sm:$0xff]
    %v1178 = vld [vmem:[%s1 + $0x23c0] sm:$0xff]
    %v1179 = vld [vmem:[%s1 + $0x23c8] sm:$0xff]
    %v1180 = vld [vmem:[%s1 + $0x23d0] sm:$0xff]
    %v1181 = vld [vmem:[%s1 + $0x23d8] sm:$0xff]
    %v1182 = vld [vmem:[%s1 + $0x23e0] sm:$0xff]
    %v1183 = vld [vmem:[%s1 + $0x23e8] sm:$0xff]
    %v1184 = vld [vmem:[%s1 + $0x23f0] sm:$0xff]
    %v1185 = vld [vmem:[%s1 + $0x23f8] sm:$0xff]
    %v1186 = vld [vmem:[%s1 + $0x2400] sm:$0xff]
    %v1187 = vld [vmem:[%s1 + $0x2408] sm:$0xff]
    %v1188 = vld [vmem:[%s1 + $0x2410] sm:$0xff]
    %v1189 = vld [vmem:[%s1 + $0x2418] sm:$0xff]
    %v1190 = vld [vmem:[%s1 + $0x2420] sm:$0xff]
    %v1191 = vld [vmem:[%s1 + $0x2428] sm:$0xff]
    %v1192 = vld [vmem:[%s1 + $0x2430] sm:$0xff]
    %v1193 = vld [vmem:[%s1 + $0x2438] sm:$0xff]
    %v1194 = vld [vmem:[%s1 + $0x2440] sm:$0xff]
    %v1195 = vld [vmem:[%s1 + $0x2448] sm:$0xff]
    %v1196 = vld [vmem:[%s1 + $0x2450] sm:$0xff]
    %v1197 = vld [vmem:[%s1 + $0x2458] sm:$0xff]
    %v1198 = vld [vmem:[%s1 + $0x2460] sm:$0xff]
    %v1199 = vld [vmem:[%s1 + $0x2468] sm:$0xff]
    %v1200 = vld [vmem:[%s1 + $0x2470] sm:$0xff]
    %v1201 = vld [vmem:[%s1 + $0x2478] sm:$0xff]
    %v1202 = vld [vmem:[%s1 + $0x2480] sm:$0xff]
    %v1203 = vld [vmem:[%s1 + $0x2488] sm:$0xff]
    %v1204 = vld [vmem:[%s1 + $0x2490] sm:$0xff]
    %v1205 = vld [vmem:[%s1 + $0x2498] sm:$0xff]
    %v1206 = vld [vmem:[%s1 + $0x24a0] sm:$0xff]
    %v1207 = vld [vmem:[%s1 + $0x24a8] sm:$0xff]
    %v1208 = vld [vmem:[%s1 + $0x24b0] sm:$0xff]
    %v1209 = vld [vmem:[%s1 + $0x24b8] sm:$0xff]
    %v1210 = vld [vmem:[%s1 + $0x24c0] sm:$0xff]
    %v1211 = vld [vmem:[%s1 + $0x24c8] sm:$0xff]
    %v1212 = vld [vmem:[%s1 + $0x24d0] sm:$0xff]
    %v1213 = vld [vmem:[%s1 + $0x24d8] sm:$0xff]
    %v1214 = vld [vmem:[%s1 + $0x24e0] sm:$0xff]
    %v1215 = vld [vmem:[%s1 + $0x24e8] sm:$0xff]
    %v1216 = vld [vmem:[%s1 + $0x24f0] sm:$0xff]
    %v1217 = vld [vmem:[%s1 + $0x24f8] sm:$0xff]
    %v1218 = vld [vmem:[%s1 + $0x2500] sm:$0xff]
    %v1219 = vld [vmem:[%s1 + $0x2508] sm:$0xff]
    %v1220 = vld [vmem:[%s1 + $0x2510] sm:$0xff]
    %v1221 = vld [vmem:[%s1 + $0x2518] sm:$0xff]
    %v1222 = vld [vmem:[%s1 + $0x2520] sm:$0xff]
    %v1223 = vld [vmem:[%s1 + $0x2528] sm:$0xff]
    %v1224 = vld [vmem:[%s1 + $0x2530] sm:$0xff]
    %v1225 = vld [vmem:[%s1 + $0x2538] sm:$0xff]
    %v1226 = vld [vmem:[%s1 + $0x2540] sm:$0xff]
    %v1227 = vld [vmem:[%s1 + $0x2548] sm:$0xff]
    %v1228 = vld [vmem:[%s1 + $0x2550] sm:$0xff]
    %v1229 = vld [vmem:[%s1 + $0x2558] sm:$0xff]
    %v1230 = vld [vmem:[%s1 + $0x2560] sm:$0xff]
    %v1231 = vld [vmem:[%s1 + $0x2568] sm:$0xff]
    %v1232 = vld [vmem:[%s1 + $0x2570] sm:$0xff]
    %v1233 = vld [vmem:[%s1 + $0x2578] sm:$0xff]
    %v1234 = vld [vmem:[%s1 + $0x2580] sm:$0xff]
    %v1235 = vld [vmem:[%s1 + $0x2588] sm:$0xff]
    %v1236 = vld [vmem:[%s1 + $0x2590] sm:$0xff]
    %v1237 = vld [vmem:[%s1 + $0x2598] sm:$0xff]
    %v1238 = vld [vmem:[%s1 + $0x25a0] sm:$0xff]
    %v1239 = vld [vmem:[%s1 + $0x25a8] sm:$0xff]
    %v1240 = vld [vmem:[%s1 + $0x25b0] sm:$0xff]
    %v1241 = vld [vmem:[%s1 + $0x25b8] sm:$0xff]
    %v1242 = vld [vmem:[%s1 + $0x25c0] sm:$0xff]
    %v1243 = vld [vmem:[%s1 + $0x25c8] sm:$0xff]
    %v1244 = vld [vmem:[%s1 + $0x25d0] sm:$0xff]
    %v1245 = vld [vmem:[%s1 + $0x25d8] sm:$0xff]
    %v1246 = vld [vmem:[%s1 + $0x25e0] sm:$0xff]
    %v1247 = vld [vmem:[%s1 + $0x25e8] sm:$0xff]
    %v1248 = vld [vmem:[%s1 + $0x25f0] sm:$0xff]
    %v1249 = vld [vmem:[%s1 + $0x25f8] sm:$0xff]
    %v1250 = vld [vmem:[%s1 + $0x2600] sm:$0xff]
    %v1251 = vld [vmem:[%s1 + $0x2608] sm:$0xff]
    %v1252 = vld [vmem:[%s1 + $0x2610] sm:$0xff]
    %v1253 = vld [vmem:[%s1 + $0x2618] sm:$0xff]
    %v1254 = vld [vmem:[%s1 + $0x2620] sm:$0xff]
    %v1255 = vld [vmem:[%s1 + $0x2628] sm:$0xff]
    %v1256 = vld [vmem:[%s1 + $0x2630] sm:$0xff]
    %v1257 = vld [vmem:[%s1 + $0x2638] sm:$0xff]
    %v1258 = vld [vmem:[%s1 + $0x2640] sm:$0xff]
    %v1259 = vld [vmem:[%s1 + $0x2648] sm:$0xff]
    %v1260 = vld [vmem:[%s1 + $0x2650] sm:$0xff]
    %v1261 = vld [vmem:[%s1 + $0x2658] sm:$0xff]
    %v1262 = vld [vmem:[%s1 + $0x2660] sm:$0xff]
    %v1263 = vld [vmem:[%s1 + $0x2668] sm:$0xff]
    %v1264 = vld [vmem:[%s1 + $0x2670] sm:$0xff]
    %v1265 = vld [vmem:[%s1 + $0x2678] sm:$0xff]
    %v1266 = vld [vmem:[%s1 + $0x2680] sm:$0xff]
    %v1267 = vld [vmem:[%s1 + $0x2688] sm:$0xff]
    %v1268 = vld [vmem:[%s1 + $0x2690] sm:$0xff]
    %v1269 = vld [vmem:[%s1 + $0x2698] sm:$0xff]
    %v1270 = vld [vmem:[%s1 + $0x26a0] sm:$0xff]
    %v1271 = vld [vmem:[%s1 + $0x26a8] sm:$0xff]
    %v1272 = vld [vmem:[%s1 + $0x26b0] sm:$0xff]
    %v1273 = vld [vmem:[%s1 + $0x26b8] sm:$0xff]
    %v1274 = vld [vmem:[%s1 + $0x26c0] sm:$0xff]
    %v1275 = vld [vmem:[%s1 + $0x26c8] sm:$0xff]
    %v1276 = vld [vmem:[%s1 + $0x26d0] sm:$0xff]
    %v1277 = vld [vmem:[%s1 + $0x26d8] sm:$0xff]
    %v1278 = vld [vmem:[%s1 + $0x26e0] sm:$0xff]
    %v1279 = vld [vmem:[%s1 + $0x26e8] sm:$0xff]
    %v1280 = vld [vmem:[%s1 + $0x26f0] sm:$0xff]
    %v1281 = vld [vmem:[%s1 + $0x26f8] sm:$0xff]
    %v1282 = vld [vmem:[%s1 + $0x2700] sm:$0xff]
    %v1283 = vld [vmem:[%s1 + $0x2708] sm:$0xff]
    %v1284 = vld [vmem:[%s1 + $0x2710] sm:$0xff]
    %v1285 = vld [vmem:[%s1 + $0x2718] sm:$0xff]
    %v1286 = vld [vmem:[%s1 + $0x2720] sm:$0xff]
    %v1287 = vld [vmem:[%s1 + $0x2728] sm:$0xff]
    %v1288 = vld [vmem:[%s1 + $0x2730] sm:$0xff]
    %v1289 = vld [vmem:[%s1 + $0x2738] sm:$0xff]
    %v1290 = vld [vmem:[%s1 + $0x2740] sm:$0xff]
    %v1291 = vld [vmem:[%s1 + $0x2748] sm:$0xff]
    %v1292 = vld [vmem:[%s1 + $0x2750] sm:$0xff]
    %v1293 = vld [vmem:[%s1 + $0x2758] sm:$0xff]
    %v1294 = vld [vmem:[%s1 + $0x2760] sm:$0xff]
    %v1295 = vld [vmem:[%s1 + $0x2768] sm:$0xff]
    %v1296 = vld [vmem:[%s1 + $0x2770] sm:$0xff]
    %v1297 = vld [vmem:[%s1 + $0x2778] sm:$0xff]
    %v1298 = vld [vmem:[%s1 + $0x2780] sm:$0xff]
    %v1299 = vld [vmem:[%s1 + $0x2788] sm:$0xff]
    %v1300 = vld [vmem:[%s1 + $0x2790] sm:$0xff]
    %v1301 = vld [vmem:[%s1 + $0x2798] sm:$0xff]
    %v1302 = vld [vmem:[%s1 + $0x27a0] sm:$0xff]
    %v1303 = vld [vmem:[%s1 + $0x27a8] sm:$0xff]
    %v1304 = vld [vmem:[%s1 + $0x27b0] sm:$0xff]
    %v1305 = vld [vmem:[%s1 + $0x27b8] sm:$0xff]
    %v1306 = vld [vmem:[%s1 + $0x27c0] sm:$0xff]
    %v1307 = vld [vmem:[%s1 + $0x27c8] sm:$0xff]
    %v1308 = vld [vmem:[%s1 + $0x27d0] sm:$0xff]
    %v1309 = vld [vmem:[%s1 + $0x27d8] sm:$0xff]
    %v1310 = vld [vmem:[%s1 + $0x27e0] sm:$0xff]
    %v1311 = vld [vmem:[%s1 + $0x27e8] sm:$0xff]
    %v1312 = vld [vmem:[%s1 + $0x27f0] sm:$0xff]
    %v1313 = vld [vmem:[%s1 + $0x27f8] sm:$0xff]
    %v1314 = vld [vmem:[%s1 + $0x2800] sm:$0xff]
    %v1315 = vld [vmem:[%s1 + $0x2808] sm:$0xff]
    %v1316 = vld [vmem:[%s1 + $0x2810] sm:$0xff]
    %v1317 = vld [vmem:[%s1 + $0x2818] sm:$0xff]
    %v1318 = vld [vmem:[%s1 + $0x2820] sm:$0xff]
    %v1319 = vld [vmem:[%s1 + $0x2828] sm:$0xff]
    %v1320 = vld [vmem:[%s1 + $0x2830] sm:$0xff]
    %v1321 = vld [vmem:[%s1 + $0x2838] sm:$0xff]
    %v1322 = vld [vmem:[%s1 + $0x2840] sm:$0xff]
    %v1323 = vld [vmem:[%s1 + $0x2848] sm:$0xff]
    %v1324 = vld [vmem:[%s1 + $0x2850] sm:$0xff]
    %v1325 = vld [vmem:[%s1 + $0x2858] sm:$0xff]
    %v1326 = vld [vmem:[%s1 + $0x2860] sm:$0xff]
    %v1327 = vld [vmem:[%s1 + $0x2868] sm:$0xff]
    %v1328 = vld [vmem:[%s1 + $0x2870] sm:$0xff]
    %v1329 = vld [vmem:[%s1 + $0x2878] sm:$0xff]
    %v1330 = vld [vmem:[%s1 + $0x2880] sm:$0xff]
    %v1331 = vld [vmem:[%s1 + $0x2888] sm:$0xff]
    %v1332 = vld [vmem:[%s1 + $0x2890] sm:$0xff]
    %v1333 = vld [vmem:[%s1 + $0x2898] sm:$0xff]
    %v1334 = vld [vmem:[%s1 + $0x28a0] sm:$0xff]
    %v1335 = vld [vmem:[%s1 + $0x28a8] sm:$0xff]
    %v1336 = vld [vmem:[%s1 + $0x28b0] sm:$0xff]
    %v1337 = vld [vmem:[%s1 + $0x28b8] sm:$0xff]
    %v1338 = vld [vmem:[%s1 + $0x28c0] sm:$0xff]
    %v1339 = vld [vmem:[%s1 + $0x28c8] sm:$0xff]
    %v1340 = vld [vmem:[%s1 + $0x28d0] sm:$0xff]
    %v1341 = vld [vmem:[%s1 + $0x28d8] sm:$0xff]
    %v1342 = vld [vmem:[%s1 + $0x28e0] sm:$0xff]
    %v1343 = vld [vmem:[%s1 + $0x28e8] sm:$0xff]
    %v1344 = vld [vmem:[%s1 + $0x28f0] sm:$0xff]
    %v1345 = vld [vmem:[%s1 + $0x28f8] sm:$0xff]
    %v1346 = vld [vmem:[%s1 + $0x2900] sm:$0xff]
    %v1347 = vld [vmem:[%s1 + $0x2908] sm:$0xff]
    %v1348 = vld [vmem:[%s1 + $0x2910] sm:$0xff]
    %v1349 = vld [vmem:[%s1 + $0x2918] sm:$0xff]
    %v1350 = vld [vmem:[%s1 + $0x2920] sm:$0xff]
    %v1351 = vld [vmem:[%s1 + $0x2928] sm:$0xff]
    %v1352 = vld [vmem:[%s1 + $0x2930] sm:$0xff]
    %v1353 = vld [vmem:[%s1 + $0x2938] sm:$0xff]
    %v1354 = vld [vmem:[%s1 + $0x2940] sm:$0xff]
    %v1355 = vld [vmem:[%s1 + $0x2948] sm:$0xff]
    %v1356 = vld [vmem:[%s1 + $0x2950] sm:$0xff]
    %v1357 = vld [vmem:[%s1 + $0x2958] sm:$0xff]
    %v1358 = vld [vmem:[%s1 + $0x2960] sm:$0xff]
    %v1359 = vld [vmem:[%s1 + $0x2968] sm:$0xff]
    %v1360 = vld [vmem:[%s1 + $0x2970] sm:$0xff]
    %v1361 = vld [vmem:[%s1 + $0x2978] sm:$0xff]
    %v1362 = vld [vmem:[%s1 + $0x2980] sm:$0xff]
    %v1363 = vld [vmem:[%s1 + $0x2988] sm:$0xff]
    %v1364 = vld [vmem:[%s1 + $0x2990] sm:$0xff]
    %v1365 = vld [vmem:[%s1 + $0x2998] sm:$0xff]
    %v1366 = vld [vmem:[%s1 + $0x29a0] sm:$0xff]
    %v1367 = vld [vmem:[%s1 + $0x29a8] sm:$0xff]
    %v1368 = vld [vmem:[%s1 + $0x29b0] sm:$0xff]
    %v1369 = vld [vmem:[%s1 + $0x29b8] sm:$0xff]
    %v1370 = vld [vmem:[%s1 + $0x29c0] sm:$0xff]
    %v1371 = vld [vmem:[%s1 + $0x29c8] sm:$0xff]
    %v1372 = vld [vmem:[%s1 + $0x29d0] sm:$0xff]
    %v1373 = vld [vmem:[%s1 + $0x29d8] sm:$0xff]
    %v1374 = vld [vmem:[%s1 + $0x29e0] sm:$0xff]
    %v1375 = vld [vmem:[%s1 + $0x29e8] sm:$0xff]
    %v1376 = vld [vmem:[%s1 + $0x29f0] sm:$0xff]
    %v1377 = vld [vmem:[%s1 + $0x29f8] sm:$0xff]
    %v1378 = vld [vmem:[%s1 + $0x2a00] sm:$0xff]
    %v1379 = vld [vmem:[%s1 + $0x2a08] sm:$0xff]
    %v1380 = vld [vmem:[%s1 + $0x2a10] sm:$0xff]
    %v1381 = vld [vmem:[%s1 + $0x2a18] sm:$0xff]
    %v1382 = vld [vmem:[%s1 + $0x2a20] sm:$0xff]
    %v1383 = vld [vmem:[%s1 + $0x2a28] sm:$0xff]
    %v1384 = vld [vmem:[%s1 + $0x2a30] sm:$0xff]
    %v1385 = vld [vmem:[%s1 + $0x2a38] sm:$0xff]
    %v1386 = vld [vmem:[%s1 + $0x2a40] sm:$0xff]
    %v1387 = vld [vmem:[%s1 + $0x2a48] sm:$0xff]
    %v1388 = vld [vmem:[%s1 + $0x2a50] sm:$0xff]
    %v1389 = vld [vmem:[%s1 + $0x2a58] sm:$0xff]
    %v1390 = vld [vmem:[%s1 + $0x2a60] sm:$0xff]
    %v1391 = vld [vmem:[%s1 + $0x2a68] sm:$0xff]
    %v1392 = vld [vmem:[%s1 + $0x2a70] sm:$0xff]
    %v1393 = vld [vmem:[%s1 + $0x2a78] sm:$0xff]
    %v1394 = vld [vmem:[%s1 + $0x2a80] sm:$0xff]
    %v1395 = vld [vmem:[%s1 + $0x2a88] sm:$0xff]
    %v1396 = vld [vmem:[%s1 + $0x2a90] sm:$0xff]
    %v1397 = vld [vmem:[%s1 + $0x2a98] sm:$0xff]
    %v1398 = vld [vmem:[%s1 + $0x2aa0] sm:$0xff]
    %v1399 = vld [vmem:[%s1 + $0x2aa8] sm:$0xff]
    %v1400 = vld [vmem:[%s1 + $0x2ab0] sm:$0xff]
    %v1401 = vld [vmem:[%s1 + $0x2ab8] sm:$0xff]
    %v1402 = vld [vmem:[%s1 + $0x2ac0] sm:$0xff]
    %v1403 = vld [vmem:[%s1 + $0x2ac8] sm:$0xff]
    %v1404 = vld [vmem:[%s1 + $0x2ad0] sm:$0xff]
    %v1405 = vld [vmem:[%s1 + $0x2ad8] sm:$0xff]
    %v1406 = vld [vmem:[%s1 + $0x2ae0] sm:$0xff]
    %v1407 = vld [vmem:[%s1 + $0x2ae8] sm:$0xff]
    %v1408 = vld [vmem:[%s1 + $0x2af0] sm:$0xff]
    %v1409 = vld [vmem:[%s1 + $0x2af8] sm:$0xff]
    %v1410 = vld [vmem:[%s1 + $0x2b00] sm:$0xff]
    %v1411 = vld [vmem:[%s1 + $0x2b08] sm:$0xff]
    %v1412 = vld [vmem:[%s1 + $0x2b10] sm:$0xff]
    %v1413 = vld [vmem:[%s1 + $0x2b18] sm:$0xff]
    %v1414 = vld [vmem:[%s1 + $0x2b20] sm:$0xff]
    %v1415 = vld [vmem:[%s1 + $0x2b28] sm:$0xff]
    %v1416 = vld [vmem:[%s1 + $0x2b30] sm:$0xff]
    %v1417 = vld [vmem:[%s1 + $0x2b38] sm:$0xff]
    %v1418 = vld [vmem:[%s1 + $0x2b40] sm:$0xff]
    %v1419 = vld [vmem:[%s1 + $0x2b48] sm:$0xff]
    %v1420 = vld [vmem:[%s1 + $0x2b50] sm:$0xff]
    %v1421 = vld [vmem:[%s1 + $0x2b58] sm:$0xff]
    %v1422 = vld [vmem:[%s1 + $0x2b60] sm:$0xff]
    %v1423 = vld [vmem:[%s1 + $0x2b68] sm:$0xff]
    %v1424 = vld [vmem:[%s1 + $0x2b70] sm:$0xff]
    %v1425 = vld [vmem:[%s1 + $0x2b78] sm:$0xff]
    %v1426 = vld [vmem:[%s1 + $0x2b80] sm:$0xff]
    %v1427 = vld [vmem:[%s1 + $0x2b88] sm:$0xff]
    %v1428 = vld [vmem:[%s1 + $0x2b90] sm:$0xff]
    %v1429 = vld [vmem:[%s1 + $0x2b98] sm:$0xff]
    %v1430 = vld [vmem:[%s1 + $0x2ba0] sm:$0xff]
    %v1431 = vld [vmem:[%s1 + $0x2ba8] sm:$0xff]
    %v1432 = vld [vmem:[%s1 + $0x2bb0] sm:$0xff]
    %v1433 = vld [vmem:[%s1 + $0x2bb8] sm:$0xff]
    %v1434 = vld [vmem:[%s1 + $0x2bc0] sm:$0xff]
    %v1435 = vld [vmem:[%s1 + $0x2bc8] sm:$0xff]
    %v1436 = vld [vmem:[%s1 + $0x2bd0] sm:$0xff]
    %v1437 = vld [vmem:[%s1 + $0x2bd8] sm:$0xff]
    %v1438 = vld [vmem:[%s1 + $0x2be0] sm:$0xff]
    %v1439 = vld [vmem:[%s1 + $0x2be8] sm:$0xff]
    %v1440 = vld [vmem:[%s1 + $0x2bf0] sm:$0xff]
    %v1441 = vld [vmem:[%s1 + $0x2bf8] sm:$0xff]
    %v1442 = vld [vmem:[%s1 + $0x2c00] sm:$0xff]
    %v1443 = vld [vmem:[%s1 + $0x2c08] sm:$0xff]
    %v1444 = vld [vmem:[%s1 + $0x2c10] sm:$0xff]
    %v1445 = vld [vmem:[%s1 + $0x2c18] sm:$0xff]
    %v1446 = vld [vmem:[%s1 + $0x2c20] sm:$0xff]
    %v1447 = vld [vmem:[%s1 + $0x2c28] sm:$0xff]
    %v1448 = vld [vmem:[%s1 + $0x2c30] sm:$0xff]
    %v1449 = vld [vmem:[%s1 + $0x2c38] sm:$0xff]
    %v1450 = vld [vmem:[%s1 + $0x2c40] sm:$0xff]
    %v1451 = vld [vmem:[%s1 + $0x2c48] sm:$0xff]
    %v1452 = vld [vmem:[%s1 + $0x2c50] sm:$0xff]
    %v1453 = vld [vmem:[%s1 + $0x2c58] sm:$0xff]
    %v1454 = vld [vmem:[%s1 + $0x2c60] sm:$0xff]
    %v1455 = vld [vmem:[%s1 + $0x2c68] sm:$0xff]
    %v1456 = vld [vmem:[%s1 + $0x2c70] sm:$0xff]
    %v1457 = vld [vmem:[%s1 + $0x2c78] sm:$0xff]
    %v1458 = vld [vmem:[%s1 + $0x2c80] sm:$0xff]
    %v1459 = vld [vmem:[%s1 + $0x2c88] sm:$0xff]
    %v1460 = vld [vmem:[%s1 + $0x2c90] sm:$0xff]
    %v1461 = vld [vmem:[%s1 + $0x2c98] sm:$0xff]
    %v1462 = vld [vmem:[%s1 + $0x2ca0] sm:$0xff]
    %v1463 = vld [vmem:[%s1 + $0x2ca8] sm:$0xff]
    %v1464 = vld [vmem:[%s1 + $0x2cb0] sm:$0xff]
    %v1465 = vld [vmem:[%s1 + $0x2cb8] sm:$0xff]
    %v1466 = vld [vmem:[%s1 + $0x2cc0] sm:$0xff]
    %v1467 = vld [vmem:[%s1 + $0x2cc8] sm:$0xff]
    %v1468 = vld [vmem:[%s1 + $0x2cd0] sm:$0xff]
    %v1469 = vld [vmem:[%s1 + $0x2cd8] sm:$0xff]
    %v1470 = vld [vmem:[%s1 + $0x2ce0] sm:$0xff]
    %v1471 = vld [vmem:[%s1 + $0x2ce8] sm:$0xff]
    %v1472 = vld [vmem:[%s1 + $0x2cf0] sm:$0xff]
    %v1473 = vld [vmem:[%s1 + $0x2cf8] sm:$0xff]
    %v1474 = vld [vmem:[%s1 + $0x2d00] sm:$0xff]
    %v1475 = vld [vmem:[%s1 + $0x2d08] sm:$0xff]
    %v1476 = vld [vmem:[%s1 + $0x2d10] sm:$0xff]
    %v1477 = vld [vmem:[%s1 + $0x2d18] sm:$0xff]
    %v1478 = vld [vmem:[%s1 + $0x2d20] sm:$0xff]
    %v1479 = vld [vmem:[%s1 + $0x2d28] sm:$0xff]
    %v1480 = vld [vmem:[%s1 + $0x2d30] sm:$0xff]
    %v1481 = vld [vmem:[%s1 + $0x2d38] sm:$0xff]
    %v1482 = vld [vmem:[%s1 + $0x2d40] sm:$0xff]
    %v1483 = vld [vmem:[%s1 + $0x2d48] sm:$0xff]
    %v1484 = vld [vmem:[%s1 + $0x2d50] sm:$0xff]
    %v1485 = vld [vmem:[%s1 + $0x2d58] sm:$0xff]
    %v1486 = vld [vmem:[%s1 + $0x2d60] sm:$0xff]
    %v1487 = vld [vmem:[%s1 + $0x2d68] sm:$0xff]
    %v1488 = vld [vmem:[%s1 + $0x2d70] sm:$0xff]
    %v1489 = vld [vmem:[%s1 + $0x2d78] sm:$0xff]
    %v1490 = vld [vmem:[%s1 + $0x2d80] sm:$0xff]
    %v1491 = vld [vmem:[%s1 + $0x2d88] sm:$0xff]
    %v1492 = vld [vmem:[%s1 + $0x2d90] sm:$0xff]
    %v1493 = vld [vmem:[%s1 + $0x2d98] sm:$0xff]
    %v1494 = vld [vmem:[%s1 + $0x2da0] sm:$0xff]
    %v1495 = vld [vmem:[%s1 + $0x2da8] sm:$0xff]
    %v1496 = vld [vmem:[%s1 + $0x2db0] sm:$0xff]
    %v1497 = vld [vmem:[%s1 + $0x2db8] sm:$0xff]
    %v1498 = vld [vmem:[%s1 + $0x2dc0] sm:$0xff]
    %v1499 = vld [vmem:[%s1 + $0x2dc8] sm:$0xff]
    %v1500 = vld [vmem:[%s1 + $0x2dd0] sm:$0xff]
    %v1501 = vld [vmem:[%s1 + $0x2dd8] sm:$0xff]
    %v1502 = vld [vmem:[%s1 + $0x2de0] sm:$0xff]
    %v1503 = vld [vmem:[%s1 + $0x2de8] sm:$0xff]
    %v1504 = vld [vmem:[%s1 + $0x2df0] sm:$0xff]
    %v1505 = vld [vmem:[%s1 + $0x2df8] sm:$0xff]
    %v1506 = vld [vmem:[%s1 + $0x2e00] sm:$0xff]
    %v1507 = vld [vmem:[%s1 + $0x2e08] sm:$0xff]
    %v1508 = vld [vmem:[%s1 + $0x2e10] sm:$0xff]
    %v1509 = vld [vmem:[%s1 + $0x2e18] sm:$0xff]
    %v1510 = vld [vmem:[%s1 + $0x2e20] sm:$0xff]
    %v1511 = vld [vmem:[%s1 + $0x2e28] sm:$0xff]
    %v1512 = vld [vmem:[%s1 + $0x2e30] sm:$0xff]
    %v1513 = vld [vmem:[%s1 + $0x2e38] sm:$0xff]
    %v1514 = vld [vmem:[%s1 + $0x2e40] sm:$0xff]
    %v1515 = vld [vmem:[%s1 + $0x2e48] sm:$0xff]
    %v1516 = vld [vmem:[%s1 + $0x2e50] sm:$0xff]
    %v1517 = vld [vmem:[%s1 + $0x2e58] sm:$0xff]
    %v1518 = vld [vmem:[%s1 + $0x2e60] sm:$0xff]
    %v1519 = vld [vmem:[%s1 + $0x2e68] sm:$0xff]
    %v1520 = vld [vmem:[%s1 + $0x2e70] sm:$0xff]
    %v1521 = vld [vmem:[%s1 + $0x2e78] sm:$0xff]
    %v1522 = vld [vmem:[%s1 + $0x2e80] sm:$0xff]
    %v1523 = vld [vmem:[%s1 + $0x2e88] sm:$0xff]
    %v1524 = vld [vmem:[%s1 + $0x2e90] sm:$0xff]
    %v1525 = vld [vmem:[%s1 + $0x2e98] sm:$0xff]
    %v1526 = vld [vmem:[%s1 + $0x2ea0] sm:$0xff]
    %v1527 = vld [vmem:[%s1 + $0x2ea8] sm:$0xff]
    %v1528 = vld [vmem:[%s1 + $0x2eb0] sm:$0xff]
    %v1529 = vld [vmem:[%s1 + $0x2eb8] sm:$0xff]
    %v1530 = vld [vmem:[%s1 + $0x2ec0] sm:$0xff]
    %v1531 = vld [vmem:[%s1 + $0x2ec8] sm:$0xff]
    %v1532 = vld [vmem:[%s1 + $0x2ed0] sm:$0xff]
    %v1533 = vld [vmem:[%s1 + $0x2ed8] sm:$0xff]
    %v1534 = vld [vmem:[%s1 + $0x2ee0] sm:$0xff]
    %v1535 = vld [vmem:[%s1 + $0x2ee8] sm:$0xff]
    %v1536 = vld [vmem:[%s1 + $0x2ef0] sm:$0xff]
    %v1537 = vld [vmem:[%s1 + $0x2ef8] sm:$0xff]
    %v1538 = vld [vmem:[%s1 + $0x2f00] sm:$0xff]
    %v1539 = vld [vmem:[%s1 + $0x2f08] sm:$0xff]
    %v1540 = vld [vmem:[%s1 + $0x2f10] sm:$0xff]
    %v1541 = vld [vmem:[%s1 + $0x2f18] sm:$0xff]
    %v1542 = vld [vmem:[%s1 + $0x2f20] sm:$0xff]
    %v1543 = vld [vmem:[%s1 + $0x2f28] sm:$0xff]
    %v1544 = vld [vmem:[%s1 + $0x2f30] sm:$0xff]
    %v1545 = vld [vmem:[%s1 + $0x2f38] sm:$0xff]
    %v1546 = vld [vmem:[%s1 + $0x2f40] sm:$0xff]
    %v1547 = vld [vmem:[%s1 + $0x2f48] sm:$0xff]
    %v1548 = vld [vmem:[%s1 + $0x2f50] sm:$0xff]
    %v1549 = vld [vmem:[%s1 + $0x2f58] sm:$0xff]
    %v1550 = vld [vmem:[%s1 + $0x2f60] sm:$0xff]
    %v1551 = vld [vmem:[%s1 + $0x2f68] sm:$0xff]
    %v1552 = vld [vmem:[%s1 + $0x2f70] sm:$0xff]
    %v1553 = vld [vmem:[%s1 + $0x2f78] sm:$0xff]
    %v1554 = vld [vmem:[%s1 + $0x2f80] sm:$0xff]
    %v1555 = vld [vmem:[%s1 + $0x2f88] sm:$0xff]
    %v1556 = vld [vmem:[%s1 + $0x2f90] sm:$0xff]
    %v1557 = vld [vmem:[%s1 + $0x2f98] sm:$0xff]
    %v1558 = vld [vmem:[%s1 + $0x2fa0] sm:$0xff]
    %v1559 = vld [vmem:[%s1 + $0x2fa8] sm:$0xff]
    %v1560 = vld [vmem:[%s1 + $0x2fb0] sm:$0xff]
    %v1561 = vld [vmem:[%s1 + $0x2fb8] sm:$0xff]
    %v1562 = vld [vmem:[%s1 + $0x2fc0] sm:$0xff]
    %v1563 = vld [vmem:[%s1 + $0x2fc8] sm:$0xff]
    %v1564 = vld [vmem:[%s1 + $0x2fd0] sm:$0xff]
    %v1565 = vld [vmem:[%s1 + $0x2fd8] sm:$0xff]
    %v1566 = vld [vmem:[%s1 + $0x2fe0] sm:$0xff]
    %v1567 = vld [vmem:[%s1 + $0x2fe8] sm:$0xff]
    %v1568 = vld [vmem:[%s1 + $0x2ff0] sm:$0xff]
    %v1569 = vld [vmem:[%s1 + $0x2ff8] sm:$0xff]
    %v1570 = vld [vmem:[%s1 + $0x3000] sm:$0xff]
    %v1571 = vld [vmem:[%s1 + $0x3008] sm:$0xff]
    %v1572 = vld [vmem:[%s1 + $0x3010] sm:$0xff]
    %v1573 = vld [vmem:[%s1 + $0x3018] sm:$0xff]
    %v1574 = vld [vmem:[%s1 + $0x3020] sm:$0xff]
    %v1575 = vld [vmem:[%s1 + $0x3028] sm:$0xff]
    %v1576 = vld [vmem:[%s1 + $0x3030] sm:$0xff]
    %v1577 = vld [vmem:[%s1 + $0x3038] sm:$0xff]
    %v1578 = vld [vmem:[%s1 + $0x3040] sm:$0xff]
    %v1579 = vld [vmem:[%s1 + $0x3048] sm:$0xff]
    %v1580 = vld [vmem:[%s1 + $0x3050] sm:$0xff]
    %v1581 = vld [vmem:[%s1 + $0x3058] sm:$0xff]
    %v1582 = vld [vmem:[%s1 + $0x3060] sm:$0xff]
    %v1583 = vld [vmem:[%s1 + $0x3068] sm:$0xff]
    %v1584 = vld [vmem:[%s1 + $0x3070] sm:$0xff]
    %v1585 = vld [vmem:[%s1 + $0x3078] sm:$0xff]
    %v1586 = vld [vmem:[%s1 + $0x3080] sm:$0xff]
    %v1587 = vld [vmem:[%s1 + $0x3088] sm:$0xff]
    %v1588 = vld [vmem:[%s1 + $0x3090] sm:$0xff]
    %v1589 = vld [vmem:[%s1 + $0x3098] sm:$0xff]
    %v1590 = vld [vmem:[%s1 + $0x30a0] sm:$0xff]
    %v1591 = vld [vmem:[%s1 + $0x30a8] sm:$0xff]
    %v1592 = vld [vmem:[%s1 + $0x30b0] sm:$0xff]
    %v1593 = vld [vmem:[%s1 + $0x30b8] sm:$0xff]
    %v1594 = vld [vmem:[%s1 + $0x30c0] sm:$0xff]
    %v1595 = vld [vmem:[%s1 + $0x30c8] sm:$0xff]
    %v1596 = vld [vmem:[%s1 + $0x30d0] sm:$0xff]
    %v1597 = vld [vmem:[%s1 + $0x30d8] sm:$0xff]
    %v1598 = vld [vmem:[%s1 + $0x30e0] sm:$0xff]
    %v1599 = vld [vmem:[%s1 + $0x30e8] sm:$0xff]
    %v1600 = vld [vmem:[%s1 + $0x30f0] sm:$0xff]
    %v1601 = vld [vmem:[%s1 + $0x30f8] sm:$0xff]
    %v1602 = vld [vmem:[%s1 + $0x3100] sm:$0xff]
    %v1603 = vld [vmem:[%s1 + $0x3108] sm:$0xff]
    %v1604 = vld [vmem:[%s1 + $0x3110] sm:$0xff]
    %v1605 = vld [vmem:[%s1 + $0x3118] sm:$0xff]
    %v1606 = vld [vmem:[%s1 + $0x3120] sm:$0xff]
    %v1607 = vld [vmem:[%s1 + $0x3128] sm:$0xff]
    %v1608 = vld [vmem:[%s1 + $0x3130] sm:$0xff]
    %v1609 = vld [vmem:[%s1 + $0x3138] sm:$0xff]
    %v1610 = vld [vmem:[%s1 + $0x3140] sm:$0xff]
    %v1611 = vld [vmem:[%s1 + $0x3148] sm:$0xff]
    %v1612 = vld [vmem:[%s1 + $0x3150] sm:$0xff]
    %v1613 = vld [vmem:[%s1 + $0x3158] sm:$0xff]
    %v1614 = vld [vmem:[%s1 + $0x3160] sm:$0xff]
    %v1615 = vld [vmem:[%s1 + $0x3168] sm:$0xff]
    %v1616 = vld [vmem:[%s1 + $0x3170] sm:$0xff]
    %v1617 = vld [vmem:[%s1 + $0x3178] sm:$0xff]
    %v1618 = vld [vmem:[%s1 + $0x3180] sm:$0xff]
    %v1619 = vld [vmem:[%s1 + $0x3188] sm:$0xff]
    %v1620 = vld [vmem:[%s1 + $0x3190] sm:$0xff]
    %v1621 = vld [vmem:[%s1 + $0x3198] sm:$0xff]
    %v1622 = vld [vmem:[%s1 + $0x31a0] sm:$0xff]
    %v1623 = vld [vmem:[%s1 + $0x31a8] sm:$0xff]
    %v1624 = vld [vmem:[%s1 + $0x31b0] sm:$0xff]
    %v1625 = vld [vmem:[%s1 + $0x31b8] sm:$0xff]
    %v1626 = vld [vmem:[%s1 + $0x31c0] sm:$0xff]
    %v1627 = vld [vmem:[%s1 + $0x31c8] sm:$0xff]
    %v1628 = vld [vmem:[%s1 + $0x31d0] sm:$0xff]
    %v1629 = vld [vmem:[%s1 + $0x31d8] sm:$0xff]
    %v1630 = vld [vmem:[%s1 + $0x31e0] sm:$0xff]
    %v1631 = vld [vmem:[%s1 + $0x31e8] sm:$0xff]
    %v1632 = vld [vmem:[%s1 + $0x31f0] sm:$0xff]
    %v1633 = vld [vmem:[%s1 + $0x31f8] sm:$0xff]
    %v1634 = vld [vmem:[%s1 + $0x3200] sm:$0xff]
    %v1635 = vld [vmem:[%s1 + $0x3208] sm:$0xff]
    %v1636 = vld [vmem:[%s1 + $0x3210] sm:$0xff]
    %v1637 = vld [vmem:[%s1 + $0x3218] sm:$0xff]
    %v1638 = vld [vmem:[%s1 + $0x3220] sm:$0xff]
    %v1639 = vld [vmem:[%s1 + $0x3228] sm:$0xff]
    %v1640 = vld [vmem:[%s1 + $0x3230] sm:$0xff]
    %v1641 = vld [vmem:[%s1 + $0x3238] sm:$0xff]
    %v1642 = vld [vmem:[%s1 + $0x3240] sm:$0xff]
    %v1643 = vld [vmem:[%s1 + $0x3248] sm:$0xff]
    %v1644 = vld [vmem:[%s1 + $0x3250] sm:$0xff]
    %v1645 = vld [vmem:[%s1 + $0x3258] sm:$0xff]
    %v1646 = vld [vmem:[%s1 + $0x3260] sm:$0xff]
    %v1647 = vld [vmem:[%s1 + $0x3268] sm:$0xff]
    %v1648 = vld [vmem:[%s1 + $0x3270] sm:$0xff]
    %v1649 = vld [vmem:[%s1 + $0x3278] sm:$0xff]
    %v1650 = vld [vmem:[%s1 + $0x3280] sm:$0xff]
    %v1651 = vld [vmem:[%s1 + $0x3288] sm:$0xff]
    %v1652 = vld [vmem:[%s1 + $0x3290] sm:$0xff]
    %v1653 = vld [vmem:[%s1 + $0x3298] sm:$0xff]
    %v1654 = vld [vmem:[%s1 + $0x32a0] sm:$0xff]
    %v1655 = vld [vmem:[%s1 + $0x32a8] sm:$0xff]
    %v1656 = vld [vmem:[%s1 + $0x32b0] sm:$0xff]
    %v1657 = vld [vmem:[%s1 + $0x32b8] sm:$0xff]
    %v1658 = vld [vmem:[%s1 + $0x32c0] sm:$0xff]
    %v1659 = vld [vmem:[%s1 + $0x32c8] sm:$0xff]
    %v1660 = vld [vmem:[%s1 + $0x32d0] sm:$0xff]
    %v1661 = vld [vmem:[%s1 + $0x32d8] sm:$0xff]
    %v1662 = vld [vmem:[%s1 + $0x32e0] sm:$0xff]
    %v1663 = vld [vmem:[%s1 + $0x32e8] sm:$0xff]
    %v1664 = vld [vmem:[%s1 + $0x32f0] sm:$0xff]
    %v1665 = vld [vmem:[%s1 + $0x32f8] sm:$0xff]
    %v1666 = vld [vmem:[%s1 + $0x3300] sm:$0xff]
    %v1667 = vld [vmem:[%s1 + $0x3308] sm:$0xff]
    %v1668 = vld [vmem:[%s1 + $0x3310] sm:$0xff]
    %v1669 = vld [vmem:[%s1 + $0x3318] sm:$0xff]
    %v1670 = vld [vmem:[%s1 + $0x3320] sm:$0xff]
    %v1671 = vld [vmem:[%s1 + $0x3328] sm:$0xff]
    %v1672 = vld [vmem:[%s1 + $0x3330] sm:$0xff]
    %v1673 = vld [vmem:[%s1 + $0x3338] sm:$0xff]
    %v1674 = vld [vmem:[%s1 + $0x3340] sm:$0xff]
    %v1675 = vld [vmem:[%s1 + $0x3348] sm:$0xff]
    %v1676 = vld [vmem:[%s1 + $0x3350] sm:$0xff]
    %v1677 = vld [vmem:[%s1 + $0x3358] sm:$0xff]
    %v1678 = vld [vmem:[%s1 + $0x3360] sm:$0xff]
    %v1679 = vld [vmem:[%s1 + $0x3368] sm:$0xff]
    %v1680 = vld [vmem:[%s1 + $0x3370] sm:$0xff]
    %v1681 = vld [vmem:[%s1 + $0x3378] sm:$0xff]
    %v1682 = vld [vmem:[%s1 + $0x3380] sm:$0xff]
    %v1683 = vld [vmem:[%s1 + $0x3388] sm:$0xff]
    %v1684 = vld [vmem:[%s1 + $0x3390] sm:$0xff]
    %v1685 = vld [vmem:[%s1 + $0x3398] sm:$0xff]
    %v1686 = vld [vmem:[%s1 + $0x33a0] sm:$0xff]
    %v1687 = vld [vmem:[%s1 + $0x33a8] sm:$0xff]
    %v1688 = vld [vmem:[%s1 + $0x33b0] sm:$0xff]
    %v1689 = vld [vmem:[%s1 + $0x33b8] sm:$0xff]
    %v1690 = vld [vmem:[%s1 + $0x33c0] sm:$0xff]
    %v1691 = vld [vmem:[%s1 + $0x33c8] sm:$0xff]
    %v1692 = vld [vmem:[%s1 + $0x33d0] sm:$0xff]
    %v1693 = vld [vmem:[%s1 + $0x33d8] sm:$0xff]
    %v1694 = vld [vmem:[%s1 + $0x33e0] sm:$0xff]
    %v1695 = vld [vmem:[%s1 + $0x33e8] sm:$0xff]
    %v1696 = vld [vmem:[%s1 + $0x33f0] sm:$0xff]
    %v1697 = vld [vmem:[%s1 + $0x33f8] sm:$0xff]
    %v1698 = vld [vmem:[%s1 + $0x3400] sm:$0xff]
    %v1699 = vld [vmem:[%s1 + $0x3408] sm:$0xff]
    %v1700 = vld [vmem:[%s1 + $0x3410] sm:$0xff]
    %v1701 = vld [vmem:[%s1 + $0x3418] sm:$0xff]
    %v1702 = vld [vmem:[%s1 + $0x3420] sm:$0xff]
    %v1703 = vld [vmem:[%s1 + $0x3428] sm:$0xff]
    %v1704 = vld [vmem:[%s1 + $0x3430] sm:$0xff]
    %v1705 = vld [vmem:[%s1 + $0x3438] sm:$0xff]
    %v1706 = vld [vmem:[%s1 + $0x3440] sm:$0xff]
    %v1707 = vld [vmem:[%s1 + $0x3448] sm:$0xff]
    %v1708 = vld [vmem:[%s1 + $0x3450] sm:$0xff]
    %v1709 = vld [vmem:[%s1 + $0x3458] sm:$0xff]
    %v1710 = vld [vmem:[%s1 + $0x3460] sm:$0xff]
    %v1711 = vld [vmem:[%s1 + $0x3468] sm:$0xff]
    %v1712 = vld [vmem:[%s1 + $0x3470] sm:$0xff]
    %v1713 = vld [vmem:[%s1 + $0x3478] sm:$0xff]
    %v1714 = vld [vmem:[%s1 + $0x3480] sm:$0xff]
    %v1715 = vld [vmem:[%s1 + $0x3488] sm:$0xff]
    %v1716 = vld [vmem:[%s1 + $0x3490] sm:$0xff]
    %v1717 = vld [vmem:[%s1 + $0x3498] sm:$0xff]
    %v1718 = vld [vmem:[%s1 + $0x34a0] sm:$0xff]
    %v1719 = vld [vmem:[%s1 + $0x34a8] sm:$0xff]
    %v1720 = vld [vmem:[%s1 + $0x34b0] sm:$0xff]
    %v1721 = vld [vmem:[%s1 + $0x34b8] sm:$0xff]
    %v1722 = vld [vmem:[%s1 + $0x34c0] sm:$0xff]
    %v1723 = vld [vmem:[%s1 + $0x34c8] sm:$0xff]
    %v1724 = vld [vmem:[%s1 + $0x34d0] sm:$0xff]
    %v1725 = vld [vmem:[%s1 + $0x34d8] sm:$0xff]
    %v1726 = vld [vmem:[%s1 + $0x34e0] sm:$0xff]
    %v1727 = vld [vmem:[%s1 + $0x34e8] sm:$0xff]
    %v1728 = vld [vmem:[%s1 + $0x34f0] sm:$0xff]
    %v1729 = vld [vmem:[%s1 + $0x34f8] sm:$0xff]
    %v1730 = vld [vmem:[%s1 + $0x3500] sm:$0xff]
    %v1731 = vld [vmem:[%s1 + $0x3508] sm:$0xff]
    %v1732 = vld [vmem:[%s1 + $0x3510] sm:$0xff]
    %v1733 = vld [vmem:[%s1 + $0x3518] sm:$0xff]
    %v1734 = vld [vmem:[%s1 + $0x3520] sm:$0xff]
    %v1735 = vld [vmem:[%s1 + $0x3528] sm:$0xff]
    %v1736 = vld [vmem:[%s1 + $0x3530] sm:$0xff]
    %v1737 = vld [vmem:[%s1 + $0x3538] sm:$0xff]
    %v1738 = vld [vmem:[%s1 + $0x3540] sm:$0xff]
    %v1739 = vld [vmem:[%s1 + $0x3548] sm:$0xff]
    %v1740 = vld [vmem:[%s1 + $0x3550] sm:$0xff]
    %v1741 = vld [vmem:[%s1 + $0x3558] sm:$0xff]
    %v1742 = vld [vmem:[%s1 + $0x3560] sm:$0xff]
    %v1743 = vld [vmem:[%s1 + $0x3568] sm:$0xff]
    %v1744 = vld [vmem:[%s1 + $0x3570] sm:$0xff]
    %v1745 = vld [vmem:[%s1 + $0x3578] sm:$0xff]
    %v1746 = vld [vmem:[%s1 + $0x3580] sm:$0xff]
    %v1747 = vld [vmem:[%s1 + $0x3588] sm:$0xff]
    %v1748 = vld [vmem:[%s1 + $0x3590] sm:$0xff]
    %v1749 = vld [vmem:[%s1 + $0x3598] sm:$0xff]
    %v1750 = vld [vmem:[%s1 + $0x35a0] sm:$0xff]
    %v1751 = vld [vmem:[%s1 + $0x35a8] sm:$0xff]
    %v1752 = vld [vmem:[%s1 + $0x35b0] sm:$0xff]
    %v1753 = vld [vmem:[%s1 + $0x35b8] sm:$0xff]
    %v1754 = vld [vmem:[%s1 + $0x35c0] sm:$0xff]
    %v1755 = vld [vmem:[%s1 + $0x35c8] sm:$0xff]
    %v1756 = vld [vmem:[%s1 + $0x35d0] sm:$0xff]
    %v1757 = vld [vmem:[%s1 + $0x35d8] sm:$0xff]
    %v1758 = vld [vmem:[%s1 + $0x35e0] sm:$0xff]
    %v1759 = vld [vmem:[%s1 + $0x35e8] sm:$0xff]
    %v1760 = vld [vmem:[%s1 + $0x35f0] sm:$0xff]
    %v1761 = vld [vmem:[%s1 + $0x35f8] sm:$0xff]
    %v1762 = vld [vmem:[%s1 + $0x3600] sm:$0xff]
    %v1763 = vld [vmem:[%s1 + $0x3608] sm:$0xff]
    %v1764 = vld [vmem:[%s1 + $0x3610] sm:$0xff]
    %v1765 = vld [vmem:[%s1 + $0x3618] sm:$0xff]
    %v1766 = vld [vmem:[%s1 + $0x3620] sm:$0xff]
    %v1767 = vld [vmem:[%s1 + $0x3628] sm:$0xff]
    %v1768 = vld [vmem:[%s1 + $0x3630] sm:$0xff]
    %v1769 = vld [vmem:[%s1 + $0x3638] sm:$0xff]
    %v1770 = vld [vmem:[%s1 + $0x3640] sm:$0xff]
    %v1771 = vld [vmem:[%s1 + $0x3648] sm:$0xff]
    %v1772 = vld [vmem:[%s1 + $0x3650] sm:$0xff]
    %v1773 = vld [vmem:[%s1 + $0x3658] sm:$0xff]
    %v1774 = vld [vmem:[%s1 + $0x3660] sm:$0xff]
    %v1775 = vld [vmem:[%s1 + $0x3668] sm:$0xff]
    %v1776 = vld [vmem:[%s1 + $0x3670] sm:$0xff]
    %v1777 = vld [vmem:[%s1 + $0x3678] sm:$0xff]
    %v1778 = vld [vmem:[%s1 + $0x3680] sm:$0xff]
    %v1779 = vld [vmem:[%s1 + $0x3688] sm:$0xff]
    %v1780 = vld [vmem:[%s1 + $0x3690] sm:$0xff]
    %v1781 = vld [vmem:[%s1 + $0x3698] sm:$0xff]
    %v1782 = vld [vmem:[%s1 + $0x36a0] sm:$0xff]
    %v1783 = vld [vmem:[%s1 + $0x36a8] sm:$0xff]
    %v1784 = vld [vmem:[%s1 + $0x36b0] sm:$0xff]
    %v1785 = vld [vmem:[%s1 + $0x36b8] sm:$0xff]
    %v1786 = vld [vmem:[%s1 + $0x36c0] sm:$0xff]
    %v1787 = vld [vmem:[%s1 + $0x36c8] sm:$0xff]
    %v1788 = vld [vmem:[%s1 + $0x36d0] sm:$0xff]
    %v1789 = vld [vmem:[%s1 + $0x36d8] sm:$0xff]
    %v1790 = vld [vmem:[%s1 + $0x36e0] sm:$0xff]
    %v1791 = vld [vmem:[%s1 + $0x36e8] sm:$0xff]
    %v1792 = vld [vmem:[%s1 + $0x36f0] sm:$0xff]
    %v1793 = vld [vmem:[%s1 + $0x36f8] sm:$0xff]
    %v1794 = vld [vmem:[%s1 + $0x3700] sm:$0xff]
    %v1795 = vld [vmem:[%s1 + $0x3708] sm:$0xff]
    %v1796 = vld [vmem:[%s1 + $0x3710] sm:$0xff]
    %v1797 = vld [vmem:[%s1 + $0x3718] sm:$0xff]
    %v1798 = vld [vmem:[%s1 + $0x3720] sm:$0xff]
    %v1799 = vld [vmem:[%s1 + $0x3728] sm:$0xff]
    %v1800 = vld [vmem:[%s1 + $0x3730] sm:$0xff]
    %v1801 = vld [vmem:[%s1 + $0x3738] sm:$0xff]
    %v1802 = vld [vmem:[%s1 + $0x3740] sm:$0xff]
    %v1803 = vld [vmem:[%s1 + $0x3748] sm:$0xff]
    %v1804 = vld [vmem:[%s1 + $0x3750] sm:$0xff]
    %v1805 = vld [vmem:[%s1 + $0x3758] sm:$0xff]
    %v1806 = vld [vmem:[%s1 + $0x3760] sm:$0xff]
    %v1807 = vld [vmem:[%s1 + $0x3768] sm:$0xff]
    %v1808 = vld [vmem:[%s1 + $0x3770] sm:$0xff]
    %v1809 = vld [vmem:[%s1 + $0x3778] sm:$0xff]
    %v1810 = vld [vmem:[%s1 + $0x3780] sm:$0xff]
    %v1811 = vld [vmem:[%s1 + $0x3788] sm:$0xff]
    %v1812 = vld [vmem:[%s1 + $0x3790] sm:$0xff]
    %v1813 = vld [vmem:[%s1 + $0x3798] sm:$0xff]
    %v1814 = vld [vmem:[%s1 + $0x37a0] sm:$0xff]
    %v1815 = vld [vmem:[%s1 + $0x37a8] sm:$0xff]
    %v1816 = vld [vmem:[%s1 + $0x37b0] sm:$0xff]
    %v1817 = vld [vmem:[%s1 + $0x37b8] sm:$0xff]
    %v1818 = vld [vmem:[%s1 + $0x37c0] sm:$0xff]
    %v1819 = vld [vmem:[%s1 + $0x37c8] sm:$0xff]
    %v1820 = vld [vmem:[%s1 + $0x37d0] sm:$0xff]
    %v1821 = vld [vmem:[%s1 + $0x37d8] sm:$0xff]
    %v1822 = vld [vmem:[%s1 + $0x37e0] sm:$0xff]
    %v1823 = vld [vmem:[%s1 + $0x37e8] sm:$0xff]
    %v1824 = vld [vmem:[%s1 + $0x37f0] sm:$0xff]
    %v1825 = vld [vmem:[%s1 + $0x37f8] sm:$0xff]
    %v1826 = vld [vmem:[%s1 + $0x3800] sm:$0xff]
    %v1827 = vld [vmem:[%s1 + $0x3808] sm:$0xff]
    %v1828 = vld [vmem:[%s1 + $0x3810] sm:$0xff]
    %v1829 = vld [vmem:[%s1 + $0x3818] sm:$0xff]
    %v1830 = vld [vmem:[%s1 + $0x3820] sm:$0xff]
    %v1831 = vld [vmem:[%s1 + $0x3828] sm:$0xff]
    %v1832 = vld [vmem:[%s1 + $0x3830] sm:$0xff]
    %v1833 = vld [vmem:[%s1 + $0x3838] sm:$0xff]
    %v1834 = vld [vmem:[%s1 + $0x3840] sm:$0xff]
    %v1835 = vld [vmem:[%s1 + $0x3848] sm:$0xff]
    %v1836 = vld [vmem:[%s1 + $0x3850] sm:$0xff]
    %v1837 = vld [vmem:[%s1 + $0x3858] sm:$0xff]
    %v1838 = vld [vmem:[%s1 + $0x3860] sm:$0xff]
    %v1839 = vld [vmem:[%s1 + $0x3868] sm:$0xff]
    %v1840 = vld [vmem:[%s1 + $0x3870] sm:$0xff]
    %v1841 = vld [vmem:[%s1 + $0x3878] sm:$0xff]
    %v1842 = vld [vmem:[%s1 + $0x3880] sm:$0xff]
    %v1843 = vld [vmem:[%s1 + $0x3888] sm:$0xff]
    %v1844 = vld [vmem:[%s1 + $0x3890] sm:$0xff]
    %v1845 = vld [vmem:[%s1 + $0x3898] sm:$0xff]
    %v1846 = vld [vmem:[%s1 + $0x38a0] sm:$0xff]
    %v1847 = vld [vmem:[%s1 + $0x38a8] sm:$0xff]
    %v1848 = vld [vmem:[%s1 + $0x38b0] sm:$0xff]
    %v1849 = vld [vmem:[%s1 + $0x38b8] sm:$0xff]
    %v1850 = vld [vmem:[%s1 + $0x38c0] sm:$0xff]
    %v1851 = vld [vmem:[%s1 + $0x38c8] sm:$0xff]
    %v1852 = vld [vmem:[%s1 + $0x38d0] sm:$0xff]
    %v1853 = vld [vmem:[%s1 + $0x38d8] sm:$0xff]
    %v1854 = vld [vmem:[%s1 + $0x38e0] sm:$0xff]
    %v1855 = vld [vmem:[%s1 + $0x38e8] sm:$0xff]
    %v1856 = vld [vmem:[%s1 + $0x38f0] sm:$0xff]
    %v1857 = vld [vmem:[%s1 + $0x38f8] sm:$0xff]
    %v1858 = vld [vmem:[%s1 + $0x3900] sm:$0xff]
    %v1859 = vld [vmem:[%s1 + $0x3908] sm:$0xff]
    %v1860 = vld [vmem:[%s1 + $0x3910] sm:$0xff]
    %v1861 = vld [vmem:[%s1 + $0x3918] sm:$0xff]
    %v1862 = vld [vmem:[%s1 + $0x3920] sm:$0xff]
    %v1863 = vld [vmem:[%s1 + $0x3928] sm:$0xff]
    %v1864 = vld [vmem:[%s1 + $0x3930] sm:$0xff]
    %v1865 = vld [vmem:[%s1 + $0x3938] sm:$0xff]
    %v1866 = vld [vmem:[%s1 + $0x3940] sm:$0xff]
    %v1867 = vld [vmem:[%s1 + $0x3948] sm:$0xff]
    %v1868 = vld [vmem:[%s1 + $0x3950] sm:$0xff]
    %v1869 = vld [vmem:[%s1 + $0x3958] sm:$0xff]
    %v1870 = vld [vmem:[%s1 + $0x3960] sm:$0xff]
    %v1871 = vld [vmem:[%s1 + $0x3968] sm:$0xff]
    %v1872 = vld [vmem:[%s1 + $0x3970] sm:$0xff]
    %v1873 = vld [vmem:[%s1 + $0x3978] sm:$0xff]
    %v1874 = vld [vmem:[%s1 + $0x3980] sm:$0xff]
    %v1875 = vld [vmem:[%s1 + $0x3988] sm:$0xff]
    %v1876 = vld [vmem:[%s1 + $0x3990] sm:$0xff]
    %v1877 = vld [vmem:[%s1 + $0x3998] sm:$0xff]
    %v1878 = vld [vmem:[%s1 + $0x39a0] sm:$0xff]
    %v1879 = vld [vmem:[%s1 + $0x39a8] sm:$0xff]
    %v1880 = vld [vmem:[%s1 + $0x39b0] sm:$0xff]
    %v1881 = vld [vmem:[%s1 + $0x39b8] sm:$0xff]
    %v1882 = vld [vmem:[%s1 + $0x39c0] sm:$0xff]
    %v1883 = vld [vmem:[%s1 + $0x39c8] sm:$0xff]
    %v1884 = vld [vmem:[%s1 + $0x39d0] sm:$0xff]
    %v1885 = vld [vmem:[%s1 + $0x39d8] sm:$0xff]
    %v1886 = vld [vmem:[%s1 + $0x39e0] sm:$0xff]
    %v1887 = vld [vmem:[%s1 + $0x39e8] sm:$0xff]
    %v1888 = vld [vmem:[%s1 + $0x39f0] sm:$0xff]
    %v1889 = vld [vmem:[%s1 + $0x39f8] sm:$0xff]
    %v1890 = vld [vmem:[%s1 + $0x3a00] sm:$0xff]
    %v1891 = vld [vmem:[%s1 + $0x3a08] sm:$0xff]
    %v1892 = vld [vmem:[%s1 + $0x3a10] sm:$0xff]
    %v1893 = vld [vmem:[%s1 + $0x3a18] sm:$0xff]
    %v1894 = vld [vmem:[%s1 + $0x3a20] sm:$0xff]
    %v1895 = vld [vmem:[%s1 + $0x3a28] sm:$0xff]
    %v1896 = vld [vmem:[%s1 + $0x3a30] sm:$0xff]
    %v1897 = vld [vmem:[%s1 + $0x3a38] sm:$0xff]
    %v1898 = vld [vmem:[%s1 + $0x3a40] sm:$0xff]
    %v1899 = vld [vmem:[%s1 + $0x3a48] sm:$0xff]
    %v1900 = vld [vmem:[%s1 + $0x3a50] sm:$0xff]
    %v1901 = vld [vmem:[%s1 + $0x3a58] sm:$0xff]
    %v1902 = vld [vmem:[%s1 + $0x3a60] sm:$0xff]
    %v1903 = vld [vmem:[%s1 + $0x3a68] sm:$0xff]
    %v1904 = vld [vmem:[%s1 + $0x3a70] sm:$0xff]
    %v1905 = vld [vmem:[%s1 + $0x3a78] sm:$0xff]
    %v1906 = vld [vmem:[%s1 + $0x3a80] sm:$0xff]
    %v1907 = vld [vmem:[%s1 + $0x3a88] sm:$0xff]
    %v1908 = vld [vmem:[%s1 + $0x3a90] sm:$0xff]
    %v1909 = vld [vmem:[%s1 + $0x3a98] sm:$0xff]
    %v1910 = vld [vmem:[%s1 + $0x3aa0] sm:$0xff]
    %v1911 = vld [vmem:[%s1 + $0x3aa8] sm:$0xff]
    %v1912 = vld [vmem:[%s1 + $0x3ab0] sm:$0xff]
    %v1913 = vld [vmem:[%s1 + $0x3ab8] sm:$0xff]
    %v1914 = vld [vmem:[%s1 + $0x3ac0] sm:$0xff]
    %v1915 = vld [vmem:[%s1 + $0x3ac8] sm:$0xff]
    %v1916 = vld [vmem:[%s1 + $0x3ad0] sm:$0xff]
    %v1917 = vld [vmem:[%s1 + $0x3ad8] sm:$0xff]
    %v1918 = vld [vmem:[%s1 + $0x3ae0] sm:$0xff]
    %v1919 = vld [vmem:[%s1 + $0x3ae8] sm:$0xff]
    %v1920 = vld [vmem:[%s1 + $0x3af0] sm:$0xff]
    %v1921 = vld [vmem:[%s1 + $0x3af8] sm:$0xff]
    %v1922 = vld [vmem:[%s1 + $0x3b00] sm:$0xff]
    %v1923 = vld [vmem:[%s1 + $0x3b08] sm:$0xff]
    %v1924 = vld [vmem:[%s1 + $0x3b10] sm:$0xff]
    %v1925 = vld [vmem:[%s1 + $0x3b18] sm:$0xff]
    %v1926 = vld [vmem:[%s1 + $0x3b20] sm:$0xff]
    %v1927 = vld [vmem:[%s1 + $0x3b28] sm:$0xff]
    %v1928 = vld [vmem:[%s1 + $0x3b30] sm:$0xff]
    %v1929 = vld [vmem:[%s1 + $0x3b38] sm:$0xff]
    %v1930 = vld [vmem:[%s1 + $0x3b40] sm:$0xff]
    %v1931 = vld [vmem:[%s1 + $0x3b48] sm:$0xff]
    %v1932 = vld [vmem:[%s1 + $0x3b50] sm:$0xff]
    %v1933 = vld [vmem:[%s1 + $0x3b58] sm:$0xff]
    %v1934 = vld [vmem:[%s1 + $0x3b60] sm:$0xff]
    %v1935 = vld [vmem:[%s1 + $0x3b68] sm:$0xff]
    %v1936 = vld [vmem:[%s1 + $0x3b70] sm:$0xff]
    %v1937 = vld [vmem:[%s1 + $0x3b78] sm:$0xff]
    %v1938 = vld [vmem:[%s1 + $0x3b80] sm:$0xff]
    %v1939 = vld [vmem:[%s1 + $0x3b88] sm:$0xff]
    %v1940 = vld [vmem:[%s1 + $0x3b90] sm:$0xff]
    %v1941 = vld [vmem:[%s1 + $0x3b98] sm:$0xff]
    %v1942 = vld [vmem:[%s1 + $0x3ba0] sm:$0xff]
    %v1943 = vld [vmem:[%s1 + $0x3ba8] sm:$0xff]
    %v1944 = vld [vmem:[%s1 + $0x3bb0] sm:$0xff]
    %v1945 = vld [vmem:[%s1 + $0x3bb8] sm:$0xff]
    %v1946 = vld [vmem:[%s1 + $0x3bc0] sm:$0xff]
    %v1947 = vld [vmem:[%s1 + $0x3bc8] sm:$0xff]
    %v1948 = vld [vmem:[%s1 + $0x3bd0] sm:$0xff]
    %v1949 = vld [vmem:[%s1 + $0x3bd8] sm:$0xff]
    %v1950 = vld [vmem:[%s1 + $0x3be0] sm:$0xff]
    %v1951 = vld [vmem:[%s1 + $0x3be8] sm:$0xff]
    %v1952 = vld [vmem:[%s1 + $0x3bf0] sm:$0xff]
    %v1953 = vld [vmem:[%s1 + $0x3bf8] sm:$0xff]
    %v1954 = vld [vmem:[%s1 + $0x3c00] sm:$0xff]
    %v1955 = vld [vmem:[%s1 + $0x3c08] sm:$0xff]
    %v1956 = vld [vmem:[%s1 + $0x3c10] sm:$0xff]
    %v1957 = vld [vmem:[%s1 + $0x3c18] sm:$0xff]
    %v1958 = vld [vmem:[%s1 + $0x3c20] sm:$0xff]
    %v1959 = vld [vmem:[%s1 + $0x3c28] sm:$0xff]
    %v1960 = vld [vmem:[%s1 + $0x3c30] sm:$0xff]
    %v1961 = vld [vmem:[%s1 + $0x3c38] sm:$0xff]
    %v1962 = vld [vmem:[%s1 + $0x3c40] sm:$0xff]
    %v1963 = vld [vmem:[%s1 + $0x3c48] sm:$0xff]
    %v1964 = vld [vmem:[%s1 + $0x3c50] sm:$0xff]
    %v1965 = vld [vmem:[%s1 + $0x3c58] sm:$0xff]
    %v1966 = vld [vmem:[%s1 + $0x3c60] sm:$0xff]
    %v1967 = vld [vmem:[%s1 + $0x3c68] sm:$0xff]
    %v1968 = vld [vmem:[%s1 + $0x3c70] sm:$0xff]
    %v1969 = vld [vmem:[%s1 + $0x3c78] sm:$0xff]
    %v1970 = vld [vmem:[%s1 + $0x3c80] sm:$0xff]
    %v1971 = vld [vmem:[%s1 + $0x3c88] sm:$0xff]
    %v1972 = vld [vmem:[%s1 + $0x3c90] sm:$0xff]
    %v1973 = vld [vmem:[%s1 + $0x3c98] sm:$0xff]
    %v1974 = vld [vmem:[%s1 + $0x3ca0] sm:$0xff]
    %v1975 = vld [vmem:[%s1 + $0x3ca8] sm:$0xff]
    %v1976 = vld [vmem:[%s1 + $0x3cb0] sm:$0xff]
    %v1977 = vld [vmem:[%s1 + $0x3cb8] sm:$0xff]
    %v1978 = vld [vmem:[%s1 + $0x3cc0] sm:$0xff]
    %v1979 = vld [vmem:[%s1 + $0x3cc8] sm:$0xff]
    %v1980 = vld [vmem:[%s1 + $0x3cd0] sm:$0xff]
    %v1981 = vld [vmem:[%s1 + $0x3cd8] sm:$0xff]
    %v1982 = vld [vmem:[%s1 + $0x3ce0] sm:$0xff]
    %v1983 = vld [vmem:[%s1 + $0x3ce8] sm:$0xff]
    %v1984 = vld [vmem:[%s1 + $0x3cf0] sm:$0xff]
    %v1985 = vld [vmem:[%s1 + $0x3cf8] sm:$0xff]
    %v1986 = vld [vmem:[%s1 + $0x3d00] sm:$0xff]
    %v1987 = vld [vmem:[%s1 + $0x3d08] sm:$0xff]
    %v1988 = vld [vmem:[%s1 + $0x3d10] sm:$0xff]
    %v1989 = vld [vmem:[%s1 + $0x3d18] sm:$0xff]
    %v1990 = vld [vmem:[%s1 + $0x3d20] sm:$0xff]
    %v1991 = vld [vmem:[%s1 + $0x3d28] sm:$0xff]
    %v1992 = vld [vmem:[%s1 + $0x3d30] sm:$0xff]
    %v1993 = vld [vmem:[%s1 + $0x3d38] sm:$0xff]
    %v1994 = vld [vmem:[%s1 + $0x3d40] sm:$0xff]
    %v1995 = vld [vmem:[%s1 + $0x3d48] sm:$0xff]
    %v1996 = vld [vmem:[%s1 + $0x3d50] sm:$0xff]
    %v1997 = vld [vmem:[%s1 + $0x3d58] sm:$0xff]
    %v1998 = vld [vmem:[%s1 + $0x3d60] sm:$0xff]
    %v1999 = vld [vmem:[%s1 + $0x3d68] sm:$0xff]
    %v2000 = vld [vmem:[%s1 + $0x3d70] sm:$0xff]
    %v2001 = vld [vmem:[%s1 + $0x3d78] sm:$0xff]
    %v2002 = vld [vmem:[%s1 + $0x3d80] sm:$0xff]
    %v2003 = vld [vmem:[%s1 + $0x3d88] sm:$0xff]
    %v2004 = vld [vmem:[%s1 + $0x3d90] sm:$0xff]
    %v2005 = vld [vmem:[%s1 + $0x3d98] sm:$0xff]
    %v2006 = vld [vmem:[%s1 + $0x3da0] sm:$0xff]
    %v2007 = vld [vmem:[%s1 + $0x3da8] sm:$0xff]
    %v2008 = vld [vmem:[%s1 + $0x3db0] sm:$0xff]
    %v2009 = vld [vmem:[%s1 + $0x3db8] sm:$0xff]
    %v2010 = vld [vmem:[%s1 + $0x3dc0] sm:$0xff]
    %v2011 = vld [vmem:[%s1 + $0x3dc8] sm:$0xff]
    %v2012 = vld [vmem:[%s1 + $0x3dd0] sm:$0xff]
    %v2013 = vld [vmem:[%s1 + $0x3dd8] sm:$0xff]
    %v2014 = vld [vmem:[%s1 + $0x3de0] sm:$0xff]
    %v2015 = vld [vmem:[%s1 + $0x3de8] sm:$0xff]
    %v2016 = vld [vmem:[%s1 + $0x3df0] sm:$0xff]
    %v2017 = vld [vmem:[%s1 + $0x3df8] sm:$0xff]
    %v2018 = vld [vmem:[%s1 + $0x3e00] sm:$0xff]
    %v2019 = vld [vmem:[%s1 + $0x3e08] sm:$0xff]
    %v2020 = vld [vmem:[%s1 + $0x3e10] sm:$0xff]
    %v2021 = vld [vmem:[%s1 + $0x3e18] sm:$0xff]
    %v2022 = vld [vmem:[%s1 + $0x3e20] sm:$0xff]
    %v2023 = vld [vmem:[%s1 + $0x3e28] sm:$0xff]
    %v2024 = vld [vmem:[%s1 + $0x3e30] sm:$0xff]
    %v2025 = vld [vmem:[%s1 + $0x3e38] sm:$0xff]
    %v2026 = vld [vmem:[%s1 + $0x3e40] sm:$0xff]
    %v2027 = vld [vmem:[%s1 + $0x3e48] sm:$0xff]
    %v2028 = vld [vmem:[%s1 + $0x3e50] sm:$0xff]
    %v2029 = vld [vmem:[%s1 + $0x3e58] sm:$0xff]
    %v2030 = vld [vmem:[%s1 + $0x3e60] sm:$0xff]
    %v2031 = vld [vmem:[%s1 + $0x3e68] sm:$0xff]
    %v2032 = vld [vmem:[%s1 + $0x3e70] sm:$0xff]
    %v2033 = vld [vmem:[%s1 + $0x3e78] sm:$0xff]
    %v2034 = vld [vmem:[%s1 + $0x3e80] sm:$0xff]
    %v2035 = vld [vmem:[%s1 + $0x3e88] sm:$0xff]
    %v2036 = vld [vmem:[%s1 + $0x3e90] sm:$0xff]
    %v2037 = vld [vmem:[%s1 + $0x3e98] sm:$0xff]
    %v2038 = vld [vmem:[%s1 + $0x3ea0] sm:$0xff]
    %v2039 = vld [vmem:[%s1 + $0x3ea8] sm:$0xff]
    %v2040 = vld [vmem:[%s1 + $0x3eb0] sm:$0xff]
    %v2041 = vld [vmem:[%s1 + $0x3eb8] sm:$0xff]
    %v2042 = vld [vmem:[%s1 + $0x3ec0] sm:$0xff]
    %v2043 = vld [vmem:[%s1 + $0x3ec8] sm:$0xff]
    %v2044 = vld [vmem:[%s1 + $0x3ed0] sm:$0xff]
    %v2045 = vld [vmem:[%s1 + $0x3ed8] sm:$0xff]
    %v2046 = vld [vmem:[%s1 + $0x3ee0] sm:$0xff]
    %v2047 = vld [vmem:[%s1 + $0x3ee8] sm:$0xff]
    %v2048 = vld [vmem:[%s1 + $0x3ef0] sm:$0xff]
    %v2049 = vld [vmem:[%s1 + $0x3ef8] sm:$0xff]
    %v2050 = vld [vmem:[%s1 + $0x3f00] sm:$0xff]
    %v2051 = vld [vmem:[%s1 + $0x3f08] sm:$0xff]
    %v2052 = vld [vmem:[%s1 + $0x3f10] sm:$0xff]
    %v2053 = vld [vmem:[%s1 + $0x3f18] sm:$0xff]
    %v2054 = vld [vmem:[%s1 + $0x3f20] sm:$0xff]
    %v2055 = vld [vmem:[%s1 + $0x3f28] sm:$0xff]
    %v2056 = vld [vmem:[%s1 + $0x3f30] sm:$0xff]
    %v2057 = vld [vmem:[%s1 + $0x3f38] sm:$0xff]
    %v2058 = vld [vmem:[%s1 + $0x3f40] sm:$0xff]
    %v2059 = vld [vmem:[%s1 + $0x3f48] sm:$0xff]
    %v2060 = vld [vmem:[%s1 + $0x3f50] sm:$0xff]
    %v2061 = vld [vmem:[%s1 + $0x3f58] sm:$0xff]
    %v2062 = vld [vmem:[%s1 + $0x3f60] sm:$0xff]
    %v2063 = vld [vmem:[%s1 + $0x3f68] sm:$0xff]
    %v2064 = vld [vmem:[%s1 + $0x3f70] sm:$0xff]
    %v2065 = vld [vmem:[%s1 + $0x3f78] sm:$0xff]
    %v2066 = vld [vmem:[%s1 + $0x3f80] sm:$0xff]
    %v2067 = vld [vmem:[%s1 + $0x3f88] sm:$0xff]
    %v2068 = vld [vmem:[%s1 + $0x3f90] sm:$0xff]
    %v2069 = vld [vmem:[%s1 + $0x3f98] sm:$0xff]
    %v2070 = vld [vmem:[%s1 + $0x3fa0] sm:$0xff]
    %v2071 = vld [vmem:[%s1 + $0x3fa8] sm:$0xff]
    %v2072 = vld [vmem:[%s1 + $0x3fb0] sm:$0xff]
    %v2073 = vld [vmem:[%s1 + $0x3fb8] sm:$0xff]
    %v2074 = vld [vmem:[%s1 + $0x3fc0] sm:$0xff]
    %v2075 = vld [vmem:[%s1 + $0x3fc8] sm:$0xff]
    %v2076 = vld [vmem:[%s1 + $0x3fd0] sm:$0xff]
    %v2077 = vld [vmem:[%s1 + $0x3fd8] sm:$0xff]
    %v2078 = vld [vmem:[%s1 + $0x3fe0] sm:$0xff]
    %v2079 = vld [vmem:[%s1 + $0x3fe8] sm:$0xff]
    %v2080 = vld [vmem:[%s1 + $0x3ff0] sm:$0xff]
    %v2081 = vld [vmem:[%s1 + $0x3ff8] sm:$0xff]
    %v2082 = vld [vmem:[%s1 + $0x4000] sm:$0xff]
    %v2083 = vld [vmem:[%s1 + $0x4008] sm:$0xff]
    %v2084 = vld [vmem:[%s1 + $0x4010] sm:$0xff]
    %v2085 = vld [vmem:[%s1 + $0x4018] sm:$0xff]
    %v2086 = vld [vmem:[%s1 + $0x4020] sm:$0xff]
    %v2087 = vld [vmem:[%s1 + $0x4028] sm:$0xff]
    %v2088 = vld [vmem:[%s1 + $0x4030] sm:$0xff]
    %v2089 = vld [vmem:[%s1 + $0x4038] sm:$0xff]
    %v2090 = vld [vmem:[%s1 + $0x4040] sm:$0xff]
    %v2091 = vld [vmem:[%s1 + $0x4048] sm:$0xff]
    %v2092 = vld [vmem:[%s1 + $0x4050] sm:$0xff]
    %v2093 = vld [vmem:[%s1 + $0x4058] sm:$0xff]
    %v2094 = vld [vmem:[%s1 + $0x4060] sm:$0xff]
    %v2095 = vld [vmem:[%s1 + $0x4068] sm:$0xff]
    %v2096 = vld [vmem:[%s1 + $0x4070] sm:$0xff]
    %v2097 = vld [vmem:[%s1 + $0x4078] sm:$0xff]
    %v2098 = vld [vmem:[%s1 + $0x4080] sm:$0xff]
    %v2099 = vld [vmem:[%s1 + $0x4088] sm:$0xff]
    %v2100 = vld [vmem:[%s1 + $0x4090] sm:$0xff]
    %v2101 = vld [vmem:[%s1 + $0x4098] sm:$0xff]
    %v2102 = vld [vmem:[%s1 + $0x40a0] sm:$0xff]
    %v2103 = vld [vmem:[%s1 + $0x40a8] sm:$0xff]
    %v2104 = vld [vmem:[%s1 + $0x40b0] sm:$0xff]
    %v2105 = vld [vmem:[%s1 + $0x40b8] sm:$0xff]
    %v2106 = vld [vmem:[%s1 + $0x40c0] sm:$0xff]
    %v2107 = vld [vmem:[%s1 + $0x40c8] sm:$0xff]
    %v2108 = vld [vmem:[%s1 + $0x40d0] sm:$0xff]
    %v2109 = vld [vmem:[%s1 + $0x40d8] sm:$0xff]
    %v2110 = vld [vmem:[%s1 + $0x40e0] sm:$0xff]
    %v2111 = vld [vmem:[%s1 + $0x40e8] sm:$0xff]
    %v2112 = vld [vmem:[%s1 + $0x40f0] sm:$0xff]
    %v2113 = vld [vmem:[%s1 + $0x40f8] sm:$0xff]
    %v2114 = vld [vmem:[%s1 + $0x4100] sm:$0xff]
    %v2115 = vld [vmem:[%s1 + $0x4108] sm:$0xff]
    %v2116 = vld [vmem:[%s1 + $0x4110] sm:$0xff]
    %v2117 = vld [vmem:[%s1 + $0x4118] sm:$0xff]
    %v2118 = vld [vmem:[%s1 + $0x4120] sm:$0xff]
    %v2119 = vld [vmem:[%s1 + $0x4128] sm:$0xff]
    %v2120 = vld [vmem:[%s1 + $0x4130] sm:$0xff]
    %v2121 = vld [vmem:[%s1 + $0x4138] sm:$0xff]
    %v2122 = vld [vmem:[%s1 + $0x4140] sm:$0xff]
    %v2123 = vld [vmem:[%s1 + $0x4148] sm:$0xff]
    %v2124 = vld [vmem:[%s1 + $0x4150] sm:$0xff]
    %v2125 = vld [vmem:[%s1 + $0x4158] sm:$0xff]
    %v2126 = vld [vmem:[%s1 + $0x4160] sm:$0xff]
    %v2127 = vld [vmem:[%s1 + $0x4168] sm:$0xff]
    %v2128 = vld [vmem:[%s1 + $0x4170] sm:$0xff]
    %v2129 = vld [vmem:[%s1 + $0x4178] sm:$0xff]
    %v2130 = vld [vmem:[%s1 + $0x4180] sm:$0xff]
    %v2131 = vld [vmem:[%s1 + $0x4188] sm:$0xff]
    %v2132 = vld [vmem:[%s1 + $0x4190] sm:$0xff]
    %v2133 = vld [vmem:[%s1 + $0x4198] sm:$0xff]
    %v2134 = vld [vmem:[%s1 + $0x41a0] sm:$0xff]
    %v2135 = vld [vmem:[%s1 + $0x41a8] sm:$0xff]
    %v2136 = vld [vmem:[%s1 + $0x41b0] sm:$0xff]
    %v2137 = vld [vmem:[%s1 + $0x41b8] sm:$0xff]
    %v2138 = vld [vmem:[%s1 + $0x41c0] sm:$0xff]
    %v2139 = vld [vmem:[%s1 + $0x41c8] sm:$0xff]
    %v2140 = vld [vmem:[%s1 + $0x41d0] sm:$0xff]
    %v2141 = vld [vmem:[%s1 + $0x41d8] sm:$0xff]
    %v2142 = vld [vmem:[%s1 + $0x41e0] sm:$0xff]
    %v2143 = vld [vmem:[%s1 + $0x41e8] sm:$0xff]
    %v2144 = vld [vmem:[%s1 + $0x41f0] sm:$0xff]
    %v2145 = vld [vmem:[%s1 + $0x41f8] sm:$0xff]
    %v2146 = vld [vmem:[%s1 + $0x4200] sm:$0xff]
    %v2147 = vld [vmem:[%s1 + $0x4208] sm:$0xff]
    %v2148 = vld [vmem:[%s1 + $0x4210] sm:$0xff]
    %v2149 = vld [vmem:[%s1 + $0x4218] sm:$0xff]
    %v2150 = vld [vmem:[%s1 + $0x4220] sm:$0xff]
    %v2151 = vld [vmem:[%s1 + $0x4228] sm:$0xff]
    %v2152 = vld [vmem:[%s1 + $0x4230] sm:$0xff]
    %v2153 = vld [vmem:[%s1 + $0x4238] sm:$0xff]
    %v2154 = vld [vmem:[%s1 + $0x4240] sm:$0xff]
    %v2155 = vld [vmem:[%s1 + $0x4248] sm:$0xff]
    %v2156 = vld [vmem:[%s1 + $0x4250] sm:$0xff]
    %v2157 = vld [vmem:[%s1 + $0x4258] sm:$0xff]
    %v2158 = vld [vmem:[%s1 + $0x4260] sm:$0xff]
    %v2159 = vld [vmem:[%s1 + $0x4268] sm:$0xff]
    %v2160 = vld [vmem:[%s1 + $0x4270] sm:$0xff]
    %v2161 = vld [vmem:[%s1 + $0x4278] sm:$0xff]
    %v2162 = vld [vmem:[%s1 + $0x4280] sm:$0xff]
    %v2163 = vld [vmem:[%s1 + $0x4288] sm:$0xff]
    %v2164 = vld [vmem:[%s1 + $0x4290] sm:$0xff]
    %v2165 = vld [vmem:[%s1 + $0x4298] sm:$0xff]
    %v2166 = vld [vmem:[%s1 + $0x42a0] sm:$0xff]
    %v2167 = vld [vmem:[%s1 + $0x42a8] sm:$0xff]
    %v2168 = vld [vmem:[%s1 + $0x42b0] sm:$0xff]
    %v2169 = vld [vmem:[%s1 + $0x42b8] sm:$0xff]
    %v2170 = vld [vmem:[%s1 + $0x42c0] sm:$0xff]
    %v2171 = vld [vmem:[%s1 + $0x42c8] sm:$0xff]
    %v2172 = vld [vmem:[%s1 + $0x42d0] sm:$0xff]
    %v2173 = vld [vmem:[%s1 + $0x42d8] sm:$0xff]
    %v2174 = vld [vmem:[%s1 + $0x42e0] sm:$0xff]
    %v2175 = vld [vmem:[%s1 + $0x42e8] sm:$0xff]
    %v2176 = vld [vmem:[%s1 + $0x42f0] sm:$0xff]
    %v2177 = vld [vmem:[%s1 + $0x42f8] sm:$0xff]
    %v2178 = vld [vmem:[%s1 + $0x4300] sm:$0xff]
    %v2179 = vld [vmem:[%s1 + $0x4308] sm:$0xff]
    %v2180 = vld [vmem:[%s1 + $0x4310] sm:$0xff]
    %v2181 = vld [vmem:[%s1 + $0x4318] sm:$0xff]
    %v2182 = vld [vmem:[%s1 + $0x4320] sm:$0xff]
    %v2183 = vld [vmem:[%s1 + $0x4328] sm:$0xff]
    %v2184 = vld [vmem:[%s1 + $0x4330] sm:$0xff]
    %v2185 = vld [vmem:[%s1 + $0x4338] sm:$0xff]
    %v2186 = vld [vmem:[%s1 + $0x4340] sm:$0xff]
    %v2187 = vld [vmem:[%s1 + $0x4348] sm:$0xff]
    %v2188 = vld [vmem:[%s1 + $0x4350] sm:$0xff]
    %v2189 = vld [vmem:[%s1 + $0x4358] sm:$0xff]
    %v2190 = vld [vmem:[%s1 + $0x4360] sm:$0xff]
    %v2191 = vld [vmem:[%s1 + $0x4368] sm:$0xff]
    %v2192 = vld [vmem:[%s1 + $0x4370] sm:$0xff]
    %v2193 = vld [vmem:[%s1 + $0x4378] sm:$0xff]
    %v2194 = vld [vmem:[%s1 + $0x4380] sm:$0xff]
    %v2195 = vld [vmem:[%s1 + $0x4388] sm:$0xff]
    %v2196 = vld [vmem:[%s1 + $0x4390] sm:$0xff]
    %v2197 = vld [vmem:[%s1 + $0x4398] sm:$0xff]
    %v2198 = vld [vmem:[%s1 + $0x43a0] sm:$0xff]
    %v2199 = vld [vmem:[%s1 + $0x43a8] sm:$0xff]
    %v2200 = vld [vmem:[%s1 + $0x43b0] sm:$0xff]
    %v2201 = vld [vmem:[%s1 + $0x43b8] sm:$0xff]
    %v2202 = vld [vmem:[%s1 + $0x43c0] sm:$0xff]
    %v2203 = vld [vmem:[%s1 + $0x43c8] sm:$0xff]
    %v2204 = vld [vmem:[%s1 + $0x43d0] sm:$0xff]
    %v2205 = vld [vmem:[%s1 + $0x43d8] sm:$0xff]
    %v2206 = vld [vmem:[%s1 + $0x43e0] sm:$0xff]
    %v2207 = vld [vmem:[%s1 + $0x43e8] sm:$0xff]
    %v2208 = vld [vmem:[%s1 + $0x43f0] sm:$0xff]
    %v2209 = vld [vmem:[%s1 + $0x43f8] sm:$0xff]
    %v2210 = vld [vmem:[%s1 + $0x4400] sm:$0xff]
    %v2211 = vld [vmem:[%s1 + $0x4408] sm:$0xff]
    %v2212 = vld [vmem:[%s1 + $0x4410] sm:$0xff]
    %v2213 = vld [vmem:[%s1 + $0x4418] sm:$0xff]
    %v2214 = vld [vmem:[%s1 + $0x4420] sm:$0xff]
    %v2215 = vld [vmem:[%s1 + $0x4428] sm:$0xff]
    %v2216 = vld [vmem:[%s1 + $0x4430] sm:$0xff]
    %v2217 = vld [vmem:[%s1 + $0x4438] sm:$0xff]
    %v2218 = vld [vmem:[%s1 + $0x4440] sm:$0xff]
    %v2219 = vld [vmem:[%s1 + $0x4448] sm:$0xff]
    %v2220 = vld [vmem:[%s1 + $0x4450] sm:$0xff]
    %v2221 = vld [vmem:[%s1 + $0x4458] sm:$0xff]
    %v2222 = vld [vmem:[%s1 + $0x4460] sm:$0xff]
    %v2223 = vld [vmem:[%s1 + $0x4468] sm:$0xff]
    %v2224 = vld [vmem:[%s1 + $0x4470] sm:$0xff]
    %v2225 = vld [vmem:[%s1 + $0x4478] sm:$0xff]
    %v2226 = vld [vmem:[%s1 + $0x4480] sm:$0xff]
    %v2227 = vld [vmem:[%s1 + $0x4488] sm:$0xff]
    %v2228 = vld [vmem:[%s1 + $0x4490] sm:$0xff]
    %v2229 = vld [vmem:[%s1 + $0x4498] sm:$0xff]
    %v2230 = vld [vmem:[%s1 + $0x44a0] sm:$0xff]
    %v2231 = vld [vmem:[%s1 + $0x44a8] sm:$0xff]
    %v2232 = vld [vmem:[%s1 + $0x44b0] sm:$0xff]
    %v2233 = vld [vmem:[%s1 + $0x44b8] sm:$0xff]
    %v2234 = vld [vmem:[%s1 + $0x44c0] sm:$0xff]
    %v2235 = vld [vmem:[%s1 + $0x44c8] sm:$0xff]
    %v2236 = vld [vmem:[%s1 + $0x44d0] sm:$0xff]
    %v2237 = vld [vmem:[%s1 + $0x44d8] sm:$0xff]
    %v2238 = vld [vmem:[%s1 + $0x44e0] sm:$0xff]
    %v2239 = vld [vmem:[%s1 + $0x44e8] sm:$0xff]
    %v2240 = vld [vmem:[%s1 + $0x44f0] sm:$0xff]
    %v2241 = vld [vmem:[%s1 + $0x44f8] sm:$0xff]
    %v2242 = vld [vmem:[%s1 + $0x4500] sm:$0xff]
    %v2243 = vld [vmem:[%s1 + $0x4508] sm:$0xff]
    %v2244 = vld [vmem:[%s1 + $0x4510] sm:$0xff]
    %v2245 = vld [vmem:[%s1 + $0x4518] sm:$0xff]
    %v2246 = vld [vmem:[%s1 + $0x4520] sm:$0xff]
    %v2247 = vld [vmem:[%s1 + $0x4528] sm:$0xff]
    %v2248 = vld [vmem:[%s1 + $0x4530] sm:$0xff]
    %v2249 = vld [vmem:[%s1 + $0x4538] sm:$0xff]
    %v2250 = vld [vmem:[%s1 + $0x4540] sm:$0xff]
    %v2251 = vld [vmem:[%s1 + $0x4548] sm:$0xff]
    %v2252 = vld [vmem:[%s1 + $0x4550] sm:$0xff]
    %v2253 = vld [vmem:[%s1 + $0x4558] sm:$0xff]
    %v2254 = vld [vmem:[%s1 + $0x4560] sm:$0xff]
    %v2255 = vld [vmem:[%s1 + $0x4568] sm:$0xff]
    %v2256 = vld [vmem:[%s1 + $0x4570] sm:$0xff]
    %v2257 = vld [vmem:[%s1 + $0x4578] sm:$0xff]
    %v2258 = vld [vmem:[%s1 + $0x4580] sm:$0xff]
    %v2259 = vld [vmem:[%s1 + $0x4588] sm:$0xff]
    %v2260 = vld [vmem:[%s1 + $0x4590] sm:$0xff]
    %v2261 = vld [vmem:[%s1 + $0x4598] sm:$0xff]
    %v2262 = vld [vmem:[%s1 + $0x45a0] sm:$0xff]
    %v2263 = vld [vmem:[%s1 + $0x45a8] sm:$0xff]
    %v2264 = vld [vmem:[%s1 + $0x45b0] sm:$0xff]
    %v2265 = vld [vmem:[%s1 + $0x45b8] sm:$0xff]
    %v2266 = vld [vmem:[%s1 + $0x45c0] sm:$0xff]
    %v2267 = vld [vmem:[%s1 + $0x45c8] sm:$0xff]
    %v2268 = vld [vmem:[%s1 + $0x45d0] sm:$0xff]
    %v2269 = vld [vmem:[%s1 + $0x45d8] sm:$0xff]
    %v2270 = vld [vmem:[%s1 + $0x45e0] sm:$0xff]
    %v2271 = vld [vmem:[%s1 + $0x45e8] sm:$0xff]
    %v2272 = vld [vmem:[%s1 + $0x45f0] sm:$0xff]
    %v2273 = vld [vmem:[%s1 + $0x45f8] sm:$0xff]
    %v2274 = vld [vmem:[%s1 + $0x4600] sm:$0xff]
    %v2275 = vld [vmem:[%s1 + $0x4608] sm:$0xff]
    %v2276 = vld [vmem:[%s1 + $0x4610] sm:$0xff]
    %v2277 = vld [vmem:[%s1 + $0x4618] sm:$0xff]
    %v2278 = vld [vmem:[%s1 + $0x4620] sm:$0xff]
    %v2279 = vld [vmem:[%s1 + $0x4628] sm:$0xff]
    %v2280 = vld [vmem:[%s1 + $0x4630] sm:$0xff]
    %v2281 = vld [vmem:[%s1 + $0x4638] sm:$0xff]
    %v2282 = vld [vmem:[%s1 + $0x4640] sm:$0xff]
    %v2283 = vld [vmem:[%s1 + $0x4648] sm:$0xff]
    %v2284 = vld [vmem:[%s1 + $0x4650] sm:$0xff]
    %v2285 = vld [vmem:[%s1 + $0x4658] sm:$0xff]
    %v2286 = vld [vmem:[%s1 + $0x4660] sm:$0xff]
    %v2287 = vld [vmem:[%s1 + $0x4668] sm:$0xff]
    %v2288 = vld [vmem:[%s1 + $0x4670] sm:$0xff]
    %v2289 = vld [vmem:[%s1 + $0x4678] sm:$0xff]
    %v2290 = vld [vmem:[%s1 + $0x4680] sm:$0xff]
    %v2291 = vld [vmem:[%s1 + $0x4688] sm:$0xff]
    %v2292 = vld [vmem:[%s1 + $0x4690] sm:$0xff]
    %v2293 = vld [vmem:[%s1 + $0x4698] sm:$0xff]
    %v2294 = vld [vmem:[%s1 + $0x46a0] sm:$0xff]
    %v2295 = vld [vmem:[%s1 + $0x46a8] sm:$0xff]
    %v2296 = vld [vmem:[%s1 + $0x46b0] sm:$0xff]
    %v2297 = vld [vmem:[%s1 + $0x46b8] sm:$0xff]
    %v2298 = vld [vmem:[%s1 + $0x46c0] sm:$0xff]
    %v2299 = vld [vmem:[%s1 + $0x46c8] sm:$0xff]
    %v2300 = vld [vmem:[%s1 + $0x46d0] sm:$0xff]
    %v2301 = vld [vmem:[%s1 + $0x46d8] sm:$0xff]
    %v2302 = vld [vmem:[%s1 + $0x46e0] sm:$0xff]
    %v2303 = vld [vmem:[%s1 + $0x46e8] sm:$0xff]
    %v2304 = vld [vmem:[%s1 + $0x46f0] sm:$0xff]
    %v2305 = vld [vmem:[%s1 + $0x46f8] sm:$0xff]
    %v2306 = vld [vmem:[%s1 + $0x4700] sm:$0xff]
    %v2307 = vld [vmem:[%s1 + $0x4708] sm:$0xff]
    %v2308 = vld [vmem:[%s1 + $0x4710] sm:$0xff]
    %v2309 = vld [vmem:[%s1 + $0x4718] sm:$0xff]
    %v2310 = vld [vmem:[%s1 + $0x4720] sm:$0xff]
    %v2311 = vld [vmem:[%s1 + $0x4728] sm:$0xff]
    %v2312 = vld [vmem:[%s1 + $0x4730] sm:$0xff]
    %v2313 = vld [vmem:[%s1 + $0x4738] sm:$0xff]
    %v2314 = vld [vmem:[%s1 + $0x4740] sm:$0xff]
    %v2315 = vld [vmem:[%s1 + $0x4748] sm:$0xff]
    %v2316 = vld [vmem:[%s1 + $0x4750] sm:$0xff]
    %v2317 = vld [vmem:[%s1 + $0x4758] sm:$0xff]
    %v2318 = vld [vmem:[%s1 + $0x4760] sm:$0xff]
    %v2319 = vld [vmem:[%s1 + $0x4768] sm:$0xff]
    %v2320 = vld [vmem:[%s1 + $0x4770] sm:$0xff]
    %v2321 = vld [vmem:[%s1 + $0x4778] sm:$0xff]
    %v2322 = vld [vmem:[%s1 + $0x4780] sm:$0xff]
    %v2323 = vld [vmem:[%s1 + $0x4788] sm:$0xff]
    %v2324 = vld [vmem:[%s1 + $0x4790] sm:$0xff]
    %v2325 = vld [vmem:[%s1 + $0x4798] sm:$0xff]
    %v2326 = vld [vmem:[%s1 + $0x47a0] sm:$0xff]
    %v2327 = vld [vmem:[%s1 + $0x47a8] sm:$0xff]
    %v2328 = vld [vmem:[%s1 + $0x47b0] sm:$0xff]
    %v2329 = vld [vmem:[%s1 + $0x47b8] sm:$0xff]
    %v2330 = vld [vmem:[%s1 + $0x47c0] sm:$0xff]
    %v2331 = vld [vmem:[%s1 + $0x47c8] sm:$0xff]
    %v2332 = vld [vmem:[%s1 + $0x47d0] sm:$0xff]
    %v2333 = vld [vmem:[%s1 + $0x47d8] sm:$0xff]
    %v2334 = vld [vmem:[%s1 + $0x47e0] sm:$0xff]
    %v2335 = vld [vmem:[%s1 + $0x47e8] sm:$0xff]
    %v2336 = vld [vmem:[%s1 + $0x47f0] sm:$0xff]
    %v2337 = vld [vmem:[%s1 + $0x47f8] sm:$0xff]
    %v2338 = vld [vmem:[%s1 + $0x4800] sm:$0xff]
    %v2339 = vld [vmem:[%s1 + $0x4808] sm:$0xff]
    %v2340 = vld [vmem:[%s1 + $0x4810] sm:$0xff]
    %v2341 = vld [vmem:[%s1 + $0x4818] sm:$0xff]
    %v2342 = vld [vmem:[%s1 + $0x4820] sm:$0xff]
    %v2343 = vld [vmem:[%s1 + $0x4828] sm:$0xff]
    %v2344 = vld [vmem:[%s1 + $0x4830] sm:$0xff]
    %v2345 = vld [vmem:[%s1 + $0x4838] sm:$0xff]
    %v2346 = vld [vmem:[%s1 + $0x4840] sm:$0xff]
    %v2347 = vld [vmem:[%s1 + $0x4848] sm:$0xff]
    %v2348 = vld [vmem:[%s1 + $0x4850] sm:$0xff]
    %v2349 = vld [vmem:[%s1 + $0x4858] sm:$0xff]
    %v2350 = vld [vmem:[%s1 + $0x4860] sm:$0xff]
    %v2351 = vld [vmem:[%s1 + $0x4868] sm:$0xff]
    %v2352 = vld [vmem:[%s1 + $0x4870] sm:$0xff]
    %v2353 = vld [vmem:[%s1 + $0x4878] sm:$0xff]
    %v2354 = vld [vmem:[%s1 + $0x4880] sm:$0xff]
    %v2355 = vld [vmem:[%s1 + $0x4888] sm:$0xff]
    %v2356 = vld [vmem:[%s1 + $0x4890] sm:$0xff]
    %v2357 = vld [vmem:[%s1 + $0x4898] sm:$0xff]
    %v2358 = vld [vmem:[%s1 + $0x48a0] sm:$0xff]
    %v2359 = vld [vmem:[%s1 + $0x48a8] sm:$0xff]
    %v2360 = vld [vmem:[%s1 + $0x48b0] sm:$0xff]
    %v2361 = vld [vmem:[%s1 + $0x48b8] sm:$0xff]
    %v2362 = vld [vmem:[%s1 + $0x48c0] sm:$0xff]
    %v2363 = vld [vmem:[%s1 + $0x48c8] sm:$0xff]
    %v2364 = vld [vmem:[%s1 + $0x48d0] sm:$0xff]
    %v2365 = vld [vmem:[%s1 + $0x48d8] sm:$0xff]
    %v2366 = vld [vmem:[%s1 + $0x48e0] sm:$0xff]
    %v2367 = vld [vmem:[%s1 + $0x48e8] sm:$0xff]
    %v2368 = vld [vmem:[%s1 + $0x48f0] sm:$0xff]
    %v2369 = vld [vmem:[%s1 + $0x48f8] sm:$0xff]
    %v2370 = vld [vmem:[%s1 + $0x4900] sm:$0xff]
    %v2371 = vld [vmem:[%s1 + $0x4908] sm:$0xff]
    %v2372 = vld [vmem:[%s1 + $0x4910] sm:$0xff]
    %v2373 = vld [vmem:[%s1 + $0x4918] sm:$0xff]
    %v2374 = vld [vmem:[%s1 + $0x4920] sm:$0xff]
    %v2375 = vld [vmem:[%s1 + $0x4928] sm:$0xff]
    %v2376 = vld [vmem:[%s1 + $0x4930] sm:$0xff]
    %v2377 = vld [vmem:[%s1 + $0x4938] sm:$0xff]
    %v2378 = vld [vmem:[%s1 + $0x4940] sm:$0xff]
    %v2379 = vld [vmem:[%s1 + $0x4948] sm:$0xff]
    %v2380 = vld [vmem:[%s1 + $0x4950] sm:$0xff]
    %v2381 = vld [vmem:[%s1 + $0x4958] sm:$0xff]
    %v2382 = vld [vmem:[%s1 + $0x4960] sm:$0xff]
    %v2383 = vld [vmem:[%s1 + $0x4968] sm:$0xff]
    %v2384 = vld [vmem:[%s1 + $0x4970] sm:$0xff]
    %v2385 = vld [vmem:[%s1 + $0x4978] sm:$0xff]
    %v2386 = vld [vmem:[%s1 + $0x4980] sm:$0xff]
    %v2387 = vld [vmem:[%s1 + $0x4988] sm:$0xff]
    %v2388 = vld [vmem:[%s1 + $0x4990] sm:$0xff]
    %v2389 = vld [vmem:[%s1 + $0x4998] sm:$0xff]
    %v2390 = vld [vmem:[%s1 + $0x49a0] sm:$0xff]
    %v2391 = vld [vmem:[%s1 + $0x49a8] sm:$0xff]
    %v2392 = vld [vmem:[%s1 + $0x49b0] sm:$0xff]
    %v2393 = vld [vmem:[%s1 + $0x49b8] sm:$0xff]
    %v2394 = vld [vmem:[%s1 + $0x49c0] sm:$0xff]
    %v2395 = vld [vmem:[%s1 + $0x49c8] sm:$0xff]
    %v2396 = vld [vmem:[%s1 + $0x49d0] sm:$0xff]
    %v2397 = vld [vmem:[%s1 + $0x49d8] sm:$0xff]
    %v2398 = vld [vmem:[%s1 + $0x49e0] sm:$0xff]
    %v2399 = vld [vmem:[%s1 + $0x49e8] sm:$0xff]
    %v2400 = vld [vmem:[%s1 + $0x49f0] sm:$0xff]
    %v2401 = vld [vmem:[%s1 + $0x49f8] sm:$0xff]
    %v2402 = vld [vmem:[%s1 + $0x4a00] sm:$0xff]
    %v2403 = vld [vmem:[%s1 + $0x4a08] sm:$0xff]
    %v2404 = vld [vmem:[%s1 + $0x4a10] sm:$0xff]
    %v2405 = vld [vmem:[%s1 + $0x4a18] sm:$0xff]
    %v2406 = vld [vmem:[%s1 + $0x4a20] sm:$0xff]
    %v2407 = vld [vmem:[%s1 + $0x4a28] sm:$0xff]
    %v2408 = vld [vmem:[%s1 + $0x4a30] sm:$0xff]
    %v2409 = vld [vmem:[%s1 + $0x4a38] sm:$0xff]
    %v2410 = vld [vmem:[%s1 + $0x4a40] sm:$0xff]
    %v2411 = vld [vmem:[%s1 + $0x4a48] sm:$0xff]
    %v2412 = vld [vmem:[%s1 + $0x4a50] sm:$0xff]
    %v2413 = vld [vmem:[%s1 + $0x4a58] sm:$0xff]
    %v2414 = vld [vmem:[%s1 + $0x4a60] sm:$0xff]
    %v2415 = vld [vmem:[%s1 + $0x4a68] sm:$0xff]
    %v2416 = vld [vmem:[%s1 + $0x4a70] sm:$0xff]
    %v2417 = vld [vmem:[%s1 + $0x4a78] sm:$0xff]
    %v2418 = vld [vmem:[%s1 + $0x4a80] sm:$0xff]
    %v2419 = vld [vmem:[%s1 + $0x4a88] sm:$0xff]
    %v2420 = vld [vmem:[%s1 + $0x4a90] sm:$0xff]
    %v2421 = vld [vmem:[%s1 + $0x4a98] sm:$0xff]
    %v2422 = vld [vmem:[%s1 + $0x4aa0] sm:$0xff]
    %v2423 = vld [vmem:[%s1 + $0x4aa8] sm:$0xff]
    %v2424 = vld [vmem:[%s1 + $0x4ab0] sm:$0xff]
    %v2425 = vld [vmem:[%s1 + $0x4ab8] sm:$0xff]
    %v2426 = vld [vmem:[%s1 + $0x4ac0] sm:$0xff]
    %v2427 = vld [vmem:[%s1 + $0x4ac8] sm:$0xff]
    %v2428 = vld [vmem:[%s1 + $0x4ad0] sm:$0xff]
    %v2429 = vld [vmem:[%s1 + $0x4ad8] sm:$0xff]
    %v2430 = vld [vmem:[%s1 + $0x4ae0] sm:$0xff]
    %v2431 = vld [vmem:[%s1 + $0x4ae8] sm:$0xff]
    %v2432 = vld [vmem:[%s1 + $0x4af0] sm:$0xff]
    %v2433 = vld [vmem:[%s1 + $0x4af8] sm:$0xff]
    %v2434 = vld [vmem:[%s1 + $0x4b00] sm:$0xff]
    %v2435 = vld [vmem:[%s1 + $0x4b08] sm:$0xff]
    %v2436 = vld [vmem:[%s1 + $0x4b10] sm:$0xff]
    %v2437 = vld [vmem:[%s1 + $0x4b18] sm:$0xff]
    %v2438 = vld [vmem:[%s1 + $0x4b20] sm:$0xff]
    %v2439 = vld [vmem:[%s1 + $0x4b28] sm:$0xff]
    %v2440 = vld [vmem:[%s1 + $0x4b30] sm:$0xff]
    %v2441 = vld [vmem:[%s1 + $0x4b38] sm:$0xff]
    %v2442 = vld [vmem:[%s1 + $0x4b40] sm:$0xff]
    %v2443 = vld [vmem:[%s1 + $0x4b48] sm:$0xff]
    %v2444 = vld [vmem:[%s1 + $0x4b50] sm:$0xff]
    %v2445 = vld [vmem:[%s1 + $0x4b58] sm:$0xff]
    %v2446 = vld [vmem:[%s1 + $0x4b60] sm:$0xff]
    %v2447 = vld [vmem:[%s1 + $0x4b68] sm:$0xff]
    %v2448 = vld [vmem:[%s1 + $0x4b70] sm:$0xff]
    %v2449 = vld [vmem:[%s1 + $0x4b78] sm:$0xff]
    %v2450 = vld [vmem:[%s1 + $0x4b80] sm:$0xff]
    %v2451 = vld [vmem:[%s1 + $0x4b88] sm:$0xff]
    %v2452 = vld [vmem:[%s1 + $0x4b90] sm:$0xff]
    %v2453 = vld [vmem:[%s1 + $0x4b98] sm:$0xff]
    %v2454 = vld [vmem:[%s1 + $0x4ba0] sm:$0xff]
    %v2455 = vld [vmem:[%s1 + $0x4ba8] sm:$0xff]
    %v2456 = vld [vmem:[%s1 + $0x4bb0] sm:$0xff]
    %v2457 = vld [vmem:[%s1 + $0x4bb8] sm:$0xff]
    %v2458 = vld [vmem:[%s1 + $0x4bc0] sm:$0xff]
    %v2459 = vld [vmem:[%s1 + $0x4bc8] sm:$0xff]
    %v2460 = vld [vmem:[%s1 + $0x4bd0] sm:$0xff]
    %v2461 = vld [vmem:[%s1 + $0x4bd8] sm:$0xff]
    %v2462 = vld [vmem:[%s1 + $0x4be0] sm:$0xff]
    %v2463 = vld [vmem:[%s1 + $0x4be8] sm:$0xff]
    %v2464 = vld [vmem:[%s1 + $0x4bf0] sm:$0xff]
    %v2465 = vld [vmem:[%s1 + $0x4bf8] sm:$0xff]
    %v2466 = vld [vmem:[%s1 + $0x4c00] sm:$0xff]
    %v2467 = vld [vmem:[%s1 + $0x4c08] sm:$0xff]
    %v2468 = vld [vmem:[%s1 + $0x4c10] sm:$0xff]
    %v2469 = vld [vmem:[%s1 + $0x4c18] sm:$0xff]
    %v2470 = vld [vmem:[%s1 + $0x4c20] sm:$0xff]
    %v2471 = vld [vmem:[%s1 + $0x4c28] sm:$0xff]
    %v2472 = vld [vmem:[%s1 + $0x4c30] sm:$0xff]
    %v2473 = vld [vmem:[%s1 + $0x4c38] sm:$0xff]
    %v2474 = vld [vmem:[%s1 + $0x4c40] sm:$0xff]
    %v2475 = vld [vmem:[%s1 + $0x4c48] sm:$0xff]
    %v2476 = vld [vmem:[%s1 + $0x4c50] sm:$0xff]
    %v2477 = vld [vmem:[%s1 + $0x4c58] sm:$0xff]
    %v2478 = vld [vmem:[%s1 + $0x4c60] sm:$0xff]
    %v2479 = vld [vmem:[%s1 + $0x4c68] sm:$0xff]
    %v2480 = vld [vmem:[%s1 + $0x4c70] sm:$0xff]
    %v2481 = vld [vmem:[%s1 + $0x4c78] sm:$0xff]
    %v2482 = vld [vmem:[%s1 + $0x4c80] sm:$0xff]
    %v2483 = vld [vmem:[%s1 + $0x4c88] sm:$0xff]
    %v2484 = vld [vmem:[%s1 + $0x4c90] sm:$0xff]
    %v2485 = vld [vmem:[%s1 + $0x4c98] sm:$0xff]
    %v2486 = vld [vmem:[%s1 + $0x4ca0] sm:$0xff]
    %v2487 = vld [vmem:[%s1 + $0x4ca8] sm:$0xff]
    %v2488 = vld [vmem:[%s1 + $0x4cb0] sm:$0xff]
    %v2489 = vld [vmem:[%s1 + $0x4cb8] sm:$0xff]
    %v2490 = vld [vmem:[%s1 + $0x4cc0] sm:$0xff]
    %v2491 = vld [vmem:[%s1 + $0x4cc8] sm:$0xff]
    %v2492 = vld [vmem:[%s1 + $0x4cd0] sm:$0xff]
    %v2493 = vld [vmem:[%s1 + $0x4cd8] sm:$0xff]
    %v2494 = vld [vmem:[%s1 + $0x4ce0] sm:$0xff]
    %v2495 = vld [vmem:[%s1 + $0x4ce8] sm:$0xff]
    %v2496 = vld [vmem:[%s1 + $0x4cf0] sm:$0xff]
    %v2497 = vld [vmem:[%s1 + $0x4cf8] sm:$0xff]
    %v2498 = vld [vmem:[%s1 + $0x4d00] sm:$0xff]
    %v2499 = vld [vmem:[%s1 + $0x4d08] sm:$0xff]
    %v2500 = vld [vmem:[%s1 + $0x4d10] sm:$0xff]
    %v2501 = vld [vmem:[%s1 + $0x4d18] sm:$0xff]
    %v2502 = vld [vmem:[%s1 + $0x4d20] sm:$0xff]
    %v2503 = vld [vmem:[%s1 + $0x4d28] sm:$0xff]
    %v2504 = vld [vmem:[%s1 + $0x4d30] sm:$0xff]
    %v2505 = vld [vmem:[%s1 + $0x4d38] sm:$0xff]
    %v2506 = vld [vmem:[%s1 + $0x4d40] sm:$0xff]
    %v2507 = vld [vmem:[%s1 + $0x4d48] sm:$0xff]
    %v2508 = vld [vmem:[%s1 + $0x4d50] sm:$0xff]
    %v2509 = vld [vmem:[%s1 + $0x4d58] sm:$0xff]
    %v2510 = vld [vmem:[%s1 + $0x4d60] sm:$0xff]
    %v2511 = vld [vmem:[%s1 + $0x4d68] sm:$0xff]
    %v2512 = vld [vmem:[%s1 + $0x4d70] sm:$0xff]
    %v2513 = vld [vmem:[%s1 + $0x4d78] sm:$0xff]
    %v2514 = vld [vmem:[%s1 + $0x4d80] sm:$0xff]
    %v2515 = vld [vmem:[%s1 + $0x4d88] sm:$0xff]
    %v2516 = vld [vmem:[%s1 + $0x4d90] sm:$0xff]
    %v2517 = vld [vmem:[%s1 + $0x4d98] sm:$0xff]
    %v2518 = vld [vmem:[%s1 + $0x4da0] sm:$0xff]
    %v2519 = vld [vmem:[%s1 + $0x4da8] sm:$0xff]
    %v2520 = vld [vmem:[%s1 + $0x4db0] sm:$0xff]
    %v2521 = vld [vmem:[%s1 + $0x4db8] sm:$0xff]
    %v2522 = vld [vmem:[%s1 + $0x4dc0] sm:$0xff]
    %v2523 = vld [vmem:[%s1 + $0x4dc8] sm:$0xff]
    %v2524 = vld [vmem:[%s1 + $0x4dd0] sm:$0xff]
    %v2525 = vld [vmem:[%s1 + $0x4dd8] sm:$0xff]
    %v2526 = vld [vmem:[%s1 + $0x4de0] sm:$0xff]
    %v2527 = vld [vmem:[%s1 + $0x4de8] sm:$0xff]
    %v2528 = vld [vmem:[%s1 + $0x4df0] sm:$0xff]
    %v2529 = vld [vmem:[%s1 + $0x4df8] sm:$0xff]
    %v2530 = vld [vmem:[%s1 + $0x4e00] sm:$0xff]
    %v2531 = vld [vmem:[%s1 + $0x4e08] sm:$0xff]
    %v2532 = vld [vmem:[%s1 + $0x4e10] sm:$0xff]
    %v2533 = vld [vmem:[%s1 + $0x4e18] sm:$0xff]
    %v2534 = vld [vmem:[%s1 + $0x4e20] sm:$0xff]
    %v2535 = vld [vmem:[%s1 + $0x4e28] sm:$0xff]
    %v2536 = vld [vmem:[%s1 + $0x4e30] sm:$0xff]
    %v2537 = vld [vmem:[%s1 + $0x4e38] sm:$0xff]
    %v2538 = vld [vmem:[%s1 + $0x4e40] sm:$0xff]
    %v2539 = vld [vmem:[%s1 + $0x4e48] sm:$0xff]
    %v2540 = vld [vmem:[%s1 + $0x4e50] sm:$0xff]
    %v2541 = vld [vmem:[%s1 + $0x4e58] sm:$0xff]
    %v2542 = vld [vmem:[%s1 + $0x4e60] sm:$0xff]
    %v2543 = vld [vmem:[%s1 + $0x4e68] sm:$0xff]
    %v2544 = vld [vmem:[%s1 + $0x4e70] sm:$0xff]
    %v2545 = vld [vmem:[%s1 + $0x4e78] sm:$0xff]
    %v2546 = vld [vmem:[%s1 + $0x4e80] sm:$0xff]
    %v2547 = vld [vmem:[%s1 + $0x4e88] sm:$0xff]
    %v2548 = vld [vmem:[%s1 + $0x4e90] sm:$0xff]
    %v2549 = vld [vmem:[%s1 + $0x4e98] sm:$0xff]
    %v2550 = vld [vmem:[%s1 + $0x4ea0] sm:$0xff]
    %v2551 = vld [vmem:[%s1 + $0x4ea8] sm:$0xff]
    %v2552 = vld [vmem:[%s1 + $0x4eb0] sm:$0xff]
    %v2553 = vld [vmem:[%s1 + $0x4eb8] sm:$0xff]
    %v2554 = vld [vmem:[%s1 + $0x4ec0] sm:$0xff]
    %v2555 = vld [vmem:[%s1 + $0x4ec8] sm:$0xff]
    %v2556 = vld [vmem:[%s1 + $0x4ed0] sm:$0xff]
    %v2557 = vld [vmem:[%s1 + $0x4ed8] sm:$0xff]
    %v2558 = vld [vmem:[%s1 + $0x4ee0] sm:$0xff]
    %v2559 = vld [vmem:[%s1 + $0x4ee8] sm:$0xff]
    %v2560 = vld [vmem:[%s1 + $0x4ef0] sm:$0xff]
    %v2561 = vld [vmem:[%s1 + $0x4ef8] sm:$0xff]
    %v2562 = vld [vmem:[%s1 + $0x4f00] sm:$0xff]
    %v2563 = vld [vmem:[%s1 + $0x4f08] sm:$0xff]
    %v2564 = vld [vmem:[%s1 + $0x4f10] sm:$0xff]
    %v2565 = vld [vmem:[%s1 + $0x4f18] sm:$0xff]
    %v2566 = vld [vmem:[%s1 + $0x4f20] sm:$0xff]
    %v2567 = vld [vmem:[%s1 + $0x4f28] sm:$0xff]
    %v2568 = vld [vmem:[%s1 + $0x4f30] sm:$0xff]
    %v2569 = vld [vmem:[%s1 + $0x4f38] sm:$0xff]
    %v2570 = vld [vmem:[%s1 + $0x4f40] sm:$0xff]
    %v2571 = vld [vmem:[%s1 + $0x4f48] sm:$0xff]
    %v2572 = vld [vmem:[%s1 + $0x4f50] sm:$0xff]
    %v2573 = vld [vmem:[%s1 + $0x4f58] sm:$0xff]
    %v2574 = vld [vmem:[%s1 + $0x4f60] sm:$0xff]
    %v2575 = vld [vmem:[%s1 + $0x4f68] sm:$0xff]
    %v2576 = vld [vmem:[%s1 + $0x4f70] sm:$0xff]
    %v2577 = vld [vmem:[%s1 + $0x4f78] sm:$0xff]
    %v2578 = vld [vmem:[%s1 + $0x4f80] sm:$0xff]
    %v2579 = vld [vmem:[%s1 + $0x4f88] sm:$0xff]
    %v2580 = vld [vmem:[%s1 + $0x4f90] sm:$0xff]
    %v2581 = vld [vmem:[%s1 + $0x4f98] sm:$0xff]
    %v2582 = vld [vmem:[%s1 + $0x4fa0] sm:$0xff]
    %v2583 = vld [vmem:[%s1 + $0x4fa8] sm:$0xff]
    %v2584 = vld [vmem:[%s1 + $0x4fb0] sm:$0xff]
    %v2585 = vld [vmem:[%s1 + $0x4fb8] sm:$0xff]
    %v2586 = vld [vmem:[%s1 + $0x4fc0] sm:$0xff]
    %v2587 = vld [vmem:[%s1 + $0x4fc8] sm:$0xff]
    %v2588 = vld [vmem:[%s1 + $0x4fd0] sm:$0xff]
    %v2589 = vld [vmem:[%s1 + $0x4fd8] sm:$0xff]
    %v2590 = vld [vmem:[%s1 + $0x4fe0] sm:$0xff]
    %v2591 = vld [vmem:[%s1 + $0x4fe8] sm:$0xff]
    %v2592 = vld [vmem:[%s1 + $0x4ff0] sm:$0xff]
    %v2593 = vld [vmem:[%s1 + $0x4ff8] sm:$0xff]
    %v2594 = vld [vmem:[%s1 + $0x5000] sm:$0xff]
    %v2595 = vld [vmem:[%s1 + $0x5008] sm:$0xff]
    %v2596 = vld [vmem:[%s1 + $0x5010] sm:$0xff]
    %v2597 = vld [vmem:[%s1 + $0x5018] sm:$0xff]
    %v2598 = vld [vmem:[%s1 + $0x5020] sm:$0xff]
    %v2599 = vld [vmem:[%s1 + $0x5028] sm:$0xff]
    %v2600 = vld [vmem:[%s1 + $0x5030] sm:$0xff]
    %v2601 = vld [vmem:[%s1 + $0x5038] sm:$0xff]
    %v2602 = vld [vmem:[%s1 + $0x5040] sm:$0xff]
    %v2603 = vld [vmem:[%s1 + $0x5048] sm:$0xff]
    %v2604 = vld [vmem:[%s1 + $0x5050] sm:$0xff]
    %v2605 = vld [vmem:[%s1 + $0x5058] sm:$0xff]
    %v2606 = vld [vmem:[%s1 + $0x5060] sm:$0xff]
    %v2607 = vld [vmem:[%s1 + $0x5068] sm:$0xff]
    %v2608 = vld [vmem:[%s1 + $0x5070] sm:$0xff]
    %v2609 = vld [vmem:[%s1 + $0x5078] sm:$0xff]
    %v2610 = vld [vmem:[%s1 + $0x5080] sm:$0xff]
    %v2611 = vld [vmem:[%s1 + $0x5088] sm:$0xff]
    %v2612 = vld [vmem:[%s1 + $0x5090] sm:$0xff]
    %v2613 = vld [vmem:[%s1 + $0x5098] sm:$0xff]
    %v2614 = vld [vmem:[%s1 + $0x50a0] sm:$0xff]
    %v2615 = vld [vmem:[%s1 + $0x50a8] sm:$0xff]
    %v2616 = vld [vmem:[%s1 + $0x50b0] sm:$0xff]
    %v2617 = vld [vmem:[%s1 + $0x50b8] sm:$0xff]
    %v2618 = vld [vmem:[%s1 + $0x50c0] sm:$0xff]
    %v2619 = vld [vmem:[%s1 + $0x50c8] sm:$0xff]
    %v2620 = vld [vmem:[%s1 + $0x50d0] sm:$0xff]
    %v2621 = vld [vmem:[%s1 + $0x50d8] sm:$0xff]
    %v2622 = vld [vmem:[%s1 + $0x50e0] sm:$0xff]
    %v2623 = vld [vmem:[%s1 + $0x50e8] sm:$0xff]
    %v2624 = vld [vmem:[%s1 + $0x50f0] sm:$0xff]
    %v2625 = vld [vmem:[%s1 + $0x50f8] sm:$0xff]
    %v2626 = vld [vmem:[%s1 + $0x5100] sm:$0xff]
    %v2627 = vld [vmem:[%s1 + $0x5108] sm:$0xff]
    %v2628 = vld [vmem:[%s1 + $0x5110] sm:$0xff]
    %v2629 = vld [vmem:[%s1 + $0x5118] sm:$0xff]
    %v2630 = vld [vmem:[%s1 + $0x5120] sm:$0xff]
    %v2631 = vld [vmem:[%s1 + $0x5128] sm:$0xff]
    %v2632 = vld [vmem:[%s1 + $0x5130] sm:$0xff]
    %v2633 = vld [vmem:[%s1 + $0x5138] sm:$0xff]
    %v2634 = vld [vmem:[%s1 + $0x5140] sm:$0xff]
    %v2635 = vld [vmem:[%s1 + $0x5148] sm:$0xff]
    %v2636 = vld [vmem:[%s1 + $0x5150] sm:$0xff]
    %v2637 = vld [vmem:[%s1 + $0x5158] sm:$0xff]
    %v2638 = vld [vmem:[%s1 + $0x5160] sm:$0xff]
    %v2639 = vld [vmem:[%s1 + $0x5168] sm:$0xff]
    %v2640 = vld [vmem:[%s1 + $0x5170] sm:$0xff]
    %v2641 = vld [vmem:[%s1 + $0x5178] sm:$0xff]
    %v2642 = vld [vmem:[%s1 + $0x5180] sm:$0xff]
    %v2643 = vld [vmem:[%s1 + $0x5188] sm:$0xff]
    %v2644 = vld [vmem:[%s1 + $0x5190] sm:$0xff]
    %v2645 = vld [vmem:[%s1 + $0x5198] sm:$0xff]
    %v2646 = vld [vmem:[%s1 + $0x51a0] sm:$0xff]
    %v2647 = vld [vmem:[%s1 + $0x51a8] sm:$0xff]
    %v2648 = vld [vmem:[%s1 + $0x51b0] sm:$0xff]
    %v2649 = vld [vmem:[%s1 + $0x51b8] sm:$0xff]
    %v2650 = vld [vmem:[%s1 + $0x51c0] sm:$0xff]
    %v2651 = vld [vmem:[%s1 + $0x51c8] sm:$0xff]
    %v2652 = vld [vmem:[%s1 + $0x51d0] sm:$0xff]
    %v2653 = vld [vmem:[%s1 + $0x51d8] sm:$0xff]
    %v2654 = vld [vmem:[%s1 + $0x51e0] sm:$0xff]
    %v2655 = vld [vmem:[%s1 + $0x51e8] sm:$0xff]
    %v2656 = vld [vmem:[%s1 + $0x51f0] sm:$0xff]
    %v2657 = vld [vmem:[%s1 + $0x51f8] sm:$0xff]
    %v2658 = vld [vmem:[%s1 + $0x5200] sm:$0xff]
    %v2659 = vld [vmem:[%s1 + $0x5208] sm:$0xff]
    %v2660 = vld [vmem:[%s1 + $0x5210] sm:$0xff]
    %v2661 = vld [vmem:[%s1 + $0x5218] sm:$0xff]
    %v2662 = vld [vmem:[%s1 + $0x5220] sm:$0xff]
    %v2663 = vld [vmem:[%s1 + $0x5228] sm:$0xff]
    %v2664 = vld [vmem:[%s1 + $0x5230] sm:$0xff]
    %v2665 = vld [vmem:[%s1 + $0x5238] sm:$0xff]
    %v2666 = vld [vmem:[%s1 + $0x5240] sm:$0xff]
    %v2667 = vld [vmem:[%s1 + $0x5248] sm:$0xff]
    %v2668 = vld [vmem:[%s1 + $0x5250] sm:$0xff]
    %v2669 = vld [vmem:[%s1 + $0x5258] sm:$0xff]
    %v2670 = vld [vmem:[%s1 + $0x5260] sm:$0xff]
    %v2671 = vld [vmem:[%s1 + $0x5268] sm:$0xff]
    %v2672 = vld [vmem:[%s1 + $0x5270] sm:$0xff]
    %v2673 = vld [vmem:[%s1 + $0x5278] sm:$0xff]
    %v2674 = vld [vmem:[%s1 + $0x5280] sm:$0xff]
    %v2675 = vld [vmem:[%s1 + $0x5288] sm:$0xff]
    %v2676 = vld [vmem:[%s1 + $0x5290] sm:$0xff]
    %v2677 = vld [vmem:[%s1 + $0x5298] sm:$0xff]
    %v2678 = vld [vmem:[%s1 + $0x52a0] sm:$0xff]
    %v2679 = vld [vmem:[%s1 + $0x52a8] sm:$0xff]
    %v2680 = vld [vmem:[%s1 + $0x52b0] sm:$0xff]
    %v2681 = vld [vmem:[%s1 + $0x52b8] sm:$0xff]
    %v2682 = vld [vmem:[%s1 + $0x52c0] sm:$0xff]
    %v2683 = vld [vmem:[%s1 + $0x52c8] sm:$0xff]
    %v2684 = vld [vmem:[%s1 + $0x52d0] sm:$0xff]
    %v2685 = vld [vmem:[%s1 + $0x52d8] sm:$0xff]
    %v2686 = vld [vmem:[%s1 + $0x52e0] sm:$0xff]
    %v2687 = vld [vmem:[%s1 + $0x52e8] sm:$0xff]
    %v2688 = vld [vmem:[%s1 + $0x52f0] sm:$0xff]
    %v2689 = vld [vmem:[%s1 + $0x52f8] sm:$0xff]
    %v2690 = vld [vmem:[%s1 + $0x5300] sm:$0xff]
    %v2691 = vld [vmem:[%s1 + $0x5308] sm:$0xff]
    %v2692 = vld [vmem:[%s1 + $0x5310] sm:$0xff]
    %v2693 = vld [vmem:[%s1 + $0x5318] sm:$0xff]
    %v2694 = vld [vmem:[%s1 + $0x5320] sm:$0xff]
    %v2695 = vld [vmem:[%s1 + $0x5328] sm:$0xff]
    %v2696 = vld [vmem:[%s1 + $0x5330] sm:$0xff]
    %v2697 = vld [vmem:[%s1 + $0x5338] sm:$0xff]
    %v2698 = vld [vmem:[%s1 + $0x5340] sm:$0xff]
    %v2699 = vld [vmem:[%s1 + $0x5348] sm:$0xff]
    %v2700 = vld [vmem:[%s1 + $0x5350] sm:$0xff]
    %v2701 = vld [vmem:[%s1 + $0x5358] sm:$0xff]
    %v2702 = vld [vmem:[%s1 + $0x5360] sm:$0xff]
    %v2703 = vld [vmem:[%s1 + $0x5368] sm:$0xff]
    %v2704 = vld [vmem:[%s1 + $0x5370] sm:$0xff]
    %v2705 = vld [vmem:[%s1 + $0x5378] sm:$0xff]
    %v2706 = vld [vmem:[%s1 + $0x5380] sm:$0xff]
    %v2707 = vld [vmem:[%s1 + $0x5388] sm:$0xff]
    %v2708 = vld [vmem:[%s1 + $0x5390] sm:$0xff]
    %v2709 = vld [vmem:[%s1 + $0x5398] sm:$0xff]
    %v2710 = vld [vmem:[%s1 + $0x53a0] sm:$0xff]
    %v2711 = vld [vmem:[%s1 + $0x53a8] sm:$0xff]
    %v2712 = vld [vmem:[%s1 + $0x53b0] sm:$0xff]
    %v2713 = vld [vmem:[%s1 + $0x53b8] sm:$0xff]
    %v2714 = vld [vmem:[%s1 + $0x53c0] sm:$0xff]
    %v2715 = vld [vmem:[%s1 + $0x53c8] sm:$0xff]
    %v2716 = vld [vmem:[%s1 + $0x53d0] sm:$0xff]
    %v2717 = vld [vmem:[%s1 + $0x53d8] sm:$0xff]
    %v2718 = vld [vmem:[%s1 + $0x53e0] sm:$0xff]
    %v2719 = vld [vmem:[%s1 + $0x53e8] sm:$0xff]
    %v2720 = vld [vmem:[%s1 + $0x53f0] sm:$0xff]
    %v2721 = vld [vmem:[%s1 + $0x53f8] sm:$0xff]
    %v2722 = vld [vmem:[%s1 + $0x5400] sm:$0xff]
    %v2723 = vld [vmem:[%s1 + $0x5408] sm:$0xff]
    %v2724 = vld [vmem:[%s1 + $0x5410] sm:$0xff]
    %v2725 = vld [vmem:[%s1 + $0x5418] sm:$0xff]
    %v2726 = vld [vmem:[%s1 + $0x5420] sm:$0xff]
    %v2727 = vld [vmem:[%s1 + $0x5428] sm:$0xff]
    %v2728 = vld [vmem:[%s1 + $0x5430] sm:$0xff]
    %v2729 = vld [vmem:[%s1 + $0x5438] sm:$0xff]
    %v2730 = vld [vmem:[%s1 + $0x5440] sm:$0xff]
    %v2731 = vld [vmem:[%s1 + $0x5448] sm:$0xff]
    %v2732 = vld [vmem:[%s1 + $0x5450] sm:$0xff]
    %v2733 = vld [vmem:[%s1 + $0x5458] sm:$0xff]
    %v2734 = vld [vmem:[%s1 + $0x5460] sm:$0xff]
    %v2735 = vld [vmem:[%s1 + $0x5468] sm:$0xff]
    %v2736 = vld [vmem:[%s1 + $0x5470] sm:$0xff]
    %v2737 = vld [vmem:[%s1 + $0x5478] sm:$0xff]
    %v2738 = vld [vmem:[%s1 + $0x5480] sm:$0xff]
    %v2739 = vld [vmem:[%s1 + $0x5488] sm:$0xff]
    %v2740 = vld [vmem:[%s1 + $0x5490] sm:$0xff]
    %v2741 = vld [vmem:[%s1 + $0x5498] sm:$0xff]
    %v2742 = vld [vmem:[%s1 + $0x54a0] sm:$0xff]
    %v2743 = vld [vmem:[%s1 + $0x54a8] sm:$0xff]
    %v2744 = vld [vmem:[%s1 + $0x54b0] sm:$0xff]
    %v2745 = vld [vmem:[%s1 + $0x54b8] sm:$0xff]
    %v2746 = vld [vmem:[%s1 + $0x54c0] sm:$0xff]
    %v2747 = vld [vmem:[%s1 + $0x54c8] sm:$0xff]
    %v2748 = vld [vmem:[%s1 + $0x54d0] sm:$0xff]
    %v2749 = vld [vmem:[%s1 + $0x54d8] sm:$0xff]
    %v2750 = vld [vmem:[%s1 + $0x54e0] sm:$0xff]
    %v2751 = vld [vmem:[%s1 + $0x54e8] sm:$0xff]
    %v2752 = vld [vmem:[%s1 + $0x54f0] sm:$0xff]
    %v2753 = vld [vmem:[%s1 + $0x54f8] sm:$0xff]
    %v2754 = vld [vmem:[%s1 + $0x5500] sm:$0xff]
    %v2755 = vld [vmem:[%s1 + $0x5508] sm:$0xff]
    %v2756 = vld [vmem:[%s1 + $0x5510] sm:$0xff]
    %v2757 = vld [vmem:[%s1 + $0x5518] sm:$0xff]
    %v2758 = vld [vmem:[%s1 + $0x5520] sm:$0xff]
    %v2759 = vld [vmem:[%s1 + $0x5528] sm:$0xff]
    %v2760 = vld [vmem:[%s1 + $0x5530] sm:$0xff]
    %v2761 = vld [vmem:[%s1 + $0x5538] sm:$0xff]
    %v2762 = vld [vmem:[%s1 + $0x5540] sm:$0xff]
    %v2763 = vld [vmem:[%s1 + $0x5548] sm:$0xff]
    %v2764 = vld [vmem:[%s1 + $0x5550] sm:$0xff]
    %v2765 = vld [vmem:[%s1 + $0x5558] sm:$0xff]
    %v2766 = vld [vmem:[%s1 + $0x5560] sm:$0xff]
    %v2767 = vld [vmem:[%s1 + $0x5568] sm:$0xff]
    %v2768 = vld [vmem:[%s1 + $0x5570] sm:$0xff]
    %v2769 = vld [vmem:[%s1 + $0x5578] sm:$0xff]
    %v2770 = vld [vmem:[%s1 + $0x5580] sm:$0xff]
    %v2771 = vld [vmem:[%s1 + $0x5588] sm:$0xff]
    %v2772 = vld [vmem:[%s1 + $0x5590] sm:$0xff]
    %v2773 = vld [vmem:[%s1 + $0x5598] sm:$0xff]
    %v2774 = vld [vmem:[%s1 + $0x55a0] sm:$0xff]
    %v2775 = vld [vmem:[%s1 + $0x55a8] sm:$0xff]
    %v2776 = vld [vmem:[%s1 + $0x55b0] sm:$0xff]
    %v2777 = vld [vmem:[%s1 + $0x55b8] sm:$0xff]
    %v2778 = vld [vmem:[%s1 + $0x55c0] sm:$0xff]
    %v2779 = vld [vmem:[%s1 + $0x55c8] sm:$0xff]
    %v2780 = vld [vmem:[%s1 + $0x55d0] sm:$0xff]
    %v2781 = vld [vmem:[%s1 + $0x55d8] sm:$0xff]
    %v2782 = vld [vmem:[%s1 + $0x55e0] sm:$0xff]
    %v2783 = vld [vmem:[%s1 + $0x55e8] sm:$0xff]
    %v2784 = vld [vmem:[%s1 + $0x55f0] sm:$0xff]
    %v2785 = vld [vmem:[%s1 + $0x55f8] sm:$0xff]
    %v2786 = vld [vmem:[%s1 + $0x5600] sm:$0xff]
    %v2787 = vld [vmem:[%s1 + $0x5608] sm:$0xff]
    %v2788 = vld [vmem:[%s1 + $0x5610] sm:$0xff]
    %v2789 = vld [vmem:[%s1 + $0x5618] sm:$0xff]
    %v2790 = vld [vmem:[%s1 + $0x5620] sm:$0xff]
    %v2791 = vld [vmem:[%s1 + $0x5628] sm:$0xff]
    %v2792 = vld [vmem:[%s1 + $0x5630] sm:$0xff]
    %v2793 = vld [vmem:[%s1 + $0x5638] sm:$0xff]
    %v2794 = vld [vmem:[%s1 + $0x5640] sm:$0xff]
    %v2795 = vld [vmem:[%s1 + $0x5648] sm:$0xff]
    %v2796 = vld [vmem:[%s1 + $0x5650] sm:$0xff]
    %v2797 = vld [vmem:[%s1 + $0x5658] sm:$0xff]
    %v2798 = vld [vmem:[%s1 + $0x5660] sm:$0xff]
    %v2799 = vld [vmem:[%s1 + $0x5668] sm:$0xff]
    %v2800 = vld [vmem:[%s1 + $0x5670] sm:$0xff]
    %v2801 = vld [vmem:[%s1 + $0x5678] sm:$0xff]
    %v2802 = vld [vmem:[%s1 + $0x5680] sm:$0xff]
    %v2803 = vld [vmem:[%s1 + $0x5688] sm:$0xff]
    %v2804 = vld [vmem:[%s1 + $0x5690] sm:$0xff]
    %v2805 = vld [vmem:[%s1 + $0x5698] sm:$0xff]
    %v2806 = vld [vmem:[%s1 + $0x56a0] sm:$0xff]
    %v2807 = vld [vmem:[%s1 + $0x56a8] sm:$0xff]
    %v2808 = vld [vmem:[%s1 + $0x56b0] sm:$0xff]
    %v2809 = vld [vmem:[%s1 + $0x56b8] sm:$0xff]
    %v2810 = vld [vmem:[%s1 + $0x56c0] sm:$0xff]
    %v2811 = vld [vmem:[%s1 + $0x56c8] sm:$0xff]
    %v2812 = vld [vmem:[%s1 + $0x56d0] sm:$0xff]
    %v2813 = vld [vmem:[%s1 + $0x56d8] sm:$0xff]
    %v2814 = vld [vmem:[%s1 + $0x56e0] sm:$0xff]
    %v2815 = vld [vmem:[%s1 + $0x56e8] sm:$0xff]
    %v2816 = vld [vmem:[%s1 + $0x56f0] sm:$0xff]
    %v2817 = vld [vmem:[%s1 + $0x56f8] sm:$0xff]
    %v2818 = vld [vmem:[%s1 + $0x5700] sm:$0xff]
    %v2819 = vld [vmem:[%s1 + $0x5708] sm:$0xff]
    %v2820 = vld [vmem:[%s1 + $0x5710] sm:$0xff]
    %v2821 = vld [vmem:[%s1 + $0x5718] sm:$0xff]
    %v2822 = vld [vmem:[%s1 + $0x5720] sm:$0xff]
    %v2823 = vld [vmem:[%s1 + $0x5728] sm:$0xff]
    %v2824 = vld [vmem:[%s1 + $0x5730] sm:$0xff]
    %v2825 = vld [vmem:[%s1 + $0x5738] sm:$0xff]
    %v2826 = vld [vmem:[%s1 + $0x5740] sm:$0xff]
    %v2827 = vld [vmem:[%s1 + $0x5748] sm:$0xff]
    %v2828 = vld [vmem:[%s1 + $0x5750] sm:$0xff]
    %v2829 = vld [vmem:[%s1 + $0x5758] sm:$0xff]
    %v2830 = vld [vmem:[%s1 + $0x5760] sm:$0xff]
    %v2831 = vld [vmem:[%s1 + $0x5768] sm:$0xff]
    %v2832 = vld [vmem:[%s1 + $0x5770] sm:$0xff]
    %v2833 = vld [vmem:[%s1 + $0x5778] sm:$0xff]
    %v2834 = vld [vmem:[%s1 + $0x5780] sm:$0xff]
    %v2835 = vld [vmem:[%s1 + $0x5788] sm:$0xff]
    %v2836 = vld [vmem:[%s1 + $0x5790] sm:$0xff]
    %v2837 = vld [vmem:[%s1 + $0x5798] sm:$0xff]
    %v2838 = vld [vmem:[%s1 + $0x57a0] sm:$0xff]
    %v2839 = vld [vmem:[%s1 + $0x57a8] sm:$0xff]
    %v2840 = vld [vmem:[%s1 + $0x57b0] sm:$0xff]
    %v2841 = vld [vmem:[%s1 + $0x57b8] sm:$0xff]
    %v2842 = vld [vmem:[%s1 + $0x57c0] sm:$0xff]
    %v2843 = vld [vmem:[%s1 + $0x57c8] sm:$0xff]
    %v2844 = vld [vmem:[%s1 + $0x57d0] sm:$0xff]
    %v2845 = vld [vmem:[%s1 + $0x57d8] sm:$0xff]
    %v2846 = vld [vmem:[%s1 + $0x57e0] sm:$0xff]
    %v2847 = vld [vmem:[%s1 + $0x57e8] sm:$0xff]
    %v2848 = vld [vmem:[%s1 + $0x57f0] sm:$0xff]
    %v2849 = vld [vmem:[%s1 + $0x57f8] sm:$0xff]
    %v2850 = vld [vmem:[%s1 + $0x5800] sm:$0xff]
    %v2851 = vld [vmem:[%s1 + $0x5808] sm:$0xff]
    %v2852 = vld [vmem:[%s1 + $0x5810] sm:$0xff]
    %v2853 = vld [vmem:[%s1 + $0x5818] sm:$0xff]
    %v2854 = vld [vmem:[%s1 + $0x5820] sm:$0xff]
    %v2855 = vld [vmem:[%s1 + $0x5828] sm:$0xff]
    %v2856 = vld [vmem:[%s1 + $0x5830] sm:$0xff]
    %v2857 = vld [vmem:[%s1 + $0x5838] sm:$0xff]
    %v2858 = vld [vmem:[%s1 + $0x5840] sm:$0xff]
    %v2859 = vld [vmem:[%s1 + $0x5848] sm:$0xff]
    %v2860 = vld [vmem:[%s1 + $0x5850] sm:$0xff]
    %v2861 = vld [vmem:[%s1 + $0x5858] sm:$0xff]
    %v2862 = vld [vmem:[%s1 + $0x5860] sm:$0xff]
    %v2863 = vld [vmem:[%s1 + $0x5868] sm:$0xff]
    %v2864 = vld [vmem:[%s1 + $0x5870] sm:$0xff]
    %v2865 = vld [vmem:[%s1 + $0x5878] sm:$0xff]
    %v2866 = vld [vmem:[%s1 + $0x5880] sm:$0xff]
    %v2867 = vld [vmem:[%s1 + $0x5888] sm:$0xff]
    %v2868 = vld [vmem:[%s1 + $0x5890] sm:$0xff]
    %v2869 = vld [vmem:[%s1 + $0x5898] sm:$0xff]
    %v2870 = vld [vmem:[%s1 + $0x58a0] sm:$0xff]
    %v2871 = vld [vmem:[%s1 + $0x58a8] sm:$0xff]
    %v2872 = vld [vmem:[%s1 + $0x58b0] sm:$0xff]
    %v2873 = vld [vmem:[%s1 + $0x58b8] sm:$0xff]
    %v2874 = vld [vmem:[%s1 + $0x58c0] sm:$0xff]
    %v2875 = vld [vmem:[%s1 + $0x58c8] sm:$0xff]
    %v2876 = vld [vmem:[%s1 + $0x58d0] sm:$0xff]
    %v2877 = vld [vmem:[%s1 + $0x58d8] sm:$0xff]
    %v2878 = vld [vmem:[%s1 + $0x58e0] sm:$0xff]
    %v2879 = vld [vmem:[%s1 + $0x58e8] sm:$0xff]
    %v2880 = vld [vmem:[%s1 + $0x58f0] sm:$0xff]
    %v2881 = vld [vmem:[%s1 + $0x58f8] sm:$0xff]
    %v2882 = vld [vmem:[%s1 + $0x5900] sm:$0xff]
    %v2883 = vld [vmem:[%s1 + $0x5908] sm:$0xff]
    %v2884 = vld [vmem:[%s1 + $0x5910] sm:$0xff]
    %v2885 = vld [vmem:[%s1 + $0x5918] sm:$0xff]
    %v2886 = vld [vmem:[%s1 + $0x5920] sm:$0xff]
    %v2887 = vld [vmem:[%s1 + $0x5928] sm:$0xff]
    %v2888 = vld [vmem:[%s1 + $0x5930] sm:$0xff]
    %v2889 = vld [vmem:[%s1 + $0x5938] sm:$0xff]
    %v2890 = vld [vmem:[%s1 + $0x5940] sm:$0xff]
    %v2891 = vld [vmem:[%s1 + $0x5948] sm:$0xff]
    %v2892 = vld [vmem:[%s1 + $0x5950] sm:$0xff]
    %v2893 = vld [vmem:[%s1 + $0x5958] sm:$0xff]
    %v2894 = vld [vmem:[%s1 + $0x5960] sm:$0xff]
    %v2895 = vld [vmem:[%s1 + $0x5968] sm:$0xff]
    %v2896 = vld [vmem:[%s1 + $0x5970] sm:$0xff]
    %v2897 = vld [vmem:[%s1 + $0x5978] sm:$0xff]
    %v2898 = vld [vmem:[%s1 + $0x5980] sm:$0xff]
    %v2899 = vld [vmem:[%s1 + $0x5988] sm:$0xff]
    %v2900 = vld [vmem:[%s1 + $0x5990] sm:$0xff]
    %v2901 = vld [vmem:[%s1 + $0x5998] sm:$0xff]
    %v2902 = vld [vmem:[%s1 + $0x59a0] sm:$0xff]
    %v2903 = vld [vmem:[%s1 + $0x59a8] sm:$0xff]
    %v2904 = vld [vmem:[%s1 + $0x59b0] sm:$0xff]
    %v2905 = vld [vmem:[%s1 + $0x59b8] sm:$0xff]
    %v2906 = vld [vmem:[%s1 + $0x59c0] sm:$0xff]
    %v2907 = vld [vmem:[%s1 + $0x59c8] sm:$0xff]
    %v2908 = vld [vmem:[%s1 + $0x59d0] sm:$0xff]
    %v2909 = vld [vmem:[%s1 + $0x59d8] sm:$0xff]
    %v2910 = vld [vmem:[%s1 + $0x59e0] sm:$0xff]
    %v2911 = vld [vmem:[%s1 + $0x59e8] sm:$0xff]
    %v2912 = vld [vmem:[%s1 + $0x59f0] sm:$0xff]
    %v2913 = vld [vmem:[%s1 + $0x59f8] sm:$0xff]
    %v2914 = vld [vmem:[%s1 + $0x5a00] sm:$0xff]
    %v2915 = vld [vmem:[%s1 + $0x5a08] sm:$0xff]
    %v2916 = vld [vmem:[%s1 + $0x5a10] sm:$0xff]
    %v2917 = vld [vmem:[%s1 + $0x5a18] sm:$0xff]
    %v2918 = vld [vmem:[%s1 + $0x5a20] sm:$0xff]
    %v2919 = vld [vmem:[%s1 + $0x5a28] sm:$0xff]
    %v2920 = vld [vmem:[%s1 + $0x5a30] sm:$0xff]
    %v2921 = vld [vmem:[%s1 + $0x5a38] sm:$0xff]
    %v2922 = vld [vmem:[%s1 + $0x5a40] sm:$0xff]
    %v2923 = vld [vmem:[%s1 + $0x5a48] sm:$0xff]
    %v2924 = vld [vmem:[%s1 + $0x5a50] sm:$0xff]
    %v2925 = vld [vmem:[%s1 + $0x5a58] sm:$0xff]
    %v2926 = vld [vmem:[%s1 + $0x5a60] sm:$0xff]
    %v2927 = vld [vmem:[%s1 + $0x5a68] sm:$0xff]
    %v2928 = vld [vmem:[%s1 + $0x5a70] sm:$0xff]
    %v2929 = vld [vmem:[%s1 + $0x5a78] sm:$0xff]
    %v2930 = vld [vmem:[%s1 + $0x5a80] sm:$0xff]
    %v2931 = vld [vmem:[%s1 + $0x5a88] sm:$0xff]
    %v2932 = vld [vmem:[%s1 + $0x5a90] sm:$0xff]
    %v2933 = vld [vmem:[%s1 + $0x5a98] sm:$0xff]
    %v2934 = vld [vmem:[%s1 + $0x5aa0] sm:$0xff]
    %v2935 = vld [vmem:[%s1 + $0x5aa8] sm:$0xff]
    %v2936 = vld [vmem:[%s1 + $0x5ab0] sm:$0xff]
    %v2937 = vld [vmem:[%s1 + $0x5ab8] sm:$0xff]
    %v2938 = vld [vmem:[%s1 + $0x5ac0] sm:$0xff]
    %v2939 = vld [vmem:[%s1 + $0x5ac8] sm:$0xff]
    %v2940 = vld [vmem:[%s1 + $0x5ad0] sm:$0xff]
    %v2941 = vld [vmem:[%s1 + $0x5ad8] sm:$0xff]
    %v2942 = vld [vmem:[%s1 + $0x5ae0] sm:$0xff]
    %v2943 = vld [vmem:[%s1 + $0x5ae8] sm:$0xff]
    %v2944 = vld [vmem:[%s1 + $0x5af0] sm:$0xff]
    %v2945 = vld [vmem:[%s1 + $0x5af8] sm:$0xff]
    %v2946 = vld [vmem:[%s1 + $0x5b00] sm:$0xff]
    %v2947 = vld [vmem:[%s1 + $0x5b08] sm:$0xff]
    %v2948 = vld [vmem:[%s1 + $0x5b10] sm:$0xff]
    %v2949 = vld [vmem:[%s1 + $0x5b18] sm:$0xff]
    %v2950 = vld [vmem:[%s1 + $0x5b20] sm:$0xff]
    %v2951 = vld [vmem:[%s1 + $0x5b28] sm:$0xff]
    %v2952 = vld [vmem:[%s1 + $0x5b30] sm:$0xff]
    %v2953 = vld [vmem:[%s1 + $0x5b38] sm:$0xff]
    %v2954 = vld [vmem:[%s1 + $0x5b40] sm:$0xff]
    %v2955 = vld [vmem:[%s1 + $0x5b48] sm:$0xff]
    %v2956 = vld [vmem:[%s1 + $0x5b50] sm:$0xff]
    %v2957 = vld [vmem:[%s1 + $0x5b58] sm:$0xff]
    %v2958 = vld [vmem:[%s1 + $0x5b60] sm:$0xff]
    %v2959 = vld [vmem:[%s1 + $0x5b68] sm:$0xff]
    %v2960 = vld [vmem:[%s1 + $0x5b70] sm:$0xff]
    %v2961 = vld [vmem:[%s1 + $0x5b78] sm:$0xff]
    %v2962 = vld [vmem:[%s1 + $0x5b80] sm:$0xff]
    %v2963 = vld [vmem:[%s1 + $0x5b88] sm:$0xff]
    %v2964 = vld [vmem:[%s1 + $0x5b90] sm:$0xff]
    %v2965 = vld [vmem:[%s1 + $0x5b98] sm:$0xff]
    %v2966 = vld [vmem:[%s1 + $0x5ba0] sm:$0xff]
    %v2967 = vld [vmem:[%s1 + $0x5ba8] sm:$0xff]
    %v2968 = vld [vmem:[%s1 + $0x5bb0] sm:$0xff]
    %v2969 = vld [vmem:[%s1 + $0x5bb8] sm:$0xff]
    %v2970 = vld [vmem:[%s1 + $0x5bc0] sm:$0xff]
    %v2971 = vld [vmem:[%s1 + $0x5bc8] sm:$0xff]
    %v2972 = vld [vmem:[%s1 + $0x5bd0] sm:$0xff]
    %v2973 = vld [vmem:[%s1 + $0x5bd8] sm:$0xff]
    %v2974 = vld [vmem:[%s1 + $0x5be0] sm:$0xff]
    %v2975 = vld [vmem:[%s1 + $0x5be8] sm:$0xff]
    %v2976 = vld [vmem:[%s1 + $0x5bf0] sm:$0xff]
    %v2977 = vld [vmem:[%s1 + $0x5bf8] sm:$0xff]
    %v2978 = vld [vmem:[%s1 + $0x5c00] sm:$0xff]
    %v2979 = vld [vmem:[%s1 + $0x5c08] sm:$0xff]
    %v2980 = vld [vmem:[%s1 + $0x5c10] sm:$0xff]
    %v2981 = vld [vmem:[%s1 + $0x5c18] sm:$0xff]
    %v2982 = vld [vmem:[%s1 + $0x5c20] sm:$0xff]
    %v2983 = vld [vmem:[%s1 + $0x5c28] sm:$0xff]
    %v2984 = vld [vmem:[%s1 + $0x5c30] sm:$0xff]
    %v2985 = vld [vmem:[%s1 + $0x5c38] sm:$0xff]
    %v2986 = vld [vmem:[%s1 + $0x5c40] sm:$0xff]
    %v2987 = vld [vmem:[%s1 + $0x5c48] sm:$0xff]
    %v2988 = vld [vmem:[%s1 + $0x5c50] sm:$0xff]
    %v2989 = vld [vmem:[%s1 + $0x5c58] sm:$0xff]
    %v2990 = vld [vmem:[%s1 + $0x5c60] sm:$0xff]
    %v2991 = vld [vmem:[%s1 + $0x5c68] sm:$0xff]
    %v2992 = vld [vmem:[%s1 + $0x5c70] sm:$0xff]
    %v2993 = vld [vmem:[%s1 + $0x5c78] sm:$0xff]
    %v2994 = vld [vmem:[%s1 + $0x5c80] sm:$0xff]
    %v2995 = vld [vmem:[%s1 + $0x5c88] sm:$0xff]
    %v2996 = vld [vmem:[%s1 + $0x5c90] sm:$0xff]
    %v2997 = vld [vmem:[%s1 + $0x5c98] sm:$0xff]
    %v2998 = vld [vmem:[%s1 + $0x5ca0] sm:$0xff]
    %v2999 = vld [vmem:[%s1 + $0x5ca8] sm:$0xff]
    %v3000 = vld [vmem:[%s1 + $0x5cb0] sm:$0xff]
    %v3001 = vld [vmem:[%s1 + $0x5cb8] sm:$0xff]
    %v3002 = vld [vmem:[%s1 + $0x5cc0] sm:$0xff]
    %v3003 = vld [vmem:[%s1 + $0x5cc8] sm:$0xff]
    %v3004 = vld [vmem:[%s1 + $0x5cd0] sm:$0xff]
    %v3005 = vld [vmem:[%s1 + $0x5cd8] sm:$0xff]
    %v3006 = vld [vmem:[%s1 + $0x5ce0] sm:$0xff]
    %v3007 = vld [vmem:[%s1 + $0x5ce8] sm:$0xff]
    %v3008 = vld [vmem:[%s1 + $0x5cf0] sm:$0xff]
    %v3009 = vld [vmem:[%s1 + $0x5cf8] sm:$0xff]
    %v3010 = vld [vmem:[%s1 + $0x5d00] sm:$0xff]
    %v3011 = vld [vmem:[%s1 + $0x5d08] sm:$0xff]
    %v3012 = vld [vmem:[%s1 + $0x5d10] sm:$0xff]
    %v3013 = vld [vmem:[%s1 + $0x5d18] sm:$0xff]
    %v3014 = vld [vmem:[%s1 + $0x5d20] sm:$0xff]
    %v3015 = vld [vmem:[%s1 + $0x5d28] sm:$0xff]
    %v3016 = vld [vmem:[%s1 + $0x5d30] sm:$0xff]
    %v3017 = vld [vmem:[%s1 + $0x5d38] sm:$0xff]
    %v3018 = vld [vmem:[%s1 + $0x5d40] sm:$0xff]
    %v3019 = vld [vmem:[%s1 + $0x5d48] sm:$0xff]
    %v3020 = vld [vmem:[%s1 + $0x5d50] sm:$0xff]
    %v3021 = vld [vmem:[%s1 + $0x5d58] sm:$0xff]
    %v3022 = vld [vmem:[%s1 + $0x5d60] sm:$0xff]
    %v3023 = vld [vmem:[%s1 + $0x5d68] sm:$0xff]
    %v3024 = vld [vmem:[%s1 + $0x5d70] sm:$0xff]
    %v3025 = vld [vmem:[%s1 + $0x5d78] sm:$0xff]
    %v3026 = vld [vmem:[%s1 + $0x5d80] sm:$0xff]
    %v3027 = vld [vmem:[%s1 + $0x5d88] sm:$0xff]
    %v3028 = vld [vmem:[%s1 + $0x5d90] sm:$0xff]
    %v3029 = vld [vmem:[%s1 + $0x5d98] sm:$0xff]
    %v3030 = vld [vmem:[%s1 + $0x5da0] sm:$0xff]
    %v3031 = vld [vmem:[%s1 + $0x5da8] sm:$0xff]
    %v3032 = vld [vmem:[%s1 + $0x5db0] sm:$0xff]
    %v3033 = vld [vmem:[%s1 + $0x5db8] sm:$0xff]
    %v3034 = vld [vmem:[%s1 + $0x5dc0] sm:$0xff]
    %v3035 = vld [vmem:[%s1 + $0x5dc8] sm:$0xff]
    %v3036 = vld [vmem:[%s1 + $0x5dd0] sm:$0xff]
    %v3037 = vld [vmem:[%s1 + $0x5dd8] sm:$0xff]
    %v3038 = vld [vmem:[%s1 + $0x5de0] sm:$0xff]
    %v3039 = vld [vmem:[%s1 + $0x5de8] sm:$0xff]
    %v3040 = vld [vmem:[%s1 + $0x5df0] sm:$0xff]
    %v3041 = vld [vmem:[%s1 + $0x5df8] sm:$0xff]
    %v3042 = vld [vmem:[%s1 + $0x5e00] sm:$0xff]
    %v3043 = vld [vmem:[%s1 + $0x5e08] sm:$0xff]
    %v3044 = vld [vmem:[%s1 + $0x5e10] sm:$0xff]
    %v3045 = vld [vmem:[%s1 + $0x5e18] sm:$0xff]
    %v3046 = vld [vmem:[%s1 + $0x5e20] sm:$0xff]
    %v3047 = vld [vmem:[%s1 + $0x5e28] sm:$0xff]
    %v3048 = vld [vmem:[%s1 + $0x5e30] sm:$0xff]
    %v3049 = vld [vmem:[%s1 + $0x5e38] sm:$0xff]
    %v3050 = vld [vmem:[%s1 + $0x5e40] sm:$0xff]
    %v3051 = vld [vmem:[%s1 + $0x5e48] sm:$0xff]
    %v3052 = vld [vmem:[%s1 + $0x5e50] sm:$0xff]
    %v3053 = vld [vmem:[%s1 + $0x5e58] sm:$0xff]
    %v3054 = vld [vmem:[%s1 + $0x5e60] sm:$0xff]
    %v3055 = vld [vmem:[%s1 + $0x5e68] sm:$0xff]
    %v3056 = vld [vmem:[%s1 + $0x5e70] sm:$0xff]
    %v3057 = vld [vmem:[%s1 + $0x5e78] sm:$0xff]
    %v3058 = vld [vmem:[%s1 + $0x5e80] sm:$0xff]
    %v3059 = vld [vmem:[%s1 + $0x5e88] sm:$0xff]
    %v3060 = vld [vmem:[%s1 + $0x5e90] sm:$0xff]
    %v3061 = vld [vmem:[%s1 + $0x5e98] sm:$0xff]
    %v3062 = vld [vmem:[%s1 + $0x5ea0] sm:$0xff]
    %v3063 = vld [vmem:[%s1 + $0x5ea8] sm:$0xff]
    %v3064 = vld [vmem:[%s1 + $0x5eb0] sm:$0xff]
    %v3065 = vld [vmem:[%s1 + $0x5eb8] sm:$0xff]
    %v3066 = vld [vmem:[%s1 + $0x5ec0] sm:$0xff]
    %v3067 = vld [vmem:[%s1 + $0x5ec8] sm:$0xff]
    %v3068 = vld [vmem:[%s1 + $0x5ed0] sm:$0xff]
    %v3069 = vld [vmem:[%s1 + $0x5ed8] sm:$0xff]
    %v3070 = vld [vmem:[%s1 + $0x5ee0] sm:$0xff]
    %v3071 = vld [vmem:[%s1 + $0x5ee8] sm:$0xff]
    %v3072 = vld [vmem:[%s1 + $0x5ef0] sm:$0xff]
    %v3073 = vld [vmem:[%s1 + $0x5ef8] sm:$0xff]
    %v3074 = vld [vmem:[%s1 + $0x5f00] sm:$0xff]
    %v3075 = vld [vmem:[%s1 + $0x5f08] sm:$0xff]
    %v3076 = vld [vmem:[%s1 + $0x5f10] sm:$0xff]
    %v3077 = vld [vmem:[%s1 + $0x5f18] sm:$0xff]
    %v3078 = vld [vmem:[%s1 + $0x5f20] sm:$0xff]
    %v3079 = vld [vmem:[%s1 + $0x5f28] sm:$0xff]
    %v3080 = vld [vmem:[%s1 + $0x5f30] sm:$0xff]
    %v3081 = vld [vmem:[%s1 + $0x5f38] sm:$0xff]
    %v3082 = vld [vmem:[%s1 + $0x5f40] sm:$0xff]
    %v3083 = vld [vmem:[%s1 + $0x5f48] sm:$0xff]
    %v3084 = vld [vmem:[%s1 + $0x5f50] sm:$0xff]
    %v3085 = vld [vmem:[%s1 + $0x5f58] sm:$0xff]
    %v3086 = vld [vmem:[%s1 + $0x5f60] sm:$0xff]
    %v3087 = vld [vmem:[%s1 + $0x5f68] sm:$0xff]
    %v3088 = vld [vmem:[%s1 + $0x5f70] sm:$0xff]
    %v3089 = vld [vmem:[%s1 + $0x5f78] sm:$0xff]
    %v3090 = vld [vmem:[%s1 + $0x5f80] sm:$0xff]
    %v3091 = vld [vmem:[%s1 + $0x5f88] sm:$0xff]
    %v3092 = vld [vmem:[%s1 + $0x5f90] sm:$0xff]
    %v3093 = vld [vmem:[%s1 + $0x5f98] sm:$0xff]
    %v3094 = vld [vmem:[%s1 + $0x5fa0] sm:$0xff]
    %v3095 = vld [vmem:[%s1 + $0x5fa8] sm:$0xff]
    %v3096 = vld [vmem:[%s1 + $0x5fb0] sm:$0xff]
    %v3097 = vld [vmem:[%s1 + $0x5fb8] sm:$0xff]
    %v3098 = vld [vmem:[%s1 + $0x5fc0] sm:$0xff]
    %v3099 = vld [vmem:[%s1 + $0x5fc8] sm:$0xff]
    %v3100 = vld [vmem:[%s1 + $0x5fd0] sm:$0xff]
    %v3101 = vld [vmem:[%s1 + $0x5fd8] sm:$0xff]
    %v3102 = vld [vmem:[%s1 + $0x5fe0] sm:$0xff]
    %v3103 = vld [vmem:[%s1 + $0x5fe8] sm:$0xff]
    %v3104 = vld [vmem:[%s1 + $0x5ff0] sm:$0xff]
    %v3105 = vld [vmem:[%s1 + $0x5ff8] sm:$0xff]
    %v3106 = vld [vmem:[%s1 + $0x6000] sm:$0xff]
    %v3107 = vld [vmem:[%s1 + $0x6008] sm:$0xff]
    %v3108 = vld [vmem:[%s1 + $0x6010] sm:$0xff]
    %v3109 = vld [vmem:[%s1 + $0x6018] sm:$0xff]
    %v3110 = vld [vmem:[%s1 + $0x6020] sm:$0xff]
    %v3111 = vld [vmem:[%s1 + $0x6028] sm:$0xff]
    %v3112 = vld [vmem:[%s1 + $0x6030] sm:$0xff]
    %v3113 = vld [vmem:[%s1 + $0x6038] sm:$0xff]
    %v3114 = vld [vmem:[%s1 + $0x6040] sm:$0xff]
    %v3115 = vld [vmem:[%s1 + $0x6048] sm:$0xff]
    %v3116 = vld [vmem:[%s1 + $0x6050] sm:$0xff]
    %v3117 = vld [vmem:[%s1 + $0x6058] sm:$0xff]
    %v3118 = vld [vmem:[%s1 + $0x6060] sm:$0xff]
    %v3119 = vld [vmem:[%s1 + $0x6068] sm:$0xff]
    %v3120 = vld [vmem:[%s1 + $0x6070] sm:$0xff]
    %v3121 = vld [vmem:[%s1 + $0x6078] sm:$0xff]
    %v3122 = vld [vmem:[%s1 + $0x6080] sm:$0xff]
    %v3123 = vld [vmem:[%s1 + $0x6088] sm:$0xff]
    %v3124 = vld [vmem:[%s1 + $0x6090] sm:$0xff]
    %v3125 = vld [vmem:[%s1 + $0x6098] sm:$0xff]
    %v3126 = vld [vmem:[%s1 + $0x60a0] sm:$0xff]
    %v3127 = vld [vmem:[%s1 + $0x60a8] sm:$0xff]
    %v3128 = vld [vmem:[%s1 + $0x60b0] sm:$0xff]
    %v3129 = vld [vmem:[%s1 + $0x60b8] sm:$0xff]
    %v3130 = vld [vmem:[%s1 + $0x60c0] sm:$0xff]
    %v3131 = vld [vmem:[%s1 + $0x60c8] sm:$0xff]
    %v3132 = vld [vmem:[%s1 + $0x60d0] sm:$0xff]
    %v3133 = vld [vmem:[%s1 + $0x60d8] sm:$0xff]
    %v3134 = vld [vmem:[%s1 + $0x60e0] sm:$0xff]
    %v3135 = vld [vmem:[%s1 + $0x60e8] sm:$0xff]
    %v3136 = vld [vmem:[%s1 + $0x60f0] sm:$0xff]
    %v3137 = vld [vmem:[%s1 + $0x60f8] sm:$0xff]
    %v3138 = vld [vmem:[%s1 + $0x6100] sm:$0xff]
    %v3139 = vld [vmem:[%s1 + $0x6108] sm:$0xff]
    %v3140 = vld [vmem:[%s1 + $0x6110] sm:$0xff]
    %v3141 = vld [vmem:[%s1 + $0x6118] sm:$0xff]
    %v3142 = vld [vmem:[%s1 + $0x6120] sm:$0xff]
    %v3143 = vld [vmem:[%s1 + $0x6128] sm:$0xff]
    %v3144 = vld [vmem:[%s1 + $0x6130] sm:$0xff]
    %v3145 = vld [vmem:[%s1 + $0x6138] sm:$0xff]
    %v3146 = vld [vmem:[%s1 + $0x6140] sm:$0xff]
    %v3147 = vld [vmem:[%s1 + $0x6148] sm:$0xff]
    %v3148 = vld [vmem:[%s1 + $0x6150] sm:$0xff]
    %v3149 = vld [vmem:[%s1 + $0x6158] sm:$0xff]
    %v3150 = vld [vmem:[%s1 + $0x6160] sm:$0xff]
    %v3151 = vld [vmem:[%s1 + $0x6168] sm:$0xff]
    %v3152 = vld [vmem:[%s1 + $0x6170] sm:$0xff]
    %v3153 = vld [vmem:[%s1 + $0x6178] sm:$0xff]
    %v3154 = vld [vmem:[%s1 + $0x6180] sm:$0xff]
    %v3155 = vld [vmem:[%s1 + $0x6188] sm:$0xff]
    %v3156 = vld [vmem:[%s1 + $0x6190] sm:$0xff]
    %v3157 = vld [vmem:[%s1 + $0x6198] sm:$0xff]
    %v3158 = vld [vmem:[%s1 + $0x61a0] sm:$0xff]
    %v3159 = vld [vmem:[%s1 + $0x61a8] sm:$0xff]
    %v3160 = vld [vmem:[%s1 + $0x61b0] sm:$0xff]
    %v3161 = vld [vmem:[%s1 + $0x61b8] sm:$0xff]
    %v3162 = vld [vmem:[%s1 + $0x61c0] sm:$0xff]
    %v3163 = vld [vmem:[%s1 + $0x61c8] sm:$0xff]
    %v3164 = vld [vmem:[%s1 + $0x61d0] sm:$0xff]
    %v3165 = vld [vmem:[%s1 + $0x61d8] sm:$0xff]
    %v3166 = vld [vmem:[%s1 + $0x61e0] sm:$0xff]
    %v3167 = vld [vmem:[%s1 + $0x61e8] sm:$0xff]
    %v3168 = vld [vmem:[%s1 + $0x61f0] sm:$0xff]
    %v3169 = vld [vmem:[%s1 + $0x61f8] sm:$0xff]
    %v3170 = vld [vmem:[%s2] sm:$0xf]
    %v3172 = vlaneseq
    %v3173 = vshrl.u32 %v3172, 7
    %v3174 = vsub.s32 0, %v3173
    %v3175 = vrot.slane %v3170, %v3174
    %v3176 = vlaneseq
    %v3177 = vshrl.u32 %v3176, 7
    %v3178 = vsub.s32 1, %v3177
    %v3179 = vrot.slane %v3170, %v3178
    %v3180 = vlaneseq
    %v3181 = vshrl.u32 %v3180, 7
    %v3182 = vsub.s32 2, %v3181
    %v3183 = vrot.slane %v3170, %v3182
    %v3184 = vlaneseq
    %v3185 = vshrl.u32 %v3184, 7
    %v3186 = vsub.s32 3, %v3185
    %v3187 = vrot.slane %v3170, %v3186
    %v3205 = vcombine.high %v21, %v21
    %v3207 = vunpack.c.l.s4 1983009808
    %v3208 = vunpack.c.0.s8 %v3207
    %v3209 = vlaneseq
    %v3210 = vshrl.u32 %v3209, 7
    %v3211 = vsub.s32 %v3208, %v3210
    %v3212 = vrot.slane %v21, %v3211
    %v3214 = vunpack.c.l.s4 1983009808
    %v3215 = vunpack.c.0.s8 %v3214
    %v3216 = vlaneseq
    %v3217 = vshrl.u32 %v3216, 7
    %v3218 = vsub.s32 %v3215, %v3217
    %v3219 = vrot.slane %v3205, %v3218
    %v3220 = vcombine.high %v3212, %v3212
    %v3221 = vcombine.high %v3219, %v3219
    %v3222 = vcombine.high %v22, %v22
    %v3224 = vunpack.c.l.s4 1983009808
    %v3225 = vunpack.c.0.s8 %v3224
    %v3226 = vlaneseq
    %v3227 = vshrl.u32 %v3226, 7
    %v3228 = vsub.s32 %v3225, %v3227
    %v3229 = vrot.slane %v22, %v3228
    %v3231 = vunpack.c.l.s4 1983009808
    %v3232 = vunpack.c.0.s8 %v3231
    %v3233 = vlaneseq
    %v3234 = vshrl.u32 %v3233, 7
    %v3235 = vsub.s32 %v3232, %v3234
    %v3236 = vrot.slane %v3222, %v3235
    %v3237 = vcombine.high %v3229, %v3229
    %v3238 = vcombine.high %v3236, %v3236
    %v3239 = vcombine.high %v23, %v23
    %v3241 = vunpack.c.l.s4 1983009808
    %v3242 = vunpack.c.0.s8 %v3241
    %v3243 = vlaneseq
    %v3244 = vshrl.u32 %v3243, 7
    %v3245 = vsub.s32 %v3242, %v3244
    %v3246 = vrot.slane %v23, %v3245
    %v3248 = vunpack.c.l.s4 1983009808
    %v3249 = vunpack.c.0.s8 %v3248
    %v3250 = vlaneseq
    %v3251 = vshrl.u32 %v3250, 7
    %v3252 = vsub.s32 %v3249, %v3251
    %v3253 = vrot.slane %v3239, %v3252
    %v3254 = vcombine.high %v3246, %v3246
    %v3255 = vcombine.high %v3253, %v3253
    %v3256 = vcombine.high %v24, %v24
    %v3258 = vunpack.c.l.s4 1983009808
    %v3259 = vunpack.c.0.s8 %v3258
    %v3260 = vlaneseq
    %v3261 = vshrl.u32 %v3260, 7
    %v3262 = vsub.s32 %v3259, %v3261
    %v3263 = vrot.slane %v24, %v3262
    %v3265 = vunpack.c.l.s4 1983009808
    %v3266 = vunpack.c.0.s8 %v3265
    %v3267 = vlaneseq
    %v3268 = vshrl.u32 %v3267, 7
    %v3269 = vsub.s32 %v3266, %v3268
    %v3270 = vrot.slane %v3256, %v3269
    %v3271 = vcombine.high %v3263, %v3263
    %v3272 = vcombine.high %v3270, %v3270
    %v3273 = vcombine.high %v25, %v25
    %v3275 = vunpack.c.l.s4 1983009808
    %v3276 = vunpack.c.0.s8 %v3275
    %v3277 = vlaneseq
    %v3278 = vshrl.u32 %v3277, 7
    %v3279 = vsub.s32 %v3276, %v3278
    %v3280 = vrot.slane %v25, %v3279
    %v3282 = vunpack.c.l.s4 1983009808
    %v3283 = vunpack.c.0.s8 %v3282
    %v3284 = vlaneseq
    %v3285 = vshrl.u32 %v3284, 7
    %v3286 = vsub.s32 %v3283, %v3285
    %v3287 = vrot.slane %v3273, %v3286
    %v3288 = vcombine.high %v3280, %v3280
    %v3289 = vcombine.high %v3287, %v3287
    %v3290 = vcombine.high %v26, %v26
    %v3292 = vunpack.c.l.s4 1983009808
    %v3293 = vunpack.c.0.s8 %v3292
    %v3294 = vlaneseq
    %v3295 = vshrl.u32 %v3294, 7
    %v3296 = vsub.s32 %v3293, %v3295
    %v3297 = vrot.slane %v26, %v3296
    %v3299 = vunpack.c.l.s4 1983009808
    %v3300 = vunpack.c.0.s8 %v3299
    %v3301 = vlaneseq
    %v3302 = vshrl.u32 %v3301, 7
    %v3303 = vsub.s32 %v3300, %v3302
    %v3304 = vrot.slane %v3290, %v3303
    %v3305 = vcombine.high %v3297, %v3297
    %v3306 = vcombine.high %v3304, %v3304
    %v3307 = vcombine.high %v27, %v27
    %v3309 = vunpack.c.l.s4 1983009808
    %v3310 = vunpack.c.0.s8 %v3309
    %v3311 = vlaneseq
    %v3312 = vshrl.u32 %v3311, 7
    %v3313 = vsub.s32 %v3310, %v3312
    %v3314 = vrot.slane %v27, %v3313
    %v3316 = vunpack.c.l.s4 1983009808
    %v3317 = vunpack.c.0.s8 %v3316
    %v3318 = vlaneseq
    %v3319 = vshrl.u32 %v3318, 7
    %v3320 = vsub.s32 %v3317, %v3319
    %v3321 = vrot.slane %v3307, %v3320
    %v3322 = vcombine.high %v3314, %v3314
    %v3323 = vcombine.high %v3321, %v3321
    %v3324 = vcombine.high %v28, %v28
    %v3326 = vunpack.c.l.s4 1983009808
    %v3327 = vunpack.c.0.s8 %v3326
    %v3328 = vlaneseq
    %v3329 = vshrl.u32 %v3328, 7
    %v3330 = vsub.s32 %v3327, %v3329
    %v3331 = vrot.slane %v28, %v3330
    %v3333 = vunpack.c.l.s4 1983009808
    %v3334 = vunpack.c.0.s8 %v3333
    %v3335 = vlaneseq
    %v3336 = vshrl.u32 %v3335, 7
    %v3337 = vsub.s32 %v3334, %v3336
    %v3338 = vrot.slane %v3324, %v3337
    %v3339 = vcombine.high %v3331, %v3331
    %v3340 = vcombine.high %v3338, %v3338
    %v3341 = vcombine.high %v29, %v29
    %v3343 = vunpack.c.l.s4 1983009808
    %v3344 = vunpack.c.0.s8 %v3343
    %v3345 = vlaneseq
    %v3346 = vshrl.u32 %v3345, 7
    %v3347 = vsub.s32 %v3344, %v3346
    %v3348 = vrot.slane %v29, %v3347
    %v3350 = vunpack.c.l.s4 1983009808
    %v3351 = vunpack.c.0.s8 %v3350
    %v3352 = vlaneseq
    %v3353 = vshrl.u32 %v3352, 7
    %v3354 = vsub.s32 %v3351, %v3353
    %v3355 = vrot.slane %v3341, %v3354
    %v3356 = vcombine.high %v3348, %v3348
    %v3357 = vcombine.high %v3355, %v3355
    %v3358 = vcombine.high %v30, %v30
    %v3360 = vunpack.c.l.s4 1983009808
    %v3361 = vunpack.c.0.s8 %v3360
    %v3362 = vlaneseq
    %v3363 = vshrl.u32 %v3362, 7
    %v3364 = vsub.s32 %v3361, %v3363
    %v3365 = vrot.slane %v30, %v3364
    %v3367 = vunpack.c.l.s4 1983009808
    %v3368 = vunpack.c.0.s8 %v3367
    %v3369 = vlaneseq
    %v3370 = vshrl.u32 %v3369, 7
    %v3371 = vsub.s32 %v3368, %v3370
    %v3372 = vrot.slane %v3358, %v3371
    %v3373 = vcombine.high %v3365, %v3365
    %v3374 = vcombine.high %v3372, %v3372
    %v3375 = vcombine.high %v31, %v31
    %v3377 = vunpack.c.l.s4 1983009808
    %v3378 = vunpack.c.0.s8 %v3377
    %v3379 = vlaneseq
    %v3380 = vshrl.u32 %v3379, 7
    %v3381 = vsub.s32 %v3378, %v3380
    %v3382 = vrot.slane %v31, %v3381
    %v3384 = vunpack.c.l.s4 1983009808
    %v3385 = vunpack.c.0.s8 %v3384
    %v3386 = vlaneseq
    %v3387 = vshrl.u32 %v3386, 7
    %v3388 = vsub.s32 %v3385, %v3387
    %v3389 = vrot.slane %v3375, %v3388
    %v3390 = vcombine.high %v3382, %v3382
    %v3391 = vcombine.high %v3389, %v3389
    %v3392 = vcombine.high %v32, %v32
    %v3394 = vunpack.c.l.s4 1983009808
    %v3395 = vunpack.c.0.s8 %v3394
    %v3396 = vlaneseq
    %v3397 = vshrl.u32 %v3396, 7
    %v3398 = vsub.s32 %v3395, %v3397
    %v3399 = vrot.slane %v32, %v3398
    %v3401 = vunpack.c.l.s4 1983009808
    %v3402 = vunpack.c.0.s8 %v3401
    %v3403 = vlaneseq
    %v3404 = vshrl.u32 %v3403, 7
    %v3405 = vsub.s32 %v3402, %v3404
    %v3406 = vrot.slane %v3392, %v3405
    %v3407 = vcombine.high %v3399, %v3399
    %v3408 = vcombine.high %v3406, %v3406
    %v3410 = vunpack.c.l.s4 1983009808
    %v3411 = vunpack.c.0.s8 %v3410
    %v3412 = vlaneseq
    %v3413 = vshrl.u32 %v3412, 7
    %v3414 = vsub.s32 %v3411, %v3413
    %v3415 = vrot.slane %v33, %v3414
    %3465 = vmatprep.subr.mxu0 %v35
    %3466 = vmatpush1.msra.mxu0 %v34
    %3467 = vmatprep.subr.mxu0 %v39
    %3468 = vmatpush1.msra.mxu0 %v38
    %3469 = vmatprep.subr.mxu0 %v43
    %3470 = vmatpush1.msra.mxu0 %v42
    %3471 = vmatprep.subr.mxu0 %v47
    %3472 = vmatpush1.msra.mxu0 %v46
    %3473 = vmatprep.subr.mxu0 %v51
    %3474 = vmatpush1.msra.mxu0 %v50
    %3475 = vmatprep.subr.mxu0 %v55
    %3476 = vmatpush1.msra.mxu0 %v54
    %3477 = vmatprep.subr.mxu0 %v59
    %3478 = vmatpush1.msra.mxu0 %v58
    %3479 = vmatprep.subr.mxu0 %v63
    %3480 = vmatpush1.msra.mxu0 %v62
    %3481 = vmatprep.subr.mxu0 %v67
    %3482 = vmatpush1.msra.mxu0 %v66
    %3483 = vmatprep.subr.mxu0 %v71
    %3484 = vmatpush1.msra.mxu0 %v70
    %3485 = vmatprep.subr.mxu0 %v75
    %3486 = vmatpush1.msra.mxu0 %v74
    %3487 = vmatprep.subr.mxu0 %v79
    %3488 = vmatpush1.msra.mxu0 %v78
    %3489 = vmatprep.subr.mxu0 %v83
    %3490 = vmatpush1.msra.mxu0 %v82
    %3491 = vmatprep.subr.mxu0 %v87
    %3492 = vmatpush1.msra.mxu0 %v86
    %3493 = vmatprep.subr.mxu0 %v91
    %3494 = vmatpush1.msra.mxu0 %v90
    %3495 = vmatprep.subr.mxu0 %v95
    %3496 = vmatpush1.msra.mxu0 %v94
    %3497 = vmatprep.subr.mxu0 %v99
    %3498 = vmatpush1.msra.mxu0 %v98
    %3499 = vmatprep.subr.mxu0 %v103
    %3500 = vmatpush1.msra.mxu0 %v102
    %3501 = vmatprep.subr.mxu0 %v107
    %3502 = vmatpush1.msra.mxu0 %v106
    %3503 = vmatprep.subr.mxu0 %v111
    %3504 = vmatpush1.msra.mxu0 %v110
    %3505 = vmatprep.subr.mxu0 %v115
    %3506 = vmatpush1.msra.mxu0 %v114
    %3507 = vmatprep.subr.mxu0 %v119
    %3508 = vmatpush1.msra.mxu0 %v118
    %3509 = vmatprep.subr.mxu0 %v123
    %3510 = vmatpush1.msra.mxu0 %v122
    %3511 = vmatprep.subr.mxu0 %v127
    %3512 = vmatpush1.msra.mxu0 %v126
    %3513 = vmatprep.subr.mxu0 %v131
    %3514 = vmatpush1.msra.mxu0 %v130
    %3515 = vmatprep.subr.mxu0 %v135
    %3516 = vmatpush1.msra.mxu0 %v134
    %3517 = vmatprep.subr.mxu0 %v139
    %3518 = vmatpush1.msra.mxu0 %v138
    %3519 = vmatprep.subr.mxu0 %v143
    %3520 = vmatpush1.msra.mxu0 %v142
    %3521 = vmatprep.subr.mxu0 %v147
    %3522 = vmatpush1.msra.mxu0 %v146
    %3523 = vmatprep.subr.mxu0 %v151
    %3524 = vmatpush1.msra.mxu0 %v150
    %3525 = vmatprep.subr.mxu0 %v155
    %3526 = vmatpush1.msra.mxu0 %v154
    %3527 = vmatprep.subr.mxu0 %v159
    %3528 = vmatpush1.msra.mxu0 %v158
    %3529 = vmatprep.mubr.f32.mxu0 %v3220
    %3530 = vmatmul.mubr.f32.gmra.mrb[0].mxu0 %v3212
    %v3531 = vpop.f32.mrb[0].mxu0
    %v3532 = vadd.f32 %v3175, %v3531
    %v3533 = vpop.f32.mrb[0].mxu0
    %v3534 = vadd.f32 %v3179, %v3533
    %3535 = vdwg.mxu0
    %3536 = vmatprep.subr.mxu0 %v163
    %3537 = vmatpush1.msra.mxu0 %v162
    %3538 = vmatprep.subr.mxu0 %v167
    %3539 = vmatpush1.msra.mxu0 %v166
    %3540 = vmatprep.subr.mxu0 %v171
    %3541 = vmatpush1.msra.mxu0 %v170
    %3542 = vmatprep.subr.mxu0 %v175
    %3543 = vmatpush1.msra.mxu0 %v174
    %3544 = vmatprep.subr.mxu0 %v179
    %3545 = vmatpush1.msra.mxu0 %v178
    %3546 = vmatprep.subr.mxu0 %v183
    %3547 = vmatpush1.msra.mxu0 %v182
    %3548 = vmatprep.subr.mxu0 %v187
    %3549 = vmatpush1.msra.mxu0 %v186
    %3550 = vmatprep.subr.mxu0 %v191
    %3551 = vmatpush1.msra.mxu0 %v190
    %3552 = vmatprep.subr.mxu0 %v195
    %3553 = vmatpush1.msra.mxu0 %v194
    %3554 = vmatprep.subr.mxu0 %v199
    %3555 = vmatpush1.msra.mxu0 %v198
    %3556 = vmatprep.subr.mxu0 %v203
    %3557 = vmatpush1.msra.mxu0 %v202
    %3558 = vmatprep.subr.mxu0 %v207
    %3559 = vmatpush1.msra.mxu0 %v206
    %3560 = vmatprep.subr.mxu0 %v211
    %3561 = vmatpush1.msra.mxu0 %v210
    %3562 = vmatprep.subr.mxu0 %v215
    %3563 = vmatpush1.msra.mxu0 %v214
    %3564 = vmatprep.subr.mxu0 %v219
    %3565 = vmatpush1.msra.mxu0 %v218
    %3566 = vmatprep.subr.mxu0 %v223
    %3567 = vmatpush1.msra.mxu0 %v222
    %3568 = vmatprep.subr.mxu0 %v227
    %3569 = vmatpush1.msra.mxu0 %v226
    %3570 = vmatprep.subr.mxu0 %v231
    %3571 = vmatpush1.msra.mxu0 %v230
    %3572 = vmatprep.subr.mxu0 %v235
    %3573 = vmatpush1.msra.mxu0 %v234
    %3574 = vmatprep.subr.mxu0 %v239
    %3575 = vmatpush1.msra.mxu0 %v238
    %3576 = vmatprep.subr.mxu0 %v243
    %3577 = vmatpush1.msra.mxu0 %v242
    %3578 = vmatprep.subr.mxu0 %v247
    %3579 = vmatpush1.msra.mxu0 %v246
    %3580 = vmatprep.subr.mxu0 %v251
    %3581 = vmatpush1.msra.mxu0 %v250
    %3582 = vmatprep.subr.mxu0 %v255
    %3583 = vmatpush1.msra.mxu0 %v254
    %3584 = vmatprep.subr.mxu0 %v259
    %3585 = vmatpush1.msra.mxu0 %v258
    %3586 = vmatprep.subr.mxu0 %v263
    %3587 = vmatpush1.msra.mxu0 %v262
    %3588 = vmatprep.subr.mxu0 %v267
    %3589 = vmatpush1.msra.mxu0 %v266
    %3590 = vmatprep.subr.mxu0 %v271
    %3591 = vmatpush1.msra.mxu0 %v270
    %3592 = vmatprep.subr.mxu0 %v275
    %3593 = vmatpush1.msra.mxu0 %v274
    %3594 = vmatprep.subr.mxu0 %v279
    %3595 = vmatpush1.msra.mxu0 %v278
    %3596 = vmatprep.subr.mxu0 %v283
    %3597 = vmatpush1.msra.mxu0 %v282
    %3598 = vmatprep.subr.mxu0 %v287
    %3599 = vmatpush1.msra.mxu0 %v286
    %3600 = vmatprep.mubr.f32.mxu0 %v3221
    %3601 = vmatmul.mubr.f32.gmra.mrb[0].mxu0 %v3219
    %v3602 = vpop.f32.mrb[0].mxu0
    %v3603 = vadd.f32 %v3532, %v3602
    %v3604 = vpop.f32.mrb[0].mxu0
    %v3605 = vadd.f32 %v3534, %v3604
    %3606 = vdwg.mxu0
    %3607 = vmatprep.subr.mxu0 %v291
    %3608 = vmatpush1.msra.mxu0 %v290
    %3609 = vmatprep.subr.mxu0 %v295
    %3610 = vmatpush1.msra.mxu0 %v294
    %3611 = vmatprep.subr.mxu0 %v299
    %3612 = vmatpush1.msra.mxu0 %v298
    %3613 = vmatprep.subr.mxu0 %v303
    %3614 = vmatpush1.msra.mxu0 %v302
    %3615 = vmatprep.subr.mxu0 %v307
    %3616 = vmatpush1.msra.mxu0 %v306
    %3617 = vmatprep.subr.mxu0 %v311
    %3618 = vmatpush1.msra.mxu0 %v310
    %3619 = vmatprep.subr.mxu0 %v315
    %3620 = vmatpush1.msra.mxu0 %v314
    %3621 = vmatprep.subr.mxu0 %v319
    %3622 = vmatpush1.msra.mxu0 %v318
    %3623 = vmatprep.subr.mxu0 %v323
    %3624 = vmatpush1.msra.mxu0 %v322
    %3625 = vmatprep.subr.mxu0 %v327
    %3626 = vmatpush1.msra.mxu0 %v326
    %3627 = vmatprep.subr.mxu0 %v331
    %3628 = vmatpush1.msra.mxu0 %v330
    %3629 = vmatprep.subr.mxu0 %v335
    %3630 = vmatpush1.msra.mxu0 %v334
    %3631 = vmatprep.subr.mxu0 %v339
    %3632 = vmatpush1.msra.mxu0 %v338
    %3633 = vmatprep.subr.mxu0 %v343
    %3634 = vmatpush1.msra.mxu0 %v342
    %3635 = vmatprep.subr.mxu0 %v347
    %3636 = vmatpush1.msra.mxu0 %v346
    %3637 = vmatprep.subr.mxu0 %v351
    %3638 = vmatpush1.msra.mxu0 %v350
    %3639 = vmatprep.subr.mxu0 %v355
    %3640 = vmatpush1.msra.mxu0 %v354
    %3641 = vmatprep.subr.mxu0 %v359
    %3642 = vmatpush1.msra.mxu0 %v358
    %3643 = vmatprep.subr.mxu0 %v363
    %3644 = vmatpush1.msra.mxu0 %v362
    %3645 = vmatprep.subr.mxu0 %v367
    %3646 = vmatpush1.msra.mxu0 %v366
    %3647 = vmatprep.subr.mxu0 %v371
    %3648 = vmatpush1.msra.mxu0 %v370
    %3649 = vmatprep.subr.mxu0 %v375
    %3650 = vmatpush1.msra.mxu0 %v374
    %3651 = vmatprep.subr.mxu0 %v379
    %3652 = vmatpush1.msra.mxu0 %v378
    %3653 = vmatprep.subr.mxu0 %v383
    %3654 = vmatpush1.msra.mxu0 %v382
    %3655 = vmatprep.subr.mxu0 %v387
    %3656 = vmatpush1.msra.mxu0 %v386
    %3657 = vmatprep.subr.mxu0 %v391
    %3658 = vmatpush1.msra.mxu0 %v390
    %3659 = vmatprep.subr.mxu0 %v395
    %3660 = vmatpush1.msra.mxu0 %v394
    %3661 = vmatprep.subr.mxu0 %v399
    %3662 = vmatpush1.msra.mxu0 %v398
    %3663 = vmatprep.subr.mxu0 %v403
    %3664 = vmatpush1.msra.mxu0 %v402
    %3665 = vmatprep.subr.mxu0 %v407
    %3666 = vmatpush1.msra.mxu0 %v406
    %3667 = vmatprep.subr.mxu0 %v411
    %3668 = vmatpush1.msra.mxu0 %v410
    %3669 = vmatprep.subr.mxu0 %v415
    %3670 = vmatpush1.msra.mxu0 %v414
    %3671 = vmatprep.mubr.f32.mxu0 %v3237
    %3672 = vmatmul.mubr.f32.gmra.mrb[0].mxu0 %v3229
    %v3673 = vpop.f32.mrb[0].mxu0
    %v3674 = vadd.f32 %v3603, %v3673
    %v3675 = vpop.f32.mrb[0].mxu0
    %v3676 = vadd.f32 %v3605, %v3675
    %3677 = vdwg.mxu0
    %3678 = vmatprep.subr.mxu0 %v419
    %3679 = vmatpush1.msra.mxu0 %v418
    %3680 = vmatprep.subr.mxu0 %v423
    %3681 = vmatpush1.msra.mxu0 %v422
    %3682 = vmatprep.subr.mxu0 %v427
    %3683 = vmatpush1.msra.mxu0 %v426
    %3684 = vmatprep.subr.mxu0 %v431
    %3685 = vmatpush1.msra.mxu0 %v430
    %3686 = vmatprep.subr.mxu0 %v435
    %3687 = vmatpush1.msra.mxu0 %v434
    %3688 = vmatprep.subr.mxu0 %v439
    %3689 = vmatpush1.msra.mxu0 %v438
    %3690 = vmatprep.subr.mxu0 %v443
    %3691 = vmatpush1.msra.mxu0 %v442
    %3692 = vmatprep.subr.mxu0 %v447
    %3693 = vmatpush1.msra.mxu0 %v446
    %3694 = vmatprep.subr.mxu0 %v451
    %3695 = vmatpush1.msra.mxu0 %v450
    %3696 = vmatprep.subr.mxu0 %v455
    %3697 = vmatpush1.msra.mxu0 %v454
    %3698 = vmatprep.subr.mxu0 %v459
    %3699 = vmatpush1.msra.mxu0 %v458
    %3700 = vmatprep.subr.mxu0 %v463
    %3701 = vmatpush1.msra.mxu0 %v462
    %3702 = vmatprep.subr.mxu0 %v467
    %3703 = vmatpush1.msra.mxu0 %v466
    %3704 = vmatprep.subr.mxu0 %v471
    %3705 = vmatpush1.msra.mxu0 %v470
    %3706 = vmatprep.subr.mxu0 %v475
    %3707 = vmatpush1.msra.mxu0 %v474
    %3708 = vmatprep.subr.mxu0 %v479
    %3709 = vmatpush1.msra.mxu0 %v478
    %3710 = vmatprep.subr.mxu0 %v483
    %3711 = vmatpush1.msra.mxu0 %v482
    %3712 = vmatprep.subr.mxu0 %v487
    %3713 = vmatpush1.msra.mxu0 %v486
    %3714 = vmatprep.subr.mxu0 %v491
    %3715 = vmatpush1.msra.mxu0 %v490
    %3716 = vmatprep.subr.mxu0 %v495
    %3717 = vmatpush1.msra.mxu0 %v494
    %3718 = vmatprep.subr.mxu0 %v499
    %3719 = vmatpush1.msra.mxu0 %v498
    %3720 = vmatprep.subr.mxu0 %v503
    %3721 = vmatpush1.msra.mxu0 %v502
    %3722 = vmatprep.subr.mxu0 %v507
    %3723 = vmatpush1.msra.mxu0 %v506
    %3724 = vmatprep.subr.mxu0 %v511
    %3725 = vmatpush1.msra.mxu0 %v510
    %3726 = vmatprep.subr.mxu0 %v515
    %3727 = vmatpush1.msra.mxu0 %v514
    %3728 = vmatprep.subr.mxu0 %v519
    %3729 = vmatpush1.msra.mxu0 %v518
    %3730 = vmatprep.subr.mxu0 %v523
    %3731 = vmatpush1.msra.mxu0 %v522
    %3732 = vmatprep.subr.mxu0 %v527
    %3733 = vmatpush1.msra.mxu0 %v526
    %3734 = vmatprep.subr.mxu0 %v531
    %3735 = vmatpush1.msra.mxu0 %v530
    %3736 = vmatprep.subr.mxu0 %v535
    %3737 = vmatpush1.msra.mxu0 %v534
    %3738 = vmatprep.subr.mxu0 %v539
    %3739 = vmatpush1.msra.mxu0 %v538
    %3740 = vmatprep.subr.mxu0 %v543
    %3741 = vmatpush1.msra.mxu0 %v542
    %3742 = vmatprep.mubr.f32.mxu0 %v3238
    %3743 = vmatmul.mubr.f32.gmra.mrb[0].mxu0 %v3236
    %v3744 = vpop.f32.mrb[0].mxu0
    %v3745 = vadd.f32 %v3674, %v3744
    %v3746 = vpop.f32.mrb[0].mxu0
    %v3747 = vadd.f32 %v3676, %v3746
    %3748 = vdwg.mxu0
    %3749 = vmatprep.subr.mxu0 %v547
    %3750 = vmatpush1.msra.mxu0 %v546
    %3751 = vmatprep.subr.mxu0 %v551
    %3752 = vmatpush1.msra.mxu0 %v550
    %3753 = vmatprep.subr.mxu0 %v555
    %3754 = vmatpush1.msra.mxu0 %v554
    %3755 = vmatprep.subr.mxu0 %v559
    %3756 = vmatpush1.msra.mxu0 %v558
    %3757 = vmatprep.subr.mxu0 %v563
    %3758 = vmatpush1.msra.mxu0 %v562
    %3759 = vmatprep.subr.mxu0 %v567
    %3760 = vmatpush1.msra.mxu0 %v566
    %3761 = vmatprep.subr.mxu0 %v571
    %3762 = vmatpush1.msra.mxu0 %v570
    %3763 = vmatprep.subr.mxu0 %v575
    %3764 = vmatpush1.msra.mxu0 %v574
    %3765 = vmatprep.subr.mxu0 %v579
    %3766 = vmatpush1.msra.mxu0 %v578
    %3767 = vmatprep.subr.mxu0 %v583
    %3768 = vmatpush1.msra.mxu0 %v582
    %3769 = vmatprep.subr.mxu0 %v587
    %3770 = vmatpush1.msra.mxu0 %v586
    %3771 = vmatprep.subr.mxu0 %v591
    %3772 = vmatpush1.msra.mxu0 %v590
    %3773 = vmatprep.subr.mxu0 %v595
    %3774 = vmatpush1.msra.mxu0 %v594
    %3775 = vmatprep.subr.mxu0 %v599
    %3776 = vmatpush1.msra.mxu0 %v598
    %3777 = vmatprep.subr.mxu0 %v603
    %3778 = vmatpush1.msra.mxu0 %v602
    %3779 = vmatprep.subr.mxu0 %v607
    %3780 = vmatpush1.msra.mxu0 %v606
    %3781 = vmatprep.subr.mxu0 %v611
    %3782 = vmatpush1.msra.mxu0 %v610
    %3783 = vmatprep.subr.mxu0 %v615
    %3784 = vmatpush1.msra.mxu0 %v614
    %3785 = vmatprep.subr.mxu0 %v619
    %3786 = vmatpush1.msra.mxu0 %v618
    %3787 = vmatprep.subr.mxu0 %v623
    %3788 = vmatpush1.msra.mxu0 %v622
    %3789 = vmatprep.subr.mxu0 %v627
    %3790 = vmatpush1.msra.mxu0 %v626
    %3791 = vmatprep.subr.mxu0 %v631
    %3792 = vmatpush1.msra.mxu0 %v630
    %3793 = vmatprep.subr.mxu0 %v635
    %3794 = vmatpush1.msra.mxu0 %v634
    %3795 = vmatprep.subr.mxu0 %v639
    %3796 = vmatpush1.msra.mxu0 %v638
    %3797 = vmatprep.subr.mxu0 %v643
    %3798 = vmatpush1.msra.mxu0 %v642
    %3799 = vmatprep.subr.mxu0 %v647
    %3800 = vmatpush1.msra.mxu0 %v646
    %3801 = vmatprep.subr.mxu0 %v651
    %3802 = vmatpush1.msra.mxu0 %v650
    %3803 = vmatprep.subr.mxu0 %v655
    %3804 = vmatpush1.msra.mxu0 %v654
    %3805 = vmatprep.subr.mxu0 %v659
    %3806 = vmatpush1.msra.mxu0 %v658
    %3807 = vmatprep.subr.mxu0 %v663
    %3808 = vmatpush1.msra.mxu0 %v662
    %3809 = vmatprep.subr.mxu0 %v667
    %3810 = vmatpush1.msra.mxu0 %v666
    %3811 = vmatprep.subr.mxu0 %v671
    %3812 = vmatpush1.msra.mxu0 %v670
    %3813 = vmatprep.mubr.f32.mxu0 %v3254
    %3814 = vmatmul.mubr.f32.gmra.mrb[0].mxu0 %v3246
    %v3815 = vpop.f32.mrb[0].mxu0
    %v3816 = vadd.f32 %v3745, %v3815
    %v3817 = vpop.f32.mrb[0].mxu0
    %v3818 = vadd.f32 %v3747, %v3817
    %3819 = vdwg.mxu0
    %3820 = vmatprep.subr.mxu0 %v675
    %3821 = vmatpush1.msra.mxu0 %v674
    %3822 = vmatprep.subr.mxu0 %v679
    %3823 = vmatpush1.msra.mxu0 %v678
    %3824 = vmatprep.subr.mxu0 %v683
    %3825 = vmatpush1.msra.mxu0 %v682
    %3826 = vmatprep.subr.mxu0 %v687
    %3827 = vmatpush1.msra.mxu0 %v686
    %3828 = vmatprep.subr.mxu0 %v691
    %3829 = vmatpush1.msra.mxu0 %v690
    %3830 = vmatprep.subr.mxu0 %v695
    %3831 = vmatpush1.msra.mxu0 %v694
    %3832 = vmatprep.subr.mxu0 %v699
    %3833 = vmatpush1.msra.mxu0 %v698
    %3834 = vmatprep.subr.mxu0 %v703
    %3835 = vmatpush1.msra.mxu0 %v702
    %3836 = vmatprep.subr.mxu0 %v707
    %3837 = vmatpush1.msra.mxu0 %v706
    %3838 = vmatprep.subr.mxu0 %v711
    %3839 = vmatpush1.msra.mxu0 %v710
    %3840 = vmatprep.subr.mxu0 %v715
    %3841 = vmatpush1.msra.mxu0 %v714
    %3842 = vmatprep.subr.mxu0 %v719
    %3843 = vmatpush1.msra.mxu0 %v718
    %3844 = vmatprep.subr.mxu0 %v723
    %3845 = vmatpush1.msra.mxu0 %v722
    %3846 = vmatprep.subr.mxu0 %v727
    %3847 = vmatpush1.msra.mxu0 %v726
    %3848 = vmatprep.subr.mxu0 %v731
    %3849 = vmatpush1.msra.mxu0 %v730
    %3850 = vmatprep.subr.mxu0 %v735
    %3851 = vmatpush1.msra.mxu0 %v734
    %3852 = vmatprep.subr.mxu0 %v739
    %3853 = vmatpush1.msra.mxu0 %v738
    %3854 = vmatprep.subr.mxu0 %v743
    %3855 = vmatpush1.msra.mxu0 %v742
    %3856 = vmatprep.subr.mxu0 %v747
    %3857 = vmatpush1.msra.mxu0 %v746
    %3858 = vmatprep.subr.mxu0 %v751
    %3859 = vmatpush1.msra.mxu0 %v750
    %3860 = vmatprep.subr.mxu0 %v755
    %3861 = vmatpush1.msra.mxu0 %v754
    %3862 = vmatprep.subr.mxu0 %v759
    %3863 = vmatpush1.msra.mxu0 %v758
    %3864 = vmatprep.subr.mxu0 %v763
    %3865 = vmatpush1.msra.mxu0 %v762
    %3866 = vmatprep.subr.mxu0 %v767
    %3867 = vmatpush1.msra.mxu0 %v766
    %3868 = vmatprep.subr.mxu0 %v771
    %3869 = vmatpush1.msra.mxu0 %v770
    %3870 = vmatprep.subr.mxu0 %v775
    %3871 = vmatpush1.msra.mxu0 %v774
    %3872 = vmatprep.subr.mxu0 %v779
    %3873 = vmatpush1.msra.mxu0 %v778
    %3874 = vmatprep.subr.mxu0 %v783
    %3875 = vmatpush1.msra.mxu0 %v782
    %3876 = vmatprep.subr.mxu0 %v787
    %3877 = vmatpush1.msra.mxu0 %v786
    %3878 = vmatprep.subr.mxu0 %v791
    %3879 = vmatpush1.msra.mxu0 %v790
    %3880 = vmatprep.subr.mxu0 %v795
    %3881 = vmatpush1.msra.mxu0 %v794
    %3882 = vmatprep.subr.mxu0 %v799
    %3883 = vmatpush1.msra.mxu0 %v798
    %3884 = vmatprep.mubr.f32.mxu0 %v3255
    %3885 = vmatmul.mubr.f32.gmra.mrb[0].mxu0 %v3253
    %v3886 = vpop.f32.mrb[0].mxu0
    %v3887 = vadd.f32 %v3816, %v3886
    %v3888 = vpop.f32.mrb[0].mxu0
    %v3889 = vadd.f32 %v3818, %v3888
    %3890 = vdwg.mxu0
    %3891 = vmatprep.subr.mxu0 %v803
    %3892 = vmatpush1.msra.mxu0 %v802
    %3893 = vmatprep.subr.mxu0 %v807
    %3894 = vmatpush1.msra.mxu0 %v806
    %3895 = vmatprep.subr.mxu0 %v811
    %3896 = vmatpush1.msra.mxu0 %v810
    %3897 = vmatprep.subr.mxu0 %v815
    %3898 = vmatpush1.msra.mxu0 %v814
    %3899 = vmatprep.subr.mxu0 %v819
    %3900 = vmatpush1.msra.mxu0 %v818
    %3901 = vmatprep.subr.mxu0 %v823
    %3902 = vmatpush1.msra.mxu0 %v822
    %3903 = vmatprep.subr.mxu0 %v827
    %3904 = vmatpush1.msra.mxu0 %v826
    %3905 = vmatprep.subr.mxu0 %v831
    %3906 = vmatpush1.msra.mxu0 %v830
    %3907 = vmatprep.subr.mxu0 %v835
    %3908 = vmatpush1.msra.mxu0 %v834
    %3909 = vmatprep.subr.mxu0 %v839
    %3910 = vmatpush1.msra.mxu0 %v838
    %3911 = vmatprep.subr.mxu0 %v843
    %3912 = vmatpush1.msra.mxu0 %v842
    %3913 = vmatprep.subr.mxu0 %v847
    %3914 = vmatpush1.msra.mxu0 %v846
    %3915 = vmatprep.subr.mxu0 %v851
    %3916 = vmatpush1.msra.mxu0 %v850
    %3917 = vmatprep.subr.mxu0 %v855
    %3918 = vmatpush1.msra.mxu0 %v854
    %3919 = vmatprep.subr.mxu0 %v859
    %3920 = vmatpush1.msra.mxu0 %v858
    %3921 = vmatprep.subr.mxu0 %v863
    %3922 = vmatpush1.msra.mxu0 %v862
    %3923 = vmatprep.subr.mxu0 %v867
    %3924 = vmatpush1.msra.mxu0 %v866
    %3925 = vmatprep.subr.mxu0 %v871
    %3926 = vmatpush1.msra.mxu0 %v870
    %3927 = vmatprep.subr.mxu0 %v875
    %3928 = vmatpush1.msra.mxu0 %v874
    %3929 = vmatprep.subr.mxu0 %v879
    %3930 = vmatpush1.msra.mxu0 %v878
    %3931 = vmatprep.subr.mxu0 %v883
    %3932 = vmatpush1.msra.mxu0 %v882
    %3933 = vmatprep.subr.mxu0 %v887
    %3934 = vmatpush1.msra.mxu0 %v886
    %3935 = vmatprep.subr.mxu0 %v891
    %3936 = vmatpush1.msra.mxu0 %v890
    %3937 = vmatprep.subr.mxu0 %v895
    %3938 = vmatpush1.msra.mxu0 %v894
    %3939 = vmatprep.subr.mxu0 %v899
    %3940 = vmatpush1.msra.mxu0 %v898
    %3941 = vmatprep.subr.mxu0 %v903
    %3942 = vmatpush1.msra.mxu0 %v902
    %3943 = vmatprep.subr.mxu0 %v907
    %3944 = vmatpush1.msra.mxu0 %v906
    %3945 = vmatprep.subr.mxu0 %v911
    %3946 = vmatpush1.msra.mxu0 %v910
    %3947 = vmatprep.subr.mxu0 %v915
    %3948 = vmatpush1.msra.mxu0 %v914
    %3949 = vmatprep.subr.mxu0 %v919
    %3950 = vmatpush1.msra.mxu0 %v918
    %3951 = vmatprep.subr.mxu0 %v923
    %3952 = vmatpush1.msra.mxu0 %v922
    %3953 = vmatprep.subr.mxu0 %v927
    %3954 = vmatpush1.msra.mxu0 %v926
    %3955 = vmatprep.mubr.f32.mxu0 %v3271
    %3956 = vmatmul.mubr.f32.gmra.mrb[0].mxu0 %v3263
    %v3957 = vpop.f32.mrb[0].mxu0
    %v3958 = vadd.f32 %v3887, %v3957
    %v3959 = vpop.f32.mrb[0].mxu0
    %v3960 = vadd.f32 %v3889, %v3959
    %3961 = vdwg.mxu0
    %3962 = vmatprep.subr.mxu0 %v931
    %3963 = vmatpush1.msra.mxu0 %v930
    %3964 = vmatprep.subr.mxu0 %v935
    %3965 = vmatpush1.msra.mxu0 %v934
    %3966 = vmatprep.subr.mxu0 %v939
    %3967 = vmatpush1.msra.mxu0 %v938
    %3968 = vmatprep.subr.mxu0 %v943
    %3969 = vmatpush1.msra.mxu0 %v942
    %3970 = vmatprep.subr.mxu0 %v947
    %3971 = vmatpush1.msra.mxu0 %v946
    %3972 = vmatprep.subr.mxu0 %v951
    %3973 = vmatpush1.msra.mxu0 %v950
    %3974 = vmatprep.subr.mxu0 %v955
    %3975 = vmatpush1.msra.mxu0 %v954
    %3976 = vmatprep.subr.mxu0 %v959
    %3977 = vmatpush1.msra.mxu0 %v958
    %3978 = vmatprep.subr.mxu0 %v963
    %3979 = vmatpush1.msra.mxu0 %v962
    %3980 = vmatprep.subr.mxu0 %v967
    %3981 = vmatpush1.msra.mxu0 %v966
    %3982 = vmatprep.subr.mxu0 %v971
    %3983 = vmatpush1.msra.mxu0 %v970
    %3984 = vmatprep.subr.mxu0 %v975
    %3985 = vmatpush1.msra.mxu0 %v974
    %3986 = vmatprep.subr.mxu0 %v979
    %3987 = vmatpush1.msra.mxu0 %v978
    %3988 = vmatprep.subr.mxu0 %v983
    %3989 = vmatpush1.msra.mxu0 %v982
    %3990 = vmatprep.subr.mxu0 %v987
    %3991 = vmatpush1.msra.mxu0 %v986
    %3992 = vmatprep.subr.mxu0 %v991
    %3993 = vmatpush1.msra.mxu0 %v990
    %3994 = vmatprep.subr.mxu0 %v995
    %3995 = vmatpush1.msra.mxu0 %v994
    %3996 = vmatprep.subr.mxu0 %v999
    %3997 = vmatpush1.msra.mxu0 %v998
    %3998 = vmatprep.subr.mxu0 %v1003
    %3999 = vmatpush1.msra.mxu0 %v1002
    %4000 = vmatprep.subr.mxu0 %v1007
    %4001 = vmatpush1.msra.mxu0 %v1006
    %4002 = vmatprep.subr.mxu0 %v1011
    %4003 = vmatpush1.msra.mxu0 %v1010
    %4004 = vmatprep.subr.mxu0 %v1015
    %4005 = vmatpush1.msra.mxu0 %v1014
    %4006 = vmatprep.subr.mxu0 %v1019
    %4007 = vmatpush1.msra.mxu0 %v1018
    %4008 = vmatprep.subr.mxu0 %v1023
    %4009 = vmatpush1.msra.mxu0 %v1022
    %4010 = vmatprep.subr.mxu0 %v1027
    %4011 = vmatpush1.msra.mxu0 %v1026
    %4012 = vmatprep.subr.mxu0 %v1031
    %4013 = vmatpush1.msra.mxu0 %v1030
    %4014 = vmatprep.subr.mxu0 %v1035
    %4015 = vmatpush1.msra.mxu0 %v1034
    %4016 = vmatprep.subr.mxu0 %v1039
    %4017 = vmatpush1.msra.mxu0 %v1038
    %4018 = vmatprep.subr.mxu0 %v1043
    %4019 = vmatpush1.msra.mxu0 %v1042
    %4020 = vmatprep.subr.mxu0 %v1047
    %4021 = vmatpush1.msra.mxu0 %v1046
    %4022 = vmatprep.subr.mxu0 %v1051
    %4023 = vmatpush1.msra.mxu0 %v1050
    %4024 = vmatprep.subr.mxu0 %v1055
    %4025 = vmatpush1.msra.mxu0 %v1054
    %4026 = vmatprep.mubr.f32.mxu0 %v3272
    %4027 = vmatmul.mubr.f32.gmra.mrb[0].mxu0 %v3270
    %v4028 = vpop.f32.mrb[0].mxu0
    %v4029 = vadd.f32 %v3958, %v4028
    %v4030 = vpop.f32.mrb[0].mxu0
    %v4031 = vadd.f32 %v3960, %v4030
    %4032 = vdwg.mxu0
    %4033 = vmatprep.subr.mxu0 %v1059
    %4034 = vmatpush1.msra.mxu0 %v1058
    %4035 = vmatprep.subr.mxu0 %v1063
    %4036 = vmatpush1.msra.mxu0 %v1062
    %4037 = vmatprep.subr.mxu0 %v1067
    %4038 = vmatpush1.msra.mxu0 %v1066
    %4039 = vmatprep.subr.mxu0 %v1071
    %4040 = vmatpush1.msra.mxu0 %v1070
    %4041 = vmatprep.subr.mxu0 %v1075
    %4042 = vmatpush1.msra.mxu0 %v1074
    %4043 = vmatprep.subr.mxu0 %v1079
    %4044 = vmatpush1.msra.mxu0 %v1078
    %4045 = vmatprep.subr.mxu0 %v1083
    %4046 = vmatpush1.msra.mxu0 %v1082
    %4047 = vmatprep.subr.mxu0 %v1087
    %4048 = vmatpush1.msra.mxu0 %v1086
    %4049 = vmatprep.subr.mxu0 %v1091
    %4050 = vmatpush1.msra.mxu0 %v1090
    %4051 = vmatprep.subr.mxu0 %v1095
    %4052 = vmatpush1.msra.mxu0 %v1094
    %4053 = vmatprep.subr.mxu0 %v1099
    %4054 = vmatpush1.msra.mxu0 %v1098
    %4055 = vmatprep.subr.mxu0 %v1103
    %4056 = vmatpush1.msra.mxu0 %v1102
    %4057 = vmatprep.subr.mxu0 %v1107
    %4058 = vmatpush1.msra.mxu0 %v1106
    %4059 = vmatprep.subr.mxu0 %v1111
    %4060 = vmatpush1.msra.mxu0 %v1110
    %4061 = vmatprep.subr.mxu0 %v1115
    %4062 = vmatpush1.msra.mxu0 %v1114
    %4063 = vmatprep.subr.mxu0 %v1119
    %4064 = vmatpush1.msra.mxu0 %v1118
    %4065 = vmatprep.subr.mxu0 %v1123
    %4066 = vmatpush1.msra.mxu0 %v1122
    %4067 = vmatprep.subr.mxu0 %v1127
    %4068 = vmatpush1.msra.mxu0 %v1126
    %4069 = vmatprep.subr.mxu0 %v1131
    %4070 = vmatpush1.msra.mxu0 %v1130
    %4071 = vmatprep.subr.mxu0 %v1135
    %4072 = vmatpush1.msra.mxu0 %v1134
    %4073 = vmatprep.subr.mxu0 %v1139
    %4074 = vmatpush1.msra.mxu0 %v1138
    %4075 = vmatprep.subr.mxu0 %v1143
    %4076 = vmatpush1.msra.mxu0 %v1142
    %4077 = vmatprep.subr.mxu0 %v1147
    %4078 = vmatpush1.msra.mxu0 %v1146
    %4079 = vmatprep.subr.mxu0 %v1151
    %4080 = vmatpush1.msra.mxu0 %v1150
    %4081 = vmatprep.subr.mxu0 %v1155
    %4082 = vmatpush1.msra.mxu0 %v1154
    %4083 = vmatprep.subr.mxu0 %v1159
    %4084 = vmatpush1.msra.mxu0 %v1158
    %4085 = vmatprep.subr.mxu0 %v1163
    %4086 = vmatpush1.msra.mxu0 %v1162
    %4087 = vmatprep.subr.mxu0 %v1167
    %4088 = vmatpush1.msra.mxu0 %v1166
    %4089 = vmatprep.subr.mxu0 %v1171
    %4090 = vmatpush1.msra.mxu0 %v1170
    %4091 = vmatprep.subr.mxu0 %v1175
    %4092 = vmatpush1.msra.mxu0 %v1174
    %4093 = vmatprep.subr.mxu0 %v1179
    %4094 = vmatpush1.msra.mxu0 %v1178
    %4095 = vmatprep.subr.mxu0 %v1183
    %4096 = vmatpush1.msra.mxu0 %v1182
    %4097 = vmatprep.mubr.f32.mxu0 %v3288
    %4098 = vmatmul.mubr.f32.gmra.mrb[0].mxu0 %v3280
    %v4099 = vpop.f32.mrb[0].mxu0
    %v4100 = vadd.f32 %v4029, %v4099
    %v4101 = vpop.f32.mrb[0].mxu0
    %v4102 = vadd.f32 %v4031, %v4101
    %4103 = vdwg.mxu0
    %4104 = vmatprep.subr.mxu0 %v1187
    %4105 = vmatpush1.msra.mxu0 %v1186
    %4106 = vmatprep.subr.mxu0 %v1191
    %4107 = vmatpush1.msra.mxu0 %v1190
    %4108 = vmatprep.subr.mxu0 %v1195
    %4109 = vmatpush1.msra.mxu0 %v1194
    %4110 = vmatprep.subr.mxu0 %v1199
    %4111 = vmatpush1.msra.mxu0 %v1198
    %4112 = vmatprep.subr.mxu0 %v1203
    %4113 = vmatpush1.msra.mxu0 %v1202
    %4114 = vmatprep.subr.mxu0 %v1207
    %4115 = vmatpush1.msra.mxu0 %v1206
    %4116 = vmatprep.subr.mxu0 %v1211
    %4117 = vmatpush1.msra.mxu0 %v1210
    %4118 = vmatprep.subr.mxu0 %v1215
    %4119 = vmatpush1.msra.mxu0 %v1214
    %4120 = vmatprep.subr.mxu0 %v1219
    %4121 = vmatpush1.msra.mxu0 %v1218
    %4122 = vmatprep.subr.mxu0 %v1223
    %4123 = vmatpush1.msra.mxu0 %v1222
    %4124 = vmatprep.subr.mxu0 %v1227
    %4125 = vmatpush1.msra.mxu0 %v1226
    %4126 = vmatprep.subr.mxu0 %v1231
    %4127 = vmatpush1.msra.mxu0 %v1230
    %4128 = vmatprep.subr.mxu0 %v1235
    %4129 = vmatpush1.msra.mxu0 %v1234
    %4130 = vmatprep.subr.mxu0 %v1239
    %4131 = vmatpush1.msra.mxu0 %v1238
    %4132 = vmatprep.subr.mxu0 %v1243
    %4133 = vmatpush1.msra.mxu0 %v1242
    %4134 = vmatprep.subr.mxu0 %v1247
    %4135 = vmatpush1.msra.mxu0 %v1246
    %4136 = vmatprep.subr.mxu0 %v1251
    %4137 = vmatpush1.msra.mxu0 %v1250
    %4138 = vmatprep.subr.mxu0 %v1255
    %4139 = vmatpush1.msra.mxu0 %v1254
    %4140 = vmatprep.subr.mxu0 %v1259
    %4141 = vmatpush1.msra.mxu0 %v1258
    %4142 = vmatprep.subr.mxu0 %v1263
    %4143 = vmatpush1.msra.mxu0 %v1262
    %4144 = vmatprep.subr.mxu0 %v1267
    %4145 = vmatpush1.msra.mxu0 %v1266
    %4146 = vmatprep.subr.mxu0 %v1271
    %4147 = vmatpush1.msra.mxu0 %v1270
    %4148 = vmatprep.subr.mxu0 %v1275
    %4149 = vmatpush1.msra.mxu0 %v1274
    %4150 = vmatprep.subr.mxu0 %v1279
    %4151 = vmatpush1.msra.mxu0 %v1278
    %4152 = vmatprep.subr.mxu0 %v1283
    %4153 = vmatpush1.msra.mxu0 %v1282
    %4154 = vmatprep.subr.mxu0 %v1287
    %4155 = vmatpush1.msra.mxu0 %v1286
    %4156 = vmatprep.subr.mxu0 %v1291
    %4157 = vmatpush1.msra.mxu0 %v1290
    %4158 = vmatprep.subr.mxu0 %v1295
    %4159 = vmatpush1.msra.mxu0 %v1294
    %4160 = vmatprep.subr.mxu0 %v1299
    %4161 = vmatpush1.msra.mxu0 %v1298
    %4162 = vmatprep.subr.mxu0 %v1303
    %4163 = vmatpush1.msra.mxu0 %v1302
    %4164 = vmatprep.subr.mxu0 %v1307
    %4165 = vmatpush1.msra.mxu0 %v1306
    %4166 = vmatprep.subr.mxu0 %v1311
    %4167 = vmatpush1.msra.mxu0 %v1310
    %4168 = vmatprep.mubr.f32.mxu0 %v3289
    %4169 = vmatmul.mubr.f32.gmra.mrb[0].mxu0 %v3287
    %v4170 = vpop.f32.mrb[0].mxu0
    %v4171 = vadd.f32 %v4100, %v4170
    %v4172 = vpop.f32.mrb[0].mxu0
    %v4173 = vadd.f32 %v4102, %v4172
    %4174 = vdwg.mxu0
    %4175 = vmatprep.subr.mxu0 %v1315
    %4176 = vmatpush1.msra.mxu0 %v1314
    %4177 = vmatprep.subr.mxu0 %v1319
    %4178 = vmatpush1.msra.mxu0 %v1318
    %4179 = vmatprep.subr.mxu0 %v1323
    %4180 = vmatpush1.msra.mxu0 %v1322
    %4181 = vmatprep.subr.mxu0 %v1327
    %4182 = vmatpush1.msra.mxu0 %v1326
    %4183 = vmatprep.subr.mxu0 %v1331
    %4184 = vmatpush1.msra.mxu0 %v1330
    %4185 = vmatprep.subr.mxu0 %v1335
    %4186 = vmatpush1.msra.mxu0 %v1334
    %4187 = vmatprep.subr.mxu0 %v1339
    %4188 = vmatpush1.msra.mxu0 %v1338
    %4189 = vmatprep.subr.mxu0 %v1343
    %4190 = vmatpush1.msra.mxu0 %v1342
    %4191 = vmatprep.subr.mxu0 %v1347
    %4192 = vmatpush1.msra.mxu0 %v1346
    %4193 = vmatprep.subr.mxu0 %v1351
    %4194 = vmatpush1.msra.mxu0 %v1350
    %4195 = vmatprep.subr.mxu0 %v1355
    %4196 = vmatpush1.msra.mxu0 %v1354
    %4197 = vmatprep.subr.mxu0 %v1359
    %4198 = vmatpush1.msra.mxu0 %v1358
    %4199 = vmatprep.subr.mxu0 %v1363
    %4200 = vmatpush1.msra.mxu0 %v1362
    %4201 = vmatprep.subr.mxu0 %v1367
    %4202 = vmatpush1.msra.mxu0 %v1366
    %4203 = vmatprep.subr.mxu0 %v1371
    %4204 = vmatpush1.msra.mxu0 %v1370
    %4205 = vmatprep.subr.mxu0 %v1375
    %4206 = vmatpush1.msra.mxu0 %v1374
    %4207 = vmatprep.subr.mxu0 %v1379
    %4208 = vmatpush1.msra.mxu0 %v1378
    %4209 = vmatprep.subr.mxu0 %v1383
    %4210 = vmatpush1.msra.mxu0 %v1382
    %4211 = vmatprep.subr.mxu0 %v1387
    %4212 = vmatpush1.msra.mxu0 %v1386
    %4213 = vmatprep.subr.mxu0 %v1391
    %4214 = vmatpush1.msra.mxu0 %v1390
    %4215 = vmatprep.subr.mxu0 %v1395
    %4216 = vmatpush1.msra.mxu0 %v1394
    %4217 = vmatprep.subr.mxu0 %v1399
    %4218 = vmatpush1.msra.mxu0 %v1398
    %4219 = vmatprep.subr.mxu0 %v1403
    %4220 = vmatpush1.msra.mxu0 %v1402
    %4221 = vmatprep.subr.mxu0 %v1407
    %4222 = vmatpush1.msra.mxu0 %v1406
    %4223 = vmatprep.subr.mxu0 %v1411
    %4224 = vmatpush1.msra.mxu0 %v1410
    %4225 = vmatprep.subr.mxu0 %v1415
    %4226 = vmatpush1.msra.mxu0 %v1414
    %4227 = vmatprep.subr.mxu0 %v1419
    %4228 = vmatpush1.msra.mxu0 %v1418
    %4229 = vmatprep.subr.mxu0 %v1423
    %4230 = vmatpush1.msra.mxu0 %v1422
    %4231 = vmatprep.subr.mxu0 %v1427
    %4232 = vmatpush1.msra.mxu0 %v1426
    %4233 = vmatprep.subr.mxu0 %v1431
    %4234 = vmatpush1.msra.mxu0 %v1430
    %4235 = vmatprep.subr.mxu0 %v1435
    %4236 = vmatpush1.msra.mxu0 %v1434
    %4237 = vmatprep.subr.mxu0 %v1439
    %4238 = vmatpush1.msra.mxu0 %v1438
    %4239 = vmatprep.mubr.f32.mxu0 %v3305
    %4240 = vmatmul.mubr.f32.gmra.mrb[0].mxu0 %v3297
    %v4241 = vpop.f32.mrb[0].mxu0
    %v4242 = vadd.f32 %v4171, %v4241
    %v4243 = vpop.f32.mrb[0].mxu0
    %v4244 = vadd.f32 %v4173, %v4243
    %4245 = vdwg.mxu0
    %4246 = vmatprep.subr.mxu0 %v1443
    %4247 = vmatpush1.msra.mxu0 %v1442
    %4248 = vmatprep.subr.mxu0 %v1447
    %4249 = vmatpush1.msra.mxu0 %v1446
    %4250 = vmatprep.subr.mxu0 %v1451
    %4251 = vmatpush1.msra.mxu0 %v1450
    %4252 = vmatprep.subr.mxu0 %v1455
    %4253 = vmatpush1.msra.mxu0 %v1454
    %4254 = vmatprep.subr.mxu0 %v1459
    %4255 = vmatpush1.msra.mxu0 %v1458
    %4256 = vmatprep.subr.mxu0 %v1463
    %4257 = vmatpush1.msra.mxu0 %v1462
    %4258 = vmatprep.subr.mxu0 %v1467
    %4259 = vmatpush1.msra.mxu0 %v1466
    %4260 = vmatprep.subr.mxu0 %v1471
    %4261 = vmatpush1.msra.mxu0 %v1470
    %4262 = vmatprep.subr.mxu0 %v1475
    %4263 = vmatpush1.msra.mxu0 %v1474
    %4264 = vmatprep.subr.mxu0 %v1479
    %4265 = vmatpush1.msra.mxu0 %v1478
    %4266 = vmatprep.subr.mxu0 %v1483
    %4267 = vmatpush1.msra.mxu0 %v1482
    %4268 = vmatprep.subr.mxu0 %v1487
    %4269 = vmatpush1.msra.mxu0 %v1486
    %4270 = vmatprep.subr.mxu0 %v1491
    %4271 = vmatpush1.msra.mxu0 %v1490
    %4272 = vmatprep.subr.mxu0 %v1495
    %4273 = vmatpush1.msra.mxu0 %v1494
    %4274 = vmatprep.subr.mxu0 %v1499
    %4275 = vmatpush1.msra.mxu0 %v1498
    %4276 = vmatprep.subr.mxu0 %v1503
    %4277 = vmatpush1.msra.mxu0 %v1502
    %4278 = vmatprep.subr.mxu0 %v1507
    %4279 = vmatpush1.msra.mxu0 %v1506
    %4280 = vmatprep.subr.mxu0 %v1511
    %4281 = vmatpush1.msra.mxu0 %v1510
    %4282 = vmatprep.subr.mxu0 %v1515
    %4283 = vmatpush1.msra.mxu0 %v1514
    %4284 = vmatprep.subr.mxu0 %v1519
    %4285 = vmatpush1.msra.mxu0 %v1518
    %4286 = vmatprep.subr.mxu0 %v1523
    %4287 = vmatpush1.msra.mxu0 %v1522
    %4288 = vmatprep.subr.mxu0 %v1527
    %4289 = vmatpush1.msra.mxu0 %v1526
    %4290 = vmatprep.subr.mxu0 %v1531
    %4291 = vmatpush1.msra.mxu0 %v1530
    %4292 = vmatprep.subr.mxu0 %v1535
    %4293 = vmatpush1.msra.mxu0 %v1534
    %4294 = vmatprep.subr.mxu0 %v1539
    %4295 = vmatpush1.msra.mxu0 %v1538
    %4296 = vmatprep.subr.mxu0 %v1543
    %4297 = vmatpush1.msra.mxu0 %v1542
    %4298 = vmatprep.subr.mxu0 %v1547
    %4299 = vmatpush1.msra.mxu0 %v1546
    %4300 = vmatprep.subr.mxu0 %v1551
    %4301 = vmatpush1.msra.mxu0 %v1550
    %4302 = vmatprep.subr.mxu0 %v1555
    %4303 = vmatpush1.msra.mxu0 %v1554
    %4304 = vmatprep.subr.mxu0 %v1559
    %4305 = vmatpush1.msra.mxu0 %v1558
    %4306 = vmatprep.subr.mxu0 %v1563
    %4307 = vmatpush1.msra.mxu0 %v1562
    %4308 = vmatprep.subr.mxu0 %v1567
    %4309 = vmatpush1.msra.mxu0 %v1566
    %4310 = vmatprep.mubr.f32.mxu0 %v3306
    %4311 = vmatmul.mubr.f32.gmra.mrb[0].mxu0 %v3304
    %v4312 = vpop.f32.mrb[0].mxu0
    %v4313 = vadd.f32 %v4242, %v4312
    %v4314 = vpop.f32.mrb[0].mxu0
    %v4315 = vadd.f32 %v4244, %v4314
    %4316 = vdwg.mxu0
    %4317 = vmatprep.subr.mxu0 %v1571
    %4318 = vmatpush1.msra.mxu0 %v1570
    %4319 = vmatprep.subr.mxu0 %v1575
    %4320 = vmatpush1.msra.mxu0 %v1574
    %4321 = vmatprep.subr.mxu0 %v1579
    %4322 = vmatpush1.msra.mxu0 %v1578
    %4323 = vmatprep.subr.mxu0 %v1583
    %4324 = vmatpush1.msra.mxu0 %v1582
    %4325 = vmatprep.subr.mxu0 %v1587
    %4326 = vmatpush1.msra.mxu0 %v1586
    %4327 = vmatprep.subr.mxu0 %v1591
    %4328 = vmatpush1.msra.mxu0 %v1590
    %4329 = vmatprep.subr.mxu0 %v1595
    %4330 = vmatpush1.msra.mxu0 %v1594
    %4331 = vmatprep.subr.mxu0 %v1599
    %4332 = vmatpush1.msra.mxu0 %v1598
    %4333 = vmatprep.subr.mxu0 %v1603
    %4334 = vmatpush1.msra.mxu0 %v1602
    %4335 = vmatprep.subr.mxu0 %v1607
    %4336 = vmatpush1.msra.mxu0 %v1606
    %4337 = vmatprep.subr.mxu0 %v1611
    %4338 = vmatpush1.msra.mxu0 %v1610
    %4339 = vmatprep.subr.mxu0 %v1615
    %4340 = vmatpush1.msra.mxu0 %v1614
    %4341 = vmatprep.subr.mxu0 %v1619
    %4342 = vmatpush1.msra.mxu0 %v1618
    %4343 = vmatprep.subr.mxu0 %v1623
    %4344 = vmatpush1.msra.mxu0 %v1622
    %4345 = vmatprep.subr.mxu0 %v1627
    %4346 = vmatpush1.msra.mxu0 %v1626
    %4347 = vmatprep.subr.mxu0 %v1631
    %4348 = vmatpush1.msra.mxu0 %v1630
    %4349 = vmatprep.subr.mxu0 %v1635
    %4350 = vmatpush1.msra.mxu0 %v1634
    %4351 = vmatprep.subr.mxu0 %v1639
    %4352 = vmatpush1.msra.mxu0 %v1638
    %4353 = vmatprep.subr.mxu0 %v1643
    %4354 = vmatpush1.msra.mxu0 %v1642
    %4355 = vmatprep.subr.mxu0 %v1647
    %4356 = vmatpush1.msra.mxu0 %v1646
    %4357 = vmatprep.subr.mxu0 %v1651
    %4358 = vmatpush1.msra.mxu0 %v1650
    %4359 = vmatprep.subr.mxu0 %v1655
    %4360 = vmatpush1.msra.mxu0 %v1654
    %4361 = vmatprep.subr.mxu0 %v1659
    %4362 = vmatpush1.msra.mxu0 %v1658
    %4363 = vmatprep.subr.mxu0 %v1663
    %4364 = vmatpush1.msra.mxu0 %v1662
    %4365 = vmatprep.subr.mxu0 %v1667
    %4366 = vmatpush1.msra.mxu0 %v1666
    %4367 = vmatprep.subr.mxu0 %v1671
    %4368 = vmatpush1.msra.mxu0 %v1670
    %4369 = vmatprep.subr.mxu0 %v1675
    %4370 = vmatpush1.msra.mxu0 %v1674
    %4371 = vmatprep.subr.mxu0 %v1679
    %4372 = vmatpush1.msra.mxu0 %v1678
    %4373 = vmatprep.subr.mxu0 %v1683
    %4374 = vmatpush1.msra.mxu0 %v1682
    %4375 = vmatprep.subr.mxu0 %v1687
    %4376 = vmatpush1.msra.mxu0 %v1686
    %4377 = vmatprep.subr.mxu0 %v1691
    %4378 = vmatpush1.msra.mxu0 %v1690
    %4379 = vmatprep.subr.mxu0 %v1695
    %4380 = vmatpush1.msra.mxu0 %v1694
    %4381 = vmatprep.mubr.f32.mxu0 %v3322
    %4382 = vmatmul.mubr.f32.gmra.mrb[0].mxu0 %v3314
    %v4383 = vpop.f32.mrb[0].mxu0
    %v4384 = vadd.f32 %v4313, %v4383
    %v4385 = vpop.f32.mrb[0].mxu0
    %v4386 = vadd.f32 %v4315, %v4385
    %4387 = vdwg.mxu0
    %4388 = vmatprep.subr.mxu0 %v1699
    %4389 = vmatpush1.msra.mxu0 %v1698
    %4390 = vmatprep.subr.mxu0 %v1703
    %4391 = vmatpush1.msra.mxu0 %v1702
    %4392 = vmatprep.subr.mxu0 %v1707
    %4393 = vmatpush1.msra.mxu0 %v1706
    %4394 = vmatprep.subr.mxu0 %v1711
    %4395 = vmatpush1.msra.mxu0 %v1710
    %4396 = vmatprep.subr.mxu0 %v1715
    %4397 = vmatpush1.msra.mxu0 %v1714
    %4398 = vmatprep.subr.mxu0 %v1719
    %4399 = vmatpush1.msra.mxu0 %v1718
    %4400 = vmatprep.subr.mxu0 %v1723
    %4401 = vmatpush1.msra.mxu0 %v1722
    %4402 = vmatprep.subr.mxu0 %v1727
    %4403 = vmatpush1.msra.mxu0 %v1726
    %4404 = vmatprep.subr.mxu0 %v1731
    %4405 = vmatpush1.msra.mxu0 %v1730
    %4406 = vmatprep.subr.mxu0 %v1735
    %4407 = vmatpush1.msra.mxu0 %v1734
    %4408 = vmatprep.subr.mxu0 %v1739
    %4409 = vmatpush1.msra.mxu0 %v1738
    %4410 = vmatprep.subr.mxu0 %v1743
    %4411 = vmatpush1.msra.mxu0 %v1742
    %4412 = vmatprep.subr.mxu0 %v1747
    %4413 = vmatpush1.msra.mxu0 %v1746
    %4414 = vmatprep.subr.mxu0 %v1751
    %4415 = vmatpush1.msra.mxu0 %v1750
    %4416 = vmatprep.subr.mxu0 %v1755
    %4417 = vmatpush1.msra.mxu0 %v1754
    %4418 = vmatprep.subr.mxu0 %v1759
    %4419 = vmatpush1.msra.mxu0 %v1758
    %4420 = vmatprep.subr.mxu0 %v1763
    %4421 = vmatpush1.msra.mxu0 %v1762
    %4422 = vmatprep.subr.mxu0 %v1767
    %4423 = vmatpush1.msra.mxu0 %v1766
    %4424 = vmatprep.subr.mxu0 %v1771
    %4425 = vmatpush1.msra.mxu0 %v1770
    %4426 = vmatprep.subr.mxu0 %v1775
    %4427 = vmatpush1.msra.mxu0 %v1774
    %4428 = vmatprep.subr.mxu0 %v1779
    %4429 = vmatpush1.msra.mxu0 %v1778
    %4430 = vmatprep.subr.mxu0 %v1783
    %4431 = vmatpush1.msra.mxu0 %v1782
    %4432 = vmatprep.subr.mxu0 %v1787
    %4433 = vmatpush1.msra.mxu0 %v1786
    %4434 = vmatprep.subr.mxu0 %v1791
    %4435 = vmatpush1.msra.mxu0 %v1790
    %4436 = vmatprep.subr.mxu0 %v1795
    %4437 = vmatpush1.msra.mxu0 %v1794
    %4438 = vmatprep.subr.mxu0 %v1799
    %4439 = vmatpush1.msra.mxu0 %v1798
    %4440 = vmatprep.subr.mxu0 %v1803
    %4441 = vmatpush1.msra.mxu0 %v1802
    %4442 = vmatprep.subr.mxu0 %v1807
    %4443 = vmatpush1.msra.mxu0 %v1806
    %4444 = vmatprep.subr.mxu0 %v1811
    %4445 = vmatpush1.msra.mxu0 %v1810
    %4446 = vmatprep.subr.mxu0 %v1815
    %4447 = vmatpush1.msra.mxu0 %v1814
    %4448 = vmatprep.subr.mxu0 %v1819
    %4449 = vmatpush1.msra.mxu0 %v1818
    %4450 = vmatprep.subr.mxu0 %v1823
    %4451 = vmatpush1.msra.mxu0 %v1822
    %4452 = vmatprep.mubr.f32.mxu0 %v3323
    %4453 = vmatmul.mubr.f32.gmra.mrb[0].mxu0 %v3321
    %v4454 = vpop.f32.mrb[0].mxu0
    %v4455 = vadd.f32 %v4384, %v4454
    %v4456 = vpop.f32.mrb[0].mxu0
    %v4457 = vadd.f32 %v4386, %v4456
    %4458 = vdwg.mxu0
    %4459 = vmatprep.subr.mxu0 %v1827
    %4460 = vmatpush1.msra.mxu0 %v1826
    %4461 = vmatprep.subr.mxu0 %v1831
    %4462 = vmatpush1.msra.mxu0 %v1830
    %4463 = vmatprep.subr.mxu0 %v1835
    %4464 = vmatpush1.msra.mxu0 %v1834
    %4465 = vmatprep.subr.mxu0 %v1839
    %4466 = vmatpush1.msra.mxu0 %v1838
    %4467 = vmatprep.subr.mxu0 %v1843
    %4468 = vmatpush1.msra.mxu0 %v1842
    %4469 = vmatprep.subr.mxu0 %v1847
    %4470 = vmatpush1.msra.mxu0 %v1846
    %4471 = vmatprep.subr.mxu0 %v1851
    %4472 = vmatpush1.msra.mxu0 %v1850
    %4473 = vmatprep.subr.mxu0 %v1855
    %4474 = vmatpush1.msra.mxu0 %v1854
    %4475 = vmatprep.subr.mxu0 %v1859
    %4476 = vmatpush1.msra.mxu0 %v1858
    %4477 = vmatprep.subr.mxu0 %v1863
    %4478 = vmatpush1.msra.mxu0 %v1862
    %4479 = vmatprep.subr.mxu0 %v1867
    %4480 = vmatpush1.msra.mxu0 %v1866
    %4481 = vmatprep.subr.mxu0 %v1871
    %4482 = vmatpush1.msra.mxu0 %v1870
    %4483 = vmatprep.subr.mxu0 %v1875
    %4484 = vmatpush1.msra.mxu0 %v1874
    %4485 = vmatprep.subr.mxu0 %v1879
    %4486 = vmatpush1.msra.mxu0 %v1878
    %4487 = vmatprep.subr.mxu0 %v1883
    %4488 = vmatpush1.msra.mxu0 %v1882
    %4489 = vmatprep.subr.mxu0 %v1887
    %4490 = vmatpush1.msra.mxu0 %v1886
    %4491 = vmatprep.subr.mxu0 %v1891
    %4492 = vmatpush1.msra.mxu0 %v1890
    %4493 = vmatprep.subr.mxu0 %v1895
    %4494 = vmatpush1.msra.mxu0 %v1894
    %4495 = vmatprep.subr.mxu0 %v1899
    %4496 = vmatpush1.msra.mxu0 %v1898
    %4497 = vmatprep.subr.mxu0 %v1903
    %4498 = vmatpush1.msra.mxu0 %v1902
    %4499 = vmatprep.subr.mxu0 %v1907
    %4500 = vmatpush1.msra.mxu0 %v1906
    %4501 = vmatprep.subr.mxu0 %v1911
    %4502 = vmatpush1.msra.mxu0 %v1910
    %4503 = vmatprep.subr.mxu0 %v1915
    %4504 = vmatpush1.msra.mxu0 %v1914
    %4505 = vmatprep.subr.mxu0 %v1919
    %4506 = vmatpush1.msra.mxu0 %v1918
    %4507 = vmatprep.subr.mxu0 %v1923
    %4508 = vmatpush1.msra.mxu0 %v1922
    %4509 = vmatprep.subr.mxu0 %v1927
    %4510 = vmatpush1.msra.mxu0 %v1926
    %4511 = vmatprep.subr.mxu0 %v1931
    %4512 = vmatpush1.msra.mxu0 %v1930
    %4513 = vmatprep.subr.mxu0 %v1935
    %4514 = vmatpush1.msra.mxu0 %v1934
    %4515 = vmatprep.subr.mxu0 %v1939
    %4516 = vmatpush1.msra.mxu0 %v1938
    %4517 = vmatprep.subr.mxu0 %v1943
    %4518 = vmatpush1.msra.mxu0 %v1942
    %4519 = vmatprep.subr.mxu0 %v1947
    %4520 = vmatpush1.msra.mxu0 %v1946
    %4521 = vmatprep.subr.mxu0 %v1951
    %4522 = vmatpush1.msra.mxu0 %v1950
    %4523 = vmatprep.mubr.f32.mxu0 %v3339
    %4524 = vmatmul.mubr.f32.gmra.mrb[0].mxu0 %v3331
    %v4525 = vpop.f32.mrb[0].mxu0
    %v4526 = vadd.f32 %v4455, %v4525
    %v4527 = vpop.f32.mrb[0].mxu0
    %v4528 = vadd.f32 %v4457, %v4527
    %4529 = vdwg.mxu0
    %4530 = vmatprep.subr.mxu0 %v1955
    %4531 = vmatpush1.msra.mxu0 %v1954
    %4532 = vmatprep.subr.mxu0 %v1959
    %4533 = vmatpush1.msra.mxu0 %v1958
    %4534 = vmatprep.subr.mxu0 %v1963
    %4535 = vmatpush1.msra.mxu0 %v1962
    %4536 = vmatprep.subr.mxu0 %v1967
    %4537 = vmatpush1.msra.mxu0 %v1966
    %4538 = vmatprep.subr.mxu0 %v1971
    %4539 = vmatpush1.msra.mxu0 %v1970
    %4540 = vmatprep.subr.mxu0 %v1975
    %4541 = vmatpush1.msra.mxu0 %v1974
    %4542 = vmatprep.subr.mxu0 %v1979
    %4543 = vmatpush1.msra.mxu0 %v1978
    %4544 = vmatprep.subr.mxu0 %v1983
    %4545 = vmatpush1.msra.mxu0 %v1982
    %4546 = vmatprep.subr.mxu0 %v1987
    %4547 = vmatpush1.msra.mxu0 %v1986
    %4548 = vmatprep.subr.mxu0 %v1991
    %4549 = vmatpush1.msra.mxu0 %v1990
    %4550 = vmatprep.subr.mxu0 %v1995
    %4551 = vmatpush1.msra.mxu0 %v1994
    %4552 = vmatprep.subr.mxu0 %v1999
    %4553 = vmatpush1.msra.mxu0 %v1998
    %4554 = vmatprep.subr.mxu0 %v2003
    %4555 = vmatpush1.msra.mxu0 %v2002
    %4556 = vmatprep.subr.mxu0 %v2007
    %4557 = vmatpush1.msra.mxu0 %v2006
    %4558 = vmatprep.subr.mxu0 %v2011
    %4559 = vmatpush1.msra.mxu0 %v2010
    %4560 = vmatprep.subr.mxu0 %v2015
    %4561 = vmatpush1.msra.mxu0 %v2014
    %4562 = vmatprep.subr.mxu0 %v2019
    %4563 = vmatpush1.msra.mxu0 %v2018
    %4564 = vmatprep.subr.mxu0 %v2023
    %4565 = vmatpush1.msra.mxu0 %v2022
    %4566 = vmatprep.subr.mxu0 %v2027
    %4567 = vmatpush1.msra.mxu0 %v2026
    %4568 = vmatprep.subr.mxu0 %v2031
    %4569 = vmatpush1.msra.mxu0 %v2030
    %4570 = vmatprep.subr.mxu0 %v2035
    %4571 = vmatpush1.msra.mxu0 %v2034
    %4572 = vmatprep.subr.mxu0 %v2039
    %4573 = vmatpush1.msra.mxu0 %v2038
    %4574 = vmatprep.subr.mxu0 %v2043
    %4575 = vmatpush1.msra.mxu0 %v2042
    %4576 = vmatprep.subr.mxu0 %v2047
    %4577 = vmatpush1.msra.mxu0 %v2046
    %4578 = vmatprep.subr.mxu0 %v2051
    %4579 = vmatpush1.msra.mxu0 %v2050
    %4580 = vmatprep.subr.mxu0 %v2055
    %4581 = vmatpush1.msra.mxu0 %v2054
    %4582 = vmatprep.subr.mxu0 %v2059
    %4583 = vmatpush1.msra.mxu0 %v2058
    %4584 = vmatprep.subr.mxu0 %v2063
    %4585 = vmatpush1.msra.mxu0 %v2062
    %4586 = vmatprep.subr.mxu0 %v2067
    %4587 = vmatpush1.msra.mxu0 %v2066
    %4588 = vmatprep.subr.mxu0 %v2071
    %4589 = vmatpush1.msra.mxu0 %v2070
    %4590 = vmatprep.subr.mxu0 %v2075
    %4591 = vmatpush1.msra.mxu0 %v2074
    %4592 = vmatprep.subr.mxu0 %v2079
    %4593 = vmatpush1.msra.mxu0 %v2078
    %4594 = vmatprep.mubr.f32.mxu0 %v3340
    %4595 = vmatmul.mubr.f32.gmra.mrb[0].mxu0 %v3338
    %v4596 = vpop.f32.mrb[0].mxu0
    %v4597 = vadd.f32 %v4526, %v4596
    %v4598 = vpop.f32.mrb[0].mxu0
    %v4599 = vadd.f32 %v4528, %v4598
    %4600 = vdwg.mxu0
    %4601 = vmatprep.subr.mxu0 %v2083
    %4602 = vmatpush1.msra.mxu0 %v2082
    %4603 = vmatprep.subr.mxu0 %v2087
    %4604 = vmatpush1.msra.mxu0 %v2086
    %4605 = vmatprep.subr.mxu0 %v2091
    %4606 = vmatpush1.msra.mxu0 %v2090
    %4607 = vmatprep.subr.mxu0 %v2095
    %4608 = vmatpush1.msra.mxu0 %v2094
    %4609 = vmatprep.subr.mxu0 %v2099
    %4610 = vmatpush1.msra.mxu0 %v2098
    %4611 = vmatprep.subr.mxu0 %v2103
    %4612 = vmatpush1.msra.mxu0 %v2102
    %4613 = vmatprep.subr.mxu0 %v2107
    %4614 = vmatpush1.msra.mxu0 %v2106
    %4615 = vmatprep.subr.mxu0 %v2111
    %4616 = vmatpush1.msra.mxu0 %v2110
    %4617 = vmatprep.subr.mxu0 %v2115
    %4618 = vmatpush1.msra.mxu0 %v2114
    %4619 = vmatprep.subr.mxu0 %v2119
    %4620 = vmatpush1.msra.mxu0 %v2118
    %4621 = vmatprep.subr.mxu0 %v2123
    %4622 = vmatpush1.msra.mxu0 %v2122
    %4623 = vmatprep.subr.mxu0 %v2127
    %4624 = vmatpush1.msra.mxu0 %v2126
    %4625 = vmatprep.subr.mxu0 %v2131
    %4626 = vmatpush1.msra.mxu0 %v2130
    %4627 = vmatprep.subr.mxu0 %v2135
    %4628 = vmatpush1.msra.mxu0 %v2134
    %4629 = vmatprep.subr.mxu0 %v2139
    %4630 = vmatpush1.msra.mxu0 %v2138
    %4631 = vmatprep.subr.mxu0 %v2143
    %4632 = vmatpush1.msra.mxu0 %v2142
    %4633 = vmatprep.subr.mxu0 %v2147
    %4634 = vmatpush1.msra.mxu0 %v2146
    %4635 = vmatprep.subr.mxu0 %v2151
    %4636 = vmatpush1.msra.mxu0 %v2150
    %4637 = vmatprep.subr.mxu0 %v2155
    %4638 = vmatpush1.msra.mxu0 %v2154
    %4639 = vmatprep.subr.mxu0 %v2159
    %4640 = vmatpush1.msra.mxu0 %v2158
    %4641 = vmatprep.subr.mxu0 %v2163
    %4642 = vmatpush1.msra.mxu0 %v2162
    %4643 = vmatprep.subr.mxu0 %v2167
    %4644 = vmatpush1.msra.mxu0 %v2166
    %4645 = vmatprep.subr.mxu0 %v2171
    %4646 = vmatpush1.msra.mxu0 %v2170
    %4647 = vmatprep.subr.mxu0 %v2175
    %4648 = vmatpush1.msra.mxu0 %v2174
    %4649 = vmatprep.subr.mxu0 %v2179
    %4650 = vmatpush1.msra.mxu0 %v2178
    %4651 = vmatprep.subr.mxu0 %v2183
    %4652 = vmatpush1.msra.mxu0 %v2182
    %4653 = vmatprep.subr.mxu0 %v2187
    %4654 = vmatpush1.msra.mxu0 %v2186
    %4655 = vmatprep.subr.mxu0 %v2191
    %4656 = vmatpush1.msra.mxu0 %v2190
    %4657 = vmatprep.subr.mxu0 %v2195
    %4658 = vmatpush1.msra.mxu0 %v2194
    %4659 = vmatprep.subr.mxu0 %v2199
    %4660 = vmatpush1.msra.mxu0 %v2198
    %4661 = vmatprep.subr.mxu0 %v2203
    %4662 = vmatpush1.msra.mxu0 %v2202
    %4663 = vmatprep.subr.mxu0 %v2207
    %4664 = vmatpush1.msra.mxu0 %v2206
    %4665 = vmatprep.mubr.f32.mxu0 %v3356
    %4666 = vmatmul.mubr.f32.gmra.mrb[0].mxu0 %v3348
    %v4667 = vpop.f32.mrb[0].mxu0
    %v4668 = vadd.f32 %v4597, %v4667
    %v4669 = vpop.f32.mrb[0].mxu0
    %v4670 = vadd.f32 %v4599, %v4669
    %4671 = vdwg.mxu0
    %4672 = vmatprep.subr.mxu0 %v2211
    %4673 = vmatpush1.msra.mxu0 %v2210
    %4674 = vmatprep.subr.mxu0 %v2215
    %4675 = vmatpush1.msra.mxu0 %v2214
    %4676 = vmatprep.subr.mxu0 %v2219
    %4677 = vmatpush1.msra.mxu0 %v2218
    %4678 = vmatprep.subr.mxu0 %v2223
    %4679 = vmatpush1.msra.mxu0 %v2222
    %4680 = vmatprep.subr.mxu0 %v2227
    %4681 = vmatpush1.msra.mxu0 %v2226
    %4682 = vmatprep.subr.mxu0 %v2231
    %4683 = vmatpush1.msra.mxu0 %v2230
    %4684 = vmatprep.subr.mxu0 %v2235
    %4685 = vmatpush1.msra.mxu0 %v2234
    %4686 = vmatprep.subr.mxu0 %v2239
    %4687 = vmatpush1.msra.mxu0 %v2238
    %4688 = vmatprep.subr.mxu0 %v2243
    %4689 = vmatpush1.msra.mxu0 %v2242
    %4690 = vmatprep.subr.mxu0 %v2247
    %4691 = vmatpush1.msra.mxu0 %v2246
    %4692 = vmatprep.subr.mxu0 %v2251
    %4693 = vmatpush1.msra.mxu0 %v2250
    %4694 = vmatprep.subr.mxu0 %v2255
    %4695 = vmatpush1.msra.mxu0 %v2254
    %4696 = vmatprep.subr.mxu0 %v2259
    %4697 = vmatpush1.msra.mxu0 %v2258
    %4698 = vmatprep.subr.mxu0 %v2263
    %4699 = vmatpush1.msra.mxu0 %v2262
    %4700 = vmatprep.subr.mxu0 %v2267
    %4701 = vmatpush1.msra.mxu0 %v2266
    %4702 = vmatprep.subr.mxu0 %v2271
    %4703 = vmatpush1.msra.mxu0 %v2270
    %4704 = vmatprep.subr.mxu0 %v2275
    %4705 = vmatpush1.msra.mxu0 %v2274
    %4706 = vmatprep.subr.mxu0 %v2279
    %4707 = vmatpush1.msra.mxu0 %v2278
    %4708 = vmatprep.subr.mxu0 %v2283
    %4709 = vmatpush1.msra.mxu0 %v2282
    %4710 = vmatprep.subr.mxu0 %v2287
    %4711 = vmatpush1.msra.mxu0 %v2286
    %4712 = vmatprep.subr.mxu0 %v2291
    %4713 = vmatpush1.msra.mxu0 %v2290
    %4714 = vmatprep.subr.mxu0 %v2295
    %4715 = vmatpush1.msra.mxu0 %v2294
    %4716 = vmatprep.subr.mxu0 %v2299
    %4717 = vmatpush1.msra.mxu0 %v2298
    %4718 = vmatprep.subr.mxu0 %v2303
    %4719 = vmatpush1.msra.mxu0 %v2302
    %4720 = vmatprep.subr.mxu0 %v2307
    %4721 = vmatpush1.msra.mxu0 %v2306
    %4722 = vmatprep.subr.mxu0 %v2311
    %4723 = vmatpush1.msra.mxu0 %v2310
    %4724 = vmatprep.subr.mxu0 %v2315
    %4725 = vmatpush1.msra.mxu0 %v2314
    %4726 = vmatprep.subr.mxu0 %v2319
    %4727 = vmatpush1.msra.mxu0 %v2318
    %4728 = vmatprep.subr.mxu0 %v2323
    %4729 = vmatpush1.msra.mxu0 %v2322
    %4730 = vmatprep.subr.mxu0 %v2327
    %4731 = vmatpush1.msra.mxu0 %v2326
    %4732 = vmatprep.subr.mxu0 %v2331
    %4733 = vmatpush1.msra.mxu0 %v2330
    %4734 = vmatprep.subr.mxu0 %v2335
    %4735 = vmatpush1.msra.mxu0 %v2334
    %4736 = vmatprep.mubr.f32.mxu0 %v3357
    %4737 = vmatmul.mubr.f32.gmra.mrb[0].mxu0 %v3355
    %v4738 = vpop.f32.mrb[0].mxu0
    %v4739 = vadd.f32 %v4668, %v4738
    %v4740 = vpop.f32.mrb[0].mxu0
    %v4741 = vadd.f32 %v4670, %v4740
    %4742 = vdwg.mxu0
    %4743 = vmatprep.subr.mxu0 %v2339
    %4744 = vmatpush1.msra.mxu0 %v2338
    %4745 = vmatprep.subr.mxu0 %v2343
    %4746 = vmatpush1.msra.mxu0 %v2342
    %4747 = vmatprep.subr.mxu0 %v2347
    %4748 = vmatpush1.msra.mxu0 %v2346
    %4749 = vmatprep.subr.mxu0 %v2351
    %4750 = vmatpush1.msra.mxu0 %v2350
    %4751 = vmatprep.subr.mxu0 %v2355
    %4752 = vmatpush1.msra.mxu0 %v2354
    %4753 = vmatprep.subr.mxu0 %v2359
    %4754 = vmatpush1.msra.mxu0 %v2358
    %4755 = vmatprep.subr.mxu0 %v2363
    %4756 = vmatpush1.msra.mxu0 %v2362
    %4757 = vmatprep.subr.mxu0 %v2367
    %4758 = vmatpush1.msra.mxu0 %v2366
    %4759 = vmatprep.subr.mxu0 %v2371
    %4760 = vmatpush1.msra.mxu0 %v2370
    %4761 = vmatprep.subr.mxu0 %v2375
    %4762 = vmatpush1.msra.mxu0 %v2374
    %4763 = vmatprep.subr.mxu0 %v2379
    %4764 = vmatpush1.msra.mxu0 %v2378
    %4765 = vmatprep.subr.mxu0 %v2383
    %4766 = vmatpush1.msra.mxu0 %v2382
    %4767 = vmatprep.subr.mxu0 %v2387
    %4768 = vmatpush1.msra.mxu0 %v2386
    %4769 = vmatprep.subr.mxu0 %v2391
    %4770 = vmatpush1.msra.mxu0 %v2390
    %4771 = vmatprep.subr.mxu0 %v2395
    %4772 = vmatpush1.msra.mxu0 %v2394
    %4773 = vmatprep.subr.mxu0 %v2399
    %4774 = vmatpush1.msra.mxu0 %v2398
    %4775 = vmatprep.subr.mxu0 %v2403
    %4776 = vmatpush1.msra.mxu0 %v2402
    %4777 = vmatprep.subr.mxu0 %v2407
    %4778 = vmatpush1.msra.mxu0 %v2406
    %4779 = vmatprep.subr.mxu0 %v2411
    %4780 = vmatpush1.msra.mxu0 %v2410
    %4781 = vmatprep.subr.mxu0 %v2415
    %4782 = vmatpush1.msra.mxu0 %v2414
    %4783 = vmatprep.subr.mxu0 %v2419
    %4784 = vmatpush1.msra.mxu0 %v2418
    %4785 = vmatprep.subr.mxu0 %v2423
    %4786 = vmatpush1.msra.mxu0 %v2422
    %4787 = vmatprep.subr.mxu0 %v2427
    %4788 = vmatpush1.msra.mxu0 %v2426
    %4789 = vmatprep.subr.mxu0 %v2431
    %4790 = vmatpush1.msra.mxu0 %v2430
    %4791 = vmatprep.subr.mxu0 %v2435
    %4792 = vmatpush1.msra.mxu0 %v2434
    %4793 = vmatprep.subr.mxu0 %v2439
    %4794 = vmatpush1.msra.mxu0 %v2438
    %4795 = vmatprep.subr.mxu0 %v2443
    %4796 = vmatpush1.msra.mxu0 %v2442
    %4797 = vmatprep.subr.mxu0 %v2447
    %4798 = vmatpush1.msra.mxu0 %v2446
    %4799 = vmatprep.subr.mxu0 %v2451
    %4800 = vmatpush1.msra.mxu0 %v2450
    %4801 = vmatprep.subr.mxu0 %v2455
    %4802 = vmatpush1.msra.mxu0 %v2454
    %4803 = vmatprep.subr.mxu0 %v2459
    %4804 = vmatpush1.msra.mxu0 %v2458
    %4805 = vmatprep.subr.mxu0 %v2463
    %4806 = vmatpush1.msra.mxu0 %v2462
    %4807 = vmatprep.mubr.f32.mxu0 %v3373
    %4808 = vmatmul.mubr.f32.gmra.mrb[0].mxu0 %v3365
    %v4809 = vpop.f32.mrb[0].mxu0
    %v4810 = vadd.f32 %v4739, %v4809
    %v4811 = vpop.f32.mrb[0].mxu0
    %v4812 = vadd.f32 %v4741, %v4811
    %4813 = vdwg.mxu0
    %4814 = vmatprep.subr.mxu0 %v2467
    %4815 = vmatpush1.msra.mxu0 %v2466
    %4816 = vmatprep.subr.mxu0 %v2471
    %4817 = vmatpush1.msra.mxu0 %v2470
    %4818 = vmatprep.subr.mxu0 %v2475
    %4819 = vmatpush1.msra.mxu0 %v2474
    %4820 = vmatprep.subr.mxu0 %v2479
    %4821 = vmatpush1.msra.mxu0 %v2478
    %4822 = vmatprep.subr.mxu0 %v2483
    %4823 = vmatpush1.msra.mxu0 %v2482
    %4824 = vmatprep.subr.mxu0 %v2487
    %4825 = vmatpush1.msra.mxu0 %v2486
    %4826 = vmatprep.subr.mxu0 %v2491
    %4827 = vmatpush1.msra.mxu0 %v2490
    %4828 = vmatprep.subr.mxu0 %v2495
    %4829 = vmatpush1.msra.mxu0 %v2494
    %4830 = vmatprep.subr.mxu0 %v2499
    %4831 = vmatpush1.msra.mxu0 %v2498
    %4832 = vmatprep.subr.mxu0 %v2503
    %4833 = vmatpush1.msra.mxu0 %v2502
    %4834 = vmatprep.subr.mxu0 %v2507
    %4835 = vmatpush1.msra.mxu0 %v2506
    %4836 = vmatprep.subr.mxu0 %v2511
    %4837 = vmatpush1.msra.mxu0 %v2510
    %4838 = vmatprep.subr.mxu0 %v2515
    %4839 = vmatpush1.msra.mxu0 %v2514
    %4840 = vmatprep.subr.mxu0 %v2519
    %4841 = vmatpush1.msra.mxu0 %v2518
    %4842 = vmatprep.subr.mxu0 %v2523
    %4843 = vmatpush1.msra.mxu0 %v2522
    %4844 = vmatprep.subr.mxu0 %v2527
    %4845 = vmatpush1.msra.mxu0 %v2526
    %4846 = vmatprep.subr.mxu0 %v2531
    %4847 = vmatpush1.msra.mxu0 %v2530
    %4848 = vmatprep.subr.mxu0 %v2535
    %4849 = vmatpush1.msra.mxu0 %v2534
    %4850 = vmatprep.subr.mxu0 %v2539
    %4851 = vmatpush1.msra.mxu0 %v2538
    %4852 = vmatprep.subr.mxu0 %v2543
    %4853 = vmatpush1.msra.mxu0 %v2542
    %4854 = vmatprep.subr.mxu0 %v2547
    %4855 = vmatpush1.msra.mxu0 %v2546
    %4856 = vmatprep.subr.mxu0 %v2551
    %4857 = vmatpush1.msra.mxu0 %v2550
    %4858 = vmatprep.subr.mxu0 %v2555
    %4859 = vmatpush1.msra.mxu0 %v2554
    %4860 = vmatprep.subr.mxu0 %v2559
    %4861 = vmatpush1.msra.mxu0 %v2558
    %4862 = vmatprep.subr.mxu0 %v2563
    %4863 = vmatpush1.msra.mxu0 %v2562
    %4864 = vmatprep.subr.mxu0 %v2567
    %4865 = vmatpush1.msra.mxu0 %v2566
    %4866 = vmatprep.subr.mxu0 %v2571
    %4867 = vmatpush1.msra.mxu0 %v2570
    %4868 = vmatprep.subr.mxu0 %v2575
    %4869 = vmatpush1.msra.mxu0 %v2574
    %4870 = vmatprep.subr.mxu0 %v2579
    %4871 = vmatpush1.msra.mxu0 %v2578
    %4872 = vmatprep.subr.mxu0 %v2583
    %4873 = vmatpush1.msra.mxu0 %v2582
    %4874 = vmatprep.subr.mxu0 %v2587
    %4875 = vmatpush1.msra.mxu0 %v2586
    %4876 = vmatprep.subr.mxu0 %v2591
    %4877 = vmatpush1.msra.mxu0 %v2590
    %4878 = vmatprep.mubr.f32.mxu0 %v3374
    %4879 = vmatmul.mubr.f32.gmra.mrb[0].mxu0 %v3372
    %v4880 = vpop.f32.mrb[0].mxu0
    %v4881 = vadd.f32 %v4810, %v4880
    %v4882 = vpop.f32.mrb[0].mxu0
    %v4883 = vadd.f32 %v4812, %v4882
    %4884 = vdwg.mxu0
    %4885 = vmatprep.subr.mxu0 %v2595
    %4886 = vmatpush1.msra.mxu0 %v2594
    %4887 = vmatprep.subr.mxu0 %v2599
    %4888 = vmatpush1.msra.mxu0 %v2598
    %4889 = vmatprep.subr.mxu0 %v2603
    %4890 = vmatpush1.msra.mxu0 %v2602
    %4891 = vmatprep.subr.mxu0 %v2607
    %4892 = vmatpush1.msra.mxu0 %v2606
    %4893 = vmatprep.subr.mxu0 %v2611
    %4894 = vmatpush1.msra.mxu0 %v2610
    %4895 = vmatprep.subr.mxu0 %v2615
    %4896 = vmatpush1.msra.mxu0 %v2614
    %4897 = vmatprep.subr.mxu0 %v2619
    %4898 = vmatpush1.msra.mxu0 %v2618
    %4899 = vmatprep.subr.mxu0 %v2623
    %4900 = vmatpush1.msra.mxu0 %v2622
    %4901 = vmatprep.subr.mxu0 %v2627
    %4902 = vmatpush1.msra.mxu0 %v2626
    %4903 = vmatprep.subr.mxu0 %v2631
    %4904 = vmatpush1.msra.mxu0 %v2630
    %4905 = vmatprep.subr.mxu0 %v2635
    %4906 = vmatpush1.msra.mxu0 %v2634
    %4907 = vmatprep.subr.mxu0 %v2639
    %4908 = vmatpush1.msra.mxu0 %v2638
    %4909 = vmatprep.subr.mxu0 %v2643
    %4910 = vmatpush1.msra.mxu0 %v2642
    %4911 = vmatprep.subr.mxu0 %v2647
    %4912 = vmatpush1.msra.mxu0 %v2646
    %4913 = vmatprep.subr.mxu0 %v2651
    %4914 = vmatpush1.msra.mxu0 %v2650
    %4915 = vmatprep.subr.mxu0 %v2655
    %4916 = vmatpush1.msra.mxu0 %v2654
    %4917 = vmatprep.subr.mxu0 %v2659
    %4918 = vmatpush1.msra.mxu0 %v2658
    %4919 = vmatprep.subr.mxu0 %v2663
    %4920 = vmatpush1.msra.mxu0 %v2662
    %4921 = vmatprep.subr.mxu0 %v2667
    %4922 = vmatpush1.msra.mxu0 %v2666
    %4923 = vmatprep.subr.mxu0 %v2671
    %4924 = vmatpush1.msra.mxu0 %v2670
    %4925 = vmatprep.subr.mxu0 %v2675
    %4926 = vmatpush1.msra.mxu0 %v2674
    %4927 = vmatprep.subr.mxu0 %v2679
    %4928 = vmatpush1.msra.mxu0 %v2678
    %4929 = vmatprep.subr.mxu0 %v2683
    %4930 = vmatpush1.msra.mxu0 %v2682
    %4931 = vmatprep.subr.mxu0 %v2687
    %4932 = vmatpush1.msra.mxu0 %v2686
    %4933 = vmatprep.subr.mxu0 %v2691
    %4934 = vmatpush1.msra.mxu0 %v2690
    %4935 = vmatprep.subr.mxu0 %v2695
    %4936 = vmatpush1.msra.mxu0 %v2694
    %4937 = vmatprep.subr.mxu0 %v2699
    %4938 = vmatpush1.msra.mxu0 %v2698
    %4939 = vmatprep.subr.mxu0 %v2703
    %4940 = vmatpush1.msra.mxu0 %v2702
    %4941 = vmatprep.subr.mxu0 %v2707
    %4942 = vmatpush1.msra.mxu0 %v2706
    %4943 = vmatprep.subr.mxu0 %v2711
    %4944 = vmatpush1.msra.mxu0 %v2710
    %4945 = vmatprep.subr.mxu0 %v2715
    %4946 = vmatpush1.msra.mxu0 %v2714
    %4947 = vmatprep.subr.mxu0 %v2719
    %4948 = vmatpush1.msra.mxu0 %v2718
    %4949 = vmatprep.mubr.f32.mxu0 %v3390
    %4950 = vmatmul.mubr.f32.gmra.mrb[0].mxu0 %v3382
    %v4951 = vpop.f32.mrb[0].mxu0
    %v4952 = vadd.f32 %v4881, %v4951
    %v4953 = vpop.f32.mrb[0].mxu0
    %v4954 = vadd.f32 %v4883, %v4953
    %4955 = vdwg.mxu0
    %4956 = vmatprep.subr.mxu0 %v2723
    %4957 = vmatpush1.msra.mxu0 %v2722
    %4958 = vmatprep.subr.mxu0 %v2727
    %4959 = vmatpush1.msra.mxu0 %v2726
    %4960 = vmatprep.subr.mxu0 %v2731
    %4961 = vmatpush1.msra.mxu0 %v2730
    %4962 = vmatprep.subr.mxu0 %v2735
    %4963 = vmatpush1.msra.mxu0 %v2734
    %4964 = vmatprep.subr.mxu0 %v2739
    %4965 = vmatpush1.msra.mxu0 %v2738
    %4966 = vmatprep.subr.mxu0 %v2743
    %4967 = vmatpush1.msra.mxu0 %v2742
    %4968 = vmatprep.subr.mxu0 %v2747
    %4969 = vmatpush1.msra.mxu0 %v2746
    %4970 = vmatprep.subr.mxu0 %v2751
    %4971 = vmatpush1.msra.mxu0 %v2750
    %4972 = vmatprep.subr.mxu0 %v2755
    %4973 = vmatpush1.msra.mxu0 %v2754
    %4974 = vmatprep.subr.mxu0 %v2759
    %4975 = vmatpush1.msra.mxu0 %v2758
    %4976 = vmatprep.subr.mxu0 %v2763
    %4977 = vmatpush1.msra.mxu0 %v2762
    %4978 = vmatprep.subr.mxu0 %v2767
    %4979 = vmatpush1.msra.mxu0 %v2766
    %4980 = vmatprep.subr.mxu0 %v2771
    %4981 = vmatpush1.msra.mxu0 %v2770
    %4982 = vmatprep.subr.mxu0 %v2775
    %4983 = vmatpush1.msra.mxu0 %v2774
    %4984 = vmatprep.subr.mxu0 %v2779
    %4985 = vmatpush1.msra.mxu0 %v2778
    %4986 = vmatprep.subr.mxu0 %v2783
    %4987 = vmatpush1.msra.mxu0 %v2782
    %4988 = vmatprep.subr.mxu0 %v2787
    %4989 = vmatpush1.msra.mxu0 %v2786
    %4990 = vmatprep.subr.mxu0 %v2791
    %4991 = vmatpush1.msra.mxu0 %v2790
    %4992 = vmatprep.subr.mxu0 %v2795
    %4993 = vmatpush1.msra.mxu0 %v2794
    %4994 = vmatprep.subr.mxu0 %v2799
    %4995 = vmatpush1.msra.mxu0 %v2798
    %4996 = vmatprep.subr.mxu0 %v2803
    %4997 = vmatpush1.msra.mxu0 %v2802
    %4998 = vmatprep.subr.mxu0 %v2807
    %4999 = vmatpush1.msra.mxu0 %v2806
    %5000 = vmatprep.subr.mxu0 %v2811
    %5001 = vmatpush1.msra.mxu0 %v2810
    %5002 = vmatprep.subr.mxu0 %v2815
    %5003 = vmatpush1.msra.mxu0 %v2814
    %5004 = vmatprep.subr.mxu0 %v2819
    %5005 = vmatpush1.msra.mxu0 %v2818
    %5006 = vmatprep.subr.mxu0 %v2823
    %5007 = vmatpush1.msra.mxu0 %v2822
    %5008 = vmatprep.subr.mxu0 %v2827
    %5009 = vmatpush1.msra.mxu0 %v2826
    %5010 = vmatprep.subr.mxu0 %v2831
    %5011 = vmatpush1.msra.mxu0 %v2830
    %5012 = vmatprep.subr.mxu0 %v2835
    %5013 = vmatpush1.msra.mxu0 %v2834
    %5014 = vmatprep.subr.mxu0 %v2839
    %5015 = vmatpush1.msra.mxu0 %v2838
    %5016 = vmatprep.subr.mxu0 %v2843
    %5017 = vmatpush1.msra.mxu0 %v2842
    %5018 = vmatprep.subr.mxu0 %v2847
    %5019 = vmatpush1.msra.mxu0 %v2846
    %5020 = vmatprep.mubr.f32.mxu0 %v3391
    %5021 = vmatmul.mubr.f32.gmra.mrb[0].mxu0 %v3389
    %v5022 = vpop.f32.mrb[0].mxu0
    %v5023 = vadd.f32 %v4952, %v5022
    %v5024 = vpop.f32.mrb[0].mxu0
    %v5025 = vadd.f32 %v4954, %v5024
    %5026 = vdwg.mxu0
    %5027 = vmatprep.subr.mxu0 %v2851
    %5028 = vmatpush1.msra.mxu0 %v2850
    %5029 = vmatprep.subr.mxu0 %v2855
    %5030 = vmatpush1.msra.mxu0 %v2854
    %5031 = vmatprep.subr.mxu0 %v2859
    %5032 = vmatpush1.msra.mxu0 %v2858
    %5033 = vmatprep.subr.mxu0 %v2863
    %5034 = vmatpush1.msra.mxu0 %v2862
    %5035 = vmatprep.subr.mxu0 %v2867
    %5036 = vmatpush1.msra.mxu0 %v2866
    %5037 = vmatprep.subr.mxu0 %v2871
    %5038 = vmatpush1.msra.mxu0 %v2870
    %5039 = vmatprep.subr.mxu0 %v2875
    %5040 = vmatpush1.msra.mxu0 %v2874
    %5041 = vmatprep.subr.mxu0 %v2879
    %5042 = vmatpush1.msra.mxu0 %v2878
    %5043 = vmatprep.subr.mxu0 %v2883
    %5044 = vmatpush1.msra.mxu0 %v2882
    %5045 = vmatprep.subr.mxu0 %v2887
    %5046 = vmatpush1.msra.mxu0 %v2886
    %5047 = vmatprep.subr.mxu0 %v2891
    %5048 = vmatpush1.msra.mxu0 %v2890
    %5049 = vmatprep.subr.mxu0 %v2895
    %5050 = vmatpush1.msra.mxu0 %v2894
    %5051 = vmatprep.subr.mxu0 %v2899
    %5052 = vmatpush1.msra.mxu0 %v2898
    %5053 = vmatprep.subr.mxu0 %v2903
    %5054 = vmatpush1.msra.mxu0 %v2902
    %5055 = vmatprep.subr.mxu0 %v2907
    %5056 = vmatpush1.msra.mxu0 %v2906
    %5057 = vmatprep.subr.mxu0 %v2911
    %5058 = vmatpush1.msra.mxu0 %v2910
    %5059 = vmatprep.subr.mxu0 %v2915
    %5060 = vmatpush1.msra.mxu0 %v2914
    %5061 = vmatprep.subr.mxu0 %v2919
    %5062 = vmatpush1.msra.mxu0 %v2918
    %5063 = vmatprep.subr.mxu0 %v2923
    %5064 = vmatpush1.msra.mxu0 %v2922
    %5065 = vmatprep.subr.mxu0 %v2927
    %5066 = vmatpush1.msra.mxu0 %v2926
    %5067 = vmatprep.subr.mxu0 %v2931
    %5068 = vmatpush1.msra.mxu0 %v2930
    %5069 = vmatprep.subr.mxu0 %v2935
    %5070 = vmatpush1.msra.mxu0 %v2934
    %5071 = vmatprep.subr.mxu0 %v2939
    %5072 = vmatpush1.msra.mxu0 %v2938
    %5073 = vmatprep.subr.mxu0 %v2943
    %5074 = vmatpush1.msra.mxu0 %v2942
    %5075 = vmatprep.subr.mxu0 %v2947
    %5076 = vmatpush1.msra.mxu0 %v2946
    %5077 = vmatprep.subr.mxu0 %v2951
    %5078 = vmatpush1.msra.mxu0 %v2950
    %5079 = vmatprep.subr.mxu0 %v2955
    %5080 = vmatpush1.msra.mxu0 %v2954
    %5081 = vmatprep.subr.mxu0 %v2959
    %5082 = vmatpush1.msra.mxu0 %v2958
    %5083 = vmatprep.subr.mxu0 %v2963
    %5084 = vmatpush1.msra.mxu0 %v2962
    %5085 = vmatprep.subr.mxu0 %v2967
    %5086 = vmatpush1.msra.mxu0 %v2966
    %5087 = vmatprep.subr.mxu0 %v2971
    %5088 = vmatpush1.msra.mxu0 %v2970
    %5089 = vmatprep.subr.mxu0 %v2975
    %5090 = vmatpush1.msra.mxu0 %v2974
    %5091 = vmatprep.mubr.f32.mxu0 %v3407
    %5092 = vmatmul.mubr.f32.gmra.mrb[0].mxu0 %v3399
    %v5093 = vpop.f32.mrb[0].mxu0
    %v5094 = vadd.f32 %v5023, %v5093
    %v5095 = vpop.f32.mrb[0].mxu0
    %v5096 = vadd.f32 %v5025, %v5095
    %5097 = vdwg.mxu0
    %5098 = vmatprep.subr.mxu0 %v2979
    %5099 = vmatpush1.msra.mxu0 %v2978
    %5100 = vmatprep.subr.mxu0 %v2983
    %5101 = vmatpush1.msra.mxu0 %v2982
    %5102 = vmatprep.subr.mxu0 %v2987
    %5103 = vmatpush1.msra.mxu0 %v2986
    %5104 = vmatprep.subr.mxu0 %v2991
    %5105 = vmatpush1.msra.mxu0 %v2990
    %5106 = vmatprep.subr.mxu0 %v2995
    %5107 = vmatpush1.msra.mxu0 %v2994
    %5108 = vmatprep.subr.mxu0 %v2999
    %5109 = vmatpush1.msra.mxu0 %v2998
    %5110 = vmatprep.subr.mxu0 %v3003
    %5111 = vmatpush1.msra.mxu0 %v3002
    %5112 = vmatprep.subr.mxu0 %v3007
    %5113 = vmatpush1.msra.mxu0 %v3006
    %5114 = vmatprep.subr.mxu0 %v3011
    %5115 = vmatpush1.msra.mxu0 %v3010
    %5116 = vmatprep.subr.mxu0 %v3015
    %5117 = vmatpush1.msra.mxu0 %v3014
    %5118 = vmatprep.subr.mxu0 %v3019
    %5119 = vmatpush1.msra.mxu0 %v3018
    %5120 = vmatprep.subr.mxu0 %v3023
    %5121 = vmatpush1.msra.mxu0 %v3022
    %5122 = vmatprep.subr.mxu0 %v3027
    %5123 = vmatpush1.msra.mxu0 %v3026
    %5124 = vmatprep.subr.mxu0 %v3031
    %5125 = vmatpush1.msra.mxu0 %v3030
    %5126 = vmatprep.subr.mxu0 %v3035
    %5127 = vmatpush1.msra.mxu0 %v3034
    %5128 = vmatprep.subr.mxu0 %v3039
    %5129 = vmatpush1.msra.mxu0 %v3038
    %5130 = vmatprep.subr.mxu0 %v3043
    %5131 = vmatpush1.msra.mxu0 %v3042
    %5132 = vmatprep.subr.mxu0 %v3047
    %5133 = vmatpush1.msra.mxu0 %v3046
    %5134 = vmatprep.subr.mxu0 %v3051
    %5135 = vmatpush1.msra.mxu0 %v3050
    %5136 = vmatprep.subr.mxu0 %v3055
    %5137 = vmatpush1.msra.mxu0 %v3054
    %5138 = vmatprep.subr.mxu0 %v3059
    %5139 = vmatpush1.msra.mxu0 %v3058
    %5140 = vmatprep.subr.mxu0 %v3063
    %5141 = vmatpush1.msra.mxu0 %v3062
    %5142 = vmatprep.subr.mxu0 %v3067
    %5143 = vmatpush1.msra.mxu0 %v3066
    %5144 = vmatprep.subr.mxu0 %v3071
    %5145 = vmatpush1.msra.mxu0 %v3070
    %5146 = vmatprep.subr.mxu0 %v3075
    %5147 = vmatpush1.msra.mxu0 %v3074
    %5148 = vmatprep.subr.mxu0 %v3079
    %5149 = vmatpush1.msra.mxu0 %v3078
    %5150 = vmatprep.subr.mxu0 %v3083
    %5151 = vmatpush1.msra.mxu0 %v3082
    %5152 = vmatprep.subr.mxu0 %v3087
    %5153 = vmatpush1.msra.mxu0 %v3086
    %5154 = vmatprep.subr.mxu0 %v3091
    %5155 = vmatpush1.msra.mxu0 %v3090
    %5156 = vmatprep.subr.mxu0 %v3095
    %5157 = vmatpush1.msra.mxu0 %v3094
    %5158 = vmatprep.subr.mxu0 %v3099
    %5159 = vmatpush1.msra.mxu0 %v3098
    %5160 = vmatprep.subr.mxu0 %v3103
    %5161 = vmatpush1.msra.mxu0 %v3102
    %5162 = vmatprep.mubr.f32.mxu0 %v3408
    %5163 = vmatmul.mubr.f32.gmra.mrb[0].mxu0 %v3406
    %v5164 = vpop.f32.mrb[0].mxu0
    %v5165 = vadd.f32 %v5094, %v5164
    %v5166 = vpop.f32.mrb[0].mxu0
    %v5167 = vadd.f32 %v5096, %v5166
    %5168 = vdwg.mxu0
    %5169 = vmatprep.subr.mxu0 %v3107
    %5170 = vmatpush1.msra.mxu0 %v3106
    %5171 = vmatprep.subr.mxu0 %v3111
    %5172 = vmatpush1.msra.mxu0 %v3110
    %5173 = vmatprep.subr.mxu0 %v3115
    %5174 = vmatpush1.msra.mxu0 %v3114
    %5175 = vmatprep.subr.mxu0 %v3119
    %5176 = vmatpush1.msra.mxu0 %v3118
    %5177 = vmatprep.subr.mxu0 %v3123
    %5178 = vmatpush1.msra.mxu0 %v3122
    %5179 = vmatprep.subr.mxu0 %v3127
    %5180 = vmatpush1.msra.mxu0 %v3126
    %5181 = vmatprep.subr.mxu0 %v3131
    %5182 = vmatpush1.msra.mxu0 %v3130
    %5183 = vmatprep.subr.mxu0 %v3135
    %5184 = vmatpush1.msra.mxu0 %v3134
    %5185 = vmatprep.subr.mxu0 %v3139
    %5186 = vmatpush1.msra.mxu0 %v3138
    %5187 = vmatprep.subr.mxu0 %v3143
    %5188 = vmatpush1.msra.mxu0 %v3142
    %5189 = vmatprep.subr.mxu0 %v3147
    %5190 = vmatpush1.msra.mxu0 %v3146
    %5191 = vmatprep.subr.mxu0 %v3151
    %5192 = vmatpush1.msra.mxu0 %v3150
    %5193 = vmatprep.subr.mxu0 %v3155
    %5194 = vmatpush1.msra.mxu0 %v3154
    %5195 = vmatprep.subr.mxu0 %v3159
    %5196 = vmatpush1.msra.mxu0 %v3158
    %5197 = vmatprep.subr.mxu0 %v3163
    %5198 = vmatpush1.msra.mxu0 %v3162
    %5199 = vmatprep.subr.mxu0 %v3167
    %5200 = vmatpush1.msra.mxu0 %v3166
    %5201 = vmatprep.subr.mxu0 0.0
    %5202 = vmatpush1.msra.mxu0 0.0
    %5203 = vmatprep.subr.mxu0 0.0
    %5204 = vmatpush1.msra.mxu0 0.0
    %5205 = vmatprep.subr.mxu0 0.0
    %5206 = vmatpush1.msra.mxu0 0.0
    %5207 = vmatprep.subr.mxu0 0.0
    %5208 = vmatpush1.msra.mxu0 0.0
    %5209 = vmatprep.subr.mxu0 0.0
    %5210 = vmatpush1.msra.mxu0 0.0
    %5211 = vmatprep.subr.mxu0 0.0
    %5212 = vmatpush1.msra.mxu0 0.0
    %5213 = vmatprep.subr.mxu0 0.0
    %5214 = vmatpush1.msra.mxu0 0.0
    %5215 = vmatprep.subr.mxu0 0.0
    %5216 = vmatpush1.msra.mxu0 0.0
    %5217 = vmatprep.subr.mxu0 0.0
    %5218 = vmatpush1.msra.mxu0 0.0
    %5219 = vmatprep.subr.mxu0 0.0
    %5220 = vmatpush1.msra.mxu0 0.0
    %5221 = vmatprep.subr.mxu0 0.0
    %5222 = vmatpush1.msra.mxu0 0.0
    %5223 = vmatprep.subr.mxu0 0.0
    %5224 = vmatpush1.msra.mxu0 0.0
    %5225 = vmatprep.subr.mxu0 0.0
    %5226 = vmatpush1.msra.mxu0 0.0
    %5227 = vmatprep.subr.mxu0 0.0
    %5228 = vmatpush1.msra.mxu0 0.0
    %5229 = vmatprep.subr.mxu0 0.0
    %5230 = vmatpush1.msra.mxu0 0.0
    %5231 = vmatprep.subr.mxu0 0.0
    %5232 = vmatpush1.msra.mxu0 0.0
    %5233 = vmatprep.mubr.f32.mxu0 0.0
    %5234 = vmatmul.mubr.f32.gmra.mrb[0].mxu0 %v3415
    %v5235 = vpop.f32.mrb[0].mxu0
    %v5236 = vadd.f32 %v5165, %v5235
    %v5237 = vpop.f32.mrb[0].mxu0
    %v5238 = vadd.f32 %v5167, %v5237
    %5239 = vdwg.mxu0
    %5240 = vmatprep.subr.mxu0 %v37
    %5241 = vmatpush1.msra.mxu0 %v36
    %5242 = vmatprep.subr.mxu0 %v41
    %5243 = vmatpush1.msra.mxu0 %v40
    %5244 = vmatprep.subr.mxu0 %v45
    %5245 = vmatpush1.msra.mxu0 %v44
    %5246 = vmatprep.subr.mxu0 %v49
    %5247 = vmatpush1.msra.mxu0 %v48
    %5248 = vmatprep.subr.mxu0 %v53
    %5249 = vmatpush1.msra.mxu0 %v52
    %5250 = vmatprep.subr.mxu0 %v57
    %5251 = vmatpush1.msra.mxu0 %v56
    %5252 = vmatprep.subr.mxu0 %v61
    %5253 = vmatpush1.msra.mxu0 %v60
    %5254 = vmatprep.subr.mxu0 %v65
    %5255 = vmatpush1.msra.mxu0 %v64
    %5256 = vmatprep.subr.mxu0 %v69
    %5257 = vmatpush1.msra.mxu0 %v68
    %5258 = vmatprep.subr.mxu0 %v73
    %5259 = vmatpush1.msra.mxu0 %v72
    %5260 = vmatprep.subr.mxu0 %v77
    %5261 = vmatpush1.msra.mxu0 %v76
    %5262 = vmatprep.subr.mxu0 %v81
    %5263 = vmatpush1.msra.mxu0 %v80
    %5264 = vmatprep.subr.mxu0 %v85
    %5265 = vmatpush1.msra.mxu0 %v84
    %5266 = vmatprep.subr.mxu0 %v89
    %5267 = vmatpush1.msra.mxu0 %v88
    %5268 = vmatprep.subr.mxu0 %v93
    %5269 = vmatpush1.msra.mxu0 %v92
    %5270 = vmatprep.subr.mxu0 %v97
    %5271 = vmatpush1.msra.mxu0 %v96
    %5272 = vmatprep.subr.mxu0 %v101
    %5273 = vmatpush1.msra.mxu0 %v100
    %5274 = vmatprep.subr.mxu0 %v105
    %5275 = vmatpush1.msra.mxu0 %v104
    %5276 = vmatprep.subr.mxu0 %v109
    %5277 = vmatpush1.msra.mxu0 %v108
    %5278 = vmatprep.subr.mxu0 %v113
    %5279 = vmatpush1.msra.mxu0 %v112
    %5280 = vmatprep.subr.mxu0 %v117
    %5281 = vmatpush1.msra.mxu0 %v116
    %5282 = vmatprep.subr.mxu0 %v121
    %5283 = vmatpush1.msra.mxu0 %v120
    %5284 = vmatprep.subr.mxu0 %v125
    %5285 = vmatpush1.msra.mxu0 %v124
    %5286 = vmatprep.subr.mxu0 %v129
    %5287 = vmatpush1.msra.mxu0 %v128
    %5288 = vmatprep.subr.mxu0 %v133
    %5289 = vmatpush1.msra.mxu0 %v132
    %5290 = vmatprep.subr.mxu0 %v137
    %5291 = vmatpush1.msra.mxu0 %v136
    %5292 = vmatprep.subr.mxu0 %v141
    %5293 = vmatpush1.msra.mxu0 %v140
    %5294 = vmatprep.subr.mxu0 %v145
    %5295 = vmatpush1.msra.mxu0 %v144
    %5296 = vmatprep.subr.mxu0 %v149
    %5297 = vmatpush1.msra.mxu0 %v148
    %5298 = vmatprep.subr.mxu0 %v153
    %5299 = vmatpush1.msra.mxu0 %v152
    %5300 = vmatprep.subr.mxu0 %v157
    %5301 = vmatpush1.msra.mxu0 %v156
    %5302 = vmatprep.subr.mxu0 %v161
    %5303 = vmatpush1.msra.mxu0 %v160
    %5304 = vmatprep.mubr.f32.mxu0 %v3220
    %5305 = vmatmul.mubr.f32.gmra.mrb[0].mxu0 %v3212
    %v5306 = vpop.f32.mrb[0].mxu0
    %v5307 = vadd.f32 %v3183, %v5306
    %v5308 = vpop.f32.mrb[0].mxu0
    %v5309 = vadd.f32 %v3187, %v5308
    %5310 = vdwg.mxu0
    %5311 = vmatprep.subr.mxu0 %v165
    %5312 = vmatpush1.msra.mxu0 %v164
    %5313 = vmatprep.subr.mxu0 %v169
    %5314 = vmatpush1.msra.mxu0 %v168
    %5315 = vmatprep.subr.mxu0 %v173
    %5316 = vmatpush1.msra.mxu0 %v172
    %5317 = vmatprep.subr.mxu0 %v177
    %5318 = vmatpush1.msra.mxu0 %v176
    %5319 = vmatprep.subr.mxu0 %v181
    %5320 = vmatpush1.msra.mxu0 %v180
    %5321 = vmatprep.subr.mxu0 %v185
    %5322 = vmatpush1.msra.mxu0 %v184
    %5323 = vmatprep.subr.mxu0 %v189
    %5324 = vmatpush1.msra.mxu0 %v188
    %5325 = vmatprep.subr.mxu0 %v193
    %5326 = vmatpush1.msra.mxu0 %v192
    %5327 = vmatprep.subr.mxu0 %v197
    %5328 = vmatpush1.msra.mxu0 %v196
    %5329 = vmatprep.subr.mxu0 %v201
    %5330 = vmatpush1.msra.mxu0 %v200
    %5331 = vmatprep.subr.mxu0 %v205
    %5332 = vmatpush1.msra.mxu0 %v204
    %5333 = vmatprep.subr.mxu0 %v209
    %5334 = vmatpush1.msra.mxu0 %v208
    %5335 = vmatprep.subr.mxu0 %v213
    %5336 = vmatpush1.msra.mxu0 %v212
    %5337 = vmatprep.subr.mxu0 %v217
    %5338 = vmatpush1.msra.mxu0 %v216
    %5339 = vmatprep.subr.mxu0 %v221
    %5340 = vmatpush1.msra.mxu0 %v220
    %5341 = vmatprep.subr.mxu0 %v225
    %5342 = vmatpush1.msra.mxu0 %v224
    %5343 = vmatprep.subr.mxu0 %v229
    %5344 = vmatpush1.msra.mxu0 %v228
    %5345 = vmatprep.subr.mxu0 %v233
    %5346 = vmatpush1.msra.mxu0 %v232
    %5347 = vmatprep.subr.mxu0 %v237
    %5348 = vmatpush1.msra.mxu0 %v236
    %5349 = vmatprep.subr.mxu0 %v241
    %5350 = vmatpush1.msra.mxu0 %v240
    %5351 = vmatprep.subr.mxu0 %v245
    %5352 = vmatpush1.msra.mxu0 %v244
    %5353 = vmatprep.subr.mxu0 %v249
    %5354 = vmatpush1.msra.mxu0 %v248
    %5355 = vmatprep.subr.mxu0 %v253
    %5356 = vmatpush1.msra.mxu0 %v252
    %5357 = vmatprep.subr.mxu0 %v257
    %5358 = vmatpush1.msra.mxu0 %v256
    %5359 = vmatprep.subr.mxu0 %v261
    %5360 = vmatpush1.msra.mxu0 %v260
    %5361 = vmatprep.subr.mxu0 %v265
    %5362 = vmatpush1.msra.mxu0 %v264
    %5363 = vmatprep.subr.mxu0 %v269
    %5364 = vmatpush1.msra.mxu0 %v268
    %5365 = vmatprep.subr.mxu0 %v273
    %5366 = vmatpush1.msra.mxu0 %v272
    %5367 = vmatprep.subr.mxu0 %v277
    %5368 = vmatpush1.msra.mxu0 %v276
    %5369 = vmatprep.subr.mxu0 %v281
    %5370 = vmatpush1.msra.mxu0 %v280
    %5371 = vmatprep.subr.mxu0 %v285
    %5372 = vmatpush1.msra.mxu0 %v284
    %5373 = vmatprep.subr.mxu0 %v289
    %5374 = vmatpush1.msra.mxu0 %v288
    %5375 = vmatprep.mubr.f32.mxu0 %v3221
    %5376 = vmatmul.mubr.f32.gmra.mrb[0].mxu0 %v3219
    %v5377 = vpop.f32.mrb[0].mxu0
    %v5378 = vadd.f32 %v5307, %v5377
    %v5379 = vpop.f32.mrb[0].mxu0
    %v5380 = vadd.f32 %v5309, %v5379
    %5381 = vdwg.mxu0
    %5382 = vmatprep.subr.mxu0 %v293
    %5383 = vmatpush1.msra.mxu0 %v292
    %5384 = vmatprep.subr.mxu0 %v297
    %5385 = vmatpush1.msra.mxu0 %v296
    %5386 = vmatprep.subr.mxu0 %v301
    %5387 = vmatpush1.msra.mxu0 %v300
    %5388 = vmatprep.subr.mxu0 %v305
    %5389 = vmatpush1.msra.mxu0 %v304
    %5390 = vmatprep.subr.mxu0 %v309
    %5391 = vmatpush1.msra.mxu0 %v308
    %5392 = vmatprep.subr.mxu0 %v313
    %5393 = vmatpush1.msra.mxu0 %v312
    %5394 = vmatprep.subr.mxu0 %v317
    %5395 = vmatpush1.msra.mxu0 %v316
    %5396 = vmatprep.subr.mxu0 %v321
    %5397 = vmatpush1.msra.mxu0 %v320
    %5398 = vmatprep.subr.mxu0 %v325
    %5399 = vmatpush1.msra.mxu0 %v324
    %5400 = vmatprep.subr.mxu0 %v329
    %5401 = vmatpush1.msra.mxu0 %v328
    %5402 = vmatprep.subr.mxu0 %v333
    %5403 = vmatpush1.msra.mxu0 %v332
    %5404 = vmatprep.subr.mxu0 %v337
    %5405 = vmatpush1.msra.mxu0 %v336
    %5406 = vmatprep.subr.mxu0 %v341
    %5407 = vmatpush1.msra.mxu0 %v340
    %5408 = vmatprep.subr.mxu0 %v345
    %5409 = vmatpush1.msra.mxu0 %v344
    %5410 = vmatprep.subr.mxu0 %v349
    %5411 = vmatpush1.msra.mxu0 %v348
    %5412 = vmatprep.subr.mxu0 %v353
    %5413 = vmatpush1.msra.mxu0 %v352
    %5414 = vmatprep.subr.mxu0 %v357
    %5415 = vmatpush1.msra.mxu0 %v356
    %5416 = vmatprep.subr.mxu0 %v361
    %5417 = vmatpush1.msra.mxu0 %v360
    %5418 = vmatprep.subr.mxu0 %v365
    %5419 = vmatpush1.msra.mxu0 %v364
    %5420 = vmatprep.subr.mxu0 %v369
    %5421 = vmatpush1.msra.mxu0 %v368
    %5422 = vmatprep.subr.mxu0 %v373
    %5423 = vmatpush1.msra.mxu0 %v372
    %5424 = vmatprep.subr.mxu0 %v377
    %5425 = vmatpush1.msra.mxu0 %v376
    %5426 = vmatprep.subr.mxu0 %v381
    %5427 = vmatpush1.msra.mxu0 %v380
    %5428 = vmatprep.subr.mxu0 %v385
    %5429 = vmatpush1.msra.mxu0 %v384
    %5430 = vmatprep.subr.mxu0 %v389
    %5431 = vmatpush1.msra.mxu0 %v388
    %5432 = vmatprep.subr.mxu0 %v393
    %5433 = vmatpush1.msra.mxu0 %v392
    %5434 = vmatprep.subr.mxu0 %v397
    %5435 = vmatpush1.msra.mxu0 %v396
    %5436 = vmatprep.subr.mxu0 %v401
    %5437 = vmatpush1.msra.mxu0 %v400
    %5438 = vmatprep.subr.mxu0 %v405
    %5439 = vmatpush1.msra.mxu0 %v404
    %5440 = vmatprep.subr.mxu0 %v409
    %5441 = vmatpush1.msra.mxu0 %v408
    %5442 = vmatprep.subr.mxu0 %v413
    %5443 = vmatpush1.msra.mxu0 %v412
    %5444 = vmatprep.subr.mxu0 %v417
    %5445 = vmatpush1.msra.mxu0 %v416
    %5446 = vmatprep.mubr.f32.mxu0 %v3237
    %5447 = vmatmul.mubr.f32.gmra.mrb[0].mxu0 %v3229
    %v5448 = vpop.f32.mrb[0].mxu0
    %v5449 = vadd.f32 %v5378, %v5448
    %v5450 = vpop.f32.mrb[0].mxu0
    %v5451 = vadd.f32 %v5380, %v5450
    %5452 = vdwg.mxu0
    %5453 = vmatprep.subr.mxu0 %v421
    %5454 = vmatpush1.msra.mxu0 %v420
    %5455 = vmatprep.subr.mxu0 %v425
    %5456 = vmatpush1.msra.mxu0 %v424
    %5457 = vmatprep.subr.mxu0 %v429
    %5458 = vmatpush1.msra.mxu0 %v428
    %5459 = vmatprep.subr.mxu0 %v433
    %5460 = vmatpush1.msra.mxu0 %v432
    %5461 = vmatprep.subr.mxu0 %v437
    %5462 = vmatpush1.msra.mxu0 %v436
    %5463 = vmatprep.subr.mxu0 %v441
    %5464 = vmatpush1.msra.mxu0 %v440
    %5465 = vmatprep.subr.mxu0 %v445
    %5466 = vmatpush1.msra.mxu0 %v444
    %5467 = vmatprep.subr.mxu0 %v449
    %5468 = vmatpush1.msra.mxu0 %v448
    %5469 = vmatprep.subr.mxu0 %v453
    %5470 = vmatpush1.msra.mxu0 %v452
    %5471 = vmatprep.subr.mxu0 %v457
    %5472 = vmatpush1.msra.mxu0 %v456
    %5473 = vmatprep.subr.mxu0 %v461
    %5474 = vmatpush1.msra.mxu0 %v460
    %5475 = vmatprep.subr.mxu0 %v465
    %5476 = vmatpush1.msra.mxu0 %v464
    %5477 = vmatprep.subr.mxu0 %v469
    %5478 = vmatpush1.msra.mxu0 %v468
    %5479 = vmatprep.subr.mxu0 %v473
    %5480 = vmatpush1.msra.mxu0 %v472
    %5481 = vmatprep.subr.mxu0 %v477
    %5482 = vmatpush1.msra.mxu0 %v476
    %5483 = vmatprep.subr.mxu0 %v481
    %5484 = vmatpush1.msra.mxu0 %v480
    %5485 = vmatprep.subr.mxu0 %v485
    %5486 = vmatpush1.msra.mxu0 %v484
    %5487 = vmatprep.subr.mxu0 %v489
    %5488 = vmatpush1.msra.mxu0 %v488
    %5489 = vmatprep.subr.mxu0 %v493
    %5490 = vmatpush1.msra.mxu0 %v492
    %5491 = vmatprep.subr.mxu0 %v497
    %5492 = vmatpush1.msra.mxu0 %v496
    %5493 = vmatprep.subr.mxu0 %v501
    %5494 = vmatpush1.msra.mxu0 %v500
    %5495 = vmatprep.subr.mxu0 %v505
    %5496 = vmatpush1.msra.mxu0 %v504
    %5497 = vmatprep.subr.mxu0 %v509
    %5498 = vmatpush1.msra.mxu0 %v508
    %5499 = vmatprep.subr.mxu0 %v513
    %5500 = vmatpush1.msra.mxu0 %v512
    %5501 = vmatprep.subr.mxu0 %v517
    %5502 = vmatpush1.msra.mxu0 %v516
    %5503 = vmatprep.subr.mxu0 %v521
    %5504 = vmatpush1.msra.mxu0 %v520
    %5505 = vmatprep.subr.mxu0 %v525
    %5506 = vmatpush1.msra.mxu0 %v524
    %5507 = vmatprep.subr.mxu0 %v529
    %5508 = vmatpush1.msra.mxu0 %v528
    %5509 = vmatprep.subr.mxu0 %v533
    %5510 = vmatpush1.msra.mxu0 %v532
    %5511 = vmatprep.subr.mxu0 %v537
    %5512 = vmatpush1.msra.mxu0 %v536
    %5513 = vmatprep.subr.mxu0 %v541
    %5514 = vmatpush1.msra.mxu0 %v540
    %5515 = vmatprep.subr.mxu0 %v545
    %5516 = vmatpush1.msra.mxu0 %v544
    %5517 = vmatprep.mubr.f32.mxu0 %v3238
    %5518 = vmatmul.mubr.f32.gmra.mrb[0].mxu0 %v3236
    %v5519 = vpop.f32.mrb[0].mxu0
    %v5520 = vadd.f32 %v5449, %v5519
    %v5521 = vpop.f32.mrb[0].mxu0
    %v5522 = vadd.f32 %v5451, %v5521
    %5523 = vdwg.mxu0
    %5524 = vmatprep.subr.mxu0 %v549
    %5525 = vmatpush1.msra.mxu0 %v548
    %5526 = vmatprep.subr.mxu0 %v553
    %5527 = vmatpush1.msra.mxu0 %v552
    %5528 = vmatprep.subr.mxu0 %v557
    %5529 = vmatpush1.msra.mxu0 %v556
    %5530 = vmatprep.subr.mxu0 %v561
    %5531 = vmatpush1.msra.mxu0 %v560
    %5532 = vmatprep.subr.mxu0 %v565
    %5533 = vmatpush1.msra.mxu0 %v564
    %5534 = vmatprep.subr.mxu0 %v569
    %5535 = vmatpush1.msra.mxu0 %v568
    %5536 = vmatprep.subr.mxu0 %v573
    %5537 = vmatpush1.msra.mxu0 %v572
    %5538 = vmatprep.subr.mxu0 %v577
    %5539 = vmatpush1.msra.mxu0 %v576
    %5540 = vmatprep.subr.mxu0 %v581
    %5541 = vmatpush1.msra.mxu0 %v580
    %5542 = vmatprep.subr.mxu0 %v585
    %5543 = vmatpush1.msra.mxu0 %v584
    %5544 = vmatprep.subr.mxu0 %v589
    %5545 = vmatpush1.msra.mxu0 %v588
    %5546 = vmatprep.subr.mxu0 %v593
    %5547 = vmatpush1.msra.mxu0 %v592
    %5548 = vmatprep.subr.mxu0 %v597
    %5549 = vmatpush1.msra.mxu0 %v596
    %5550 = vmatprep.subr.mxu0 %v601
    %5551 = vmatpush1.msra.mxu0 %v600
    %5552 = vmatprep.subr.mxu0 %v605
    %5553 = vmatpush1.msra.mxu0 %v604
    %5554 = vmatprep.subr.mxu0 %v609
    %5555 = vmatpush1.msra.mxu0 %v608
    %5556 = vmatprep.subr.mxu0 %v613
    %5557 = vmatpush1.msra.mxu0 %v612
    %5558 = vmatprep.subr.mxu0 %v617
    %5559 = vmatpush1.msra.mxu0 %v616
    %5560 = vmatprep.subr.mxu0 %v621
    %5561 = vmatpush1.msra.mxu0 %v620
    %5562 = vmatprep.subr.mxu0 %v625
    %5563 = vmatpush1.msra.mxu0 %v624
    %5564 = vmatprep.subr.mxu0 %v629
    %5565 = vmatpush1.msra.mxu0 %v628
    %5566 = vmatprep.subr.mxu0 %v633
    %5567 = vmatpush1.msra.mxu0 %v632
    %5568 = vmatprep.subr.mxu0 %v637
    %5569 = vmatpush1.msra.mxu0 %v636
    %5570 = vmatprep.subr.mxu0 %v641
    %5571 = vmatpush1.msra.mxu0 %v640
    %5572 = vmatprep.subr.mxu0 %v645
    %5573 = vmatpush1.msra.mxu0 %v644
    %5574 = vmatprep.subr.mxu0 %v649
    %5575 = vmatpush1.msra.mxu0 %v648
    %5576 = vmatprep.subr.mxu0 %v653
    %5577 = vmatpush1.msra.mxu0 %v652
    %5578 = vmatprep.subr.mxu0 %v657
    %5579 = vmatpush1.msra.mxu0 %v656
    %5580 = vmatprep.subr.mxu0 %v661
    %5581 = vmatpush1.msra.mxu0 %v660
    %5582 = vmatprep.subr.mxu0 %v665
    %5583 = vmatpush1.msra.mxu0 %v664
    %5584 = vmatprep.subr.mxu0 %v669
    %5585 = vmatpush1.msra.mxu0 %v668
    %5586 = vmatprep.subr.mxu0 %v673
    %5587 = vmatpush1.msra.mxu0 %v672
    %5588 = vmatprep.mubr.f32.mxu0 %v3254
    %5589 = vmatmul.mubr.f32.gmra.mrb[0].mxu0 %v3246
    %v5590 = vpop.f32.mrb[0].mxu0
    %v5591 = vadd.f32 %v5520, %v5590
    %v5592 = vpop.f32.mrb[0].mxu0
    %v5593 = vadd.f32 %v5522, %v5592
    %5594 = vdwg.mxu0
    %5595 = vmatprep.subr.mxu0 %v677
    %5596 = vmatpush1.msra.mxu0 %v676
    %5597 = vmatprep.subr.mxu0 %v681
    %5598 = vmatpush1.msra.mxu0 %v680
    %5599 = vmatprep.subr.mxu0 %v685
    %5600 = vmatpush1.msra.mxu0 %v684
    %5601 = vmatprep.subr.mxu0 %v689
    %5602 = vmatpush1.msra.mxu0 %v688
    %5603 = vmatprep.subr.mxu0 %v693
    %5604 = vmatpush1.msra.mxu0 %v692
    %5605 = vmatprep.subr.mxu0 %v697
    %5606 = vmatpush1.msra.mxu0 %v696
    %5607 = vmatprep.subr.mxu0 %v701
    %5608 = vmatpush1.msra.mxu0 %v700
    %5609 = vmatprep.subr.mxu0 %v705
    %5610 = vmatpush1.msra.mxu0 %v704
    %5611 = vmatprep.subr.mxu0 %v709
    %5612 = vmatpush1.msra.mxu0 %v708
    %5613 = vmatprep.subr.mxu0 %v713
    %5614 = vmatpush1.msra.mxu0 %v712
    %5615 = vmatprep.subr.mxu0 %v717
    %5616 = vmatpush1.msra.mxu0 %v716
    %5617 = vmatprep.subr.mxu0 %v721
    %5618 = vmatpush1.msra.mxu0 %v720
    %5619 = vmatprep.subr.mxu0 %v725
    %5620 = vmatpush1.msra.mxu0 %v724
    %5621 = vmatprep.subr.mxu0 %v729
    %5622 = vmatpush1.msra.mxu0 %v728
    %5623 = vmatprep.subr.mxu0 %v733
    %5624 = vmatpush1.msra.mxu0 %v732
    %5625 = vmatprep.subr.mxu0 %v737
    %5626 = vmatpush1.msra.mxu0 %v736
    %5627 = vmatprep.subr.mxu0 %v741
    %5628 = vmatpush1.msra.mxu0 %v740
    %5629 = vmatprep.subr.mxu0 %v745
    %5630 = vmatpush1.msra.mxu0 %v744
    %5631 = vmatprep.subr.mxu0 %v749
    %5632 = vmatpush1.msra.mxu0 %v748
    %5633 = vmatprep.subr.mxu0 %v753
    %5634 = vmatpush1.msra.mxu0 %v752
    %5635 = vmatprep.subr.mxu0 %v757
    %5636 = vmatpush1.msra.mxu0 %v756
    %5637 = vmatprep.subr.mxu0 %v761
    %5638 = vmatpush1.msra.mxu0 %v760
    %5639 = vmatprep.subr.mxu0 %v765
    %5640 = vmatpush1.msra.mxu0 %v764
    %5641 = vmatprep.subr.mxu0 %v769
    %5642 = vmatpush1.msra.mxu0 %v768
    %5643 = vmatprep.subr.mxu0 %v773
    %5644 = vmatpush1.msra.mxu0 %v772
    %5645 = vmatprep.subr.mxu0 %v777
    %5646 = vmatpush1.msra.mxu0 %v776
    %5647 = vmatprep.subr.mxu0 %v781
    %5648 = vmatpush1.msra.mxu0 %v780
    %5649 = vmatprep.subr.mxu0 %v785
    %5650 = vmatpush1.msra.mxu0 %v784
    %5651 = vmatprep.subr.mxu0 %v789
    %5652 = vmatpush1.msra.mxu0 %v788
    %5653 = vmatprep.subr.mxu0 %v793
    %5654 = vmatpush1.msra.mxu0 %v792
    %5655 = vmatprep.subr.mxu0 %v797
    %5656 = vmatpush1.msra.mxu0 %v796
    %5657 = vmatprep.subr.mxu0 %v801
    %5658 = vmatpush1.msra.mxu0 %v800
    %5659 = vmatprep.mubr.f32.mxu0 %v3255
    %5660 = vmatmul.mubr.f32.gmra.mrb[0].mxu0 %v3253
    %v5661 = vpop.f32.mrb[0].mxu0
    %v5662 = vadd.f32 %v5591, %v5661
    %v5663 = vpop.f32.mrb[0].mxu0
    %v5664 = vadd.f32 %v5593, %v5663
    %5665 = vdwg.mxu0
    %5666 = vmatprep.subr.mxu0 %v805
    %5667 = vmatpush1.msra.mxu0 %v804
    %5668 = vmatprep.subr.mxu0 %v809
    %5669 = vmatpush1.msra.mxu0 %v808
    %5670 = vmatprep.subr.mxu0 %v813
    %5671 = vmatpush1.msra.mxu0 %v812
    %5672 = vmatprep.subr.mxu0 %v817
    %5673 = vmatpush1.msra.mxu0 %v816
    %5674 = vmatprep.subr.mxu0 %v821
    %5675 = vmatpush1.msra.mxu0 %v820
    %5676 = vmatprep.subr.mxu0 %v825
    %5677 = vmatpush1.msra.mxu0 %v824
    %5678 = vmatprep.subr.mxu0 %v829
    %5679 = vmatpush1.msra.mxu0 %v828
    %5680 = vmatprep.subr.mxu0 %v833
    %5681 = vmatpush1.msra.mxu0 %v832
    %5682 = vmatprep.subr.mxu0 %v837
    %5683 = vmatpush1.msra.mxu0 %v836
    %5684 = vmatprep.subr.mxu0 %v841
    %5685 = vmatpush1.msra.mxu0 %v840
    %5686 = vmatprep.subr.mxu0 %v845
    %5687 = vmatpush1.msra.mxu0 %v844
    %5688 = vmatprep.subr.mxu0 %v849
    %5689 = vmatpush1.msra.mxu0 %v848
    %5690 = vmatprep.subr.mxu0 %v853
    %5691 = vmatpush1.msra.mxu0 %v852
    %5692 = vmatprep.subr.mxu0 %v857
    %5693 = vmatpush1.msra.mxu0 %v856
    %5694 = vmatprep.subr.mxu0 %v861
    %5695 = vmatpush1.msra.mxu0 %v860
    %5696 = vmatprep.subr.mxu0 %v865
    %5697 = vmatpush1.msra.mxu0 %v864
    %5698 = vmatprep.subr.mxu0 %v869
    %5699 = vmatpush1.msra.mxu0 %v868
    %5700 = vmatprep.subr.mxu0 %v873
    %5701 = vmatpush1.msra.mxu0 %v872
    %5702 = vmatprep.subr.mxu0 %v877
    %5703 = vmatpush1.msra.mxu0 %v876
    %5704 = vmatprep.subr.mxu0 %v881
    %5705 = vmatpush1.msra.mxu0 %v880
    %5706 = vmatprep.subr.mxu0 %v885
    %5707 = vmatpush1.msra.mxu0 %v884
    %5708 = vmatprep.subr.mxu0 %v889
    %5709 = vmatpush1.msra.mxu0 %v888
    %5710 = vmatprep.subr.mxu0 %v893
    %5711 = vmatpush1.msra.mxu0 %v892
    %5712 = vmatprep.subr.mxu0 %v897
    %5713 = vmatpush1.msra.mxu0 %v896
    %5714 = vmatprep.subr.mxu0 %v901
    %5715 = vmatpush1.msra.mxu0 %v900
    %5716 = vmatprep.subr.mxu0 %v905
    %5717 = vmatpush1.msra.mxu0 %v904
    %5718 = vmatprep.subr.mxu0 %v909
    %5719 = vmatpush1.msra.mxu0 %v908
    %5720 = vmatprep.subr.mxu0 %v913
    %5721 = vmatpush1.msra.mxu0 %v912
    %5722 = vmatprep.subr.mxu0 %v917
    %5723 = vmatpush1.msra.mxu0 %v916
    %5724 = vmatprep.subr.mxu0 %v921
    %5725 = vmatpush1.msra.mxu0 %v920
    %5726 = vmatprep.subr.mxu0 %v925
    %5727 = vmatpush1.msra.mxu0 %v924
    %5728 = vmatprep.subr.mxu0 %v929
    %5729 = vmatpush1.msra.mxu0 %v928
    %5730 = vmatprep.mubr.f32.mxu0 %v3271
    %5731 = vmatmul.mubr.f32.gmra.mrb[0].mxu0 %v3263
    %v5732 = vpop.f32.mrb[0].mxu0
    %v5733 = vadd.f32 %v5662, %v5732
    %v5734 = vpop.f32.mrb[0].mxu0
    %v5735 = vadd.f32 %v5664, %v5734
    %5736 = vdwg.mxu0
    %5737 = vmatprep.subr.mxu0 %v933
    %5738 = vmatpush1.msra.mxu0 %v932
    %5739 = vmatprep.subr.mxu0 %v937
    %5740 = vmatpush1.msra.mxu0 %v936
    %5741 = vmatprep.subr.mxu0 %v941
    %5742 = vmatpush1.msra.mxu0 %v940
    %5743 = vmatprep.subr.mxu0 %v945
    %5744 = vmatpush1.msra.mxu0 %v944
    %5745 = vmatprep.subr.mxu0 %v949
    %5746 = vmatpush1.msra.mxu0 %v948
    %5747 = vmatprep.subr.mxu0 %v953
    %5748 = vmatpush1.msra.mxu0 %v952
    %5749 = vmatprep.subr.mxu0 %v957
    %5750 = vmatpush1.msra.mxu0 %v956
    %5751 = vmatprep.subr.mxu0 %v961
    %5752 = vmatpush1.msra.mxu0 %v960
    %5753 = vmatprep.subr.mxu0 %v965
    %5754 = vmatpush1.msra.mxu0 %v964
    %5755 = vmatprep.subr.mxu0 %v969
    %5756 = vmatpush1.msra.mxu0 %v968
    %5757 = vmatprep.subr.mxu0 %v973
    %5758 = vmatpush1.msra.mxu0 %v972
    %5759 = vmatprep.subr.mxu0 %v977
    %5760 = vmatpush1.msra.mxu0 %v976
    %5761 = vmatprep.subr.mxu0 %v981
    %5762 = vmatpush1.msra.mxu0 %v980
    %5763 = vmatprep.subr.mxu0 %v985
    %5764 = vmatpush1.msra.mxu0 %v984
    %5765 = vmatprep.subr.mxu0 %v989
    %5766 = vmatpush1.msra.mxu0 %v988
    %5767 = vmatprep.subr.mxu0 %v993
    %5768 = vmatpush1.msra.mxu0 %v992
    %5769 = vmatprep.subr.mxu0 %v997
    %5770 = vmatpush1.msra.mxu0 %v996
    %5771 = vmatprep.subr.mxu0 %v1001
    %5772 = vmatpush1.msra.mxu0 %v1000
    %5773 = vmatprep.subr.mxu0 %v1005
    %5774 = vmatpush1.msra.mxu0 %v1004
    %5775 = vmatprep.subr.mxu0 %v1009
    %5776 = vmatpush1.msra.mxu0 %v1008
    %5777 = vmatprep.subr.mxu0 %v1013
    %5778 = vmatpush1.msra.mxu0 %v1012
    %5779 = vmatprep.subr.mxu0 %v1017
    %5780 = vmatpush1.msra.mxu0 %v1016
    %5781 = vmatprep.subr.mxu0 %v1021
    %5782 = vmatpush1.msra.mxu0 %v1020
    %5783 = vmatprep.subr.mxu0 %v1025
    %5784 = vmatpush1.msra.mxu0 %v1024
    %5785 = vmatprep.subr.mxu0 %v1029
    %5786 = vmatpush1.msra.mxu0 %v1028
    %5787 = vmatprep.subr.mxu0 %v1033
    %5788 = vmatpush1.msra.mxu0 %v1032
    %5789 = vmatprep.subr.mxu0 %v1037
    %5790 = vmatpush1.msra.mxu0 %v1036
    %5791 = vmatprep.subr.mxu0 %v1041
    %5792 = vmatpush1.msra.mxu0 %v1040
    %5793 = vmatprep.subr.mxu0 %v1045
    %5794 = vmatpush1.msra.mxu0 %v1044
    %5795 = vmatprep.subr.mxu0 %v1049
    %5796 = vmatpush1.msra.mxu0 %v1048
    %5797 = vmatprep.subr.mxu0 %v1053
    %5798 = vmatpush1.msra.mxu0 %v1052
    %5799 = vmatprep.subr.mxu0 %v1057
    %5800 = vmatpush1.msra.mxu0 %v1056
    %5801 = vmatprep.mubr.f32.mxu0 %v3272
    %5802 = vmatmul.mubr.f32.gmra.mrb[0].mxu0 %v3270
    %v5803 = vpop.f32.mrb[0].mxu0
    %v5804 = vadd.f32 %v5733, %v5803
    %v5805 = vpop.f32.mrb[0].mxu0
    %v5806 = vadd.f32 %v5735, %v5805
    %5807 = vdwg.mxu0
    %5808 = vmatprep.subr.mxu0 %v1061
    %5809 = vmatpush1.msra.mxu0 %v1060
    %5810 = vmatprep.subr.mxu0 %v1065
    %5811 = vmatpush1.msra.mxu0 %v1064
    %5812 = vmatprep.subr.mxu0 %v1069
    %5813 = vmatpush1.msra.mxu0 %v1068
    %5814 = vmatprep.subr.mxu0 %v1073
    %5815 = vmatpush1.msra.mxu0 %v1072
    %5816 = vmatprep.subr.mxu0 %v1077
    %5817 = vmatpush1.msra.mxu0 %v1076
    %5818 = vmatprep.subr.mxu0 %v1081
    %5819 = vmatpush1.msra.mxu0 %v1080
    %5820 = vmatprep.subr.mxu0 %v1085
    %5821 = vmatpush1.msra.mxu0 %v1084
    %5822 = vmatprep.subr.mxu0 %v1089
    %5823 = vmatpush1.msra.mxu0 %v1088
    %5824 = vmatprep.subr.mxu0 %v1093
    %5825 = vmatpush1.msra.mxu0 %v1092
    %5826 = vmatprep.subr.mxu0 %v1097
    %5827 = vmatpush1.msra.mxu0 %v1096
    %5828 = vmatprep.subr.mxu0 %v1101
    %5829 = vmatpush1.msra.mxu0 %v1100
    %5830 = vmatprep.subr.mxu0 %v1105
    %5831 = vmatpush1.msra.mxu0 %v1104
    %5832 = vmatprep.subr.mxu0 %v1109
    %5833 = vmatpush1.msra.mxu0 %v1108
    %5834 = vmatprep.subr.mxu0 %v1113
    %5835 = vmatpush1.msra.mxu0 %v1112
    %5836 = vmatprep.subr.mxu0 %v1117
    %5837 = vmatpush1.msra.mxu0 %v1116
    %5838 = vmatprep.subr.mxu0 %v1121
    %5839 = vmatpush1.msra.mxu0 %v1120
    %5840 = vmatprep.subr.mxu0 %v1125
    %5841 = vmatpush1.msra.mxu0 %v1124
    %5842 = vmatprep.subr.mxu0 %v1129
    %5843 = vmatpush1.msra.mxu0 %v1128
    %5844 = vmatprep.subr.mxu0 %v1133
    %5845 = vmatpush1.msra.mxu0 %v1132
    %5846 = vmatprep.subr.mxu0 %v1137
    %5847 = vmatpush1.msra.mxu0 %v1136
    %5848 = vmatprep.subr.mxu0 %v1141
    %5849 = vmatpush1.msra.mxu0 %v1140
    %5850 = vmatprep.subr.mxu0 %v1145
    %5851 = vmatpush1.msra.mxu0 %v1144
    %5852 = vmatprep.subr.mxu0 %v1149
    %5853 = vmatpush1.msra.mxu0 %v1148
    %5854 = vmatprep.subr.mxu0 %v1153
    %5855 = vmatpush1.msra.mxu0 %v1152
    %5856 = vmatprep.subr.mxu0 %v1157
    %5857 = vmatpush1.msra.mxu0 %v1156
    %5858 = vmatprep.subr.mxu0 %v1161
    %5859 = vmatpush1.msra.mxu0 %v1160
    %5860 = vmatprep.subr.mxu0 %v1165
    %5861 = vmatpush1.msra.mxu0 %v1164
    %5862 = vmatprep.subr.mxu0 %v1169
    %5863 = vmatpush1.msra.mxu0 %v1168
    %5864 = vmatprep.subr.mxu0 %v1173
    %5865 = vmatpush1.msra.mxu0 %v1172
    %5866 = vmatprep.subr.mxu0 %v1177
    %5867 = vmatpush1.msra.mxu0 %v1176
    %5868 = vmatprep.subr.mxu0 %v1181
    %5869 = vmatpush1.msra.mxu0 %v1180
    %5870 = vmatprep.subr.mxu0 %v1185
    %5871 = vmatpush1.msra.mxu0 %v1184
    %5872 = vmatprep.mubr.f32.mxu0 %v3288
    %5873 = vmatmul.mubr.f32.gmra.mrb[0].mxu0 %v3280
    %v5874 = vpop.f32.mrb[0].mxu0
    %v5875 = vadd.f32 %v5804, %v5874
    %v5876 = vpop.f32.mrb[0].mxu0
    %v5877 = vadd.f32 %v5806, %v5876
    %5878 = vdwg.mxu0
    %5879 = vmatprep.subr.mxu0 %v1189
    %5880 = vmatpush1.msra.mxu0 %v1188
    %5881 = vmatprep.subr.mxu0 %v1193
    %5882 = vmatpush1.msra.mxu0 %v1192
    %5883 = vmatprep.subr.mxu0 %v1197
    %5884 = vmatpush1.msra.mxu0 %v1196
    %5885 = vmatprep.subr.mxu0 %v1201
    %5886 = vmatpush1.msra.mxu0 %v1200
    %5887 = vmatprep.subr.mxu0 %v1205
    %5888 = vmatpush1.msra.mxu0 %v1204
    %5889 = vmatprep.subr.mxu0 %v1209
    %5890 = vmatpush1.msra.mxu0 %v1208
    %5891 = vmatprep.subr.mxu0 %v1213
    %5892 = vmatpush1.msra.mxu0 %v1212
    %5893 = vmatprep.subr.mxu0 %v1217
    %5894 = vmatpush1.msra.mxu0 %v1216
    %5895 = vmatprep.subr.mxu0 %v1221
    %5896 = vmatpush1.msra.mxu0 %v1220
    %5897 = vmatprep.subr.mxu0 %v1225
    %5898 = vmatpush1.msra.mxu0 %v1224
    %5899 = vmatprep.subr.mxu0 %v1229
    %5900 = vmatpush1.msra.mxu0 %v1228
    %5901 = vmatprep.subr.mxu0 %v1233
    %5902 = vmatpush1.msra.mxu0 %v1232
    %5903 = vmatprep.subr.mxu0 %v1237
    %5904 = vmatpush1.msra.mxu0 %v1236
    %5905 = vmatprep.subr.mxu0 %v1241
    %5906 = vmatpush1.msra.mxu0 %v1240
    %5907 = vmatprep.subr.mxu0 %v1245
    %5908 = vmatpush1.msra.mxu0 %v1244
    %5909 = vmatprep.subr.mxu0 %v1249
    %5910 = vmatpush1.msra.mxu0 %v1248
    %5911 = vmatprep.subr.mxu0 %v1253
    %5912 = vmatpush1.msra.mxu0 %v1252
    %5913 = vmatprep.subr.mxu0 %v1257
    %5914 = vmatpush1.msra.mxu0 %v1256
    %5915 = vmatprep.subr.mxu0 %v1261
    %5916 = vmatpush1.msra.mxu0 %v1260
    %5917 = vmatprep.subr.mxu0 %v1265
    %5918 = vmatpush1.msra.mxu0 %v1264
    %5919 = vmatprep.subr.mxu0 %v1269
    %5920 = vmatpush1.msra.mxu0 %v1268
    %5921 = vmatprep.subr.mxu0 %v1273
    %5922 = vmatpush1.msra.mxu0 %v1272
    %5923 = vmatprep.subr.mxu0 %v1277
    %5924 = vmatpush1.msra.mxu0 %v1276
    %5925 = vmatprep.subr.mxu0 %v1281
    %5926 = vmatpush1.msra.mxu0 %v1280
    %5927 = vmatprep.subr.mxu0 %v1285
    %5928 = vmatpush1.msra.mxu0 %v1284
    %5929 = vmatprep.subr.mxu0 %v1289
    %5930 = vmatpush1.msra.mxu0 %v1288
    %5931 = vmatprep.subr.mxu0 %v1293
    %5932 = vmatpush1.msra.mxu0 %v1292
    %5933 = vmatprep.subr.mxu0 %v1297
    %5934 = vmatpush1.msra.mxu0 %v1296
    %5935 = vmatprep.subr.mxu0 %v1301
    %5936 = vmatpush1.msra.mxu0 %v1300
    %5937 = vmatprep.subr.mxu0 %v1305
    %5938 = vmatpush1.msra.mxu0 %v1304
    %5939 = vmatprep.subr.mxu0 %v1309
    %5940 = vmatpush1.msra.mxu0 %v1308
    %5941 = vmatprep.subr.mxu0 %v1313
    %5942 = vmatpush1.msra.mxu0 %v1312
    %5943 = vmatprep.mubr.f32.mxu0 %v3289
    %5944 = vmatmul.mubr.f32.gmra.mrb[0].mxu0 %v3287
    %v5945 = vpop.f32.mrb[0].mxu0
    %v5946 = vadd.f32 %v5875, %v5945
    %v5947 = vpop.f32.mrb[0].mxu0
    %v5948 = vadd.f32 %v5877, %v5947
    %5949 = vdwg.mxu0
    %5950 = vmatprep.subr.mxu0 %v1317
    %5951 = vmatpush1.msra.mxu0 %v1316
    %5952 = vmatprep.subr.mxu0 %v1321
    %5953 = vmatpush1.msra.mxu0 %v1320
    %5954 = vmatprep.subr.mxu0 %v1325
    %5955 = vmatpush1.msra.mxu0 %v1324
    %5956 = vmatprep.subr.mxu0 %v1329
    %5957 = vmatpush1.msra.mxu0 %v1328
    %5958 = vmatprep.subr.mxu0 %v1333
    %5959 = vmatpush1.msra.mxu0 %v1332
    %5960 = vmatprep.subr.mxu0 %v1337
    %5961 = vmatpush1.msra.mxu0 %v1336
    %5962 = vmatprep.subr.mxu0 %v1341
    %5963 = vmatpush1.msra.mxu0 %v1340
    %5964 = vmatprep.subr.mxu0 %v1345
    %5965 = vmatpush1.msra.mxu0 %v1344
    %5966 = vmatprep.subr.mxu0 %v1349
    %5967 = vmatpush1.msra.mxu0 %v1348
    %5968 = vmatprep.subr.mxu0 %v1353
    %5969 = vmatpush1.msra.mxu0 %v1352
    %5970 = vmatprep.subr.mxu0 %v1357
    %5971 = vmatpush1.msra.mxu0 %v1356
    %5972 = vmatprep.subr.mxu0 %v1361
    %5973 = vmatpush1.msra.mxu0 %v1360
    %5974 = vmatprep.subr.mxu0 %v1365
    %5975 = vmatpush1.msra.mxu0 %v1364
    %5976 = vmatprep.subr.mxu0 %v1369
    %5977 = vmatpush1.msra.mxu0 %v1368
    %5978 = vmatprep.subr.mxu0 %v1373
    %5979 = vmatpush1.msra.mxu0 %v1372
    %5980 = vmatprep.subr.mxu0 %v1377
    %5981 = vmatpush1.msra.mxu0 %v1376
    %5982 = vmatprep.subr.mxu0 %v1381
    %5983 = vmatpush1.msra.mxu0 %v1380
    %5984 = vmatprep.subr.mxu0 %v1385
    %5985 = vmatpush1.msra.mxu0 %v1384
    %5986 = vmatprep.subr.mxu0 %v1389
    %5987 = vmatpush1.msra.mxu0 %v1388
    %5988 = vmatprep.subr.mxu0 %v1393
    %5989 = vmatpush1.msra.mxu0 %v1392
    %5990 = vmatprep.subr.mxu0 %v1397
    %5991 = vmatpush1.msra.mxu0 %v1396
    %5992 = vmatprep.subr.mxu0 %v1401
    %5993 = vmatpush1.msra.mxu0 %v1400
    %5994 = vmatprep.subr.mxu0 %v1405
    %5995 = vmatpush1.msra.mxu0 %v1404
    %5996 = vmatprep.subr.mxu0 %v1409
    %5997 = vmatpush1.msra.mxu0 %v1408
    %5998 = vmatprep.subr.mxu0 %v1413
    %5999 = vmatpush1.msra.mxu0 %v1412
    %6000 = vmatprep.subr.mxu0 %v1417
    %6001 = vmatpush1.msra.mxu0 %v1416
    %6002 = vmatprep.subr.mxu0 %v1421
    %6003 = vmatpush1.msra.mxu0 %v1420
    %6004 = vmatprep.subr.mxu0 %v1425
    %6005 = vmatpush1.msra.mxu0 %v1424
    %6006 = vmatprep.subr.mxu0 %v1429
    %6007 = vmatpush1.msra.mxu0 %v1428
    %6008 = vmatprep.subr.mxu0 %v1433
    %6009 = vmatpush1.msra.mxu0 %v1432
    %6010 = vmatprep.subr.mxu0 %v1437
    %6011 = vmatpush1.msra.mxu0 %v1436
    %6012 = vmatprep.subr.mxu0 %v1441
    %6013 = vmatpush1.msra.mxu0 %v1440
    %6014 = vmatprep.mubr.f32.mxu0 %v3305
    %6015 = vmatmul.mubr.f32.gmra.mrb[0].mxu0 %v3297
    %v6016 = vpop.f32.mrb[0].mxu0
    %v6017 = vadd.f32 %v5946, %v6016
    %v6018 = vpop.f32.mrb[0].mxu0
    %v6019 = vadd.f32 %v5948, %v6018
    %6020 = vdwg.mxu0
    %6021 = vmatprep.subr.mxu0 %v1445
    %6022 = vmatpush1.msra.mxu0 %v1444
    %6023 = vmatprep.subr.mxu0 %v1449
    %6024 = vmatpush1.msra.mxu0 %v1448
    %6025 = vmatprep.subr.mxu0 %v1453
    %6026 = vmatpush1.msra.mxu0 %v1452
    %6027 = vmatprep.subr.mxu0 %v1457
    %6028 = vmatpush1.msra.mxu0 %v1456
    %6029 = vmatprep.subr.mxu0 %v1461
    %6030 = vmatpush1.msra.mxu0 %v1460
    %6031 = vmatprep.subr.mxu0 %v1465
    %6032 = vmatpush1.msra.mxu0 %v1464
    %6033 = vmatprep.subr.mxu0 %v1469
    %6034 = vmatpush1.msra.mxu0 %v1468
    %6035 = vmatprep.subr.mxu0 %v1473
    %6036 = vmatpush1.msra.mxu0 %v1472
    %6037 = vmatprep.subr.mxu0 %v1477
    %6038 = vmatpush1.msra.mxu0 %v1476
    %6039 = vmatprep.subr.mxu0 %v1481
    %6040 = vmatpush1.msra.mxu0 %v1480
    %6041 = vmatprep.subr.mxu0 %v1485
    %6042 = vmatpush1.msra.mxu0 %v1484
    %6043 = vmatprep.subr.mxu0 %v1489
    %6044 = vmatpush1.msra.mxu0 %v1488
    %6045 = vmatprep.subr.mxu0 %v1493
    %6046 = vmatpush1.msra.mxu0 %v1492
    %6047 = vmatprep.subr.mxu0 %v1497
    %6048 = vmatpush1.msra.mxu0 %v1496
    %6049 = vmatprep.subr.mxu0 %v1501
    %6050 = vmatpush1.msra.mxu0 %v1500
    %6051 = vmatprep.subr.mxu0 %v1505
    %6052 = vmatpush1.msra.mxu0 %v1504
    %6053 = vmatprep.subr.mxu0 %v1509
    %6054 = vmatpush1.msra.mxu0 %v1508
    %6055 = vmatprep.subr.mxu0 %v1513
    %6056 = vmatpush1.msra.mxu0 %v1512
    %6057 = vmatprep.subr.mxu0 %v1517
    %6058 = vmatpush1.msra.mxu0 %v1516
    %6059 = vmatprep.subr.mxu0 %v1521
    %6060 = vmatpush1.msra.mxu0 %v1520
    %6061 = vmatprep.subr.mxu0 %v1525
    %6062 = vmatpush1.msra.mxu0 %v1524
    %6063 = vmatprep.subr.mxu0 %v1529
    %6064 = vmatpush1.msra.mxu0 %v1528
    %6065 = vmatprep.subr.mxu0 %v1533
    %6066 = vmatpush1.msra.mxu0 %v1532
    %6067 = vmatprep.subr.mxu0 %v1537
    %6068 = vmatpush1.msra.mxu0 %v1536
    %6069 = vmatprep.subr.mxu0 %v1541
    %6070 = vmatpush1.msra.mxu0 %v1540
    %6071 = vmatprep.subr.mxu0 %v1545
    %6072 = vmatpush1.msra.mxu0 %v1544
    %6073 = vmatprep.subr.mxu0 %v1549
    %6074 = vmatpush1.msra.mxu0 %v1548
    %6075 = vmatprep.subr.mxu0 %v1553
    %6076 = vmatpush1.msra.mxu0 %v1552
    %6077 = vmatprep.subr.mxu0 %v1557
    %6078 = vmatpush1.msra.mxu0 %v1556
    %6079 = vmatprep.subr.mxu0 %v1561
    %6080 = vmatpush1.msra.mxu0 %v1560
    %6081 = vmatprep.subr.mxu0 %v1565
    %6082 = vmatpush1.msra.mxu0 %v1564
    %6083 = vmatprep.subr.mxu0 %v1569
    %6084 = vmatpush1.msra.mxu0 %v1568
    %6085 = vmatprep.mubr.f32.mxu0 %v3306
    %6086 = vmatmul.mubr.f32.gmra.mrb[0].mxu0 %v3304
    %v6087 = vpop.f32.mrb[0].mxu0
    %v6088 = vadd.f32 %v6017, %v6087
    %v6089 = vpop.f32.mrb[0].mxu0
    %v6090 = vadd.f32 %v6019, %v6089
    %6091 = vdwg.mxu0
    %6092 = vmatprep.subr.mxu0 %v1573
    %6093 = vmatpush1.msra.mxu0 %v1572
    %6094 = vmatprep.subr.mxu0 %v1577
    %6095 = vmatpush1.msra.mxu0 %v1576
    %6096 = vmatprep.subr.mxu0 %v1581
    %6097 = vmatpush1.msra.mxu0 %v1580
    %6098 = vmatprep.subr.mxu0 %v1585
    %6099 = vmatpush1.msra.mxu0 %v1584
    %6100 = vmatprep.subr.mxu0 %v1589
    %6101 = vmatpush1.msra.mxu0 %v1588
    %6102 = vmatprep.subr.mxu0 %v1593
    %6103 = vmatpush1.msra.mxu0 %v1592
    %6104 = vmatprep.subr.mxu0 %v1597
    %6105 = vmatpush1.msra.mxu0 %v1596
    %6106 = vmatprep.subr.mxu0 %v1601
    %6107 = vmatpush1.msra.mxu0 %v1600
    %6108 = vmatprep.subr.mxu0 %v1605
    %6109 = vmatpush1.msra.mxu0 %v1604
    %6110 = vmatprep.subr.mxu0 %v1609
    %6111 = vmatpush1.msra.mxu0 %v1608
    %6112 = vmatprep.subr.mxu0 %v1613
    %6113 = vmatpush1.msra.mxu0 %v1612
    %6114 = vmatprep.subr.mxu0 %v1617
    %6115 = vmatpush1.msra.mxu0 %v1616
    %6116 = vmatprep.subr.mxu0 %v1621
    %6117 = vmatpush1.msra.mxu0 %v1620
    %6118 = vmatprep.subr.mxu0 %v1625
    %6119 = vmatpush1.msra.mxu0 %v1624
    %6120 = vmatprep.subr.mxu0 %v1629
    %6121 = vmatpush1.msra.mxu0 %v1628
    %6122 = vmatprep.subr.mxu0 %v1633
    %6123 = vmatpush1.msra.mxu0 %v1632
    %6124 = vmatprep.subr.mxu0 %v1637
    %6125 = vmatpush1.msra.mxu0 %v1636
    %6126 = vmatprep.subr.mxu0 %v1641
    %6127 = vmatpush1.msra.mxu0 %v1640
    %6128 = vmatprep.subr.mxu0 %v1645
    %6129 = vmatpush1.msra.mxu0 %v1644
    %6130 = vmatprep.subr.mxu0 %v1649
    %6131 = vmatpush1.msra.mxu0 %v1648
    %6132 = vmatprep.subr.mxu0 %v1653
    %6133 = vmatpush1.msra.mxu0 %v1652
    %6134 = vmatprep.subr.mxu0 %v1657
    %6135 = vmatpush1.msra.mxu0 %v1656
    %6136 = vmatprep.subr.mxu0 %v1661
    %6137 = vmatpush1.msra.mxu0 %v1660
    %6138 = vmatprep.subr.mxu0 %v1665
    %6139 = vmatpush1.msra.mxu0 %v1664
    %6140 = vmatprep.subr.mxu0 %v1669
    %6141 = vmatpush1.msra.mxu0 %v1668
    %6142 = vmatprep.subr.mxu0 %v1673
    %6143 = vmatpush1.msra.mxu0 %v1672
    %6144 = vmatprep.subr.mxu0 %v1677
    %6145 = vmatpush1.msra.mxu0 %v1676
    %6146 = vmatprep.subr.mxu0 %v1681
    %6147 = vmatpush1.msra.mxu0 %v1680
    %6148 = vmatprep.subr.mxu0 %v1685
    %6149 = vmatpush1.msra.mxu0 %v1684
    %6150 = vmatprep.subr.mxu0 %v1689
    %6151 = vmatpush1.msra.mxu0 %v1688
    %6152 = vmatprep.subr.mxu0 %v1693
    %6153 = vmatpush1.msra.mxu0 %v1692
    %6154 = vmatprep.subr.mxu0 %v1697
    %6155 = vmatpush1.msra.mxu0 %v1696
    %6156 = vmatprep.mubr.f32.mxu0 %v3322
    %6157 = vmatmul.mubr.f32.gmra.mrb[0].mxu0 %v3314
    %v6158 = vpop.f32.mrb[0].mxu0
    %v6159 = vadd.f32 %v6088, %v6158
    %v6160 = vpop.f32.mrb[0].mxu0
    %v6161 = vadd.f32 %v6090, %v6160
    %6162 = vdwg.mxu0
    %6163 = vmatprep.subr.mxu0 %v1701
    %6164 = vmatpush1.msra.mxu0 %v1700
    %6165 = vmatprep.subr.mxu0 %v1705
    %6166 = vmatpush1.msra.mxu0 %v1704
    %6167 = vmatprep.subr.mxu0 %v1709
    %6168 = vmatpush1.msra.mxu0 %v1708
    %6169 = vmatprep.subr.mxu0 %v1713
    %6170 = vmatpush1.msra.mxu0 %v1712
    %6171 = vmatprep.subr.mxu0 %v1717
    %6172 = vmatpush1.msra.mxu0 %v1716
    %6173 = vmatprep.subr.mxu0 %v1721
    %6174 = vmatpush1.msra.mxu0 %v1720
    %6175 = vmatprep.subr.mxu0 %v1725
    %6176 = vmatpush1.msra.mxu0 %v1724
    %6177 = vmatprep.subr.mxu0 %v1729
    %6178 = vmatpush1.msra.mxu0 %v1728
    %6179 = vmatprep.subr.mxu0 %v1733
    %6180 = vmatpush1.msra.mxu0 %v1732
    %6181 = vmatprep.subr.mxu0 %v1737
    %6182 = vmatpush1.msra.mxu0 %v1736
    %6183 = vmatprep.subr.mxu0 %v1741
    %6184 = vmatpush1.msra.mxu0 %v1740
    %6185 = vmatprep.subr.mxu0 %v1745
    %6186 = vmatpush1.msra.mxu0 %v1744
    %6187 = vmatprep.subr.mxu0 %v1749
    %6188 = vmatpush1.msra.mxu0 %v1748
    %6189 = vmatprep.subr.mxu0 %v1753
    %6190 = vmatpush1.msra.mxu0 %v1752
    %6191 = vmatprep.subr.mxu0 %v1757
    %6192 = vmatpush1.msra.mxu0 %v1756
    %6193 = vmatprep.subr.mxu0 %v1761
    %6194 = vmatpush1.msra.mxu0 %v1760
    %6195 = vmatprep.subr.mxu0 %v1765
    %6196 = vmatpush1.msra.mxu0 %v1764
    %6197 = vmatprep.subr.mxu0 %v1769
    %6198 = vmatpush1.msra.mxu0 %v1768
    %6199 = vmatprep.subr.mxu0 %v1773
    %6200 = vmatpush1.msra.mxu0 %v1772
    %6201 = vmatprep.subr.mxu0 %v1777
    %6202 = vmatpush1.msra.mxu0 %v1776
    %6203 = vmatprep.subr.mxu0 %v1781
    %6204 = vmatpush1.msra.mxu0 %v1780
    %6205 = vmatprep.subr.mxu0 %v1785
    %6206 = vmatpush1.msra.mxu0 %v1784
    %6207 = vmatprep.subr.mxu0 %v1789
    %6208 = vmatpush1.msra.mxu0 %v1788
    %6209 = vmatprep.subr.mxu0 %v1793
    %6210 = vmatpush1.msra.mxu0 %v1792
    %6211 = vmatprep.subr.mxu0 %v1797
    %6212 = vmatpush1.msra.mxu0 %v1796
    %6213 = vmatprep.subr.mxu0 %v1801
    %6214 = vmatpush1.msra.mxu0 %v1800
    %6215 = vmatprep.subr.mxu0 %v1805
    %6216 = vmatpush1.msra.mxu0 %v1804
    %6217 = vmatprep.subr.mxu0 %v1809
    %6218 = vmatpush1.msra.mxu0 %v1808
    %6219 = vmatprep.subr.mxu0 %v1813
    %6220 = vmatpush1.msra.mxu0 %v1812
    %6221 = vmatprep.subr.mxu0 %v1817
    %6222 = vmatpush1.msra.mxu0 %v1816
    %6223 = vmatprep.subr.mxu0 %v1821
    %6224 = vmatpush1.msra.mxu0 %v1820
    %6225 = vmatprep.subr.mxu0 %v1825
    %6226 = vmatpush1.msra.mxu0 %v1824
    %6227 = vmatprep.mubr.f32.mxu0 %v3323
    %6228 = vmatmul.mubr.f32.gmra.mrb[0].mxu0 %v3321
    %v6229 = vpop.f32.mrb[0].mxu0
    %v6230 = vadd.f32 %v6159, %v6229
    %v6231 = vpop.f32.mrb[0].mxu0
    %v6232 = vadd.f32 %v6161, %v6231
    %6233 = vdwg.mxu0
    %6234 = vmatprep.subr.mxu0 %v1829
    %6235 = vmatpush1.msra.mxu0 %v1828
    %6236 = vmatprep.subr.mxu0 %v1833
    %6237 = vmatpush1.msra.mxu0 %v1832
    %6238 = vmatprep.subr.mxu0 %v1837
    %6239 = vmatpush1.msra.mxu0 %v1836
    %6240 = vmatprep.subr.mxu0 %v1841
    %6241 = vmatpush1.msra.mxu0 %v1840
    %6242 = vmatprep.subr.mxu0 %v1845
    %6243 = vmatpush1.msra.mxu0 %v1844
    %6244 = vmatprep.subr.mxu0 %v1849
    %6245 = vmatpush1.msra.mxu0 %v1848
    %6246 = vmatprep.subr.mxu0 %v1853
    %6247 = vmatpush1.msra.mxu0 %v1852
    %6248 = vmatprep.subr.mxu0 %v1857
    %6249 = vmatpush1.msra.mxu0 %v1856
    %6250 = vmatprep.subr.mxu0 %v1861
    %6251 = vmatpush1.msra.mxu0 %v1860
    %6252 = vmatprep.subr.mxu0 %v1865
    %6253 = vmatpush1.msra.mxu0 %v1864
    %6254 = vmatprep.subr.mxu0 %v1869
    %6255 = vmatpush1.msra.mxu0 %v1868
    %6256 = vmatprep.subr.mxu0 %v1873
    %6257 = vmatpush1.msra.mxu0 %v1872
    %6258 = vmatprep.subr.mxu0 %v1877
    %6259 = vmatpush1.msra.mxu0 %v1876
    %6260 = vmatprep.subr.mxu0 %v1881
    %6261 = vmatpush1.msra.mxu0 %v1880
    %6262 = vmatprep.subr.mxu0 %v1885
    %6263 = vmatpush1.msra.mxu0 %v1884
    %6264 = vmatprep.subr.mxu0 %v1889
    %6265 = vmatpush1.msra.mxu0 %v1888
    %6266 = vmatprep.subr.mxu0 %v1893
    %6267 = vmatpush1.msra.mxu0 %v1892
    %6268 = vmatprep.subr.mxu0 %v1897
    %6269 = vmatpush1.msra.mxu0 %v1896
    %6270 = vmatprep.subr.mxu0 %v1901
    %6271 = vmatpush1.msra.mxu0 %v1900
    %6272 = vmatprep.subr.mxu0 %v1905
    %6273 = vmatpush1.msra.mxu0 %v1904
    %6274 = vmatprep.subr.mxu0 %v1909
    %6275 = vmatpush1.msra.mxu0 %v1908
    %6276 = vmatprep.subr.mxu0 %v1913
    %6277 = vmatpush1.msra.mxu0 %v1912
    %6278 = vmatprep.subr.mxu0 %v1917
    %6279 = vmatpush1.msra.mxu0 %v1916
    %6280 = vmatprep.subr.mxu0 %v1921
    %6281 = vmatpush1.msra.mxu0 %v1920
    %6282 = vmatprep.subr.mxu0 %v1925
    %6283 = vmatpush1.msra.mxu0 %v1924
    %6284 = vmatprep.subr.mxu0 %v1929
    %6285 = vmatpush1.msra.mxu0 %v1928
    %6286 = vmatprep.subr.mxu0 %v1933
    %6287 = vmatpush1.msra.mxu0 %v1932
    %6288 = vmatprep.subr.mxu0 %v1937
    %6289 = vmatpush1.msra.mxu0 %v1936
    %6290 = vmatprep.subr.mxu0 %v1941
    %6291 = vmatpush1.msra.mxu0 %v1940
    %6292 = vmatprep.subr.mxu0 %v1945
    %6293 = vmatpush1.msra.mxu0 %v1944
    %6294 = vmatprep.subr.mxu0 %v1949
    %6295 = vmatpush1.msra.mxu0 %v1948
    %6296 = vmatprep.subr.mxu0 %v1953
    %6297 = vmatpush1.msra.mxu0 %v1952
    %6298 = vmatprep.mubr.f32.mxu0 %v3339
    %6299 = vmatmul.mubr.f32.gmra.mrb[0].mxu0 %v3331
    %v6300 = vpop.f32.mrb[0].mxu0
    %v6301 = vadd.f32 %v6230, %v6300
    %v6302 = vpop.f32.mrb[0].mxu0
    %v6303 = vadd.f32 %v6232, %v6302
    %6304 = vdwg.mxu0
    %6305 = vmatprep.subr.mxu0 %v1957
    %6306 = vmatpush1.msra.mxu0 %v1956
    %6307 = vmatprep.subr.mxu0 %v1961
    %6308 = vmatpush1.msra.mxu0 %v1960
    %6309 = vmatprep.subr.mxu0 %v1965
    %6310 = vmatpush1.msra.mxu0 %v1964
    %6311 = vmatprep.subr.mxu0 %v1969
    %6312 = vmatpush1.msra.mxu0 %v1968
    %6313 = vmatprep.subr.mxu0 %v1973
    %6314 = vmatpush1.msra.mxu0 %v1972
    %6315 = vmatprep.subr.mxu0 %v1977
    %6316 = vmatpush1.msra.mxu0 %v1976
    %6317 = vmatprep.subr.mxu0 %v1981
    %6318 = vmatpush1.msra.mxu0 %v1980
    %6319 = vmatprep.subr.mxu0 %v1985
    %6320 = vmatpush1.msra.mxu0 %v1984
    %6321 = vmatprep.subr.mxu0 %v1989
    %6322 = vmatpush1.msra.mxu0 %v1988
    %6323 = vmatprep.subr.mxu0 %v1993
    %6324 = vmatpush1.msra.mxu0 %v1992
    %6325 = vmatprep.subr.mxu0 %v1997
    %6326 = vmatpush1.msra.mxu0 %v1996
    %6327 = vmatprep.subr.mxu0 %v2001
    %6328 = vmatpush1.msra.mxu0 %v2000
    %6329 = vmatprep.subr.mxu0 %v2005
    %6330 = vmatpush1.msra.mxu0 %v2004
    %6331 = vmatprep.subr.mxu0 %v2009
    %6332 = vmatpush1.msra.mxu0 %v2008
    %6333 = vmatprep.subr.mxu0 %v2013
    %6334 = vmatpush1.msra.mxu0 %v2012
    %6335 = vmatprep.subr.mxu0 %v2017
    %6336 = vmatpush1.msra.mxu0 %v2016
    %6337 = vmatprep.subr.mxu0 %v2021
    %6338 = vmatpush1.msra.mxu0 %v2020
    %6339 = vmatprep.subr.mxu0 %v2025
    %6340 = vmatpush1.msra.mxu0 %v2024
    %6341 = vmatprep.subr.mxu0 %v2029
    %6342 = vmatpush1.msra.mxu0 %v2028
    %6343 = vmatprep.subr.mxu0 %v2033
    %6344 = vmatpush1.msra.mxu0 %v2032
    %6345 = vmatprep.subr.mxu0 %v2037
    %6346 = vmatpush1.msra.mxu0 %v2036
    %6347 = vmatprep.subr.mxu0 %v2041
    %6348 = vmatpush1.msra.mxu0 %v2040
    %6349 = vmatprep.subr.mxu0 %v2045
    %6350 = vmatpush1.msra.mxu0 %v2044
    %6351 = vmatprep.subr.mxu0 %v2049
    %6352 = vmatpush1.msra.mxu0 %v2048
    %6353 = vmatprep.subr.mxu0 %v2053
    %6354 = vmatpush1.msra.mxu0 %v2052
    %6355 = vmatprep.subr.mxu0 %v2057
    %6356 = vmatpush1.msra.mxu0 %v2056
    %6357 = vmatprep.subr.mxu0 %v2061
    %6358 = vmatpush1.msra.mxu0 %v2060
    %6359 = vmatprep.subr.mxu0 %v2065
    %6360 = vmatpush1.msra.mxu0 %v2064
    %6361 = vmatprep.subr.mxu0 %v2069
    %6362 = vmatpush1.msra.mxu0 %v2068
    %6363 = vmatprep.subr.mxu0 %v2073
    %6364 = vmatpush1.msra.mxu0 %v2072
    %6365 = vmatprep.subr.mxu0 %v2077
    %6366 = vmatpush1.msra.mxu0 %v2076
    %6367 = vmatprep.subr.mxu0 %v2081
    %6368 = vmatpush1.msra.mxu0 %v2080
    %6369 = vmatprep.mubr.f32.mxu0 %v3340
    %6370 = vmatmul.mubr.f32.gmra.mrb[0].mxu0 %v3338
    %v6371 = vpop.f32.mrb[0].mxu0
    %v6372 = vadd.f32 %v6301, %v6371
    %v6373 = vpop.f32.mrb[0].mxu0
    %v6374 = vadd.f32 %v6303, %v6373
    %6375 = vdwg.mxu0
    %6376 = vmatprep.subr.mxu0 %v2085
    %6377 = vmatpush1.msra.mxu0 %v2084
    %6378 = vmatprep.subr.mxu0 %v2089
    %6379 = vmatpush1.msra.mxu0 %v2088
    %6380 = vmatprep.subr.mxu0 %v2093
    %6381 = vmatpush1.msra.mxu0 %v2092
    %6382 = vmatprep.subr.mxu0 %v2097
    %6383 = vmatpush1.msra.mxu0 %v2096
    %6384 = vmatprep.subr.mxu0 %v2101
    %6385 = vmatpush1.msra.mxu0 %v2100
    %6386 = vmatprep.subr.mxu0 %v2105
    %6387 = vmatpush1.msra.mxu0 %v2104
    %6388 = vmatprep.subr.mxu0 %v2109
    %6389 = vmatpush1.msra.mxu0 %v2108
    %6390 = vmatprep.subr.mxu0 %v2113
    %6391 = vmatpush1.msra.mxu0 %v2112
    %6392 = vmatprep.subr.mxu0 %v2117
    %6393 = vmatpush1.msra.mxu0 %v2116
    %6394 = vmatprep.subr.mxu0 %v2121
    %6395 = vmatpush1.msra.mxu0 %v2120
    %6396 = vmatprep.subr.mxu0 %v2125
    %6397 = vmatpush1.msra.mxu0 %v2124
    %6398 = vmatprep.subr.mxu0 %v2129
    %6399 = vmatpush1.msra.mxu0 %v2128
    %6400 = vmatprep.subr.mxu0 %v2133
    %6401 = vmatpush1.msra.mxu0 %v2132
    %6402 = vmatprep.subr.mxu0 %v2137
    %6403 = vmatpush1.msra.mxu0 %v2136
    %6404 = vmatprep.subr.mxu0 %v2141
    %6405 = vmatpush1.msra.mxu0 %v2140
    %6406 = vmatprep.subr.mxu0 %v2145
    %6407 = vmatpush1.msra.mxu0 %v2144
    %6408 = vmatprep.subr.mxu0 %v2149
    %6409 = vmatpush1.msra.mxu0 %v2148
    %6410 = vmatprep.subr.mxu0 %v2153
    %6411 = vmatpush1.msra.mxu0 %v2152
    %6412 = vmatprep.subr.mxu0 %v2157
    %6413 = vmatpush1.msra.mxu0 %v2156
    %6414 = vmatprep.subr.mxu0 %v2161
    %6415 = vmatpush1.msra.mxu0 %v2160
    %6416 = vmatprep.subr.mxu0 %v2165
    %6417 = vmatpush1.msra.mxu0 %v2164
    %6418 = vmatprep.subr.mxu0 %v2169
    %6419 = vmatpush1.msra.mxu0 %v2168
    %6420 = vmatprep.subr.mxu0 %v2173
    %6421 = vmatpush1.msra.mxu0 %v2172
    %6422 = vmatprep.subr.mxu0 %v2177
    %6423 = vmatpush1.msra.mxu0 %v2176
    %6424 = vmatprep.subr.mxu0 %v2181
    %6425 = vmatpush1.msra.mxu0 %v2180
    %6426 = vmatprep.subr.mxu0 %v2185
    %6427 = vmatpush1.msra.mxu0 %v2184
    %6428 = vmatprep.subr.mxu0 %v2189
    %6429 = vmatpush1.msra.mxu0 %v2188
    %6430 = vmatprep.subr.mxu0 %v2193
    %6431 = vmatpush1.msra.mxu0 %v2192
    %6432 = vmatprep.subr.mxu0 %v2197
    %6433 = vmatpush1.msra.mxu0 %v2196
    %6434 = vmatprep.subr.mxu0 %v2201
    %6435 = vmatpush1.msra.mxu0 %v2200
    %6436 = vmatprep.subr.mxu0 %v2205
    %6437 = vmatpush1.msra.mxu0 %v2204
    %6438 = vmatprep.subr.mxu0 %v2209
    %6439 = vmatpush1.msra.mxu0 %v2208
    %6440 = vmatprep.mubr.f32.mxu0 %v3356
    %6441 = vmatmul.mubr.f32.gmra.mrb[0].mxu0 %v3348
    %v6442 = vpop.f32.mrb[0].mxu0
    %v6443 = vadd.f32 %v6372, %v6442
    %v6444 = vpop.f32.mrb[0].mxu0
    %v6445 = vadd.f32 %v6374, %v6444
    %6446 = vdwg.mxu0
    %6447 = vmatprep.subr.mxu0 %v2213
    %6448 = vmatpush1.msra.mxu0 %v2212
    %6449 = vmatprep.subr.mxu0 %v2217
    %6450 = vmatpush1.msra.mxu0 %v2216
    %6451 = vmatprep.subr.mxu0 %v2221
    %6452 = vmatpush1.msra.mxu0 %v2220
    %6453 = vmatprep.subr.mxu0 %v2225
    %6454 = vmatpush1.msra.mxu0 %v2224
    %6455 = vmatprep.subr.mxu0 %v2229
    %6456 = vmatpush1.msra.mxu0 %v2228
    %6457 = vmatprep.subr.mxu0 %v2233
    %6458 = vmatpush1.msra.mxu0 %v2232
    %6459 = vmatprep.subr.mxu0 %v2237
    %6460 = vmatpush1.msra.mxu0 %v2236
    %6461 = vmatprep.subr.mxu0 %v2241
    %6462 = vmatpush1.msra.mxu0 %v2240
    %6463 = vmatprep.subr.mxu0 %v2245
    %6464 = vmatpush1.msra.mxu0 %v2244
    %6465 = vmatprep.subr.mxu0 %v2249
    %6466 = vmatpush1.msra.mxu0 %v2248
    %6467 = vmatprep.subr.mxu0 %v2253
    %6468 = vmatpush1.msra.mxu0 %v2252
    %6469 = vmatprep.subr.mxu0 %v2257
    %6470 = vmatpush1.msra.mxu0 %v2256
    %6471 = vmatprep.subr.mxu0 %v2261
    %6472 = vmatpush1.msra.mxu0 %v2260
    %6473 = vmatprep.subr.mxu0 %v2265
    %6474 = vmatpush1.msra.mxu0 %v2264
    %6475 = vmatprep.subr.mxu0 %v2269
    %6476 = vmatpush1.msra.mxu0 %v2268
    %6477 = vmatprep.subr.mxu0 %v2273
    %6478 = vmatpush1.msra.mxu0 %v2272
    %6479 = vmatprep.subr.mxu0 %v2277
    %6480 = vmatpush1.msra.mxu0 %v2276
    %6481 = vmatprep.subr.mxu0 %v2281
    %6482 = vmatpush1.msra.mxu0 %v2280
    %6483 = vmatprep.subr.mxu0 %v2285
    %6484 = vmatpush1.msra.mxu0 %v2284
    %6485 = vmatprep.subr.mxu0 %v2289
    %6486 = vmatpush1.msra.mxu0 %v2288
    %6487 = vmatprep.subr.mxu0 %v2293
    %6488 = vmatpush1.msra.mxu0 %v2292
    %6489 = vmatprep.subr.mxu0 %v2297
    %6490 = vmatpush1.msra.mxu0 %v2296
    %6491 = vmatprep.subr.mxu0 %v2301
    %6492 = vmatpush1.msra.mxu0 %v2300
    %6493 = vmatprep.subr.mxu0 %v2305
    %6494 = vmatpush1.msra.mxu0 %v2304
    %6495 = vmatprep.subr.mxu0 %v2309
    %6496 = vmatpush1.msra.mxu0 %v2308
    %6497 = vmatprep.subr.mxu0 %v2313
    %6498 = vmatpush1.msra.mxu0 %v2312
    %6499 = vmatprep.subr.mxu0 %v2317
    %6500 = vmatpush1.msra.mxu0 %v2316
    %6501 = vmatprep.subr.mxu0 %v2321
    %6502 = vmatpush1.msra.mxu0 %v2320
    %6503 = vmatprep.subr.mxu0 %v2325
    %6504 = vmatpush1.msra.mxu0 %v2324
    %6505 = vmatprep.subr.mxu0 %v2329
    %6506 = vmatpush1.msra.mxu0 %v2328
    %6507 = vmatprep.subr.mxu0 %v2333
    %6508 = vmatpush1.msra.mxu0 %v2332
    %6509 = vmatprep.subr.mxu0 %v2337
    %6510 = vmatpush1.msra.mxu0 %v2336
    %6511 = vmatprep.mubr.f32.mxu0 %v3357
    %6512 = vmatmul.mubr.f32.gmra.mrb[0].mxu0 %v3355
    %v6513 = vpop.f32.mrb[0].mxu0
    %v6514 = vadd.f32 %v6443, %v6513
    %v6515 = vpop.f32.mrb[0].mxu0
    %v6516 = vadd.f32 %v6445, %v6515
    %6517 = vdwg.mxu0
    %6518 = vmatprep.subr.mxu0 %v2341
    %6519 = vmatpush1.msra.mxu0 %v2340
    %6520 = vmatprep.subr.mxu0 %v2345
    %6521 = vmatpush1.msra.mxu0 %v2344
    %6522 = vmatprep.subr.mxu0 %v2349
    %6523 = vmatpush1.msra.mxu0 %v2348
    %6524 = vmatprep.subr.mxu0 %v2353
    %6525 = vmatpush1.msra.mxu0 %v2352
    %6526 = vmatprep.subr.mxu0 %v2357
    %6527 = vmatpush1.msra.mxu0 %v2356
    %6528 = vmatprep.subr.mxu0 %v2361
    %6529 = vmatpush1.msra.mxu0 %v2360
    %6530 = vmatprep.subr.mxu0 %v2365
    %6531 = vmatpush1.msra.mxu0 %v2364
    %6532 = vmatprep.subr.mxu0 %v2369
    %6533 = vmatpush1.msra.mxu0 %v2368
    %6534 = vmatprep.subr.mxu0 %v2373
    %6535 = vmatpush1.msra.mxu0 %v2372
    %6536 = vmatprep.subr.mxu0 %v2377
    %6537 = vmatpush1.msra.mxu0 %v2376
    %6538 = vmatprep.subr.mxu0 %v2381
    %6539 = vmatpush1.msra.mxu0 %v2380
    %6540 = vmatprep.subr.mxu0 %v2385
    %6541 = vmatpush1.msra.mxu0 %v2384
    %6542 = vmatprep.subr.mxu0 %v2389
    %6543 = vmatpush1.msra.mxu0 %v2388
    %6544 = vmatprep.subr.mxu0 %v2393
    %6545 = vmatpush1.msra.mxu0 %v2392
    %6546 = vmatprep.subr.mxu0 %v2397
    %6547 = vmatpush1.msra.mxu0 %v2396
    %6548 = vmatprep.subr.mxu0 %v2401
    %6549 = vmatpush1.msra.mxu0 %v2400
    %6550 = vmatprep.subr.mxu0 %v2405
    %6551 = vmatpush1.msra.mxu0 %v2404
    %6552 = vmatprep.subr.mxu0 %v2409
    %6553 = vmatpush1.msra.mxu0 %v2408
    %6554 = vmatprep.subr.mxu0 %v2413
    %6555 = vmatpush1.msra.mxu0 %v2412
    %6556 = vmatprep.subr.mxu0 %v2417
    %6557 = vmatpush1.msra.mxu0 %v2416
    %6558 = vmatprep.subr.mxu0 %v2421
    %6559 = vmatpush1.msra.mxu0 %v2420
    %6560 = vmatprep.subr.mxu0 %v2425
    %6561 = vmatpush1.msra.mxu0 %v2424
    %6562 = vmatprep.subr.mxu0 %v2429
    %6563 = vmatpush1.msra.mxu0 %v2428
    %6564 = vmatprep.subr.mxu0 %v2433
    %6565 = vmatpush1.msra.mxu0 %v2432
    %6566 = vmatprep.subr.mxu0 %v2437
    %6567 = vmatpush1.msra.mxu0 %v2436
    %6568 = vmatprep.subr.mxu0 %v2441
    %6569 = vmatpush1.msra.mxu0 %v2440
    %6570 = vmatprep.subr.mxu0 %v2445
    %6571 = vmatpush1.msra.mxu0 %v2444
    %6572 = vmatprep.subr.mxu0 %v2449
    %6573 = vmatpush1.msra.mxu0 %v2448
    %6574 = vmatprep.subr.mxu0 %v2453
    %6575 = vmatpush1.msra.mxu0 %v2452
    %6576 = vmatprep.subr.mxu0 %v2457
    %6577 = vmatpush1.msra.mxu0 %v2456
    %6578 = vmatprep.subr.mxu0 %v2461
    %6579 = vmatpush1.msra.mxu0 %v2460
    %6580 = vmatprep.subr.mxu0 %v2465
    %6581 = vmatpush1.msra.mxu0 %v2464
    %6582 = vmatprep.mubr.f32.mxu0 %v3373
    %6583 = vmatmul.mubr.f32.gmra.mrb[0].mxu0 %v3365
    %v6584 = vpop.f32.mrb[0].mxu0
    %v6585 = vadd.f32 %v6514, %v6584
    %v6586 = vpop.f32.mrb[0].mxu0
    %v6587 = vadd.f32 %v6516, %v6586
    %6588 = vdwg.mxu0
    %6589 = vmatprep.subr.mxu0 %v2469
    %6590 = vmatpush1.msra.mxu0 %v2468
    %6591 = vmatprep.subr.mxu0 %v2473
    %6592 = vmatpush1.msra.mxu0 %v2472
    %6593 = vmatprep.subr.mxu0 %v2477
    %6594 = vmatpush1.msra.mxu0 %v2476
    %6595 = vmatprep.subr.mxu0 %v2481
    %6596 = vmatpush1.msra.mxu0 %v2480
    %6597 = vmatprep.subr.mxu0 %v2485
    %6598 = vmatpush1.msra.mxu0 %v2484
    %6599 = vmatprep.subr.mxu0 %v2489
    %6600 = vmatpush1.msra.mxu0 %v2488
    %6601 = vmatprep.subr.mxu0 %v2493
    %6602 = vmatpush1.msra.mxu0 %v2492
    %6603 = vmatprep.subr.mxu0 %v2497
    %6604 = vmatpush1.msra.mxu0 %v2496
    %6605 = vmatprep.subr.mxu0 %v2501
    %6606 = vmatpush1.msra.mxu0 %v2500
    %6607 = vmatprep.subr.mxu0 %v2505
    %6608 = vmatpush1.msra.mxu0 %v2504
    %6609 = vmatprep.subr.mxu0 %v2509
    %6610 = vmatpush1.msra.mxu0 %v2508
    %6611 = vmatprep.subr.mxu0 %v2513
    %6612 = vmatpush1.msra.mxu0 %v2512
    %6613 = vmatprep.subr.mxu0 %v2517
    %6614 = vmatpush1.msra.mxu0 %v2516
    %6615 = vmatprep.subr.mxu0 %v2521
    %6616 = vmatpush1.msra.mxu0 %v2520
    %6617 = vmatprep.subr.mxu0 %v2525
    %6618 = vmatpush1.msra.mxu0 %v2524
    %6619 = vmatprep.subr.mxu0 %v2529
    %6620 = vmatpush1.msra.mxu0 %v2528
    %6621 = vmatprep.subr.mxu0 %v2533
    %6622 = vmatpush1.msra.mxu0 %v2532
    %6623 = vmatprep.subr.mxu0 %v2537
    %6624 = vmatpush1.msra.mxu0 %v2536
    %6625 = vmatprep.subr.mxu0 %v2541
    %6626 = vmatpush1.msra.mxu0 %v2540
    %6627 = vmatprep.subr.mxu0 %v2545
    %6628 = vmatpush1.msra.mxu0 %v2544
    %6629 = vmatprep.subr.mxu0 %v2549
    %6630 = vmatpush1.msra.mxu0 %v2548
    %6631 = vmatprep.subr.mxu0 %v2553
    %6632 = vmatpush1.msra.mxu0 %v2552
    %6633 = vmatprep.subr.mxu0 %v2557
    %6634 = vmatpush1.msra.mxu0 %v2556
    %6635 = vmatprep.subr.mxu0 %v2561
    %6636 = vmatpush1.msra.mxu0 %v2560
    %6637 = vmatprep.subr.mxu0 %v2565
    %6638 = vmatpush1.msra.mxu0 %v2564
    %6639 = vmatprep.subr.mxu0 %v2569
    %6640 = vmatpush1.msra.mxu0 %v2568
    %6641 = vmatprep.subr.mxu0 %v2573
    %6642 = vmatpush1.msra.mxu0 %v2572
    %6643 = vmatprep.subr.mxu0 %v2577
    %6644 = vmatpush1.msra.mxu0 %v2576
    %6645 = vmatprep.subr.mxu0 %v2581
    %6646 = vmatpush1.msra.mxu0 %v2580
    %6647 = vmatprep.subr.mxu0 %v2585
    %6648 = vmatpush1.msra.mxu0 %v2584
    %6649 = vmatprep.subr.mxu0 %v2589
    %6650 = vmatpush1.msra.mxu0 %v2588
    %6651 = vmatprep.subr.mxu0 %v2593
    %6652 = vmatpush1.msra.mxu0 %v2592
    %6653 = vmatprep.mubr.f32.mxu0 %v3374
    %6654 = vmatmul.mubr.f32.gmra.mrb[0].mxu0 %v3372
    %v6655 = vpop.f32.mrb[0].mxu0
    %v6656 = vadd.f32 %v6585, %v6655
    %v6657 = vpop.f32.mrb[0].mxu0
    %v6658 = vadd.f32 %v6587, %v6657
    %6659 = vdwg.mxu0
    %6660 = vmatprep.subr.mxu0 %v2597
    %6661 = vmatpush1.msra.mxu0 %v2596
    %6662 = vmatprep.subr.mxu0 %v2601
    %6663 = vmatpush1.msra.mxu0 %v2600
    %6664 = vmatprep.subr.mxu0 %v2605
    %6665 = vmatpush1.msra.mxu0 %v2604
    %6666 = vmatprep.subr.mxu0 %v2609
    %6667 = vmatpush1.msra.mxu0 %v2608
    %6668 = vmatprep.subr.mxu0 %v2613
    %6669 = vmatpush1.msra.mxu0 %v2612
    %6670 = vmatprep.subr.mxu0 %v2617
    %6671 = vmatpush1.msra.mxu0 %v2616
    %6672 = vmatprep.subr.mxu0 %v2621
    %6673 = vmatpush1.msra.mxu0 %v2620
    %6674 = vmatprep.subr.mxu0 %v2625
    %6675 = vmatpush1.msra.mxu0 %v2624
    %6676 = vmatprep.subr.mxu0 %v2629
    %6677 = vmatpush1.msra.mxu0 %v2628
    %6678 = vmatprep.subr.mxu0 %v2633
    %6679 = vmatpush1.msra.mxu0 %v2632
    %6680 = vmatprep.subr.mxu0 %v2637
    %6681 = vmatpush1.msra.mxu0 %v2636
    %6682 = vmatprep.subr.mxu0 %v2641
    %6683 = vmatpush1.msra.mxu0 %v2640
    %6684 = vmatprep.subr.mxu0 %v2645
    %6685 = vmatpush1.msra.mxu0 %v2644
    %6686 = vmatprep.subr.mxu0 %v2649
    %6687 = vmatpush1.msra.mxu0 %v2648
    %6688 = vmatprep.subr.mxu0 %v2653
    %6689 = vmatpush1.msra.mxu0 %v2652
    %6690 = vmatprep.subr.mxu0 %v2657
    %6691 = vmatpush1.msra.mxu0 %v2656
    %6692 = vmatprep.subr.mxu0 %v2661
    %6693 = vmatpush1.msra.mxu0 %v2660
    %6694 = vmatprep.subr.mxu0 %v2665
    %6695 = vmatpush1.msra.mxu0 %v2664
    %6696 = vmatprep.subr.mxu0 %v2669
    %6697 = vmatpush1.msra.mxu0 %v2668
    %6698 = vmatprep.subr.mxu0 %v2673
    %6699 = vmatpush1.msra.mxu0 %v2672
    %6700 = vmatprep.subr.mxu0 %v2677
    %6701 = vmatpush1.msra.mxu0 %v2676
    %6702 = vmatprep.subr.mxu0 %v2681
    %6703 = vmatpush1.msra.mxu0 %v2680
    %6704 = vmatprep.subr.mxu0 %v2685
    %6705 = vmatpush1.msra.mxu0 %v2684
    %6706 = vmatprep.subr.mxu0 %v2689
    %6707 = vmatpush1.msra.mxu0 %v2688
    %6708 = vmatprep.subr.mxu0 %v2693
    %6709 = vmatpush1.msra.mxu0 %v2692
    %6710 = vmatprep.subr.mxu0 %v2697
    %6711 = vmatpush1.msra.mxu0 %v2696
    %6712 = vmatprep.subr.mxu0 %v2701
    %6713 = vmatpush1.msra.mxu0 %v2700
    %6714 = vmatprep.subr.mxu0 %v2705
    %6715 = vmatpush1.msra.mxu0 %v2704
    %6716 = vmatprep.subr.mxu0 %v2709
    %6717 = vmatpush1.msra.mxu0 %v2708
    %6718 = vmatprep.subr.mxu0 %v2713
    %6719 = vmatpush1.msra.mxu0 %v2712
    %6720 = vmatprep.subr.mxu0 %v2717
    %6721 = vmatpush1.msra.mxu0 %v2716
    %6722 = vmatprep.subr.mxu0 %v2721
    %6723 = vmatpush1.msra.mxu0 %v2720
    %6724 = vmatprep.mubr.f32.mxu0 %v3390
    %6725 = vmatmul.mubr.f32.gmra.mrb[0].mxu0 %v3382
    %v6726 = vpop.f32.mrb[0].mxu0
    %v6727 = vadd.f32 %v6656, %v6726
    %v6728 = vpop.f32.mrb[0].mxu0
    %v6729 = vadd.f32 %v6658, %v6728
    %6730 = vdwg.mxu0
    %6731 = vmatprep.subr.mxu0 %v2725
    %6732 = vmatpush1.msra.mxu0 %v2724
    %6733 = vmatprep.subr.mxu0 %v2729
    %6734 = vmatpush1.msra.mxu0 %v2728
    %6735 = vmatprep.subr.mxu0 %v2733
    %6736 = vmatpush1.msra.mxu0 %v2732
    %6737 = vmatprep.subr.mxu0 %v2737
    %6738 = vmatpush1.msra.mxu0 %v2736
    %6739 = vmatprep.subr.mxu0 %v2741
    %6740 = vmatpush1.msra.mxu0 %v2740
    %6741 = vmatprep.subr.mxu0 %v2745
    %6742 = vmatpush1.msra.mxu0 %v2744
    %6743 = vmatprep.subr.mxu0 %v2749
    %6744 = vmatpush1.msra.mxu0 %v2748
    %6745 = vmatprep.subr.mxu0 %v2753
    %6746 = vmatpush1.msra.mxu0 %v2752
    %6747 = vmatprep.subr.mxu0 %v2757
    %6748 = vmatpush1.msra.mxu0 %v2756
    %6749 = vmatprep.subr.mxu0 %v2761
    %6750 = vmatpush1.msra.mxu0 %v2760
    %6751 = vmatprep.subr.mxu0 %v2765
    %6752 = vmatpush1.msra.mxu0 %v2764
    %6753 = vmatprep.subr.mxu0 %v2769
    %6754 = vmatpush1.msra.mxu0 %v2768
    %6755 = vmatprep.subr.mxu0 %v2773
    %6756 = vmatpush1.msra.mxu0 %v2772
    %6757 = vmatprep.subr.mxu0 %v2777
    %6758 = vmatpush1.msra.mxu0 %v2776
    %6759 = vmatprep.subr.mxu0 %v2781
    %6760 = vmatpush1.msra.mxu0 %v2780
    %6761 = vmatprep.subr.mxu0 %v2785
    %6762 = vmatpush1.msra.mxu0 %v2784
    %6763 = vmatprep.subr.mxu0 %v2789
    %6764 = vmatpush1.msra.mxu0 %v2788
    %6765 = vmatprep.subr.mxu0 %v2793
    %6766 = vmatpush1.msra.mxu0 %v2792
    %6767 = vmatprep.subr.mxu0 %v2797
    %6768 = vmatpush1.msra.mxu0 %v2796
    %6769 = vmatprep.subr.mxu0 %v2801
    %6770 = vmatpush1.msra.mxu0 %v2800
    %6771 = vmatprep.subr.mxu0 %v2805
    %6772 = vmatpush1.msra.mxu0 %v2804
    %6773 = vmatprep.subr.mxu0 %v2809
    %6774 = vmatpush1.msra.mxu0 %v2808
    %6775 = vmatprep.subr.mxu0 %v2813
    %6776 = vmatpush1.msra.mxu0 %v2812
    %6777 = vmatprep.subr.mxu0 %v2817
    %6778 = vmatpush1.msra.mxu0 %v2816
    %6779 = vmatprep.subr.mxu0 %v2821
    %6780 = vmatpush1.msra.mxu0 %v2820
    %6781 = vmatprep.subr.mxu0 %v2825
    %6782 = vmatpush1.msra.mxu0 %v2824
    %6783 = vmatprep.subr.mxu0 %v2829
    %6784 = vmatpush1.msra.mxu0 %v2828
    %6785 = vmatprep.subr.mxu0 %v2833
    %6786 = vmatpush1.msra.mxu0 %v2832
    %6787 = vmatprep.subr.mxu0 %v2837
    %6788 = vmatpush1.msra.mxu0 %v2836
    %6789 = vmatprep.subr.mxu0 %v2841
    %6790 = vmatpush1.msra.mxu0 %v2840
    %6791 = vmatprep.subr.mxu0 %v2845
    %6792 = vmatpush1.msra.mxu0 %v2844
    %6793 = vmatprep.subr.mxu0 %v2849
    %6794 = vmatpush1.msra.mxu0 %v2848
    %6795 = vmatprep.mubr.f32.mxu0 %v3391
    %6796 = vmatmul.mubr.f32.gmra.mrb[0].mxu0 %v3389
    %v6797 = vpop.f32.mrb[0].mxu0
    %v6798 = vadd.f32 %v6727, %v6797
    %v6799 = vpop.f32.mrb[0].mxu0
    %v6800 = vadd.f32 %v6729, %v6799
    %6801 = vdwg.mxu0
    %6802 = vmatprep.subr.mxu0 %v2853
    %6803 = vmatpush1.msra.mxu0 %v2852
    %6804 = vmatprep.subr.mxu0 %v2857
    %6805 = vmatpush1.msra.mxu0 %v2856
    %6806 = vmatprep.subr.mxu0 %v2861
    %6807 = vmatpush1.msra.mxu0 %v2860
    %6808 = vmatprep.subr.mxu0 %v2865
    %6809 = vmatpush1.msra.mxu0 %v2864
    %6810 = vmatprep.subr.mxu0 %v2869
    %6811 = vmatpush1.msra.mxu0 %v2868
    %6812 = vmatprep.subr.mxu0 %v2873
    %6813 = vmatpush1.msra.mxu0 %v2872
    %6814 = vmatprep.subr.mxu0 %v2877
    %6815 = vmatpush1.msra.mxu0 %v2876
    %6816 = vmatprep.subr.mxu0 %v2881
    %6817 = vmatpush1.msra.mxu0 %v2880
    %6818 = vmatprep.subr.mxu0 %v2885
    %6819 = vmatpush1.msra.mxu0 %v2884
    %6820 = vmatprep.subr.mxu0 %v2889
    %6821 = vmatpush1.msra.mxu0 %v2888
    %6822 = vmatprep.subr.mxu0 %v2893
    %6823 = vmatpush1.msra.mxu0 %v2892
    %6824 = vmatprep.subr.mxu0 %v2897
    %6825 = vmatpush1.msra.mxu0 %v2896
    %6826 = vmatprep.subr.mxu0 %v2901
    %6827 = vmatpush1.msra.mxu0 %v2900
    %6828 = vmatprep.subr.mxu0 %v2905
    %6829 = vmatpush1.msra.mxu0 %v2904
    %6830 = vmatprep.subr.mxu0 %v2909
    %6831 = vmatpush1.msra.mxu0 %v2908
    %6832 = vmatprep.subr.mxu0 %v2913
    %6833 = vmatpush1.msra.mxu0 %v2912
    %6834 = vmatprep.subr.mxu0 %v2917
    %6835 = vmatpush1.msra.mxu0 %v2916
    %6836 = vmatprep.subr.mxu0 %v2921
    %6837 = vmatpush1.msra.mxu0 %v2920
    %6838 = vmatprep.subr.mxu0 %v2925
    %6839 = vmatpush1.msra.mxu0 %v2924
    %6840 = vmatprep.subr.mxu0 %v2929
    %6841 = vmatpush1.msra.mxu0 %v2928
    %6842 = vmatprep.subr.mxu0 %v2933
    %6843 = vmatpush1.msra.mxu0 %v2932
    %6844 = vmatprep.subr.mxu0 %v2937
    %6845 = vmatpush1.msra.mxu0 %v2936
    %6846 = vmatprep.subr.mxu0 %v2941
    %6847 = vmatpush1.msra.mxu0 %v2940
    %6848 = vmatprep.subr.mxu0 %v2945
    %6849 = vmatpush1.msra.mxu0 %v2944
    %6850 = vmatprep.subr.mxu0 %v2949
    %6851 = vmatpush1.msra.mxu0 %v2948
    %6852 = vmatprep.subr.mxu0 %v2953
    %6853 = vmatpush1.msra.mxu0 %v2952
    %6854 = vmatprep.subr.mxu0 %v2957
    %6855 = vmatpush1.msra.mxu0 %v2956
    %6856 = vmatprep.subr.mxu0 %v2961
    %6857 = vmatpush1.msra.mxu0 %v2960
    %6858 = vmatprep.subr.mxu0 %v2965
    %6859 = vmatpush1.msra.mxu0 %v2964
    %6860 = vmatprep.subr.mxu0 %v2969
    %6861 = vmatpush1.msra.mxu0 %v2968
    %6862 = vmatprep.subr.mxu0 %v2973
    %6863 = vmatpush1.msra.mxu0 %v2972
    %6864 = vmatprep.subr.mxu0 %v2977
    %6865 = vmatpush1.msra.mxu0 %v2976
    %6866 = vmatprep.mubr.f32.mxu0 %v3407
    %6867 = vmatmul.mubr.f32.gmra.mrb[0].mxu0 %v3399
    %v6868 = vpop.f32.mrb[0].mxu0
    %v6869 = vadd.f32 %v6798, %v6868
    %v6870 = vpop.f32.mrb[0].mxu0
    %v6871 = vadd.f32 %v6800, %v6870
    %6872 = vdwg.mxu0
    %6873 = vmatprep.subr.mxu0 %v2981
    %6874 = vmatpush1.msra.mxu0 %v2980
    %6875 = vmatprep.subr.mxu0 %v2985
    %6876 = vmatpush1.msra.mxu0 %v2984
    %6877 = vmatprep.subr.mxu0 %v2989
    %6878 = vmatpush1.msra.mxu0 %v2988
    %6879 = vmatprep.subr.mxu0 %v2993
    %6880 = vmatpush1.msra.mxu0 %v2992
    %6881 = vmatprep.subr.mxu0 %v2997
    %6882 = vmatpush1.msra.mxu0 %v2996
    %6883 = vmatprep.subr.mxu0 %v3001
    %6884 = vmatpush1.msra.mxu0 %v3000
    %6885 = vmatprep.subr.mxu0 %v3005
    %6886 = vmatpush1.msra.mxu0 %v3004
    %6887 = vmatprep.subr.mxu0 %v3009
    %6888 = vmatpush1.msra.mxu0 %v3008
    %6889 = vmatprep.subr.mxu0 %v3013
    %6890 = vmatpush1.msra.mxu0 %v3012
    %6891 = vmatprep.subr.mxu0 %v3017
    %6892 = vmatpush1.msra.mxu0 %v3016
    %6893 = vmatprep.subr.mxu0 %v3021
    %6894 = vmatpush1.msra.mxu0 %v3020
    %6895 = vmatprep.subr.mxu0 %v3025
    %6896 = vmatpush1.msra.mxu0 %v3024
    %6897 = vmatprep.subr.mxu0 %v3029
    %6898 = vmatpush1.msra.mxu0 %v3028
    %6899 = vmatprep.subr.mxu0 %v3033
    %6900 = vmatpush1.msra.mxu0 %v3032
    %6901 = vmatprep.subr.mxu0 %v3037
    %6902 = vmatpush1.msra.mxu0 %v3036
    %6903 = vmatprep.subr.mxu0 %v3041
    %6904 = vmatpush1.msra.mxu0 %v3040
    %6905 = vmatprep.subr.mxu0 %v3045
    %6906 = vmatpush1.msra.mxu0 %v3044
    %6907 = vmatprep.subr.mxu0 %v3049
    %6908 = vmatpush1.msra.mxu0 %v3048
    %6909 = vmatprep.subr.mxu0 %v3053
    %6910 = vmatpush1.msra.mxu0 %v3052
    %6911 = vmatprep.subr.mxu0 %v3057
    %6912 = vmatpush1.msra.mxu0 %v3056
    %6913 = vmatprep.subr.mxu0 %v3061
    %6914 = vmatpush1.msra.mxu0 %v3060
    %6915 = vmatprep.subr.mxu0 %v3065
    %6916 = vmatpush1.msra.mxu0 %v3064
    %6917 = vmatprep.subr.mxu0 %v3069
    %6918 = vmatpush1.msra.mxu0 %v3068
    %6919 = vmatprep.subr.mxu0 %v3073
    %6920 = vmatpush1.msra.mxu0 %v3072
    %6921 = vmatprep.subr.mxu0 %v3077
    %6922 = vmatpush1.msra.mxu0 %v3076
    %6923 = vmatprep.subr.mxu0 %v3081
    %6924 = vmatpush1.msra.mxu0 %v3080
    %6925 = vmatprep.subr.mxu0 %v3085
    %6926 = vmatpush1.msra.mxu0 %v3084
    %6927 = vmatprep.subr.mxu0 %v3089
    %6928 = vmatpush1.msra.mxu0 %v3088
    %6929 = vmatprep.subr.mxu0 %v3093
    %6930 = vmatpush1.msra.mxu0 %v3092
    %6931 = vmatprep.subr.mxu0 %v3097
    %6932 = vmatpush1.msra.mxu0 %v3096
    %6933 = vmatprep.subr.mxu0 %v3101
    %6934 = vmatpush1.msra.mxu0 %v3100
    %6935 = vmatprep.subr.mxu0 %v3105
    %6936 = vmatpush1.msra.mxu0 %v3104
    %6937 = vmatprep.mubr.f32.mxu0 %v3408
    %6938 = vmatmul.mubr.f32.gmra.mrb[0].mxu0 %v3406
    %v6939 = vpop.f32.mrb[0].mxu0
    %v6940 = vadd.f32 %v6869, %v6939
    %v6941 = vpop.f32.mrb[0].mxu0
    %v6942 = vadd.f32 %v6871, %v6941
    %6943 = vdwg.mxu0
    %6944 = vmatprep.subr.mxu0 %v3109
    %6945 = vmatpush1.msra.mxu0 %v3108
    %6946 = vmatprep.subr.mxu0 %v3113
    %6947 = vmatpush1.msra.mxu0 %v3112
    %6948 = vmatprep.subr.mxu0 %v3117
    %6949 = vmatpush1.msra.mxu0 %v3116
    %6950 = vmatprep.subr.mxu0 %v3121
    %6951 = vmatpush1.msra.mxu0 %v3120
    %6952 = vmatprep.subr.mxu0 %v3125
    %6953 = vmatpush1.msra.mxu0 %v3124
    %6954 = vmatprep.subr.mxu0 %v3129
    %6955 = vmatpush1.msra.mxu0 %v3128
    %6956 = vmatprep.subr.mxu0 %v3133
    %6957 = vmatpush1.msra.mxu0 %v3132
    %6958 = vmatprep.subr.mxu0 %v3137
    %6959 = vmatpush1.msra.mxu0 %v3136
    %6960 = vmatprep.subr.mxu0 %v3141
    %6961 = vmatpush1.msra.mxu0 %v3140
    %6962 = vmatprep.subr.mxu0 %v3145
    %6963 = vmatpush1.msra.mxu0 %v3144
    %6964 = vmatprep.subr.mxu0 %v3149
    %6965 = vmatpush1.msra.mxu0 %v3148
    %6966 = vmatprep.subr.mxu0 %v3153
    %6967 = vmatpush1.msra.mxu0 %v3152
    %6968 = vmatprep.subr.mxu0 %v3157
    %6969 = vmatpush1.msra.mxu0 %v3156
    %6970 = vmatprep.subr.mxu0 %v3161
    %6971 = vmatpush1.msra.mxu0 %v3160
    %6972 = vmatprep.subr.mxu0 %v3165
    %6973 = vmatpush1.msra.mxu0 %v3164
    %6974 = vmatprep.subr.mxu0 %v3169
    %6975 = vmatpush1.msra.mxu0 %v3168
    %6976 = vmatprep.subr.mxu0 0.0
    %6977 = vmatpush1.msra.mxu0 0.0
    %6978 = vmatprep.subr.mxu0 0.0
    %6979 = vmatpush1.msra.mxu0 0.0
    %6980 = vmatprep.subr.mxu0 0.0
    %6981 = vmatpush1.msra.mxu0 0.0
    %6982 = vmatprep.subr.mxu0 0.0
    %6983 = vmatpush1.msra.mxu0 0.0
    %6984 = vmatprep.subr.mxu0 0.0
    %6985 = vmatpush1.msra.mxu0 0.0
    %6986 = vmatprep.subr.mxu0 0.0
    %6987 = vmatpush1.msra.mxu0 0.0
    %6988 = vmatprep.subr.mxu0 0.0
    %6989 = vmatpush1.msra.mxu0 0.0
    %6990 = vmatprep.subr.mxu0 0.0
    %6991 = vmatpush1.msra.mxu0 0.0
    %6992 = vmatprep.subr.mxu0 0.0
    %6993 = vmatpush1.msra.mxu0 0.0
    %6994 = vmatprep.subr.mxu0 0.0
    %6995 = vmatpush1.msra.mxu0 0.0
    %6996 = vmatprep.subr.mxu0 0.0
    %6997 = vmatpush1.msra.mxu0 0.0
    %6998 = vmatprep.subr.mxu0 0.0
    %6999 = vmatpush1.msra.mxu0 0.0
    %7000 = vmatprep.subr.mxu0 0.0
    %7001 = vmatpush1.msra.mxu0 0.0
    %7002 = vmatprep.subr.mxu0 0.0
    %7003 = vmatpush1.msra.mxu0 0.0
    %7004 = vmatprep.subr.mxu0 0.0
    %7005 = vmatpush1.msra.mxu0 0.0
    %7006 = vmatprep.subr.mxu0 0.0
    %7007 = vmatpush1.msra.mxu0 0.0
    %7008 = vmatprep.mubr.f32.mxu0 0.0
    %7009 = vmatmul.mubr.f32.gmra.mrb[0].mxu0 %v3415
    %v7010 = vpop.f32.mrb[0].mxu0
    %v7011 = vadd.f32 %v6940, %v7010
    %v7012 = vpop.f32.mrb[0].mxu0
    %v7013 = vadd.f32 %v6942, %v7012
    %7014 = vdwg.mxu0
    %v7015 = vmax.f32 %v5236, 0.0
    %v7016 = vmax.f32 %v5238, 0.0
    %v7017 = vmax.f32 %v7011, 0.0
    %v7018 = vmax.f32 %v7013, 0.0
    %v7019 = vld [vmem:[%s3] sm:$0xff]
    %v7020 = vld [vmem:[%s3 + $0x8] sm:$0xff]
    %v7021 = vld [vmem:[%s3 + $0x10] sm:$0xff]
    %v7022 = vld [vmem:[%s3 + $0x18] sm:$0xff]
    %v7023 = vld [vmem:[%s3 + $0x20] sm:$0xff]
    %v7024 = vld [vmem:[%s3 + $0x28] sm:$0xff]
    %v7025 = vld [vmem:[%s3 + $0x30] sm:$0xff]
    %v7026 = vld [vmem:[%s3 + $0x38] sm:$0xff]
    %v7027 = vld [vmem:[%s3 + $0x40] sm:$0xff]
    %v7028 = vld [vmem:[%s3 + $0x48] sm:$0xff]
    %v7029 = vld [vmem:[%s3 + $0x50] sm:$0xff]
    %v7030 = vld [vmem:[%s3 + $0x58] sm:$0xff]
    %v7031 = vld [vmem:[%s3 + $0x60] sm:$0xff]
    %v7032 = vld [vmem:[%s3 + $0x68] sm:$0xff]
    %v7033 = vld [vmem:[%s3 + $0x70] sm:$0xff]
    %v7034 = vld [vmem:[%s3 + $0x78] sm:$0xff]
    %v7035 = vld [vmem:[%s3 + $0x80] sm:$0xff]
    %v7036 = vld [vmem:[%s3 + $0x88] sm:$0xff]
    %v7037 = vld [vmem:[%s3 + $0x90] sm:$0xff]
    %v7038 = vld [vmem:[%s3 + $0x98] sm:$0xff]
    %v7039 = vld [vmem:[%s3 + $0xa0] sm:$0xff]
    %v7040 = vld [vmem:[%s3 + $0xa8] sm:$0xff]
    %v7041 = vld [vmem:[%s3 + $0xb0] sm:$0xff]
    %v7042 = vld [vmem:[%s3 + $0xb8] sm:$0xff]
    %v7043 = vld [vmem:[%s3 + $0xc0] sm:$0xff]
    %v7044 = vld [vmem:[%s3 + $0xc8] sm:$0xff]
    %v7045 = vld [vmem:[%s3 + $0xd0] sm:$0xff]
    %v7046 = vld [vmem:[%s3 + $0xd8] sm:$0xff]
    %v7047 = vld [vmem:[%s3 + $0xe0] sm:$0xff]
    %v7048 = vld [vmem:[%s3 + $0xe8] sm:$0xff]
    %v7049 = vld [vmem:[%s3 + $0xf0] sm:$0xff]
    %v7050 = vld [vmem:[%s3 + $0xf8] sm:$0xff]
    %v7051 = vld [vmem:[%s3 + $0x100] sm:$0xff]
    %v7052 = vld [vmem:[%s3 + $0x108] sm:$0xff]
    %v7053 = vld [vmem:[%s3 + $0x110] sm:$0xff]
    %v7054 = vld [vmem:[%s3 + $0x118] sm:$0xff]
    %v7055 = vld [vmem:[%s3 + $0x120] sm:$0xff]
    %v7056 = vld [vmem:[%s3 + $0x128] sm:$0xff]
    %v7057 = vld [vmem:[%s3 + $0x130] sm:$0xff]
    %v7058 = vld [vmem:[%s3 + $0x138] sm:$0xff]
    %v7059 = vld [vmem:[%s3 + $0x140] sm:$0xff]
    %v7060 = vld [vmem:[%s3 + $0x148] sm:$0xff]
    %v7061 = vld [vmem:[%s3 + $0x150] sm:$0xff]
    %v7062 = vld [vmem:[%s3 + $0x158] sm:$0xff]
    %v7063 = vld [vmem:[%s3 + $0x160] sm:$0xff]
    %v7064 = vld [vmem:[%s3 + $0x168] sm:$0xff]
    %v7065 = vld [vmem:[%s3 + $0x170] sm:$0xff]
    %v7066 = vld [vmem:[%s3 + $0x178] sm:$0xff]
    %v7067 = vld [vmem:[%s3 + $0x180] sm:$0xff]
    %v7068 = vld [vmem:[%s3 + $0x188] sm:$0xff]
    %v7069 = vld [vmem:[%s3 + $0x190] sm:$0xff]
    %v7070 = vld [vmem:[%s3 + $0x198] sm:$0xff]
    %v7071 = vld [vmem:[%s3 + $0x1a0] sm:$0xff]
    %v7072 = vld [vmem:[%s3 + $0x1a8] sm:$0xff]
    %v7073 = vld [vmem:[%s3 + $0x1b0] sm:$0xff]
    %v7074 = vld [vmem:[%s3 + $0x1b8] sm:$0xff]
    %v7075 = vld [vmem:[%s3 + $0x1c0] sm:$0xff]
    %v7076 = vld [vmem:[%s3 + $0x1c8] sm:$0xff]
    %v7077 = vld [vmem:[%s3 + $0x1d0] sm:$0xff]
    %v7078 = vld [vmem:[%s3 + $0x1d8] sm:$0xff]
    %v7079 = vld [vmem:[%s3 + $0x1e0] sm:$0xff]
    %v7080 = vld [vmem:[%s3 + $0x1e8] sm:$0xff]
    %v7081 = vld [vmem:[%s3 + $0x1f0] sm:$0xff]
    %v7082 = vld [vmem:[%s3 + $0x1f8] sm:$0xff]
    %v7083 = vld [vmem:[%s4] sm:$0x1]
    %v7085 = vlaneseq
    %v7086 = vshrl.u32 %v7085, 7
    %v7087 = vsub.s32 0, %v7086
    %v7088 = vrot.slane %v7083, %v7087
    %7090 = vmatprep.subr.mxu0 0.0
    %7091 = vmatpush1.msra.mxu0 %v7019
    %7092 = vmatprep.subr.mxu0 0.0
    %7093 = vmatpush1.msra.mxu0 %v7020
    %7094 = vmatprep.subr.mxu0 0.0
    %7095 = vmatpush1.msra.mxu0 %v7021
    %7096 = vmatprep.subr.mxu0 0.0
    %7097 = vmatpush1.msra.mxu0 %v7022
    %7098 = vmatprep.subr.mxu0 0.0
    %7099 = vmatpush1.msra.mxu0 %v7023
    %7100 = vmatprep.subr.mxu0 0.0
    %7101 = vmatpush1.msra.mxu0 %v7024
    %7102 = vmatprep.subr.mxu0 0.0
    %7103 = vmatpush1.msra.mxu0 %v7025
    %7104 = vmatprep.subr.mxu0 0.0
    %7105 = vmatpush1.msra.mxu0 %v7026
    %7106 = vmatprep.subr.mxu0 0.0
    %7107 = vmatpush1.msra.mxu0 %v7027
    %7108 = vmatprep.subr.mxu0 0.0
    %7109 = vmatpush1.msra.mxu0 %v7028
    %7110 = vmatprep.subr.mxu0 0.0
    %7111 = vmatpush1.msra.mxu0 %v7029
    %7112 = vmatprep.subr.mxu0 0.0
    %7113 = vmatpush1.msra.mxu0 %v7030
    %7114 = vmatprep.subr.mxu0 0.0
    %7115 = vmatpush1.msra.mxu0 %v7031
    %7116 = vmatprep.subr.mxu0 0.0
    %7117 = vmatpush1.msra.mxu0 %v7032
    %7118 = vmatprep.subr.mxu0 0.0
    %7119 = vmatpush1.msra.mxu0 %v7033
    %7120 = vmatprep.subr.mxu0 0.0
    %7121 = vmatpush1.msra.mxu0 %v7034
    %7122 = vmatprep.subr.mxu0 0.0
    %7123 = vmatpush1.msra.mxu0 %v7035
    %7124 = vmatprep.subr.mxu0 0.0
    %7125 = vmatpush1.msra.mxu0 %v7036
    %7126 = vmatprep.subr.mxu0 0.0
    %7127 = vmatpush1.msra.mxu0 %v7037
    %7128 = vmatprep.subr.mxu0 0.0
    %7129 = vmatpush1.msra.mxu0 %v7038
    %7130 = vmatprep.subr.mxu0 0.0
    %7131 = vmatpush1.msra.mxu0 %v7039
    %7132 = vmatprep.subr.mxu0 0.0
    %7133 = vmatpush1.msra.mxu0 %v7040
    %7134 = vmatprep.subr.mxu0 0.0
    %7135 = vmatpush1.msra.mxu0 %v7041
    %7136 = vmatprep.subr.mxu0 0.0
    %7137 = vmatpush1.msra.mxu0 %v7042
    %7138 = vmatprep.subr.mxu0 0.0
    %7139 = vmatpush1.msra.mxu0 %v7043
    %7140 = vmatprep.subr.mxu0 0.0
    %7141 = vmatpush1.msra.mxu0 %v7044
    %7142 = vmatprep.subr.mxu0 0.0
    %7143 = vmatpush1.msra.mxu0 %v7045
    %7144 = vmatprep.subr.mxu0 0.0
    %7145 = vmatpush1.msra.mxu0 %v7046
    %7146 = vmatprep.subr.mxu0 0.0
    %7147 = vmatpush1.msra.mxu0 %v7047
    %7148 = vmatprep.subr.mxu0 0.0
    %7149 = vmatpush1.msra.mxu0 %v7048
    %7150 = vmatprep.subr.mxu0 0.0
    %7151 = vmatpush1.msra.mxu0 %v7049
    %7152 = vmatprep.subr.mxu0 0.0
    %7153 = vmatpush1.msra.mxu0 %v7050
    %7154 = vmatprep.mubr.f32.mxu0 %v7016
    %7155 = vmatmul.mubr.f32.gmra.mrb[0].mxu0 %v7015
    %v7156 = vpop.f32.mrb[0].mxu0
    %v7157 = vadd.f32 %v7088, %v7156
    %v7158 = vpop.f32.mrb[0].mxu0
    %7159 = vdwg.mxu0
    %7160 = vmatprep.subr.mxu0 0.0
    %7161 = vmatpush1.msra.mxu0 %v7051
    %7162 = vmatprep.subr.mxu0 0.0
    %7163 = vmatpush1.msra.mxu0 %v7052
    %7164 = vmatprep.subr.mxu0 0.0
    %7165 = vmatpush1.msra.mxu0 %v7053
    %7166 = vmatprep.subr.mxu0 0.0
    %7167 = vmatpush1.msra.mxu0 %v7054
    %7168 = vmatprep.subr.mxu0 0.0
    %7169 = vmatpush1.msra.mxu0 %v7055
    %7170 = vmatprep.subr.mxu0 0.0
    %7171 = vmatpush1.msra.mxu0 %v7056
    %7172 = vmatprep.subr.mxu0 0.0
    %7173 = vmatpush1.msra.mxu0 %v7057
    %7174 = vmatprep.subr.mxu0 0.0
    %7175 = vmatpush1.msra.mxu0 %v7058
    %7176 = vmatprep.subr.mxu0 0.0
    %7177 = vmatpush1.msra.mxu0 %v7059
    %7178 = vmatprep.subr.mxu0 0.0
    %7179 = vmatpush1.msra.mxu0 %v7060
    %7180 = vmatprep.subr.mxu0 0.0
    %7181 = vmatpush1.msra.mxu0 %v7061
    %7182 = vmatprep.subr.mxu0 0.0
    %7183 = vmatpush1.msra.mxu0 %v7062
    %7184 = vmatprep.subr.mxu0 0.0
    %7185 = vmatpush1.msra.mxu0 %v7063
    %7186 = vmatprep.subr.mxu0 0.0
    %7187 = vmatpush1.msra.mxu0 %v7064
    %7188 = vmatprep.subr.mxu0 0.0
    %7189 = vmatpush1.msra.mxu0 %v7065
    %7190 = vmatprep.subr.mxu0 0.0
    %7191 = vmatpush1.msra.mxu0 %v7066
    %7192 = vmatprep.subr.mxu0 0.0
    %7193 = vmatpush1.msra.mxu0 %v7067
    %7194 = vmatprep.subr.mxu0 0.0
    %7195 = vmatpush1.msra.mxu0 %v7068
    %7196 = vmatprep.subr.mxu0 0.0
    %7197 = vmatpush1.msra.mxu0 %v7069
    %7198 = vmatprep.subr.mxu0 0.0
    %7199 = vmatpush1.msra.mxu0 %v7070
    %7200 = vmatprep.subr.mxu0 0.0
    %7201 = vmatpush1.msra.mxu0 %v7071
    %7202 = vmatprep.subr.mxu0 0.0
    %7203 = vmatpush1.msra.mxu0 %v7072
    %7204 = vmatprep.subr.mxu0 0.0
    %7205 = vmatpush1.msra.mxu0 %v7073
    %7206 = vmatprep.subr.mxu0 0.0
    %7207 = vmatpush1.msra.mxu0 %v7074
    %7208 = vmatprep.subr.mxu0 0.0
    %7209 = vmatpush1.msra.mxu0 %v7075
    %7210 = vmatprep.subr.mxu0 0.0
    %7211 = vmatpush1.msra.mxu0 %v7076
    %7212 = vmatprep.subr.mxu0 0.0
    %7213 = vmatpush1.msra.mxu0 %v7077
    %7214 = vmatprep.subr.mxu0 0.0
    %7215 = vmatpush1.msra.mxu0 %v7078
    %7216 = vmatprep.subr.mxu0 0.0
    %7217 = vmatpush1.msra.mxu0 %v7079
    %7218 = vmatprep.subr.mxu0 0.0
    %7219 = vmatpush1.msra.mxu0 %v7080
    %7220 = vmatprep.subr.mxu0 0.0
    %7221 = vmatpush1.msra.mxu0 %v7081
    %7222 = vmatprep.subr.mxu0 0.0
    %7223 = vmatpush1.msra.mxu0 %v7082
    %7224 = vmatprep.mubr.f32.mxu0 %v7018
    %7225 = vmatmul.mubr.f32.gmra.mrb[0].mxu0 %v7017
    %v7226 = vpop.f32.mrb[0].mxu0
    %v7227 = vadd.f32 %v7157, %v7226
    %v7228 = vpop.f32.mrb[0].mxu0
    %7229 = vdwg.mxu0
    %7230 = vst [vmem:[#allocation2] sm:$0x3] %v7227
    // Predicated region
    $region22: #{nature_paper_conv_forward.7} parent=1 // pred_check
      _
    $region23: #{nature_paper_conv_forward.7} parent=1 // pred_check_branch
      %7232 = sbr.rel (0) target = $region25
    $region24: #{nature_paper_conv_forward.7} parent=1 // pred_region
      %s7234 = ssub.s32 32, 32
      %7235 = vsyncadd [#allocation3], %s7234
      %s7237 = sshll.u32 [#allocation2], 4
      %s7238 = int_to_ptr.vmem [resolvable:$true] %s7237
      %7240 = dma.vmem_to_hbm [thread:$0]  %s7238, 32, %s5, [#allocation3]
    $region25: #{nature_paper_conv_forward.7} parent=1 // pred_fallthru
      _
    // Predicated region
    $region26: #{nature_paper_conv_forward.7} parent=1 // pred_check
      _
    $region27: #{nature_paper_conv_forward.7} parent=1 // pred_check_branch
      %7242 = sbr.rel (0) target = $region29
    $region28: #{nature_paper_conv_forward.7} parent=1 // pred_region
      %7243 = dma.done [#allocation3], 32
    $region29: #{nature_paper_conv_forward.7} parent=1 // pred_fallthru
      _
    %7244 = vsyncpa [#allocation3], 1

</llo_original>
